<compile_context>
chip_gen: v7x
topology: tpu7x:2x2x1
jax: 0.10.0
libtpu: 0.0.40
codegen_flags: <defaults>
</compile_context>

<pallas_src>
import functools

import numpy as np
import jax
import jax.numpy as jnp
from jax.experimental import pallas as pl

# ----------------------------- model config -----------------------------
HIDDEN_DIM = 32
NUM_HEAD = 4
HEAD_DIM = HIDDEN_DIM // NUM_HEAD
FFNN_DIM = 64
NUM_DECODER = 2
LN_EPS = 1e-5
LANES = 128            # parameter-slab width = one lane tile


# ------------------------- parameter slab layout -------------------------
def _build_layout():
    """Static (row, nrows, ncols) offsets shared by the host packer and kernel."""
    layout = {}
    row = 0

    def add(name, nrows, ncols):
        nonlocal row
        layout[name] = (row, nrows, ncols)
        row += nrows

    for l in range(NUM_DECODER):
        add(f"wqkv_s_{l}", HIDDEN_DIM, LANES)        # fused Q|K|V (zero-padded to 128)
        add(f"wo_s_{l}", HIDDEN_DIM, HIDDEN_DIM)
        add(f"wq_c_{l}", HIDDEN_DIM, HIDDEN_DIM)
        add(f"wo_c_{l}", HIDDEN_DIM, HIDDEN_DIM)
        add(f"w1_{l}", HIDDEN_DIM, FFNN_DIM)
        add(f"w2_{l}", FFNN_DIM, HIDDEN_DIM)
    add("wkv_c", HIDDEN_DIM, LANES)                  # hoisted cross K/V: [K0|V0|K1|V1]
    for l in range(NUM_DECODER):
        add(f"bqkv_s_{l}", 1, LANES)
        add(f"bo_s_{l}", 1, HIDDEN_DIM)
        add(f"g_s_{l}", 1, HIDDEN_DIM)
        add(f"be_s_{l}", 1, HIDDEN_DIM)
        add(f"bq_c_{l}", 1, HIDDEN_DIM)
        add(f"bo_c_{l}", 1, HIDDEN_DIM)
        add(f"g_c_{l}", 1, HIDDEN_DIM)
        add(f"be_c_{l}", 1, HIDDEN_DIM)
        add(f"b1_{l}", 1, FFNN_DIM)
        add(f"b2_{l}", 1, HIDDEN_DIM)
        add(f"g_f_{l}", 1, HIDDEN_DIM)
        add(f"be_f_{l}", 1, HIDDEN_DIM)
    add("bkv_c", 1, LANES)
    return layout, -(-row // 8) * 8                  # pad rows to a multiple of 8


LAYOUT, SLAB_ROWS = _build_layout()


# ------------------------------ fused kernel -----------------------------
def decoder_kernel(act_ref, mask_ref, p_ref, out_ref, *, nb, sq, skv):
    H, NH, HD = HIDDEN_DIM, NUM_HEAD, HEAD_DIM
    nq = nb * sq

    def read(name):
        r, nr, nc = LAYOUT[name]
        return p_ref[r:r + nr, 0:nc]

    def layernorm(y, g, b):
        mu = jnp.mean(y, axis=-1, keepdims=True)
        var = jnp.mean((y - mu) ** 2, axis=-1, keepdims=True)
        return (y - mu) * jax.lax.rsqrt(var + LN_EPS) * g + b

    scale = 1.0 / (HD ** 0.5)

    def mha(q2, k2, v2, add_mask, s_kv):
        # TODO(synk): a fully head-batched (B*NH, S, HD) formulation needs a
        # middle-dim transpose that Mosaic's transpose lowering does not
        # support; keep a static 4-head loop of batched MXU einsums instead.
        q3 = (q2 * scale).reshape(nb, sq, H)          # scale folded into Q once
        k3 = k2.reshape(nb, s_kv, H)
        v3 = v2.reshape(nb, s_kv, H)
        parts = []
        for h in range(NH):                           # static loop, contiguous lane slices
            sl = slice(h * HD, (h + 1) * HD)
            s = jnp.einsum('bqd,bkd->bqk', q3[:, :, sl], k3[:, :, sl],
                           preferred_element_type=jnp.float32)
            s = s + add_mask
            s = s - jnp.max(s, axis=-1, keepdims=True)
            pr = jnp.exp(s)
            pr = pr * pl.reciprocal(jnp.sum(pr, axis=-1, keepdims=True), approx=True)
            parts.append(jnp.einsum('bqk,bkd->bqd', pr, v3[:, :, sl],
                                    preferred_element_type=jnp.float32))
        return jnp.concatenate(parts, axis=-1).reshape(nq, H)

    dec = act_ref[0:nq, :]                            # (B*Sq, H)
    enc = act_ref[nq:nq + nb * skv, :]                # (B*Skv, H)
    la_add = mask_ref[:, :, 0:sq]                     # (B, Sq, Sq)   additive
    cr_add = mask_ref[:, :, sq:sq + skv]              # (B, Sq, Skv)  additive

    # Layer-invariant cross-attention K/V for BOTH layers in one lane-dense
    # (B*Skv, 32) @ (32, 128) matmul: columns = [K0 | V0 | K1 | V1].
    enc_kv = jnp.dot(enc, read("wkv_c"), preferred_element_type=jnp.float32) + read("bkv_c")

    x = dec
    for l in range(NUM_DECODER):                      # static unrolled layer loop
        # --- masked self-attention + residual + LayerNorm ---
        qkv = (jnp.dot(x, read(f"wqkv_s_{l}"), preferred_element_type=jnp.float32)
               + read(f"bqkv_s_{l}"))                 # (B*Sq, 128) full lane tile
        ctx = mha(qkv[:, 0:H], qkv[:, H:2 * H], qkv[:, 2 * H:3 * H], la_add, sq)
        attn = (jnp.dot(ctx, read(f"wo_s_{l}"), preferred_element_type=jnp.float32)
                + read(f"bo_s_{l}"))
        x = layernorm(attn + x, read(f"g_s_{l}"), read(f"be_s_{l}"))

        # --- cross-attention (K/V hoisted) + residual + LayerNorm ---
        qc = (jnp.dot(x, read(f"wq_c_{l}"), preferred_element_type=jnp.float32)
              + read(f"bq_c_{l}"))
        kc = enc_kv[:, 2 * l * H:(2 * l + 1) * H]
        vc = enc_kv[:, (2 * l + 1) * H:(2 * l + 2) * H]
        ctx = mha(qc, kc, vc, cr_add, skv)
        attn = (jnp.dot(ctx, read(f"wo_c_{l}"), preferred_element_type=jnp.float32)
                + read(f"bo_c_{l}"))
        x = layernorm(attn + x, read(f"g_c_{l}"), read(f"be_c_{l}"))

        # --- position-wise FFN + residual + LayerNorm ---
        h1 = jnp.maximum(jnp.dot(x, read(f"w1_{l}"), preferred_element_type=jnp.float32)
                         + read(f"b1_{l}"), 0.0)
        o = jnp.dot(h1, read(f"w2_{l}"), preferred_element_type=jnp.float32) + read(f"b2_{l}")
        x = layernorm(o + x, read(f"g_f_{l}"), read(f"be_f_{l}"))

    out_ref[...] = x                                  # (B*Sq, H)


def run_decoder(dec_input, look_ahead_mask, enc_input, attn_mask, param_slab):
    B, Sq, H = dec_input.shape
    Skv = enc_input.shape[1]
    # Fold dec/enc activations into one row slab, masks into one additive slab.
    act = jnp.concatenate([dec_input.reshape(B * Sq, H),
                           enc_input.reshape(B * Skv, H)], axis=0)
    masks = jnp.concatenate(
        [jnp.where(look_ahead_mask > 0.5, -1e9, 0.0),
         jnp.where(attn_mask > 0.5, -1e9, 0.0)], axis=-1).astype(jnp.float32)
    # Single invocation, no grid: all three inputs are whole-array VMEM blocks.
    # TODO(synk): on v7x (2 TCs) a grid=(B,) "parallel" batch split could halve
    # wall time; kept single-invocation since that is optimal on v5e/v6e.
    out = pl.pallas_call(
        functools.partial(decoder_kernel, nb=B, sq=Sq, skv=Skv),
        out_shape=jax.ShapeDtypeStruct((B * Sq, H), jnp.float32),
    )(act, masks, param_slab)
    return out.reshape(B, Sq, H)


# ------------------------- parameter construction ------------------------
def _linear_params(key, fan_in, fan_out):
    kw, kb = jax.random.split(key)
    bound = 1.0 / (fan_in ** 0.5)
    w = jax.random.uniform(kw, (fan_in, fan_out), jnp.float32, -bound, bound)
    b = jax.random.uniform(kb, (1, fan_out), jnp.float32, -bound, bound)
    return w, b


def make_mha_params(key):
    ks = jax.random.split(key, 4)
    wq, bq = _linear_params(ks[0], HIDDEN_DIM, HIDDEN_DIM)
    wk, bk = _linear_params(ks[1], HIDDEN_DIM, HIDDEN_DIM)
    wv, bv = _linear_params(ks[2], HIDDEN_DIM, HIDDEN_DIM)
    wo, bo = _linear_params(ks[3], HIDDEN_DIM, HIDDEN_DIM)
    return dict(wq=wq, bq=bq, wk=wk, bk=bk, wv=wv, bv=bv, wo=wo, bo=bo,
                g=jnp.ones((1, HIDDEN_DIM), jnp.float32),
                be=jnp.zeros((1, HIDDEN_DIM), jnp.float32))


def make_ffn_params(key):
    k1, k2 = jax.random.split(key)
    w1, b1 = _linear_params(k1, HIDDEN_DIM, FFNN_DIM)
    w2, b2 = _linear_params(k2, FFNN_DIM, HIDDEN_DIM)
    return dict(w1=w1, b1=b1, w2=w2, b2=b2,
                g=jnp.ones((1, HIDDEN_DIM), jnp.float32),
                be=jnp.zeros((1, HIDDEN_DIM), jnp.float32))


def make_decoder_params(key, num_layers):
    layers = []
    for i in range(num_layers):
        k1, k2, k3 = jax.random.split(jax.random.fold_in(key, i), 3)
        layers.append(dict(self=make_mha_params(k1),
                           cross=make_mha_params(k2),
                           ffn=make_ffn_params(k3)))
    return layers


def pack_params(layers):
    """Pack all decoder parameters into one (SLAB_ROWS, 128) f32 slab (host-side)."""
    slab = np.zeros((SLAB_ROWS, LANES), np.float32)

    def put(name, arr):
        r, nr, nc = LAYOUT[name]
        a = np.asarray(arr, np.float32).reshape(nr, -1)
        assert a.shape[1] <= nc, name
        slab[r:r + nr, :a.shape[1]] = a

    # Hoisted, layer-fused cross-attention K/V projection: [K0|V0|K1|V1].
    put("wkv_c", np.concatenate(
        [np.concatenate([np.asarray(l["cross"]["wk"]), np.asarray(l["cross"]["wv"])], axis=1)
         for l in layers], axis=1))
    put("bkv_c", np.concatenate(
        [np.concatenate([np.asarray(l["cross"]["bk"]), np.asarray(l["cross"]["bv"])], axis=1)
         for l in layers], axis=1))

    for l, lp in enumerate(layers):
        s, c, f = lp["self"], lp["cross"], lp["ffn"]
        put(f"wqkv_s_{l}", np.concatenate([np.asarray(s["wq"]), np.asarray(s["wk"]),
                                           np.asarray(s["wv"])], axis=1))
        put(f"bqkv_s_{l}", np.concatenate([np.asarray(s["bq"]), np.asarray(s["bk"]),
                                           np.asarray(s["bv"])], axis=1))
        put(f"wo_s_{l}", s["wo"]); put(f"bo_s_{l}", s["bo"])
        put(f"g_s_{l}", s["g"]);   put(f"be_s_{l}", s["be"])
        put(f"wq_c_{l}", c["wq"]); put(f"bq_c_{l}", c["bq"])
        put(f"wo_c_{l}", c["wo"]); put(f"bo_c_{l}", c["bo"])
        put(f"g_c_{l}", c["g"]);   put(f"be_c_{l}", c["be"])
        put(f"w1_{l}", f["w1"]);   put(f"b1_{l}", f["b1"])
        put(f"w2_{l}", f["w2"]);   put(f"b2_{l}", f["b2"])
        put(f"g_f_{l}", f["g"]);   put(f"be_f_{l}", f["be"])
    return jnp.asarray(slab)


# ---------------------- pure-JAX reference (for check) --------------------
def _layernorm_ref(y, g, b):
    mu = jnp.mean(y, axis=-1, keepdims=True)
    var = jnp.mean((y - mu) ** 2, axis=-1, keepdims=True)
    return (y - mu) * jax.lax.rsqrt(var + LN_EPS) * g + b


def _mha_ref(q_in, kv_in, mask, p):
    B, Sq, H = q_in.shape
    Skv = kv_in.shape[1]
    q = q_in @ p["wq"] + p["bq"]
    k = kv_in @ p["wk"] + p["bk"]
    v = kv_in @ p["wv"] + p["bv"]
    q = q.reshape(B, Sq, NUM_HEAD, HEAD_DIM).transpose(0, 2, 1, 3)
    k = k.reshape(B, Skv, NUM_HEAD, HEAD_DIM).transpose(0, 2, 1, 3)
    v = v.reshape(B, Skv, NUM_HEAD, HEAD_DIM).transpose(0, 2, 1, 3)
    s = jnp.einsum('bhqd,bhkd->bhqk', q, k) / (HEAD_DIM ** 0.5)
    s = jnp.where(mask[:, None, :, :] > 0.5, -1e9, s)     # masked_fill_
    pr = jax.nn.softmax(s, axis=-1)
    ctx = jnp.einsum('bhqk,bhkd->bhqd', pr, v).transpose(0, 2, 1, 3).reshape(B, Sq, H)
    attn = ctx @ p["wo"] + p["bo"]
    return _layernorm_ref(attn + q_in, p["g"], p["be"])


def _ffn_ref(x, p):
    h = jnp.maximum(x @ p["w1"] + p["b1"], 0.0)
    o = h @ p["w2"] + p["b2"]
    return _layernorm_ref(o + x, p["g"], p["be"])


def decoder_ref(dec_input, look_ahead_mask, enc_input, attn_mask, layers):
    x = dec_input
    for lp in layers:
        x = _mha_ref(x, x, look_ahead_mask, lp["self"])
        x = _mha_ref(x, enc_input, attn_mask, lp["cross"])
        x = _ffn_ref(x, lp["ffn"])
    return x


# --------------------------------- main ----------------------------------
if __name__ == "__main__":
    B, S_DEC, S_ENC = 2, 8, 16

    key = jax.random.PRNGKey(0)
    k_dec, k_enc, k_par = jax.random.split(key, 3)

    dec_input = jax.random.normal(k_dec, (B, S_DEC, HIDDEN_DIM), jnp.float32)
    enc_input = jax.random.normal(k_enc, (B, S_ENC, HIDDEN_DIM), jnp.float32)

    # Look-ahead mask: 1.0 above the diagonal (future positions masked).
    la = jnp.triu(jnp.ones((S_DEC, S_DEC), jnp.float32), k=1)
    look_ahead_mask = jnp.broadcast_to(la, (B, S_DEC, S_DEC))
    # Cross-attention padding mask: mask the last 4 encoder positions of batch 1.
    attn_mask = jnp.zeros((B, S_DEC, S_ENC), jnp.float32)
    attn_mask = attn_mask.at[1, :, S_ENC - 4:].set(1.0)

    layer_params = make_decoder_params(k_par, NUM_DECODER)
    param_slab = pack_params(layer_params)              # packed once, reused per call

    fwd = jax.jit(lambda d, lm, e, am: run_decoder(d, lm, e, am, param_slab))
    out = fwd(dec_input, look_ahead_mask, enc_input, attn_mask)
    jax.block_until_ready(out)

    assert out.shape == (B, S_DEC, HIDDEN_DIM)
    assert bool(jnp.all(jnp.isfinite(out)))

    # Pure-JAX reference check (tolerance covers the approximate EUP reciprocal).
    ref = decoder_ref(dec_input, look_ahead_mask, enc_input, attn_mask, layer_params)
    max_err = float(jnp.max(jnp.abs(out - ref)))
    assert max_err < 5e-3, f"kernel/reference mismatch: max|err|={max_err}"

    print("KERNEL_OK")
</pallas_src>

<mosaic_0001>
module attributes {stable_mosaic.version = 11 : i64} {
  func.func @decoder_kernel(%arg0: memref<48x32xf32, #tpu.memory_space<vmem>>, %arg1: memref<2x8x24xf32, #tpu.memory_space<vmem>>, %arg2: memref<512x128xf32, #tpu.memory_space<vmem>>, %arg3: memref<16x32xf32, #tpu.memory_space<vmem>>) attributes {dimension_semantics = [], scalar_prefetch = 0 : i64, scratch_operands = 0 : i64, tpu.core_type = #tpu.core_type<tc>} {
    %c0 = arith.constant 0 : index
    %c0_0 = arith.constant 0 : index
    %0 = vector.load %arg0[%c0, %c0_0] : memref<48x32xf32, #tpu.memory_space<vmem>>, vector<16x32xf32>
    %c16 = arith.constant 16 : index
    %c0_1 = arith.constant 0 : index
    %1 = vector.load %arg0[%c16, %c0_1] : memref<48x32xf32, #tpu.memory_space<vmem>>, vector<32x32xf32>
    %c0_2 = arith.constant 0 : index
    %c0_3 = arith.constant 0 : index
    %c0_4 = arith.constant 0 : index
    %2 = vector.load %arg1[%c0_2, %c0_3, %c0_4] : memref<2x8x24xf32, #tpu.memory_space<vmem>>, vector<2x8x8xf32>
    %c0_5 = arith.constant 0 : index
    %c0_6 = arith.constant 0 : index
    %c8 = arith.constant 8 : index
    %3 = vector.load %arg1[%c0_5, %c0_6, %c8] : memref<2x8x24xf32, #tpu.memory_space<vmem>>, vector<2x8x16xf32>
    %c448 = arith.constant 448 : index
    %c0_7 = arith.constant 0 : index
    %4 = vector.load %arg2[%c448, %c0_7] : memref<512x128xf32, #tpu.memory_space<vmem>>, vector<32x128xf32>
    %cst = arith.constant dense<0.000000e+00> : vector<32x128xf32>
    %5 = tpu.matmul %1, %4, %cst {dimension_numbers = #tpu.dot_dimension_numbers<[1], [0], [0], [1], [0, 0, 1, 1], [], []>} : vector<32x32xf32>, vector<32x128xf32>, vector<32x128xf32> -> vector<32x128xf32>
    %c504 = arith.constant 504 : index
    %c0_8 = arith.constant 0 : index
    %6 = vector.load %arg2[%c504, %c0_8] : memref<512x128xf32, #tpu.memory_space<vmem>>, vector<1x128xf32>
    %7 = vector.broadcast %6 : vector<1x128xf32> to vector<32x128xf32>
    %8 = arith.addf %5, %7 : vector<32x128xf32>
    %c0_9 = arith.constant 0 : index
    %c0_10 = arith.constant 0 : index
    %9 = vector.load %arg2[%c0_9, %c0_10] : memref<512x128xf32, #tpu.memory_space<vmem>>, vector<32x128xf32>
    %cst_11 = arith.constant dense<0.000000e+00> : vector<16x128xf32>
    %10 = tpu.matmul %0, %9, %cst_11 {dimension_numbers = #tpu.dot_dimension_numbers<[1], [0], [0], [1], [0, 0, 1, 1], [], []>} : vector<16x32xf32>, vector<32x128xf32>, vector<16x128xf32> -> vector<16x128xf32>
    %c480 = arith.constant 480 : index
    %c0_12 = arith.constant 0 : index
    %11 = vector.load %arg2[%c480, %c0_12] : memref<512x128xf32, #tpu.memory_space<vmem>>, vector<1x128xf32>
    %12 = vector.broadcast %11 : vector<1x128xf32> to vector<16x128xf32>
    %13 = arith.addf %10, %12 : vector<16x128xf32>
    %14 = vector.extract_strided_slice %13 {offsets = [0, 0], sizes = [16, 32], strides = [1, 1]} : vector<16x128xf32> to vector<16x32xf32>
    %15 = vector.extract_strided_slice %13 {offsets = [0, 32], sizes = [16, 32], strides = [1, 1]} : vector<16x128xf32> to vector<16x32xf32>
    %16 = vector.extract_strided_slice %13 {offsets = [0, 64], sizes = [16, 32], strides = [1, 1]} : vector<16x128xf32> to vector<16x32xf32>
    %cst_13 = arith.constant 0.353553385 : f32
    %17 = vector.broadcast %cst_13 : f32 to vector<16x32xf32>
    %18 = arith.mulf %14, %17 : vector<16x32xf32>
    %19 = vector.shape_cast %18 : vector<16x32xf32> to vector<2x8x32xf32>
    %20 = vector.shape_cast %15 : vector<16x32xf32> to vector<2x8x32xf32>
    %21 = vector.shape_cast %16 : vector<16x32xf32> to vector<2x8x32xf32>
    %22 = vector.extract_strided_slice %19 {offsets = [0, 0, 0], sizes = [2, 8, 8], strides = [1, 1, 1]} : vector<2x8x32xf32> to vector<2x8x8xf32>
    %23 = vector.extract_strided_slice %20 {offsets = [0, 0, 0], sizes = [2, 8, 8], strides = [1, 1, 1]} : vector<2x8x32xf32> to vector<2x8x8xf32>
    "tpu.trace_start"() <{level = 10 : i32, message = "bqd,bkd->bqk"}> : () -> ()
    %cst_14 = arith.constant dense<0.000000e+00> : vector<2x8x8xf32>
    %24 = tpu.matmul %22, %23, %cst_14 {dimension_numbers = #tpu.dot_dimension_numbers<[2], [2], [1], [1], [0, 0, 0, 1, 1, 1], [0], [0]>} : vector<2x8x8xf32>, vector<2x8x8xf32>, vector<2x8x8xf32> -> vector<2x8x8xf32>
    "tpu.trace_stop"() : () -> ()
    %25 = arith.addf %24, %2 : vector<2x8x8xf32>
    %cst_15 = arith.constant dense<0xFF800000> : vector<2x8xf32>
    %26 = vector.multi_reduction <maximumf>, %25, %cst_15 [2] : vector<2x8x8xf32> to vector<2x8xf32>
    %27 = vector.shape_cast %26 : vector<2x8xf32> to vector<2x8x1xf32>
    %28 = vector.broadcast %27 : vector<2x8x1xf32> to vector<2x8x8xf32>
    %29 = arith.subf %25, %28 : vector<2x8x8xf32>
    %30 = math.exp %29 : vector<2x8x8xf32>
    %cst_16 = arith.constant dense<0.000000e+00> : vector<2x8xf32>
    %31 = vector.multi_reduction <add>, %30, %cst_16 [2] : vector<2x8x8xf32> to vector<2x8xf32>
    %32 = vector.shape_cast %31 : vector<2x8xf32> to vector<2x8x1xf32>
    %33 = tpu.reciprocal %32 {approx = true} : vector<2x8x1xf32> -> vector<2x8x1xf32>
    %34 = vector.broadcast %33 : vector<2x8x1xf32> to vector<2x8x8xf32>
    %35 = arith.mulf %30, %34 : vector<2x8x8xf32>
    %36 = vector.extract_strided_slice %21 {offsets = [0, 0, 0], sizes = [2, 8, 8], strides = [1, 1, 1]} : vector<2x8x32xf32> to vector<2x8x8xf32>
    "tpu.trace_start"() <{level = 10 : i32, message = "bqk,bkd->bqd"}> : () -> ()
    %cst_17 = arith.constant dense<0.000000e+00> : vector<2x8x8xf32>
    %37 = tpu.matmul %35, %36, %cst_17 {dimension_numbers = #tpu.dot_dimension_numbers<[2], [1], [1], [2], [0, 0, 0, 1, 1, 2], [0], [0]>} : vector<2x8x8xf32>, vector<2x8x8xf32>, vector<2x8x8xf32> -> vector<2x8x8xf32>
    "tpu.trace_stop"() : () -> ()
    %38 = vector.extract_strided_slice %19 {offsets = [0, 0, 8], sizes = [2, 8, 8], strides = [1, 1, 1]} : vector<2x8x32xf32> to vector<2x8x8xf32>
    %39 = vector.extract_strided_slice %20 {offsets = [0, 0, 8], sizes = [2, 8, 8], strides = [1, 1, 1]} : vector<2x8x32xf32> to vector<2x8x8xf32>
    "tpu.trace_start"() <{level = 10 : i32, message = "bqd,bkd->bqk"}> : () -> ()
    %cst_18 = arith.constant dense<0.000000e+00> : vector<2x8x8xf32>
    %40 = tpu.matmul %38, %39, %cst_18 {dimension_numbers = #tpu.dot_dimension_numbers<[2], [2], [1], [1], [0, 0, 0, 1, 1, 1], [0], [0]>} : vector<2x8x8xf32>, vector<2x8x8xf32>, vector<2x8x8xf32> -> vector<2x8x8xf32>
    "tpu.trace_stop"() : () -> ()
    %41 = arith.addf %40, %2 : vector<2x8x8xf32>
    %cst_19 = arith.constant dense<0xFF800000> : vector<2x8xf32>
    %42 = vector.multi_reduction <maximumf>, %41, %cst_19 [2] : vector<2x8x8xf32> to vector<2x8xf32>
    %43 = vector.shape_cast %42 : vector<2x8xf32> to vector<2x8x1xf32>
    %44 = vector.broadcast %43 : vector<2x8x1xf32> to vector<2x8x8xf32>
    %45 = arith.subf %41, %44 : vector<2x8x8xf32>
    %46 = math.exp %45 : vector<2x8x8xf32>
    %cst_20 = arith.constant dense<0.000000e+00> : vector<2x8xf32>
    %47 = vector.multi_reduction <add>, %46, %cst_20 [2] : vector<2x8x8xf32> to vector<2x8xf32>
    %48 = vector.shape_cast %47 : vector<2x8xf32> to vector<2x8x1xf32>
    %49 = tpu.reciprocal %48 {approx = true} : vector<2x8x1xf32> -> vector<2x8x1xf32>
    %50 = vector.broadcast %49 : vector<2x8x1xf32> to vector<2x8x8xf32>
    %51 = arith.mulf %46, %50 : vector<2x8x8xf32>
    %52 = vector.extract_strided_slice %21 {offsets = [0, 0, 8], sizes = [2, 8, 8], strides = [1, 1, 1]} : vector<2x8x32xf32> to vector<2x8x8xf32>
    "tpu.trace_start"() <{level = 10 : i32, message = "bqk,bkd->bqd"}> : () -> ()
    %cst_21 = arith.constant dense<0.000000e+00> : vector<2x8x8xf32>
    %53 = tpu.matmul %51, %52, %cst_21 {dimension_numbers = #tpu.dot_dimension_numbers<[2], [1], [1], [2], [0, 0, 0, 1, 1, 2], [0], [0]>} : vector<2x8x8xf32>, vector<2x8x8xf32>, vector<2x8x8xf32> -> vector<2x8x8xf32>
    "tpu.trace_stop"() : () -> ()
    %54 = vector.extract_strided_slice %19 {offsets = [0, 0, 16], sizes = [2, 8, 8], strides = [1, 1, 1]} : vector<2x8x32xf32> to vector<2x8x8xf32>
    %55 = vector.extract_strided_slice %20 {offsets = [0, 0, 16], sizes = [2, 8, 8], strides = [1, 1, 1]} : vector<2x8x32xf32> to vector<2x8x8xf32>
    "tpu.trace_start"() <{level = 10 : i32, message = "bqd,bkd->bqk"}> : () -> ()
    %cst_22 = arith.constant dense<0.000000e+00> : vector<2x8x8xf32>
    %56 = tpu.matmul %54, %55, %cst_22 {dimension_numbers = #tpu.dot_dimension_numbers<[2], [2], [1], [1], [0, 0, 0, 1, 1, 1], [0], [0]>} : vector<2x8x8xf32>, vector<2x8x8xf32>, vector<2x8x8xf32> -> vector<2x8x8xf32>
    "tpu.trace_stop"() : () -> ()
    %57 = arith.addf %56, %2 : vector<2x8x8xf32>
    %cst_23 = arith.constant dense<0xFF800000> : vector<2x8xf32>
    %58 = vector.multi_reduction <maximumf>, %57, %cst_23 [2] : vector<2x8x8xf32> to vector<2x8xf32>
    %59 = vector.shape_cast %58 : vector<2x8xf32> to vector<2x8x1xf32>
    %60 = vector.broadcast %59 : vector<2x8x1xf32> to vector<2x8x8xf32>
    %61 = arith.subf %57, %60 : vector<2x8x8xf32>
    %62 = math.exp %61 : vector<2x8x8xf32>
    %cst_24 = arith.constant dense<0.000000e+00> : vector<2x8xf32>
    %63 = vector.multi_reduction <add>, %62, %cst_24 [2] : vector<2x8x8xf32> to vector<2x8xf32>
    %64 = vector.shape_cast %63 : vector<2x8xf32> to vector<2x8x1xf32>
    %65 = tpu.reciprocal %64 {approx = true} : vector<2x8x1xf32> -> vector<2x8x1xf32>
    %66 = vector.broadcast %65 : vector<2x8x1xf32> to vector<2x8x8xf32>
    %67 = arith.mulf %62, %66 : vector<2x8x8xf32>
    %68 = vector.extract_strided_slice %21 {offsets = [0, 0, 16], sizes = [2, 8, 8], strides = [1, 1, 1]} : vector<2x8x32xf32> to vector<2x8x8xf32>
    "tpu.trace_start"() <{level = 10 : i32, message = "bqk,bkd->bqd"}> : () -> ()
    %cst_25 = arith.constant dense<0.000000e+00> : vector<2x8x8xf32>
    %69 = tpu.matmul %67, %68, %cst_25 {dimension_numbers = #tpu.dot_dimension_numbers<[2], [1], [1], [2], [0, 0, 0, 1, 1, 2], [0], [0]>} : vector<2x8x8xf32>, vector<2x8x8xf32>, vector<2x8x8xf32> -> vector<2x8x8xf32>
    "tpu.trace_stop"() : () -> ()
    %70 = vector.extract_strided_slice %19 {offsets = [0, 0, 24], sizes = [2, 8, 8], strides = [1, 1, 1]} : vector<2x8x32xf32> to vector<2x8x8xf32>
    %71 = vector.extract_strided_slice %20 {offsets = [0, 0, 24], sizes = [2, 8, 8], strides = [1, 1, 1]} : vector<2x8x32xf32> to vector<2x8x8xf32>
    "tpu.trace_start"() <{level = 10 : i32, message = "bqd,bkd->bqk"}> : () -> ()
    %cst_26 = arith.constant dense<0.000000e+00> : vector<2x8x8xf32>
    %72 = tpu.matmul %70, %71, %cst_26 {dimension_numbers = #tpu.dot_dimension_numbers<[2], [2], [1], [1], [0, 0, 0, 1, 1, 1], [0], [0]>} : vector<2x8x8xf32>, vector<2x8x8xf32>, vector<2x8x8xf32> -> vector<2x8x8xf32>
    "tpu.trace_stop"() : () -> ()
    %73 = arith.addf %72, %2 : vector<2x8x8xf32>
    %cst_27 = arith.constant dense<0xFF800000> : vector<2x8xf32>
    %74 = vector.multi_reduction <maximumf>, %73, %cst_27 [2] : vector<2x8x8xf32> to vector<2x8xf32>
    %75 = vector.shape_cast %74 : vector<2x8xf32> to vector<2x8x1xf32>
    %76 = vector.broadcast %75 : vector<2x8x1xf32> to vector<2x8x8xf32>
    %77 = arith.subf %73, %76 : vector<2x8x8xf32>
    %78 = math.exp %77 : vector<2x8x8xf32>
    %cst_28 = arith.constant dense<0.000000e+00> : vector<2x8xf32>
    %79 = vector.multi_reduction <add>, %78, %cst_28 [2] : vector<2x8x8xf32> to vector<2x8xf32>
    %80 = vector.shape_cast %79 : vector<2x8xf32> to vector<2x8x1xf32>
    %81 = tpu.reciprocal %80 {approx = true} : vector<2x8x1xf32> -> vector<2x8x1xf32>
    %82 = vector.broadcast %81 : vector<2x8x1xf32> to vector<2x8x8xf32>
    %83 = arith.mulf %78, %82 : vector<2x8x8xf32>
    %84 = vector.extract_strided_slice %21 {offsets = [0, 0, 24], sizes = [2, 8, 8], strides = [1, 1, 1]} : vector<2x8x32xf32> to vector<2x8x8xf32>
    "tpu.trace_start"() <{level = 10 : i32, message = "bqk,bkd->bqd"}> : () -> ()
    %cst_29 = arith.constant dense<0.000000e+00> : vector<2x8x8xf32>
    %85 = tpu.matmul %83, %84, %cst_29 {dimension_numbers = #tpu.dot_dimension_numbers<[2], [1], [1], [2], [0, 0, 0, 1, 1, 2], [0], [0]>} : vector<2x8x8xf32>, vector<2x8x8xf32>, vector<2x8x8xf32> -> vector<2x8x8xf32>
    "tpu.trace_stop"() : () -> ()
    %86 = tpu.concatenate %37, %53, %69, %85 in 2 : vector<2x8x8xf32>, vector<2x8x8xf32>, vector<2x8x8xf32>, vector<2x8x8xf32> -> vector<2x8x32xf32>
    %87 = vector.shape_cast %86 : vector<2x8x32xf32> to vector<16x32xf32>
    %c32 = arith.constant 32 : index
    %c0_30 = arith.constant 0 : index
    %88 = vector.load %arg2[%c32, %c0_30] : memref<512x128xf32, #tpu.memory_space<vmem>>, vector<32x32xf32>
    %cst_31 = arith.constant dense<0.000000e+00> : vector<16x32xf32>
    %89 = tpu.matmul %87, %88, %cst_31 {dimension_numbers = #tpu.dot_dimension_numbers<[1], [0], [0], [1], [0, 0, 1, 1], [], []>} : vector<16x32xf32>, vector<32x32xf32>, vector<16x32xf32> -> vector<16x32xf32>
    %c481 = arith.constant 481 : index
    %c0_32 = arith.constant 0 : index
    %90 = vector.load %arg2[%c481, %c0_32] : memref<512x128xf32, #tpu.memory_space<vmem>>, vector<1x32xf32>
    %91 = vector.broadcast %90 : vector<1x32xf32> to vector<16x32xf32>
    %92 = arith.addf %89, %91 : vector<16x32xf32>
    %93 = arith.addf %92, %0 : vector<16x32xf32>
    %c482 = arith.constant 482 : index
    %c0_33 = arith.constant 0 : index
    %94 = vector.load %arg2[%c482, %c0_33] : memref<512x128xf32, #tpu.memory_space<vmem>>, vector<1x32xf32>
    %c483 = arith.constant 483 : index
    %c0_34 = arith.constant 0 : index
    %95 = vector.load %arg2[%c483, %c0_34] : memref<512x128xf32, #tpu.memory_space<vmem>>, vector<1x32xf32>
    %cst_35 = arith.constant dense<0.000000e+00> : vector<16xf32>
    %96 = vector.multi_reduction <add>, %93, %cst_35 [1] : vector<16x32xf32> to vector<16xf32>
    %97 = vector.shape_cast %96 : vector<16xf32> to vector<16x1xf32>
    %cst_36 = arith.constant 3.200000e+01 : f32
    %98 = vector.broadcast %cst_36 : f32 to vector<16x1xf32>
    %99 = arith.divf %97, %98 : vector<16x1xf32>
    %100 = vector.broadcast %99 : vector<16x1xf32> to vector<16x32xf32>
    %101 = arith.subf %93, %100 : vector<16x32xf32>
    %102 = arith.mulf %101, %101 : vector<16x32xf32>
    %cst_37 = arith.constant dense<0.000000e+00> : vector<16xf32>
    %103 = vector.multi_reduction <add>, %102, %cst_37 [1] : vector<16x32xf32> to vector<16xf32>
    %104 = vector.shape_cast %103 : vector<16xf32> to vector<16x1xf32>
    %cst_38 = arith.constant 3.200000e+01 : f32
    %105 = vector.broadcast %cst_38 : f32 to vector<16x1xf32>
    %106 = arith.divf %104, %105 : vector<16x1xf32>
    %107 = vector.broadcast %99 : vector<16x1xf32> to vector<16x32xf32>
    %108 = arith.subf %93, %107 : vector<16x32xf32>
    %cst_39 = arith.constant 9.99999974E-6 : f32
    %109 = vector.broadcast %cst_39 : f32 to vector<16x1xf32>
    %110 = arith.addf %106, %109 : vector<16x1xf32>
    %111 = math.rsqrt %110 : vector<16x1xf32>
    %112 = vector.broadcast %111 : vector<16x1xf32> to vector<16x32xf32>
    %113 = arith.mulf %108, %112 : vector<16x32xf32>
    %114 = vector.broadcast %94 : vector<1x32xf32> to vector<16x32xf32>
    %115 = arith.mulf %113, %114 : vector<16x32xf32>
    %116 = vector.broadcast %95 : vector<1x32xf32> to vector<16x32xf32>
    %117 = arith.addf %115, %116 : vector<16x32xf32>
    %c64 = arith.constant 64 : index
    %c0_40 = arith.constant 0 : index
    %118 = vector.load %arg2[%c64, %c0_40] : memref<512x128xf32, #tpu.memory_space<vmem>>, vector<32x32xf32>
    %cst_41 = arith.constant dense<0.000000e+00> : vector<16x32xf32>
    %119 = tpu.matmul %117, %118, %cst_41 {dimension_numbers = #tpu.dot_dimension_numbers<[1], [0], [0], [1], [0, 0, 1, 1], [], []>} : vector<16x32xf32>, vector<32x32xf32>, vector<16x32xf32> -> vector<16x32xf32>
    %c484 = arith.constant 484 : index
    %c0_42 = arith.constant 0 : index
    %120 = vector.load %arg2[%c484, %c0_42] : memref<512x128xf32, #tpu.memory_space<vmem>>, vector<1x32xf32>
    %121 = vector.broadcast %120 : vector<1x32xf32> to vector<16x32xf32>
    %122 = arith.addf %119, %121 : vector<16x32xf32>
    %123 = vector.extract_strided_slice %8 {offsets = [0, 0], sizes = [32, 32], strides = [1, 1]} : vector<32x128xf32> to vector<32x32xf32>
    %124 = vector.extract_strided_slice %8 {offsets = [0, 32], sizes = [32, 32], strides = [1, 1]} : vector<32x128xf32> to vector<32x32xf32>
    %cst_43 = arith.constant 0.353553385 : f32
    %125 = vector.broadcast %cst_43 : f32 to vector<16x32xf32>
    %126 = arith.mulf %122, %125 : vector<16x32xf32>
    %127 = vector.shape_cast %126 : vector<16x32xf32> to vector<2x8x32xf32>
    %128 = vector.shape_cast %123 : vector<32x32xf32> to vector<2x16x32xf32>
    %129 = vector.shape_cast %124 : vector<32x32xf32> to vector<2x16x32xf32>
    %130 = vector.extract_strided_slice %127 {offsets = [0, 0, 0], sizes = [2, 8, 8], strides = [1, 1, 1]} : vector<2x8x32xf32> to vector<2x8x8xf32>
    %131 = vector.extract_strided_slice %128 {offsets = [0, 0, 0], sizes = [2, 16, 8], strides = [1, 1, 1]} : vector<2x16x32xf32> to vector<2x16x8xf32>
    "tpu.trace_start"() <{level = 10 : i32, message = "bqd,bkd->bqk"}> : () -> ()
    %cst_44 = arith.constant dense<0.000000e+00> : vector<2x8x16xf32>
    %132 = tpu.matmul %130, %131, %cst_44 {dimension_numbers = #tpu.dot_dimension_numbers<[2], [2], [1], [1], [0, 0, 0, 1, 1, 1], [0], [0]>} : vector<2x8x8xf32>, vector<2x16x8xf32>, vector<2x8x16xf32> -> vector<2x8x16xf32>
    "tpu.trace_stop"() : () -> ()
    %133 = arith.addf %132, %3 : vector<2x8x16xf32>
    %cst_45 = arith.constant dense<0xFF800000> : vector<2x8xf32>
    %134 = vector.multi_reduction <maximumf>, %133, %cst_45 [2] : vector<2x8x16xf32> to vector<2x8xf32>
    %135 = vector.shape_cast %134 : vector<2x8xf32> to vector<2x8x1xf32>
    %136 = vector.broadcast %135 : vector<2x8x1xf32> to vector<2x8x16xf32>
    %137 = arith.subf %133, %136 : vector<2x8x16xf32>
    %138 = math.exp %137 : vector<2x8x16xf32>
    %cst_46 = arith.constant dense<0.000000e+00> : vector<2x8xf32>
    %139 = vector.multi_reduction <add>, %138, %cst_46 [2] : vector<2x8x16xf32> to vector<2x8xf32>
    %140 = vector.shape_cast %139 : vector<2x8xf32> to vector<2x8x1xf32>
    %141 = tpu.reciprocal %140 {approx = true} : vector<2x8x1xf32> -> vector<2x8x1xf32>
    %142 = vector.broadcast %141 : vector<2x8x1xf32> to vector<2x8x16xf32>
    %143 = arith.mulf %138, %142 : vector<2x8x16xf32>
    %144 = vector.extract_strided_slice %129 {offsets = [0, 0, 0], sizes = [2, 16, 8], strides = [1, 1, 1]} : vector<2x16x32xf32> to vector<2x16x8xf32>
    "tpu.trace_start"() <{level = 10 : i32, message = "bqk,bkd->bqd"}> : () -> ()
    %cst_47 = arith.constant dense<0.000000e+00> : vector<2x8x8xf32>
    %145 = tpu.matmul %143, %144, %cst_47 {dimension_numbers = #tpu.dot_dimension_numbers<[2], [1], [1], [2], [0, 0, 0, 1, 1, 2], [0], [0]>} : vector<2x8x16xf32>, vector<2x16x8xf32>, vector<2x8x8xf32> -> vector<2x8x8xf32>
    "tpu.trace_stop"() : () -> ()
    %146 = vector.extract_strided_slice %127 {offsets = [0, 0, 8], sizes = [2, 8, 8], strides = [1, 1, 1]} : vector<2x8x32xf32> to vector<2x8x8xf32>
    %147 = vector.extract_strided_slice %128 {offsets = [0, 0, 8], sizes = [2, 16, 8], strides = [1, 1, 1]} : vector<2x16x32xf32> to vector<2x16x8xf32>
    "tpu.trace_start"() <{level = 10 : i32, message = "bqd,bkd->bqk"}> : () -> ()
    %cst_48 = arith.constant dense<0.000000e+00> : vector<2x8x16xf32>
    %148 = tpu.matmul %146, %147, %cst_48 {dimension_numbers = #tpu.dot_dimension_numbers<[2], [2], [1], [1], [0, 0, 0, 1, 1, 1], [0], [0]>} : vector<2x8x8xf32>, vector<2x16x8xf32>, vector<2x8x16xf32> -> vector<2x8x16xf32>
    "tpu.trace_stop"() : () -> ()
    %149 = arith.addf %148, %3 : vector<2x8x16xf32>
    %cst_49 = arith.constant dense<0xFF800000> : vector<2x8xf32>
    %150 = vector.multi_reduction <maximumf>, %149, %cst_49 [2] : vector<2x8x16xf32> to vector<2x8xf32>
    %151 = vector.shape_cast %150 : vector<2x8xf32> to vector<2x8x1xf32>
    %152 = vector.broadcast %151 : vector<2x8x1xf32> to vector<2x8x16xf32>
    %153 = arith.subf %149, %152 : vector<2x8x16xf32>
    %154 = math.exp %153 : vector<2x8x16xf32>
    %cst_50 = arith.constant dense<0.000000e+00> : vector<2x8xf32>
    %155 = vector.multi_reduction <add>, %154, %cst_50 [2] : vector<2x8x16xf32> to vector<2x8xf32>
    %156 = vector.shape_cast %155 : vector<2x8xf32> to vector<2x8x1xf32>
    %157 = tpu.reciprocal %156 {approx = true} : vector<2x8x1xf32> -> vector<2x8x1xf32>
    %158 = vector.broadcast %157 : vector<2x8x1xf32> to vector<2x8x16xf32>
    %159 = arith.mulf %154, %158 : vector<2x8x16xf32>
    %160 = vector.extract_strided_slice %129 {offsets = [0, 0, 8], sizes = [2, 16, 8], strides = [1, 1, 1]} : vector<2x16x32xf32> to vector<2x16x8xf32>
    "tpu.trace_start"() <{level = 10 : i32, message = "bqk,bkd->bqd"}> : () -> ()
    %cst_51 = arith.constant dense<0.000000e+00> : vector<2x8x8xf32>
    %161 = tpu.matmul %159, %160, %cst_51 {dimension_numbers = #tpu.dot_dimension_numbers<[2], [1], [1], [2], [0, 0, 0, 1, 1, 2], [0], [0]>} : vector<2x8x16xf32>, vector<2x16x8xf32>, vector<2x8x8xf32> -> vector<2x8x8xf32>
    "tpu.trace_stop"() : () -> ()
    %162 = vector.extract_strided_slice %127 {offsets = [0, 0, 16], sizes = [2, 8, 8], strides = [1, 1, 1]} : vector<2x8x32xf32> to vector<2x8x8xf32>
    %163 = vector.extract_strided_slice %128 {offsets = [0, 0, 16], sizes = [2, 16, 8], strides = [1, 1, 1]} : vector<2x16x32xf32> to vector<2x16x8xf32>
    "tpu.trace_start"() <{level = 10 : i32, message = "bqd,bkd->bqk"}> : () -> ()
    %cst_52 = arith.constant dense<0.000000e+00> : vector<2x8x16xf32>
    %164 = tpu.matmul %162, %163, %cst_52 {dimension_numbers = #tpu.dot_dimension_numbers<[2], [2], [1], [1], [0, 0, 0, 1, 1, 1], [0], [0]>} : vector<2x8x8xf32>, vector<2x16x8xf32>, vector<2x8x16xf32> -> vector<2x8x16xf32>
    "tpu.trace_stop"() : () -> ()
    %165 = arith.addf %164, %3 : vector<2x8x16xf32>
    %cst_53 = arith.constant dense<0xFF800000> : vector<2x8xf32>
    %166 = vector.multi_reduction <maximumf>, %165, %cst_53 [2] : vector<2x8x16xf32> to vector<2x8xf32>
    %167 = vector.shape_cast %166 : vector<2x8xf32> to vector<2x8x1xf32>
    %168 = vector.broadcast %167 : vector<2x8x1xf32> to vector<2x8x16xf32>
    %169 = arith.subf %165, %168 : vector<2x8x16xf32>
    %170 = math.exp %169 : vector<2x8x16xf32>
    %cst_54 = arith.constant dense<0.000000e+00> : vector<2x8xf32>
    %171 = vector.multi_reduction <add>, %170, %cst_54 [2] : vector<2x8x16xf32> to vector<2x8xf32>
    %172 = vector.shape_cast %171 : vector<2x8xf32> to vector<2x8x1xf32>
    %173 = tpu.reciprocal %172 {approx = true} : vector<2x8x1xf32> -> vector<2x8x1xf32>
    %174 = vector.broadcast %173 : vector<2x8x1xf32> to vector<2x8x16xf32>
    %175 = arith.mulf %170, %174 : vector<2x8x16xf32>
    %176 = vector.extract_strided_slice %129 {offsets = [0, 0, 16], sizes = [2, 16, 8], strides = [1, 1, 1]} : vector<2x16x32xf32> to vector<2x16x8xf32>
    "tpu.trace_start"() <{level = 10 : i32, message = "bqk,bkd->bqd"}> : () -> ()
    %cst_55 = arith.constant dense<0.000000e+00> : vector<2x8x8xf32>
    %177 = tpu.matmul %175, %176, %cst_55 {dimension_numbers = #tpu.dot_dimension_numbers<[2], [1], [1], [2], [0, 0, 0, 1, 1, 2], [0], [0]>} : vector<2x8x16xf32>, vector<2x16x8xf32>, vector<2x8x8xf32> -> vector<2x8x8xf32>
    "tpu.trace_stop"() : () -> ()
    %178 = vector.extract_strided_slice %127 {offsets = [0, 0, 24], sizes = [2, 8, 8], strides = [1, 1, 1]} : vector<2x8x32xf32> to vector<2x8x8xf32>
    %179 = vector.extract_strided_slice %128 {offsets = [0, 0, 24], sizes = [2, 16, 8], strides = [1, 1, 1]} : vector<2x16x32xf32> to vector<2x16x8xf32>
    "tpu.trace_start"() <{level = 10 : i32, message = "bqd,bkd->bqk"}> : () -> ()
    %cst_56 = arith.constant dense<0.000000e+00> : vector<2x8x16xf32>
    %180 = tpu.matmul %178, %179, %cst_56 {dimension_numbers = #tpu.dot_dimension_numbers<[2], [2], [1], [1], [0, 0, 0, 1, 1, 1], [0], [0]>} : vector<2x8x8xf32>, vector<2x16x8xf32>, vector<2x8x16xf32> -> vector<2x8x16xf32>
    "tpu.trace_stop"() : () -> ()
    %181 = arith.addf %180, %3 : vector<2x8x16xf32>
    %cst_57 = arith.constant dense<0xFF800000> : vector<2x8xf32>
    %182 = vector.multi_reduction <maximumf>, %181, %cst_57 [2] : vector<2x8x16xf32> to vector<2x8xf32>
    %183 = vector.shape_cast %182 : vector<2x8xf32> to vector<2x8x1xf32>
    %184 = vector.broadcast %183 : vector<2x8x1xf32> to vector<2x8x16xf32>
    %185 = arith.subf %181, %184 : vector<2x8x16xf32>
    %186 = math.exp %185 : vector<2x8x16xf32>
    %cst_58 = arith.constant dense<0.000000e+00> : vector<2x8xf32>
    %187 = vector.multi_reduction <add>, %186, %cst_58 [2] : vector<2x8x16xf32> to vector<2x8xf32>
    %188 = vector.shape_cast %187 : vector<2x8xf32> to vector<2x8x1xf32>
    %189 = tpu.reciprocal %188 {approx = true} : vector<2x8x1xf32> -> vector<2x8x1xf32>
    %190 = vector.broadcast %189 : vector<2x8x1xf32> to vector<2x8x16xf32>
    %191 = arith.mulf %186, %190 : vector<2x8x16xf32>
    %192 = vector.extract_strided_slice %129 {offsets = [0, 0, 24], sizes = [2, 16, 8], strides = [1, 1, 1]} : vector<2x16x32xf32> to vector<2x16x8xf32>
    "tpu.trace_start"() <{level = 10 : i32, message = "bqk,bkd->bqd"}> : () -> ()
    %cst_59 = arith.constant dense<0.000000e+00> : vector<2x8x8xf32>
    %193 = tpu.matmul %191, %192, %cst_59 {dimension_numbers = #tpu.dot_dimension_numbers<[2], [1], [1], [2], [0, 0, 0, 1, 1, 2], [0], [0]>} : vector<2x8x16xf32>, vector<2x16x8xf32>, vector<2x8x8xf32> -> vector<2x8x8xf32>
    "tpu.trace_stop"() : () -> ()
    %194 = tpu.concatenate %145, %161, %177, %193 in 2 : vector<2x8x8xf32>, vector<2x8x8xf32>, vector<2x8x8xf32>, vector<2x8x8xf32> -> vector<2x8x32xf32>
    %195 = vector.shape_cast %194 : vector<2x8x32xf32> to vector<16x32xf32>
    %c96 = arith.constant 96 : index
    %c0_60 = arith.constant 0 : index
    %196 = vector.load %arg2[%c96, %c0_60] : memref<512x128xf32, #tpu.memory_space<vmem>>, vector<32x32xf32>
    %cst_61 = arith.constant dense<0.000000e+00> : vector<16x32xf32>
    %197 = tpu.matmul %195, %196, %cst_61 {dimension_numbers = #tpu.dot_dimension_numbers<[1], [0], [0], [1], [0, 0, 1, 1], [], []>} : vector<16x32xf32>, vector<32x32xf32>, vector<16x32xf32> -> vector<16x32xf32>
    %c485 = arith.constant 485 : index
    %c0_62 = arith.constant 0 : index
    %198 = vector.load %arg2[%c485, %c0_62] : memref<512x128xf32, #tpu.memory_space<vmem>>, vector<1x32xf32>
    %199 = vector.broadcast %198 : vector<1x32xf32> to vector<16x32xf32>
    %200 = arith.addf %197, %199 : vector<16x32xf32>
    %201 = arith.addf %200, %117 : vector<16x32xf32>
    %c486 = arith.constant 486 : index
    %c0_63 = arith.constant 0 : index
    %202 = vector.load %arg2[%c486, %c0_63] : memref<512x128xf32, #tpu.memory_space<vmem>>, vector<1x32xf32>
    %c487 = arith.constant 487 : index
    %c0_64 = arith.constant 0 : index
    %203 = vector.load %arg2[%c487, %c0_64] : memref<512x128xf32, #tpu.memory_space<vmem>>, vector<1x32xf32>
    %cst_65 = arith.constant dense<0.000000e+00> : vector<16xf32>
    %204 = vector.multi_reduction <add>, %201, %cst_65 [1] : vector<16x32xf32> to vector<16xf32>
    %205 = vector.shape_cast %204 : vector<16xf32> to vector<16x1xf32>
    %cst_66 = arith.constant 3.200000e+01 : f32
    %206 = vector.broadcast %cst_66 : f32 to vector<16x1xf32>
    %207 = arith.divf %205, %206 : vector<16x1xf32>
    %208 = vector.broadcast %207 : vector<16x1xf32> to vector<16x32xf32>
    %209 = arith.subf %201, %208 : vector<16x32xf32>
    %210 = arith.mulf %209, %209 : vector<16x32xf32>
    %cst_67 = arith.constant dense<0.000000e+00> : vector<16xf32>
    %211 = vector.multi_reduction <add>, %210, %cst_67 [1] : vector<16x32xf32> to vector<16xf32>
    %212 = vector.shape_cast %211 : vector<16xf32> to vector<16x1xf32>
    %cst_68 = arith.constant 3.200000e+01 : f32
    %213 = vector.broadcast %cst_68 : f32 to vector<16x1xf32>
    %214 = arith.divf %212, %213 : vector<16x1xf32>
    %215 = vector.broadcast %207 : vector<16x1xf32> to vector<16x32xf32>
    %216 = arith.subf %201, %215 : vector<16x32xf32>
    %cst_69 = arith.constant 9.99999974E-6 : f32
    %217 = vector.broadcast %cst_69 : f32 to vector<16x1xf32>
    %218 = arith.addf %214, %217 : vector<16x1xf32>
    %219 = math.rsqrt %218 : vector<16x1xf32>
    %220 = vector.broadcast %219 : vector<16x1xf32> to vector<16x32xf32>
    %221 = arith.mulf %216, %220 : vector<16x32xf32>
    %222 = vector.broadcast %202 : vector<1x32xf32> to vector<16x32xf32>
    %223 = arith.mulf %221, %222 : vector<16x32xf32>
    %224 = vector.broadcast %203 : vector<1x32xf32> to vector<16x32xf32>
    %225 = arith.addf %223, %224 : vector<16x32xf32>
    %c128 = arith.constant 128 : index
    %c0_70 = arith.constant 0 : index
    %226 = vector.load %arg2[%c128, %c0_70] : memref<512x128xf32, #tpu.memory_space<vmem>>, vector<32x64xf32>
    %cst_71 = arith.constant dense<0.000000e+00> : vector<16x64xf32>
    %227 = tpu.matmul %225, %226, %cst_71 {dimension_numbers = #tpu.dot_dimension_numbers<[1], [0], [0], [1], [0, 0, 1, 1], [], []>} : vector<16x32xf32>, vector<32x64xf32>, vector<16x64xf32> -> vector<16x64xf32>
    %c488 = arith.constant 488 : index
    %c0_72 = arith.constant 0 : index
    %228 = vector.load %arg2[%c488, %c0_72] : memref<512x128xf32, #tpu.memory_space<vmem>>, vector<1x64xf32>
    %229 = vector.broadcast %228 : vector<1x64xf32> to vector<16x64xf32>
    %230 = arith.addf %227, %229 : vector<16x64xf32>
    %cst_73 = arith.constant 0.000000e+00 : f32
    %231 = vector.broadcast %cst_73 : f32 to vector<16x64xf32>
    %232 = arith.maximumf %230, %231 : vector<16x64xf32>
    %c160 = arith.constant 160 : index
    %c0_74 = arith.constant 0 : index
    %233 = vector.load %arg2[%c160, %c0_74] : memref<512x128xf32, #tpu.memory_space<vmem>>, vector<64x32xf32>
    %cst_75 = arith.constant dense<0.000000e+00> : vector<16x32xf32>
    %234 = tpu.matmul %232, %233, %cst_75 {dimension_numbers = #tpu.dot_dimension_numbers<[1], [0], [0], [1], [0, 0, 1, 1], [], []>} : vector<16x64xf32>, vector<64x32xf32>, vector<16x32xf32> -> vector<16x32xf32>
    %c489 = arith.constant 489 : index
    %c0_76 = arith.constant 0 : index
    %235 = vector.load %arg2[%c489, %c0_76] : memref<512x128xf32, #tpu.memory_space<vmem>>, vector<1x32xf32>
    %236 = vector.broadcast %235 : vector<1x32xf32> to vector<16x32xf32>
    %237 = arith.addf %234, %236 : vector<16x32xf32>
    %238 = arith.addf %237, %225 : vector<16x32xf32>
    %c490 = arith.constant 490 : index
    %c0_77 = arith.constant 0 : index
    %239 = vector.load %arg2[%c490, %c0_77] : memref<512x128xf32, #tpu.memory_space<vmem>>, vector<1x32xf32>
    %c491 = arith.constant 491 : index
    %c0_78 = arith.constant 0 : index
    %240 = vector.load %arg2[%c491, %c0_78] : memref<512x128xf32, #tpu.memory_space<vmem>>, vector<1x32xf32>
    %cst_79 = arith.constant dense<0.000000e+00> : vector<16xf32>
    %241 = vector.multi_reduction <add>, %238, %cst_79 [1] : vector<16x32xf32> to vector<16xf32>
    %242 = vector.shape_cast %241 : vector<16xf32> to vector<16x1xf32>
    %cst_80 = arith.constant 3.200000e+01 : f32
    %243 = vector.broadcast %cst_80 : f32 to vector<16x1xf32>
    %244 = arith.divf %242, %243 : vector<16x1xf32>
    %245 = vector.broadcast %244 : vector<16x1xf32> to vector<16x32xf32>
    %246 = arith.subf %238, %245 : vector<16x32xf32>
    %247 = arith.mulf %246, %246 : vector<16x32xf32>
    %cst_81 = arith.constant dense<0.000000e+00> : vector<16xf32>
    %248 = vector.multi_reduction <add>, %247, %cst_81 [1] : vector<16x32xf32> to vector<16xf32>
    %249 = vector.shape_cast %248 : vector<16xf32> to vector<16x1xf32>
    %cst_82 = arith.constant 3.200000e+01 : f32
    %250 = vector.broadcast %cst_82 : f32 to vector<16x1xf32>
    %251 = arith.divf %249, %250 : vector<16x1xf32>
    %252 = vector.broadcast %244 : vector<16x1xf32> to vector<16x32xf32>
    %253 = arith.subf %238, %252 : vector<16x32xf32>
    %cst_83 = arith.constant 9.99999974E-6 : f32
    %254 = vector.broadcast %cst_83 : f32 to vector<16x1xf32>
    %255 = arith.addf %251, %254 : vector<16x1xf32>
    %256 = math.rsqrt %255 : vector<16x1xf32>
    %257 = vector.broadcast %256 : vector<16x1xf32> to vector<16x32xf32>
    %258 = arith.mulf %253, %257 : vector<16x32xf32>
    %259 = vector.broadcast %239 : vector<1x32xf32> to vector<16x32xf32>
    %260 = arith.mulf %258, %259 : vector<16x32xf32>
    %261 = vector.broadcast %240 : vector<1x32xf32> to vector<16x32xf32>
    %262 = arith.addf %260, %261 : vector<16x32xf32>
    %c224 = arith.constant 224 : index
    %c0_84 = arith.constant 0 : index
    %263 = vector.load %arg2[%c224, %c0_84] : memref<512x128xf32, #tpu.memory_space<vmem>>, vector<32x128xf32>
    %cst_85 = arith.constant dense<0.000000e+00> : vector<16x128xf32>
    %264 = tpu.matmul %262, %263, %cst_85 {dimension_numbers = #tpu.dot_dimension_numbers<[1], [0], [0], [1], [0, 0, 1, 1], [], []>} : vector<16x32xf32>, vector<32x128xf32>, vector<16x128xf32> -> vector<16x128xf32>
    %c492 = arith.constant 492 : index
    %c0_86 = arith.constant 0 : index
    %265 = vector.load %arg2[%c492, %c0_86] : memref<512x128xf32, #tpu.memory_space<vmem>>, vector<1x128xf32>
    %266 = vector.broadcast %265 : vector<1x128xf32> to vector<16x128xf32>
    %267 = arith.addf %264, %266 : vector<16x128xf32>
    %268 = vector.extract_strided_slice %267 {offsets = [0, 0], sizes = [16, 32], strides = [1, 1]} : vector<16x128xf32> to vector<16x32xf32>
    %269 = vector.extract_strided_slice %267 {offsets = [0, 32], sizes = [16, 32], strides = [1, 1]} : vector<16x128xf32> to vector<16x32xf32>
    %270 = vector.extract_strided_slice %267 {offsets = [0, 64], sizes = [16, 32], strides = [1, 1]} : vector<16x128xf32> to vector<16x32xf32>
    %cst_87 = arith.constant 0.353553385 : f32
    %271 = vector.broadcast %cst_87 : f32 to vector<16x32xf32>
    %272 = arith.mulf %268, %271 : vector<16x32xf32>
    %273 = vector.shape_cast %272 : vector<16x32xf32> to vector<2x8x32xf32>
    %274 = vector.shape_cast %269 : vector<16x32xf32> to vector<2x8x32xf32>
    %275 = vector.shape_cast %270 : vector<16x32xf32> to vector<2x8x32xf32>
    %276 = vector.extract_strided_slice %273 {offsets = [0, 0, 0], sizes = [2, 8, 8], strides = [1, 1, 1]} : vector<2x8x32xf32> to vector<2x8x8xf32>
    %277 = vector.extract_strided_slice %274 {offsets = [0, 0, 0], sizes = [2, 8, 8], strides = [1, 1, 1]} : vector<2x8x32xf32> to vector<2x8x8xf32>
    "tpu.trace_start"() <{level = 10 : i32, message = "bqd,bkd->bqk"}> : () -> ()
    %cst_88 = arith.constant dense<0.000000e+00> : vector<2x8x8xf32>
    %278 = tpu.matmul %276, %277, %cst_88 {dimension_numbers = #tpu.dot_dimension_numbers<[2], [2], [1], [1], [0, 0, 0, 1, 1, 1], [0], [0]>} : vector<2x8x8xf32>, vector<2x8x8xf32>, vector<2x8x8xf32> -> vector<2x8x8xf32>
    "tpu.trace_stop"() : () -> ()
    %279 = arith.addf %278, %2 : vector<2x8x8xf32>
    %cst_89 = arith.constant dense<0xFF800000> : vector<2x8xf32>
    %280 = vector.multi_reduction <maximumf>, %279, %cst_89 [2] : vector<2x8x8xf32> to vector<2x8xf32>
    %281 = vector.shape_cast %280 : vector<2x8xf32> to vector<2x8x1xf32>
    %282 = vector.broadcast %281 : vector<2x8x1xf32> to vector<2x8x8xf32>
    %283 = arith.subf %279, %282 : vector<2x8x8xf32>
    %284 = math.exp %283 : vector<2x8x8xf32>
    %cst_90 = arith.constant dense<0.000000e+00> : vector<2x8xf32>
    %285 = vector.multi_reduction <add>, %284, %cst_90 [2] : vector<2x8x8xf32> to vector<2x8xf32>
    %286 = vector.shape_cast %285 : vector<2x8xf32> to vector<2x8x1xf32>
    %287 = tpu.reciprocal %286 {approx = true} : vector<2x8x1xf32> -> vector<2x8x1xf32>
    %288 = vector.broadcast %287 : vector<2x8x1xf32> to vector<2x8x8xf32>
    %289 = arith.mulf %284, %288 : vector<2x8x8xf32>
    %290 = vector.extract_strided_slice %275 {offsets = [0, 0, 0], sizes = [2, 8, 8], strides = [1, 1, 1]} : vector<2x8x32xf32> to vector<2x8x8xf32>
    "tpu.trace_start"() <{level = 10 : i32, message = "bqk,bkd->bqd"}> : () -> ()
    %cst_91 = arith.constant dense<0.000000e+00> : vector<2x8x8xf32>
    %291 = tpu.matmul %289, %290, %cst_91 {dimension_numbers = #tpu.dot_dimension_numbers<[2], [1], [1], [2], [0, 0, 0, 1, 1, 2], [0], [0]>} : vector<2x8x8xf32>, vector<2x8x8xf32>, vector<2x8x8xf32> -> vector<2x8x8xf32>
    "tpu.trace_stop"() : () -> ()
    %292 = vector.extract_strided_slice %273 {offsets = [0, 0, 8], sizes = [2, 8, 8], strides = [1, 1, 1]} : vector<2x8x32xf32> to vector<2x8x8xf32>
    %293 = vector.extract_strided_slice %274 {offsets = [0, 0, 8], sizes = [2, 8, 8], strides = [1, 1, 1]} : vector<2x8x32xf32> to vector<2x8x8xf32>
    "tpu.trace_start"() <{level = 10 : i32, message = "bqd,bkd->bqk"}> : () -> ()
    %cst_92 = arith.constant dense<0.000000e+00> : vector<2x8x8xf32>
    %294 = tpu.matmul %292, %293, %cst_92 {dimension_numbers = #tpu.dot_dimension_numbers<[2], [2], [1], [1], [0, 0, 0, 1, 1, 1], [0], [0]>} : vector<2x8x8xf32>, vector<2x8x8xf32>, vector<2x8x8xf32> -> vector<2x8x8xf32>
    "tpu.trace_stop"() : () -> ()
    %295 = arith.addf %294, %2 : vector<2x8x8xf32>
    %cst_93 = arith.constant dense<0xFF800000> : vector<2x8xf32>
    %296 = vector.multi_reduction <maximumf>, %295, %cst_93 [2] : vector<2x8x8xf32> to vector<2x8xf32>
    %297 = vector.shape_cast %296 : vector<2x8xf32> to vector<2x8x1xf32>
    %298 = vector.broadcast %297 : vector<2x8x1xf32> to vector<2x8x8xf32>
    %299 = arith.subf %295, %298 : vector<2x8x8xf32>
    %300 = math.exp %299 : vector<2x8x8xf32>
    %cst_94 = arith.constant dense<0.000000e+00> : vector<2x8xf32>
    %301 = vector.multi_reduction <add>, %300, %cst_94 [2] : vector<2x8x8xf32> to vector<2x8xf32>
    %302 = vector.shape_cast %301 : vector<2x8xf32> to vector<2x8x1xf32>
    %303 = tpu.reciprocal %302 {approx = true} : vector<2x8x1xf32> -> vector<2x8x1xf32>
    %304 = vector.broadcast %303 : vector<2x8x1xf32> to vector<2x8x8xf32>
    %305 = arith.mulf %300, %304 : vector<2x8x8xf32>
    %306 = vector.extract_strided_slice %275 {offsets = [0, 0, 8], sizes = [2, 8, 8], strides = [1, 1, 1]} : vector<2x8x32xf32> to vector<2x8x8xf32>
    "tpu.trace_start"() <{level = 10 : i32, message = "bqk,bkd->bqd"}> : () -> ()
    %cst_95 = arith.constant dense<0.000000e+00> : vector<2x8x8xf32>
    %307 = tpu.matmul %305, %306, %cst_95 {dimension_numbers = #tpu.dot_dimension_numbers<[2], [1], [1], [2], [0, 0, 0, 1, 1, 2], [0], [0]>} : vector<2x8x8xf32>, vector<2x8x8xf32>, vector<2x8x8xf32> -> vector<2x8x8xf32>
    "tpu.trace_stop"() : () -> ()
    %308 = vector.extract_strided_slice %273 {offsets = [0, 0, 16], sizes = [2, 8, 8], strides = [1, 1, 1]} : vector<2x8x32xf32> to vector<2x8x8xf32>
    %309 = vector.extract_strided_slice %274 {offsets = [0, 0, 16], sizes = [2, 8, 8], strides = [1, 1, 1]} : vector<2x8x32xf32> to vector<2x8x8xf32>
    "tpu.trace_start"() <{level = 10 : i32, message = "bqd,bkd->bqk"}> : () -> ()
    %cst_96 = arith.constant dense<0.000000e+00> : vector<2x8x8xf32>
    %310 = tpu.matmul %308, %309, %cst_96 {dimension_numbers = #tpu.dot_dimension_numbers<[2], [2], [1], [1], [0, 0, 0, 1, 1, 1], [0], [0]>} : vector<2x8x8xf32>, vector<2x8x8xf32>, vector<2x8x8xf32> -> vector<2x8x8xf32>
    "tpu.trace_stop"() : () -> ()
    %311 = arith.addf %310, %2 : vector<2x8x8xf32>
    %cst_97 = arith.constant dense<0xFF800000> : vector<2x8xf32>
    %312 = vector.multi_reduction <maximumf>, %311, %cst_97 [2] : vector<2x8x8xf32> to vector<2x8xf32>
    %313 = vector.shape_cast %312 : vector<2x8xf32> to vector<2x8x1xf32>
    %314 = vector.broadcast %313 : vector<2x8x1xf32> to vector<2x8x8xf32>
    %315 = arith.subf %311, %314 : vector<2x8x8xf32>
    %316 = math.exp %315 : vector<2x8x8xf32>
    %cst_98 = arith.constant dense<0.000000e+00> : vector<2x8xf32>
    %317 = vector.multi_reduction <add>, %316, %cst_98 [2] : vector<2x8x8xf32> to vector<2x8xf32>
    %318 = vector.shape_cast %317 : vector<2x8xf32> to vector<2x8x1xf32>
    %319 = tpu.reciprocal %318 {approx = true} : vector<2x8x1xf32> -> vector<2x8x1xf32>
    %320 = vector.broadcast %319 : vector<2x8x1xf32> to vector<2x8x8xf32>
    %321 = arith.mulf %316, %320 : vector<2x8x8xf32>
    %322 = vector.extract_strided_slice %275 {offsets = [0, 0, 16], sizes = [2, 8, 8], strides = [1, 1, 1]} : vector<2x8x32xf32> to vector<2x8x8xf32>
    "tpu.trace_start"() <{level = 10 : i32, message = "bqk,bkd->bqd"}> : () -> ()
    %cst_99 = arith.constant dense<0.000000e+00> : vector<2x8x8xf32>
    %323 = tpu.matmul %321, %322, %cst_99 {dimension_numbers = #tpu.dot_dimension_numbers<[2], [1], [1], [2], [0, 0, 0, 1, 1, 2], [0], [0]>} : vector<2x8x8xf32>, vector<2x8x8xf32>, vector<2x8x8xf32> -> vector<2x8x8xf32>
    "tpu.trace_stop"() : () -> ()
    %324 = vector.extract_strided_slice %273 {offsets = [0, 0, 24], sizes = [2, 8, 8], strides = [1, 1, 1]} : vector<2x8x32xf32> to vector<2x8x8xf32>
    %325 = vector.extract_strided_slice %274 {offsets = [0, 0, 24], sizes = [2, 8, 8], strides = [1, 1, 1]} : vector<2x8x32xf32> to vector<2x8x8xf32>
    "tpu.trace_start"() <{level = 10 : i32, message = "bqd,bkd->bqk"}> : () -> ()
    %cst_100 = arith.constant dense<0.000000e+00> : vector<2x8x8xf32>
    %326 = tpu.matmul %324, %325, %cst_100 {dimension_numbers = #tpu.dot_dimension_numbers<[2], [2], [1], [1], [0, 0, 0, 1, 1, 1], [0], [0]>} : vector<2x8x8xf32>, vector<2x8x8xf32>, vector<2x8x8xf32> -> vector<2x8x8xf32>
    "tpu.trace_stop"() : () -> ()
    %327 = arith.addf %326, %2 : vector<2x8x8xf32>
    %cst_101 = arith.constant dense<0xFF800000> : vector<2x8xf32>
    %328 = vector.multi_reduction <maximumf>, %327, %cst_101 [2] : vector<2x8x8xf32> to vector<2x8xf32>
    %329 = vector.shape_cast %328 : vector<2x8xf32> to vector<2x8x1xf32>
    %330 = vector.broadcast %329 : vector<2x8x1xf32> to vector<2x8x8xf32>
    %331 = arith.subf %327, %330 : vector<2x8x8xf32>
    %332 = math.exp %331 : vector<2x8x8xf32>
    %cst_102 = arith.constant dense<0.000000e+00> : vector<2x8xf32>
    %333 = vector.multi_reduction <add>, %332, %cst_102 [2] : vector<2x8x8xf32> to vector<2x8xf32>
    %334 = vector.shape_cast %333 : vector<2x8xf32> to vector<2x8x1xf32>
    %335 = tpu.reciprocal %334 {approx = true} : vector<2x8x1xf32> -> vector<2x8x1xf32>
    %336 = vector.broadcast %335 : vector<2x8x1xf32> to vector<2x8x8xf32>
    %337 = arith.mulf %332, %336 : vector<2x8x8xf32>
    %338 = vector.extract_strided_slice %275 {offsets = [0, 0, 24], sizes = [2, 8, 8], strides = [1, 1, 1]} : vector<2x8x32xf32> to vector<2x8x8xf32>
    "tpu.trace_start"() <{level = 10 : i32, message = "bqk,bkd->bqd"}> : () -> ()
    %cst_103 = arith.constant dense<0.000000e+00> : vector<2x8x8xf32>
    %339 = tpu.matmul %337, %338, %cst_103 {dimension_numbers = #tpu.dot_dimension_numbers<[2], [1], [1], [2], [0, 0, 0, 1, 1, 2], [0], [0]>} : vector<2x8x8xf32>, vector<2x8x8xf32>, vector<2x8x8xf32> -> vector<2x8x8xf32>
    "tpu.trace_stop"() : () -> ()
    %340 = tpu.concatenate %291, %307, %323, %339 in 2 : vector<2x8x8xf32>, vector<2x8x8xf32>, vector<2x8x8xf32>, vector<2x8x8xf32> -> vector<2x8x32xf32>
    %341 = vector.shape_cast %340 : vector<2x8x32xf32> to vector<16x32xf32>
    %c256 = arith.constant 256 : index
    %c0_104 = arith.constant 0 : index
    %342 = vector.load %arg2[%c256, %c0_104] : memref<512x128xf32, #tpu.memory_space<vmem>>, vector<32x32xf32>
    %cst_105 = arith.constant dense<0.000000e+00> : vector<16x32xf32>
    %343 = tpu.matmul %341, %342, %cst_105 {dimension_numbers = #tpu.dot_dimension_numbers<[1], [0], [0], [1], [0, 0, 1, 1], [], []>} : vector<16x32xf32>, vector<32x32xf32>, vector<16x32xf32> -> vector<16x32xf32>
    %c493 = arith.constant 493 : index
    %c0_106 = arith.constant 0 : index
    %344 = vector.load %arg2[%c493, %c0_106] : memref<512x128xf32, #tpu.memory_space<vmem>>, vector<1x32xf32>
    %345 = vector.broadcast %344 : vector<1x32xf32> to vector<16x32xf32>
    %346 = arith.addf %343, %345 : vector<16x32xf32>
    %347 = arith.addf %346, %262 : vector<16x32xf32>
    %c494 = arith.constant 494 : index
    %c0_107 = arith.constant 0 : index
    %348 = vector.load %arg2[%c494, %c0_107] : memref<512x128xf32, #tpu.memory_space<vmem>>, vector<1x32xf32>
    %c495 = arith.constant 495 : index
    %c0_108 = arith.constant 0 : index
    %349 = vector.load %arg2[%c495, %c0_108] : memref<512x128xf32, #tpu.memory_space<vmem>>, vector<1x32xf32>
    %cst_109 = arith.constant dense<0.000000e+00> : vector<16xf32>
    %350 = vector.multi_reduction <add>, %347, %cst_109 [1] : vector<16x32xf32> to vector<16xf32>
    %351 = vector.shape_cast %350 : vector<16xf32> to vector<16x1xf32>
    %cst_110 = arith.constant 3.200000e+01 : f32
    %352 = vector.broadcast %cst_110 : f32 to vector<16x1xf32>
    %353 = arith.divf %351, %352 : vector<16x1xf32>
    %354 = vector.broadcast %353 : vector<16x1xf32> to vector<16x32xf32>
    %355 = arith.subf %347, %354 : vector<16x32xf32>
    %356 = arith.mulf %355, %355 : vector<16x32xf32>
    %cst_111 = arith.constant dense<0.000000e+00> : vector<16xf32>
    %357 = vector.multi_reduction <add>, %356, %cst_111 [1] : vector<16x32xf32> to vector<16xf32>
    %358 = vector.shape_cast %357 : vector<16xf32> to vector<16x1xf32>
    %cst_112 = arith.constant 3.200000e+01 : f32
    %359 = vector.broadcast %cst_112 : f32 to vector<16x1xf32>
    %360 = arith.divf %358, %359 : vector<16x1xf32>
    %361 = vector.broadcast %353 : vector<16x1xf32> to vector<16x32xf32>
    %362 = arith.subf %347, %361 : vector<16x32xf32>
    %cst_113 = arith.constant 9.99999974E-6 : f32
    %363 = vector.broadcast %cst_113 : f32 to vector<16x1xf32>
    %364 = arith.addf %360, %363 : vector<16x1xf32>
    %365 = math.rsqrt %364 : vector<16x1xf32>
    %366 = vector.broadcast %365 : vector<16x1xf32> to vector<16x32xf32>
    %367 = arith.mulf %362, %366 : vector<16x32xf32>
    %368 = vector.broadcast %348 : vector<1x32xf32> to vector<16x32xf32>
    %369 = arith.mulf %367, %368 : vector<16x32xf32>
    %370 = vector.broadcast %349 : vector<1x32xf32> to vector<16x32xf32>
    %371 = arith.addf %369, %370 : vector<16x32xf32>
    %c288 = arith.constant 288 : index
    %c0_114 = arith.constant 0 : index
    %372 = vector.load %arg2[%c288, %c0_114] : memref<512x128xf32, #tpu.memory_space<vmem>>, vector<32x32xf32>
    %cst_115 = arith.constant dense<0.000000e+00> : vector<16x32xf32>
    %373 = tpu.matmul %371, %372, %cst_115 {dimension_numbers = #tpu.dot_dimension_numbers<[1], [0], [0], [1], [0, 0, 1, 1], [], []>} : vector<16x32xf32>, vector<32x32xf32>, vector<16x32xf32> -> vector<16x32xf32>
    %c496 = arith.constant 496 : index
    %c0_116 = arith.constant 0 : index
    %374 = vector.load %arg2[%c496, %c0_116] : memref<512x128xf32, #tpu.memory_space<vmem>>, vector<1x32xf32>
    %375 = vector.broadcast %374 : vector<1x32xf32> to vector<16x32xf32>
    %376 = arith.addf %373, %375 : vector<16x32xf32>
    %377 = vector.extract_strided_slice %8 {offsets = [0, 64], sizes = [32, 32], strides = [1, 1]} : vector<32x128xf32> to vector<32x32xf32>
    %378 = vector.extract_strided_slice %8 {offsets = [0, 96], sizes = [32, 32], strides = [1, 1]} : vector<32x128xf32> to vector<32x32xf32>
    %cst_117 = arith.constant 0.353553385 : f32
    %379 = vector.broadcast %cst_117 : f32 to vector<16x32xf32>
    %380 = arith.mulf %376, %379 : vector<16x32xf32>
    %381 = vector.shape_cast %380 : vector<16x32xf32> to vector<2x8x32xf32>
    %382 = vector.shape_cast %377 : vector<32x32xf32> to vector<2x16x32xf32>
    %383 = vector.shape_cast %378 : vector<32x32xf32> to vector<2x16x32xf32>
    %384 = vector.extract_strided_slice %381 {offsets = [0, 0, 0], sizes = [2, 8, 8], strides = [1, 1, 1]} : vector<2x8x32xf32> to vector<2x8x8xf32>
    %385 = vector.extract_strided_slice %382 {offsets = [0, 0, 0], sizes = [2, 16, 8], strides = [1, 1, 1]} : vector<2x16x32xf32> to vector<2x16x8xf32>
    "tpu.trace_start"() <{level = 10 : i32, message = "bqd,bkd->bqk"}> : () -> ()
    %cst_118 = arith.constant dense<0.000000e+00> : vector<2x8x16xf32>
    %386 = tpu.matmul %384, %385, %cst_118 {dimension_numbers = #tpu.dot_dimension_numbers<[2], [2], [1], [1], [0, 0, 0, 1, 1, 1], [0], [0]>} : vector<2x8x8xf32>, vector<2x16x8xf32>, vector<2x8x16xf32> -> vector<2x8x16xf32>
    "tpu.trace_stop"() : () -> ()
    %387 = arith.addf %386, %3 : vector<2x8x16xf32>
    %cst_119 = arith.constant dense<0xFF800000> : vector<2x8xf32>
    %388 = vector.multi_reduction <maximumf>, %387, %cst_119 [2] : vector<2x8x16xf32> to vector<2x8xf32>
    %389 = vector.shape_cast %388 : vector<2x8xf32> to vector<2x8x1xf32>
    %390 = vector.broadcast %389 : vector<2x8x1xf32> to vector<2x8x16xf32>
    %391 = arith.subf %387, %390 : vector<2x8x16xf32>
    %392 = math.exp %391 : vector<2x8x16xf32>
    %cst_120 = arith.constant dense<0.000000e+00> : vector<2x8xf32>
    %393 = vector.multi_reduction <add>, %392, %cst_120 [2] : vector<2x8x16xf32> to vector<2x8xf32>
    %394 = vector.shape_cast %393 : vector<2x8xf32> to vector<2x8x1xf32>
    %395 = tpu.reciprocal %394 {approx = true} : vector<2x8x1xf32> -> vector<2x8x1xf32>
    %396 = vector.broadcast %395 : vector<2x8x1xf32> to vector<2x8x16xf32>
    %397 = arith.mulf %392, %396 : vector<2x8x16xf32>
    %398 = vector.extract_strided_slice %383 {offsets = [0, 0, 0], sizes = [2, 16, 8], strides = [1, 1, 1]} : vector<2x16x32xf32> to vector<2x16x8xf32>
    "tpu.trace_start"() <{level = 10 : i32, message = "bqk,bkd->bqd"}> : () -> ()
    %cst_121 = arith.constant dense<0.000000e+00> : vector<2x8x8xf32>
    %399 = tpu.matmul %397, %398, %cst_121 {dimension_numbers = #tpu.dot_dimension_numbers<[2], [1], [1], [2], [0, 0, 0, 1, 1, 2], [0], [0]>} : vector<2x8x16xf32>, vector<2x16x8xf32>, vector<2x8x8xf32> -> vector<2x8x8xf32>
    "tpu.trace_stop"() : () -> ()
    %400 = vector.extract_strided_slice %381 {offsets = [0, 0, 8], sizes = [2, 8, 8], strides = [1, 1, 1]} : vector<2x8x32xf32> to vector<2x8x8xf32>
    %401 = vector.extract_strided_slice %382 {offsets = [0, 0, 8], sizes = [2, 16, 8], strides = [1, 1, 1]} : vector<2x16x32xf32> to vector<2x16x8xf32>
    "tpu.trace_start"() <{level = 10 : i32, message = "bqd,bkd->bqk"}> : () -> ()
    %cst_122 = arith.constant dense<0.000000e+00> : vector<2x8x16xf32>
    %402 = tpu.matmul %400, %401, %cst_122 {dimension_numbers = #tpu.dot_dimension_numbers<[2], [2], [1], [1], [0, 0, 0, 1, 1, 1], [0], [0]>} : vector<2x8x8xf32>, vector<2x16x8xf32>, vector<2x8x16xf32> -> vector<2x8x16xf32>
    "tpu.trace_stop"() : () -> ()
    %403 = arith.addf %402, %3 : vector<2x8x16xf32>
    %cst_123 = arith.constant dense<0xFF800000> : vector<2x8xf32>
    %404 = vector.multi_reduction <maximumf>, %403, %cst_123 [2] : vector<2x8x16xf32> to vector<2x8xf32>
    %405 = vector.shape_cast %404 : vector<2x8xf32> to vector<2x8x1xf32>
    %406 = vector.broadcast %405 : vector<2x8x1xf32> to vector<2x8x16xf32>
    %407 = arith.subf %403, %406 : vector<2x8x16xf32>
    %408 = math.exp %407 : vector<2x8x16xf32>
    %cst_124 = arith.constant dense<0.000000e+00> : vector<2x8xf32>
    %409 = vector.multi_reduction <add>, %408, %cst_124 [2] : vector<2x8x16xf32> to vector<2x8xf32>
    %410 = vector.shape_cast %409 : vector<2x8xf32> to vector<2x8x1xf32>
    %411 = tpu.reciprocal %410 {approx = true} : vector<2x8x1xf32> -> vector<2x8x1xf32>
    %412 = vector.broadcast %411 : vector<2x8x1xf32> to vector<2x8x16xf32>
    %413 = arith.mulf %408, %412 : vector<2x8x16xf32>
    %414 = vector.extract_strided_slice %383 {offsets = [0, 0, 8], sizes = [2, 16, 8], strides = [1, 1, 1]} : vector<2x16x32xf32> to vector<2x16x8xf32>
    "tpu.trace_start"() <{level = 10 : i32, message = "bqk,bkd->bqd"}> : () -> ()
    %cst_125 = arith.constant dense<0.000000e+00> : vector<2x8x8xf32>
    %415 = tpu.matmul %413, %414, %cst_125 {dimension_numbers = #tpu.dot_dimension_numbers<[2], [1], [1], [2], [0, 0, 0, 1, 1, 2], [0], [0]>} : vector<2x8x16xf32>, vector<2x16x8xf32>, vector<2x8x8xf32> -> vector<2x8x8xf32>
    "tpu.trace_stop"() : () -> ()
    %416 = vector.extract_strided_slice %381 {offsets = [0, 0, 16], sizes = [2, 8, 8], strides = [1, 1, 1]} : vector<2x8x32xf32> to vector<2x8x8xf32>
    %417 = vector.extract_strided_slice %382 {offsets = [0, 0, 16], sizes = [2, 16, 8], strides = [1, 1, 1]} : vector<2x16x32xf32> to vector<2x16x8xf32>
    "tpu.trace_start"() <{level = 10 : i32, message = "bqd,bkd->bqk"}> : () -> ()
    %cst_126 = arith.constant dense<0.000000e+00> : vector<2x8x16xf32>
    %418 = tpu.matmul %416, %417, %cst_126 {dimension_numbers = #tpu.dot_dimension_numbers<[2], [2], [1], [1], [0, 0, 0, 1, 1, 1], [0], [0]>} : vector<2x8x8xf32>, vector<2x16x8xf32>, vector<2x8x16xf32> -> vector<2x8x16xf32>
    "tpu.trace_stop"() : () -> ()
    %419 = arith.addf %418, %3 : vector<2x8x16xf32>
    %cst_127 = arith.constant dense<0xFF800000> : vector<2x8xf32>
    %420 = vector.multi_reduction <maximumf>, %419, %cst_127 [2] : vector<2x8x16xf32> to vector<2x8xf32>
    %421 = vector.shape_cast %420 : vector<2x8xf32> to vector<2x8x1xf32>
    %422 = vector.broadcast %421 : vector<2x8x1xf32> to vector<2x8x16xf32>
    %423 = arith.subf %419, %422 : vector<2x8x16xf32>
    %424 = math.exp %423 : vector<2x8x16xf32>
    %cst_128 = arith.constant dense<0.000000e+00> : vector<2x8xf32>
    %425 = vector.multi_reduction <add>, %424, %cst_128 [2] : vector<2x8x16xf32> to vector<2x8xf32>
    %426 = vector.shape_cast %425 : vector<2x8xf32> to vector<2x8x1xf32>
    %427 = tpu.reciprocal %426 {approx = true} : vector<2x8x1xf32> -> vector<2x8x1xf32>
    %428 = vector.broadcast %427 : vector<2x8x1xf32> to vector<2x8x16xf32>
    %429 = arith.mulf %424, %428 : vector<2x8x16xf32>
    %430 = vector.extract_strided_slice %383 {offsets = [0, 0, 16], sizes = [2, 16, 8], strides = [1, 1, 1]} : vector<2x16x32xf32> to vector<2x16x8xf32>
    "tpu.trace_start"() <{level = 10 : i32, message = "bqk,bkd->bqd"}> : () -> ()
    %cst_129 = arith.constant dense<0.000000e+00> : vector<2x8x8xf32>
    %431 = tpu.matmul %429, %430, %cst_129 {dimension_numbers = #tpu.dot_dimension_numbers<[2], [1], [1], [2], [0, 0, 0, 1, 1, 2], [0], [0]>} : vector<2x8x16xf32>, vector<2x16x8xf32>, vector<2x8x8xf32> -> vector<2x8x8xf32>
    "tpu.trace_stop"() : () -> ()
    %432 = vector.extract_strided_slice %381 {offsets = [0, 0, 24], sizes = [2, 8, 8], strides = [1, 1, 1]} : vector<2x8x32xf32> to vector<2x8x8xf32>
    %433 = vector.extract_strided_slice %382 {offsets = [0, 0, 24], sizes = [2, 16, 8], strides = [1, 1, 1]} : vector<2x16x32xf32> to vector<2x16x8xf32>
    "tpu.trace_start"() <{level = 10 : i32, message = "bqd,bkd->bqk"}> : () -> ()
    %cst_130 = arith.constant dense<0.000000e+00> : vector<2x8x16xf32>
    %434 = tpu.matmul %432, %433, %cst_130 {dimension_numbers = #tpu.dot_dimension_numbers<[2], [2], [1], [1], [0, 0, 0, 1, 1, 1], [0], [0]>} : vector<2x8x8xf32>, vector<2x16x8xf32>, vector<2x8x16xf32> -> vector<2x8x16xf32>
    "tpu.trace_stop"() : () -> ()
    %435 = arith.addf %434, %3 : vector<2x8x16xf32>
    %cst_131 = arith.constant dense<0xFF800000> : vector<2x8xf32>
    %436 = vector.multi_reduction <maximumf>, %435, %cst_131 [2] : vector<2x8x16xf32> to vector<2x8xf32>
    %437 = vector.shape_cast %436 : vector<2x8xf32> to vector<2x8x1xf32>
    %438 = vector.broadcast %437 : vector<2x8x1xf32> to vector<2x8x16xf32>
    %439 = arith.subf %435, %438 : vector<2x8x16xf32>
    %440 = math.exp %439 : vector<2x8x16xf32>
    %cst_132 = arith.constant dense<0.000000e+00> : vector<2x8xf32>
    %441 = vector.multi_reduction <add>, %440, %cst_132 [2] : vector<2x8x16xf32> to vector<2x8xf32>
    %442 = vector.shape_cast %441 : vector<2x8xf32> to vector<2x8x1xf32>
    %443 = tpu.reciprocal %442 {approx = true} : vector<2x8x1xf32> -> vector<2x8x1xf32>
    %444 = vector.broadcast %443 : vector<2x8x1xf32> to vector<2x8x16xf32>
    %445 = arith.mulf %440, %444 : vector<2x8x16xf32>
    %446 = vector.extract_strided_slice %383 {offsets = [0, 0, 24], sizes = [2, 16, 8], strides = [1, 1, 1]} : vector<2x16x32xf32> to vector<2x16x8xf32>
    "tpu.trace_start"() <{level = 10 : i32, message = "bqk,bkd->bqd"}> : () -> ()
    %cst_133 = arith.constant dense<0.000000e+00> : vector<2x8x8xf32>
    %447 = tpu.matmul %445, %446, %cst_133 {dimension_numbers = #tpu.dot_dimension_numbers<[2], [1], [1], [2], [0, 0, 0, 1, 1, 2], [0], [0]>} : vector<2x8x16xf32>, vector<2x16x8xf32>, vector<2x8x8xf32> -> vector<2x8x8xf32>
    "tpu.trace_stop"() : () -> ()
    %448 = tpu.concatenate %399, %415, %431, %447 in 2 : vector<2x8x8xf32>, vector<2x8x8xf32>, vector<2x8x8xf32>, vector<2x8x8xf32> -> vector<2x8x32xf32>
    %449 = vector.shape_cast %448 : vector<2x8x32xf32> to vector<16x32xf32>
    %c320 = arith.constant 320 : index
    %c0_134 = arith.constant 0 : index
    %450 = vector.load %arg2[%c320, %c0_134] : memref<512x128xf32, #tpu.memory_space<vmem>>, vector<32x32xf32>
    %cst_135 = arith.constant dense<0.000000e+00> : vector<16x32xf32>
    %451 = tpu.matmul %449, %450, %cst_135 {dimension_numbers = #tpu.dot_dimension_numbers<[1], [0], [0], [1], [0, 0, 1, 1], [], []>} : vector<16x32xf32>, vector<32x32xf32>, vector<16x32xf32> -> vector<16x32xf32>
    %c497 = arith.constant 497 : index
    %c0_136 = arith.constant 0 : index
    %452 = vector.load %arg2[%c497, %c0_136] : memref<512x128xf32, #tpu.memory_space<vmem>>, vector<1x32xf32>
    %453 = vector.broadcast %452 : vector<1x32xf32> to vector<16x32xf32>
    %454 = arith.addf %451, %453 : vector<16x32xf32>
    %455 = arith.addf %454, %371 : vector<16x32xf32>
    %c498 = arith.constant 498 : index
    %c0_137 = arith.constant 0 : index
    %456 = vector.load %arg2[%c498, %c0_137] : memref<512x128xf32, #tpu.memory_space<vmem>>, vector<1x32xf32>
    %c499 = arith.constant 499 : index
    %c0_138 = arith.constant 0 : index
    %457 = vector.load %arg2[%c499, %c0_138] : memref<512x128xf32, #tpu.memory_space<vmem>>, vector<1x32xf32>
    %cst_139 = arith.constant dense<0.000000e+00> : vector<16xf32>
    %458 = vector.multi_reduction <add>, %455, %cst_139 [1] : vector<16x32xf32> to vector<16xf32>
    %459 = vector.shape_cast %458 : vector<16xf32> to vector<16x1xf32>
    %cst_140 = arith.constant 3.200000e+01 : f32
    %460 = vector.broadcast %cst_140 : f32 to vector<16x1xf32>
    %461 = arith.divf %459, %460 : vector<16x1xf32>
    %462 = vector.broadcast %461 : vector<16x1xf32> to vector<16x32xf32>
    %463 = arith.subf %455, %462 : vector<16x32xf32>
    %464 = arith.mulf %463, %463 : vector<16x32xf32>
    %cst_141 = arith.constant dense<0.000000e+00> : vector<16xf32>
    %465 = vector.multi_reduction <add>, %464, %cst_141 [1] : vector<16x32xf32> to vector<16xf32>
    %466 = vector.shape_cast %465 : vector<16xf32> to vector<16x1xf32>
    %cst_142 = arith.constant 3.200000e+01 : f32
    %467 = vector.broadcast %cst_142 : f32 to vector<16x1xf32>
    %468 = arith.divf %466, %467 : vector<16x1xf32>
    %469 = vector.broadcast %461 : vector<16x1xf32> to vector<16x32xf32>
    %470 = arith.subf %455, %469 : vector<16x32xf32>
    %cst_143 = arith.constant 9.99999974E-6 : f32
    %471 = vector.broadcast %cst_143 : f32 to vector<16x1xf32>
    %472 = arith.addf %468, %471 : vector<16x1xf32>
    %473 = math.rsqrt %472 : vector<16x1xf32>
    %474 = vector.broadcast %473 : vector<16x1xf32> to vector<16x32xf32>
    %475 = arith.mulf %470, %474 : vector<16x32xf32>
    %476 = vector.broadcast %456 : vector<1x32xf32> to vector<16x32xf32>
    %477 = arith.mulf %475, %476 : vector<16x32xf32>
    %478 = vector.broadcast %457 : vector<1x32xf32> to vector<16x32xf32>
    %479 = arith.addf %477, %478 : vector<16x32xf32>
    %c352 = arith.constant 352 : index
    %c0_144 = arith.constant 0 : index
    %480 = vector.load %arg2[%c352, %c0_144] : memref<512x128xf32, #tpu.memory_space<vmem>>, vector<32x64xf32>
    %cst_145 = arith.constant dense<0.000000e+00> : vector<16x64xf32>
    %481 = tpu.matmul %479, %480, %cst_145 {dimension_numbers = #tpu.dot_dimension_numbers<[1], [0], [0], [1], [0, 0, 1, 1], [], []>} : vector<16x32xf32>, vector<32x64xf32>, vector<16x64xf32> -> vector<16x64xf32>
    %c500 = arith.constant 500 : index
    %c0_146 = arith.constant 0 : index
    %482 = vector.load %arg2[%c500, %c0_146] : memref<512x128xf32, #tpu.memory_space<vmem>>, vector<1x64xf32>
    %483 = vector.broadcast %482 : vector<1x64xf32> to vector<16x64xf32>
    %484 = arith.addf %481, %483 : vector<16x64xf32>
    %cst_147 = arith.constant 0.000000e+00 : f32
    %485 = vector.broadcast %cst_147 : f32 to vector<16x64xf32>
    %486 = arith.maximumf %484, %485 : vector<16x64xf32>
    %c384 = arith.constant 384 : index
    %c0_148 = arith.constant 0 : index
    %487 = vector.load %arg2[%c384, %c0_148] : memref<512x128xf32, #tpu.memory_space<vmem>>, vector<64x32xf32>
    %cst_149 = arith.constant dense<0.000000e+00> : vector<16x32xf32>
    %488 = tpu.matmul %486, %487, %cst_149 {dimension_numbers = #tpu.dot_dimension_numbers<[1], [0], [0], [1], [0, 0, 1, 1], [], []>} : vector<16x64xf32>, vector<64x32xf32>, vector<16x32xf32> -> vector<16x32xf32>
    %c501 = arith.constant 501 : index
    %c0_150 = arith.constant 0 : index
    %489 = vector.load %arg2[%c501, %c0_150] : memref<512x128xf32, #tpu.memory_space<vmem>>, vector<1x32xf32>
    %490 = vector.broadcast %489 : vector<1x32xf32> to vector<16x32xf32>
    %491 = arith.addf %488, %490 : vector<16x32xf32>
    %492 = arith.addf %491, %479 : vector<16x32xf32>
    %c502 = arith.constant 502 : index
    %c0_151 = arith.constant 0 : index
    %493 = vector.load %arg2[%c502, %c0_151] : memref<512x128xf32, #tpu.memory_space<vmem>>, vector<1x32xf32>
    %c503 = arith.constant 503 : index
    %c0_152 = arith.constant 0 : index
    %494 = vector.load %arg2[%c503, %c0_152] : memref<512x128xf32, #tpu.memory_space<vmem>>, vector<1x32xf32>
    %cst_153 = arith.constant dense<0.000000e+00> : vector<16xf32>
    %495 = vector.multi_reduction <add>, %492, %cst_153 [1] : vector<16x32xf32> to vector<16xf32>
    %496 = vector.shape_cast %495 : vector<16xf32> to vector<16x1xf32>
    %cst_154 = arith.constant 3.200000e+01 : f32
    %497 = vector.broadcast %cst_154 : f32 to vector<16x1xf32>
    %498 = arith.divf %496, %497 : vector<16x1xf32>
    %499 = vector.broadcast %498 : vector<16x1xf32> to vector<16x32xf32>
    %500 = arith.subf %492, %499 : vector<16x32xf32>
    %501 = arith.mulf %500, %500 : vector<16x32xf32>
    %cst_155 = arith.constant dense<0.000000e+00> : vector<16xf32>
    %502 = vector.multi_reduction <add>, %501, %cst_155 [1] : vector<16x32xf32> to vector<16xf32>
    %503 = vector.shape_cast %502 : vector<16xf32> to vector<16x1xf32>
    %cst_156 = arith.constant 3.200000e+01 : f32
    %504 = vector.broadcast %cst_156 : f32 to vector<16x1xf32>
    %505 = arith.divf %503, %504 : vector<16x1xf32>
    %506 = vector.broadcast %498 : vector<16x1xf32> to vector<16x32xf32>
    %507 = arith.subf %492, %506 : vector<16x32xf32>
    %cst_157 = arith.constant 9.99999974E-6 : f32
    %508 = vector.broadcast %cst_157 : f32 to vector<16x1xf32>
    %509 = arith.addf %505, %508 : vector<16x1xf32>
    %510 = math.rsqrt %509 : vector<16x1xf32>
    %511 = vector.broadcast %510 : vector<16x1xf32> to vector<16x32xf32>
    %512 = arith.mulf %507, %511 : vector<16x32xf32>
    %513 = vector.broadcast %493 : vector<1x32xf32> to vector<16x32xf32>
    %514 = arith.mulf %512, %513 : vector<16x32xf32>
    %515 = vector.broadcast %494 : vector<1x32xf32> to vector<16x32xf32>
    %516 = arith.addf %514, %515 : vector<16x32xf32>
    %c0_158 = arith.constant 0 : index
    %c0_159 = arith.constant 0 : index
    %517 = vector.load %arg3[%c0_158, %c0_159] : memref<16x32xf32, #tpu.memory_space<vmem>>, vector<16x32xf32>
    tpu.vector_store %arg3[%c0_158, %c0_159], %516 {strides = array<i32>} : memref<16x32xf32, #tpu.memory_space<vmem>>, vector<16x32xf32>,
    return
  }
}

</mosaic_0001>

<llo_original>
// kernel: _lambda_.1
$region0: #{_lambda_.1}
  #allocation0 [shape = 'u32[]', space=smem, size = 0x4, offset = 0x4, fixed_abs, tag = 'smem constant byte address 0x4 - core index']
  #allocation1 [shape = 'u32[144,128]{1,0:T(1,128)}', space=vmem, size = 0x12000, scoped, tag = 'internal scratch']
  %s0 = inlined_call_operand.vmem [shape: f32[48,32], index: 0, kind: input, shape index: {}]
  %s1 = inlined_call_operand.vmem [shape: f32[2,8,24], index: 1, kind: input, shape index: {}]
  %s2 = inlined_call_operand.hbm [shape: f32[512,128], index: 2, kind: input, shape index: {}]
  %s3 = inlined_call_operand.hbm [shape: f32[16,32], index: 3, kind: output, shape index: {}]
  %s4 = sld [smem:[#allocation0]]
  $region26: #{_lambda_.1} parent=0
    _
  %s6 = ssub.s32 1, %s4
  %s7 = scalar_select 0, %s6, %s4
  $region1: #{_lambda_.1} parent=0
    #allocation2 [shape = 'u8[262144]{0}', space=vmem, size = 0x40000, scoped, tag = 'input window, operand 2, single buffered']
    #allocation3 [shape = 's32[1]{0}', space=sflag, size = 0x4, scoped, tag = 'scoped memory for _lambda_.1']
    #allocation4 [shape = 's32[1]{0}', space=sflag, size = 0x4, scoped, tag = 'scoped memory for _lambda_.1']
    #allocation5 [shape = 'u8[8192]{0}', space=vmem, size = 0x2000, scoped, tag = 'output window, operand 0, single buffered']
    %8 = vsyncpa [#allocation3], 0
    %9 = vsyncpa [#allocation4], 0
    // Predicated region
    $region2: #{_lambda_.1} parent=1 // pred_check
      _
    $region3: #{_lambda_.1} parent=1 // pred_check_branch
      %11 = sbr.rel (0) target = $region5
    $region4: #{_lambda_.1} parent=1 // pred_region
      _
    $region5: #{_lambda_.1} parent=1 // pred_fallthru
      _
    // Predicated region
    $region6: #{_lambda_.1} parent=1 // pred_check
      _
    $region7: #{_lambda_.1} parent=1 // pred_check_branch
      %13 = sbr.rel (0) target = $region9
    $region8: #{_lambda_.1} parent=1 // pred_region
      _
    $region9: #{_lambda_.1} parent=1 // pred_fallthru
      _
    // Predicated region
    $region10: #{_lambda_.1} parent=1 // pred_check
      _
    $region11: #{_lambda_.1} parent=1 // pred_check_branch
      %15 = sbr.rel (0) target = $region13
    $region12: #{_lambda_.1} parent=1 // pred_region
      %s17 = ssub.s32 8192, 8192
      %18 = vsyncadd [#allocation3], %s17
      %s19 = sshll.u32 [#allocation2], 4
      %s20 = int_to_ptr.vmem [resolvable:$true] %s19
      %25 = dma.hbm_to_vmem [thread:$0]  %s2, 8192, %s20, [#allocation3], 128, 128, 8
    $region13: #{_lambda_.1} parent=1 // pred_fallthru
      _
    // Predicated region
    $region14: #{_lambda_.1} parent=1 // pred_check
      _
    $region15: #{_lambda_.1} parent=1 // pred_check_branch
      %27 = sbr.rel (0) target = $region17
    $region16: #{_lambda_.1} parent=1 // pred_region
      %28 = dma.done [#allocation3], 8192
    $region17: #{_lambda_.1} parent=1 // pred_fallthru
      _
    %v29 = vld [vmem:[%s0] sm:$0xff]
    %v30 = vld [vmem:[%s0 + $0x8] sm:$0xff]
    %v31 = vld [vmem:[%s0 + $0x10] sm:$0xff]
    %v32 = vld [vmem:[%s0 + $0x18] sm:$0xff]
    %v33 = vld [vmem:[%s0 + $0x20] sm:$0xff]
    %v34 = vld [vmem:[%s0 + $0x28] sm:$0xff]
    %v35 = vld [vmem:[%s1] sm:$0xff]
    %v36 = vld [vmem:[%s1 + $0x8] sm:$0xff]
    %v37 = vld [vmem:[#allocation2 + $0x1c0] sm:$0xff]
    %v38 = vld [vmem:[#allocation2 + $0x1c8] sm:$0xff]
    %v39 = vld [vmem:[#allocation2 + $0x1d0] sm:$0xff]
    %v40 = vld [vmem:[#allocation2 + $0x1d8] sm:$0xff]
    %v41 = vld [vmem:[#allocation2 + $0x1f8] sm:$0x1]
    %v42 = vlaneseq
    %v43 = vshrl.u32 %v42, 7
    %v44 = vsub.s32 0, %v43
    %v45 = vrot.slane %v41, %v44
    %vm46 = vcmask 261120
    %v48 = vsel %vm46, %v31, 0
    %v51 = vsel %vm46, %v32, 0
    %v54 = vsel %vm46, %v33, 0
    %v57 = vsel %vm46, %v34, 0
    %59 = vmatprep.subr.mxu0 0.0
    %60 = vmatpush1.msra.mxu0 %v37
    %61 = vmatprep.subr.mxu0 0.0
    %62 = vmatpush1.msra.mxu0 %v38
    %63 = vmatprep.subr.mxu0 0.0
    %64 = vmatpush1.msra.mxu0 %v39
    %65 = vmatprep.subr.mxu0 0.0
    %66 = vmatpush1.msra.mxu0 %v40
    %67 = vmatprep.subr.mxu0 0.0
    %68 = vmatpush1.msra.mxu0 0.0
    %69 = vmatprep.subr.mxu0 0.0
    %70 = vmatpush1.msra.mxu0 0.0
    %71 = vmatprep.subr.mxu0 0.0
    %72 = vmatpush1.msra.mxu0 0.0
    %73 = vmatprep.subr.mxu0 0.0
    %74 = vmatpush1.msra.mxu0 0.0
    %75 = vmatprep.subr.mxu0 0.0
    %76 = vmatpush1.msra.mxu0 0.0
    %77 = vmatprep.subr.mxu0 0.0
    %78 = vmatpush1.msra.mxu0 0.0
    %79 = vmatprep.subr.mxu0 0.0
    %80 = vmatpush1.msra.mxu0 0.0
    %81 = vmatprep.subr.mxu0 0.0
    %82 = vmatpush1.msra.mxu0 0.0
    %83 = vmatprep.subr.mxu0 0.0
    %84 = vmatpush1.msra.mxu0 0.0
    %85 = vmatprep.subr.mxu0 0.0
    %86 = vmatpush1.msra.mxu0 0.0
    %87 = vmatprep.subr.mxu0 0.0
    %88 = vmatpush1.msra.mxu0 0.0
    %89 = vmatprep.subr.mxu0 0.0
    %90 = vmatpush1.msra.mxu0 0.0
    %91 = vmatprep.subr.mxu0 0.0
    %92 = vmatpush1.msra.mxu0 0.0
    %93 = vmatprep.subr.mxu0 0.0
    %94 = vmatpush1.msra.mxu0 0.0
    %95 = vmatprep.subr.mxu0 0.0
    %96 = vmatpush1.msra.mxu0 0.0
    %97 = vmatprep.subr.mxu0 0.0
    %98 = vmatpush1.msra.mxu0 0.0
    %99 = vmatprep.subr.mxu0 0.0
    %100 = vmatpush1.msra.mxu0 0.0
    %101 = vmatprep.subr.mxu0 0.0
    %102 = vmatpush1.msra.mxu0 0.0
    %103 = vmatprep.subr.mxu0 0.0
    %104 = vmatpush1.msra.mxu0 0.0
    %105 = vmatprep.subr.mxu0 0.0
    %106 = vmatpush1.msra.mxu0 0.0
    %107 = vmatprep.subr.mxu0 0.0
    %108 = vmatpush1.msra.mxu0 0.0
    %109 = vmatprep.subr.mxu0 0.0
    %110 = vmatpush1.msra.mxu0 0.0
    %111 = vmatprep.subr.mxu0 0.0
    %112 = vmatpush1.msra.mxu0 0.0
    %113 = vmatprep.subr.mxu0 0.0
    %114 = vmatpush1.msra.mxu0 0.0
    %115 = vmatprep.subr.mxu0 0.0
    %116 = vmatpush1.msra.mxu0 0.0
    %117 = vmatprep.subr.mxu0 0.0
    %118 = vmatpush1.msra.mxu0 0.0
    %119 = vmatprep.subr.mxu0 0.0
    %120 = vmatpush1.msra.mxu0 0.0
    %121 = vmatprep.subr.mxu0 0.0
    %122 = vmatpush1.msra.mxu0 0.0
    %123 = vmatprep.mubr.f32.mxu0 0.0
    %124 = vmatmul.mubr.f32.gmra.mrb[0].mxu0 %v48
    %v125 = vpop.f32.mrb[0].mxu0
    %v126 = vadd.f32 %v45, %v125
    %v127 = vpop.f32.mrb[0].mxu0
    %128 = vmatprep.mubr.f32.mxu0 0.0
    %129 = vmatmul.mubr.f32.gmra.mrb[0].mxu0 %v51
    %v130 = vpop.f32.mrb[0].mxu0
    %v131 = vadd.f32 %v45, %v130
    %v132 = vpop.f32.mrb[0].mxu0
    %133 = vmatprep.mubr.f32.mxu0 0.0
    %134 = vmatmul.mubr.f32.gmra.mrb[0].mxu0 %v54
    %v135 = vpop.f32.mrb[0].mxu0
    %v136 = vadd.f32 %v45, %v135
    %v137 = vpop.f32.mrb[0].mxu0
    %138 = vmatprep.mubr.f32.mxu0 0.0
    %139 = vmatmul.mubr.f32.gmra.mrb[0].mxu0 %v57
    %v140 = vpop.f32.mrb[0].mxu0
    %v141 = vadd.f32 %v45, %v140
    %v142 = vpop.f32.mrb[0].mxu0
    %143 = vdwg.mxu0
    %v144 = vld [vmem:[#allocation2] sm:$0xff]
    %v145 = vld [vmem:[#allocation2 + $0x8] sm:$0xff]
    %v146 = vld [vmem:[#allocation2 + $0x10] sm:$0xff]
    %v147 = vld [vmem:[#allocation2 + $0x18] sm:$0xff]
    %v148 = vld [vmem:[#allocation2 + $0x1e0] sm:$0x1]
    %v149 = vlaneseq
    %v150 = vshrl.u32 %v149, 7
    %v151 = vsub.s32 0, %v150
    %v152 = vrot.slane %v148, %v151
    %v154 = vsel %vm46, %v29, 0
    %v157 = vsel %vm46, %v30, 0
    %159 = vmatprep.subr.mxu0 0.0
    %160 = vmatpush1.msra.mxu0 %v144
    %161 = vmatprep.subr.mxu0 0.0
    %162 = vmatpush1.msra.mxu0 %v145
    %163 = vmatprep.subr.mxu0 0.0
    %164 = vmatpush1.msra.mxu0 %v146
    %165 = vmatprep.subr.mxu0 0.0
    %166 = vmatpush1.msra.mxu0 %v147
    %167 = vmatprep.subr.mxu0 0.0
    %168 = vmatpush1.msra.mxu0 0.0
    %169 = vmatprep.subr.mxu0 0.0
    %170 = vmatpush1.msra.mxu0 0.0
    %171 = vmatprep.subr.mxu0 0.0
    %172 = vmatpush1.msra.mxu0 0.0
    %173 = vmatprep.subr.mxu0 0.0
    %174 = vmatpush1.msra.mxu0 0.0
    %175 = vmatprep.subr.mxu0 0.0
    %176 = vmatpush1.msra.mxu0 0.0
    %177 = vmatprep.subr.mxu0 0.0
    %178 = vmatpush1.msra.mxu0 0.0
    %179 = vmatprep.subr.mxu0 0.0
    %180 = vmatpush1.msra.mxu0 0.0
    %181 = vmatprep.subr.mxu0 0.0
    %182 = vmatpush1.msra.mxu0 0.0
    %183 = vmatprep.subr.mxu0 0.0
    %184 = vmatpush1.msra.mxu0 0.0
    %185 = vmatprep.subr.mxu0 0.0
    %186 = vmatpush1.msra.mxu0 0.0
    %187 = vmatprep.subr.mxu0 0.0
    %188 = vmatpush1.msra.mxu0 0.0
    %189 = vmatprep.subr.mxu0 0.0
    %190 = vmatpush1.msra.mxu0 0.0
    %191 = vmatprep.subr.mxu0 0.0
    %192 = vmatpush1.msra.mxu0 0.0
    %193 = vmatprep.subr.mxu0 0.0
    %194 = vmatpush1.msra.mxu0 0.0
    %195 = vmatprep.subr.mxu0 0.0
    %196 = vmatpush1.msra.mxu0 0.0
    %197 = vmatprep.subr.mxu0 0.0
    %198 = vmatpush1.msra.mxu0 0.0
    %199 = vmatprep.subr.mxu0 0.0
    %200 = vmatpush1.msra.mxu0 0.0
    %201 = vmatprep.subr.mxu0 0.0
    %202 = vmatpush1.msra.mxu0 0.0
    %203 = vmatprep.subr.mxu0 0.0
    %204 = vmatpush1.msra.mxu0 0.0
    %205 = vmatprep.subr.mxu0 0.0
    %206 = vmatpush1.msra.mxu0 0.0
    %207 = vmatprep.subr.mxu0 0.0
    %208 = vmatpush1.msra.mxu0 0.0
    %209 = vmatprep.subr.mxu0 0.0
    %210 = vmatpush1.msra.mxu0 0.0
    %211 = vmatprep.subr.mxu0 0.0
    %212 = vmatpush1.msra.mxu0 0.0
    %213 = vmatprep.subr.mxu0 0.0
    %214 = vmatpush1.msra.mxu0 0.0
    %215 = vmatprep.subr.mxu0 0.0
    %216 = vmatpush1.msra.mxu0 0.0
    %217 = vmatprep.subr.mxu0 0.0
    %218 = vmatpush1.msra.mxu0 0.0
    %219 = vmatprep.subr.mxu0 0.0
    %220 = vmatpush1.msra.mxu0 0.0
    %221 = vmatprep.subr.mxu0 0.0
    %222 = vmatpush1.msra.mxu0 0.0
    %223 = vmatprep.mubr.f32.mxu0 0.0
    %224 = vmatmul.mubr.f32.gmra.mrb[0].mxu0 %v154
    %v225 = vpop.f32.mrb[0].mxu0
    %v226 = vadd.f32 %v152, %v225
    %v227 = vpop.f32.mrb[0].mxu0
    %228 = vmatprep.mubr.f32.mxu0 0.0
    %229 = vmatmul.mubr.f32.gmra.mrb[0].mxu0 %v157
    %v230 = vpop.f32.mrb[0].mxu0
    %v231 = vadd.f32 %v152, %v230
    %v232 = vpop.f32.mrb[0].mxu0
    %233 = vdwg.mxu0
    %v234 = vmul.f32 %v226, 0.35355338
    %v235 = vmul.f32 %v231, 0.35355338
    %237 = vrot.lane.b32.xlu0 %v226, 96
    %v238 = vpop.permute.xlu0 %237
    %vm239 = vcmask 64512
    %v241 = vsel %vm239, %v234, 0
    %v243 = vsel %vm239, %v238, 0
    %245 = vmatprep.subr.mxu0 0.0
    %246 = vmatpush1.xpose.msra.mxu0 %v243
    %247 = vmatprep.subr.mxu0 0.0
    %248 = vmatpush1.xpose.msra.mxu0 0.0
    %249 = vmatprep.subr.mxu0 0.0
    %250 = vmatpush1.xpose.msra.mxu0 0.0
    %251 = vmatprep.subr.mxu0 0.0
    %252 = vmatpush1.xpose.msra.mxu0 0.0
    %253 = vmatprep.subr.mxu0 0.0
    %254 = vmatpush1.xpose.msra.mxu0 0.0
    %255 = vmatprep.subr.mxu0 0.0
    %256 = vmatpush1.xpose.msra.mxu0 0.0
    %257 = vmatprep.subr.mxu0 0.0
    %258 = vmatpush1.xpose.msra.mxu0 0.0
    %259 = vmatprep.subr.mxu0 0.0
    %260 = vmatpush1.xpose.msra.mxu0 0.0
    %261 = vmatprep.subr.mxu0 0.0
    %262 = vmatpush1.xpose.msra.mxu0 0.0
    %263 = vmatprep.subr.mxu0 0.0
    %264 = vmatpush1.xpose.msra.mxu0 0.0
    %265 = vmatprep.subr.mxu0 0.0
    %266 = vmatpush1.xpose.msra.mxu0 0.0
    %267 = vmatprep.subr.mxu0 0.0
    %268 = vmatpush1.xpose.msra.mxu0 0.0
    %269 = vmatprep.subr.mxu0 0.0
    %270 = vmatpush1.xpose.msra.mxu0 0.0
    %271 = vmatprep.subr.mxu0 0.0
    %272 = vmatpush1.xpose.msra.mxu0 0.0
    %273 = vmatprep.subr.mxu0 0.0
    %274 = vmatpush1.xpose.msra.mxu0 0.0
    %275 = vmatprep.subr.mxu0 0.0
    %276 = vmatpush1.xpose.msra.mxu0 0.0
    %277 = vmatprep.subr.mxu0 0.0
    %278 = vmatpush1.xpose.msra.mxu0 0.0
    %279 = vmatprep.subr.mxu0 0.0
    %280 = vmatpush1.xpose.msra.mxu0 0.0
    %281 = vmatprep.subr.mxu0 0.0
    %282 = vmatpush1.xpose.msra.mxu0 0.0
    %283 = vmatprep.subr.mxu0 0.0
    %284 = vmatpush1.xpose.msra.mxu0 0.0
    %285 = vmatprep.subr.mxu0 0.0
    %286 = vmatpush1.xpose.msra.mxu0 0.0
    %287 = vmatprep.subr.mxu0 0.0
    %288 = vmatpush1.xpose.msra.mxu0 0.0
    %289 = vmatprep.subr.mxu0 0.0
    %290 = vmatpush1.xpose.msra.mxu0 0.0
    %291 = vmatprep.subr.mxu0 0.0
    %292 = vmatpush1.xpose.msra.mxu0 0.0
    %293 = vmatprep.subr.mxu0 0.0
    %294 = vmatpush1.xpose.msra.mxu0 0.0
    %295 = vmatprep.subr.mxu0 0.0
    %296 = vmatpush1.xpose.msra.mxu0 0.0
    %297 = vmatprep.subr.mxu0 0.0
    %298 = vmatpush1.xpose.msra.mxu0 0.0
    %299 = vmatprep.subr.mxu0 0.0
    %300 = vmatpush1.xpose.msra.mxu0 0.0
    %301 = vmatprep.subr.mxu0 0.0
    %302 = vmatpush1.xpose.msra.mxu0 0.0
    %303 = vmatprep.subr.mxu0 0.0
    %304 = vmatpush1.xpose.msra.mxu0 0.0
    %305 = vmatprep.subr.mxu0 0.0
    %306 = vmatpush1.xpose.msra.mxu0 0.0
    %307 = vmatprep.subr.mxu0 0.0
    %308 = vmatpush1.xpose.msra.mxu0 0.0
    %309 = vmatprep.mubr.f32.mxu0 0.0
    %310 = vmatmul.mubr.f32.gmra.mrb[0].mxu0 %v241
    %v311 = vpop.f32.mrb[0].mxu0
    %v312 = vadd.f32 %v35, %v311
    %v313 = vpop.f32.mrb[0].mxu0
    %314 = vdwg.mxu0
    %316 = vrot.lane.b32.xlu0 %v231, 96
    %v317 = vpop.permute.xlu0 %316
    %v319 = vsel %vm239, %v235, 0
    %v321 = vsel %vm239, %v317, 0
    %323 = vmatprep.subr.mxu0 0.0
    %324 = vmatpush1.xpose.msra.mxu0 %v321
    %325 = vmatprep.subr.mxu0 0.0
    %326 = vmatpush1.xpose.msra.mxu0 0.0
    %327 = vmatprep.subr.mxu0 0.0
    %328 = vmatpush1.xpose.msra.mxu0 0.0
    %329 = vmatprep.subr.mxu0 0.0
    %330 = vmatpush1.xpose.msra.mxu0 0.0
    %331 = vmatprep.subr.mxu0 0.0
    %332 = vmatpush1.xpose.msra.mxu0 0.0
    %333 = vmatprep.subr.mxu0 0.0
    %334 = vmatpush1.xpose.msra.mxu0 0.0
    %335 = vmatprep.subr.mxu0 0.0
    %336 = vmatpush1.xpose.msra.mxu0 0.0
    %337 = vmatprep.subr.mxu0 0.0
    %338 = vmatpush1.xpose.msra.mxu0 0.0
    %339 = vmatprep.subr.mxu0 0.0
    %340 = vmatpush1.xpose.msra.mxu0 0.0
    %341 = vmatprep.subr.mxu0 0.0
    %342 = vmatpush1.xpose.msra.mxu0 0.0
    %343 = vmatprep.subr.mxu0 0.0
    %344 = vmatpush1.xpose.msra.mxu0 0.0
    %345 = vmatprep.subr.mxu0 0.0
    %346 = vmatpush1.xpose.msra.mxu0 0.0
    %347 = vmatprep.subr.mxu0 0.0
    %348 = vmatpush1.xpose.msra.mxu0 0.0
    %349 = vmatprep.subr.mxu0 0.0
    %350 = vmatpush1.xpose.msra.mxu0 0.0
    %351 = vmatprep.subr.mxu0 0.0
    %352 = vmatpush1.xpose.msra.mxu0 0.0
    %353 = vmatprep.subr.mxu0 0.0
    %354 = vmatpush1.xpose.msra.mxu0 0.0
    %355 = vmatprep.subr.mxu0 0.0
    %356 = vmatpush1.xpose.msra.mxu0 0.0
    %357 = vmatprep.subr.mxu0 0.0
    %358 = vmatpush1.xpose.msra.mxu0 0.0
    %359 = vmatprep.subr.mxu0 0.0
    %360 = vmatpush1.xpose.msra.mxu0 0.0
    %361 = vmatprep.subr.mxu0 0.0
    %362 = vmatpush1.xpose.msra.mxu0 0.0
    %363 = vmatprep.subr.mxu0 0.0
    %364 = vmatpush1.xpose.msra.mxu0 0.0
    %365 = vmatprep.subr.mxu0 0.0
    %366 = vmatpush1.xpose.msra.mxu0 0.0
    %367 = vmatprep.subr.mxu0 0.0
    %368 = vmatpush1.xpose.msra.mxu0 0.0
    %369 = vmatprep.subr.mxu0 0.0
    %370 = vmatpush1.xpose.msra.mxu0 0.0
    %371 = vmatprep.subr.mxu0 0.0
    %372 = vmatpush1.xpose.msra.mxu0 0.0
    %373 = vmatprep.subr.mxu0 0.0
    %374 = vmatpush1.xpose.msra.mxu0 0.0
    %375 = vmatprep.subr.mxu0 0.0
    %376 = vmatpush1.xpose.msra.mxu0 0.0
    %377 = vmatprep.subr.mxu0 0.0
    %378 = vmatpush1.xpose.msra.mxu0 0.0
    %379 = vmatprep.subr.mxu0 0.0
    %380 = vmatpush1.xpose.msra.mxu0 0.0
    %381 = vmatprep.subr.mxu0 0.0
    %382 = vmatpush1.xpose.msra.mxu0 0.0
    %383 = vmatprep.subr.mxu0 0.0
    %384 = vmatpush1.xpose.msra.mxu0 0.0
    %385 = vmatprep.subr.mxu0 0.0
    %386 = vmatpush1.xpose.msra.mxu0 0.0
    %387 = vmatprep.mubr.f32.mxu0 0.0
    %388 = vmatmul.mubr.f32.gmra.mrb[0].mxu0 %v319
    %v389 = vpop.f32.mrb[0].mxu0
    %v390 = vadd.f32 %v36, %v389
    %v391 = vpop.f32.mrb[0].mxu0
    %392 = vdwg.mxu0
    %v393 = vsel %vm239, %v312, -inf
    %394 = vmax.xlane.f32.xlu0 %v393
    %v395 = vpop.xlane.xlu0 %394
    %v396 = vsel %vm239, %v390, -inf
    %397 = vmax.xlane.f32.xlu0 %v396
    %v398 = vpop.xlane.xlu0 %397
    %v399 = vsub.f32 %v312, %v395
    %v400 = vsub.f32 %v390, %v398
    %v401 = vmul.f32 %v399, 1.442695
    %v402 = vpow.pop %v401
    %v403 = vmul.f32 %v400, 1.442695
    %v404 = vpow.pop %v403
    %v405 = vsel %vm239, %v402, 0.0
    %406 = vadd.xlane.f32.xlu0 %v405
    %v407 = vpop.xlane.xlu0 %406
    %v408 = vsel %vm239, %v404, 0.0
    %409 = vadd.xlane.f32.xlu0 %v408
    %v410 = vpop.xlane.xlu0 %409
    %v411 = vrcp.pop %v407
    %v412 = vrcp.pop %v410
    %v413 = vmul.f32 %v402, %v411
    %v414 = vmul.f32 %v404, %v412
    %415 = vrot.lane.b32.xlu0 %v226, 64
    %v416 = vpop.permute.xlu0 %415
    %v419 = vsel %vm239, %v413, 0
    %421 = vmatprep.subr.mxu0 0.0
    %422 = vmatpush1.msra.mxu0 %v416
    %423 = vmatprep.subr.mxu0 0.0
    %424 = vmatpush1.msra.mxu0 0.0
    %425 = vmatprep.subr.mxu0 0.0
    %426 = vmatpush1.msra.mxu0 0.0
    %427 = vmatprep.subr.mxu0 0.0
    %428 = vmatpush1.msra.mxu0 0.0
    %429 = vmatprep.subr.mxu0 0.0
    %430 = vmatpush1.msra.mxu0 0.0
    %431 = vmatprep.subr.mxu0 0.0
    %432 = vmatpush1.msra.mxu0 0.0
    %433 = vmatprep.subr.mxu0 0.0
    %434 = vmatpush1.msra.mxu0 0.0
    %435 = vmatprep.subr.mxu0 0.0
    %436 = vmatpush1.msra.mxu0 0.0
    %437 = vmatprep.subr.mxu0 0.0
    %438 = vmatpush1.msra.mxu0 0.0
    %439 = vmatprep.subr.mxu0 0.0
    %440 = vmatpush1.msra.mxu0 0.0
    %441 = vmatprep.subr.mxu0 0.0
    %442 = vmatpush1.msra.mxu0 0.0
    %443 = vmatprep.subr.mxu0 0.0
    %444 = vmatpush1.msra.mxu0 0.0
    %445 = vmatprep.subr.mxu0 0.0
    %446 = vmatpush1.msra.mxu0 0.0
    %447 = vmatprep.subr.mxu0 0.0
    %448 = vmatpush1.msra.mxu0 0.0
    %449 = vmatprep.subr.mxu0 0.0
    %450 = vmatpush1.msra.mxu0 0.0
    %451 = vmatprep.subr.mxu0 0.0
    %452 = vmatpush1.msra.mxu0 0.0
    %453 = vmatprep.subr.mxu0 0.0
    %454 = vmatpush1.msra.mxu0 0.0
    %455 = vmatprep.subr.mxu0 0.0
    %456 = vmatpush1.msra.mxu0 0.0
    %457 = vmatprep.subr.mxu0 0.0
    %458 = vmatpush1.msra.mxu0 0.0
    %459 = vmatprep.subr.mxu0 0.0
    %460 = vmatpush1.msra.mxu0 0.0
    %461 = vmatprep.subr.mxu0 0.0
    %462 = vmatpush1.msra.mxu0 0.0
    %463 = vmatprep.subr.mxu0 0.0
    %464 = vmatpush1.msra.mxu0 0.0
    %465 = vmatprep.subr.mxu0 0.0
    %466 = vmatpush1.msra.mxu0 0.0
    %467 = vmatprep.subr.mxu0 0.0
    %468 = vmatpush1.msra.mxu0 0.0
    %469 = vmatprep.subr.mxu0 0.0
    %470 = vmatpush1.msra.mxu0 0.0
    %471 = vmatprep.subr.mxu0 0.0
    %472 = vmatpush1.msra.mxu0 0.0
    %473 = vmatprep.subr.mxu0 0.0
    %474 = vmatpush1.msra.mxu0 0.0
    %475 = vmatprep.subr.mxu0 0.0
    %476 = vmatpush1.msra.mxu0 0.0
    %477 = vmatprep.subr.mxu0 0.0
    %478 = vmatpush1.msra.mxu0 0.0
    %479 = vmatprep.subr.mxu0 0.0
    %480 = vmatpush1.msra.mxu0 0.0
    %481 = vmatprep.subr.mxu0 0.0
    %482 = vmatpush1.msra.mxu0 0.0
    %483 = vmatprep.subr.mxu0 0.0
    %484 = vmatpush1.msra.mxu0 0.0
    %485 = vmatprep.mubr.f32.mxu0 0.0
    %486 = vmatmul.mubr.f32.gmra.mrb[0].mxu0 %v419
    %v487 = vpop.f32.mrb[0].mxu0
    %v488 = vadd.f32 0.0, %v487
    %v489 = vpop.f32.mrb[0].mxu0
    %490 = vdwg.mxu0
    %491 = vrot.lane.b32.xlu0 %v231, 64
    %v492 = vpop.permute.xlu0 %491
    %v495 = vsel %vm239, %v414, 0
    %497 = vmatprep.subr.mxu0 0.0
    %498 = vmatpush1.msra.mxu0 %v492
    %499 = vmatprep.subr.mxu0 0.0
    %500 = vmatpush1.msra.mxu0 0.0
    %501 = vmatprep.subr.mxu0 0.0
    %502 = vmatpush1.msra.mxu0 0.0
    %503 = vmatprep.subr.mxu0 0.0
    %504 = vmatpush1.msra.mxu0 0.0
    %505 = vmatprep.subr.mxu0 0.0
    %506 = vmatpush1.msra.mxu0 0.0
    %507 = vmatprep.subr.mxu0 0.0
    %508 = vmatpush1.msra.mxu0 0.0
    %509 = vmatprep.subr.mxu0 0.0
    %510 = vmatpush1.msra.mxu0 0.0
    %511 = vmatprep.subr.mxu0 0.0
    %512 = vmatpush1.msra.mxu0 0.0
    %513 = vmatprep.subr.mxu0 0.0
    %514 = vmatpush1.msra.mxu0 0.0
    %515 = vmatprep.subr.mxu0 0.0
    %516 = vmatpush1.msra.mxu0 0.0
    %517 = vmatprep.subr.mxu0 0.0
    %518 = vmatpush1.msra.mxu0 0.0
    %519 = vmatprep.subr.mxu0 0.0
    %520 = vmatpush1.msra.mxu0 0.0
    %521 = vmatprep.subr.mxu0 0.0
    %522 = vmatpush1.msra.mxu0 0.0
    %523 = vmatprep.subr.mxu0 0.0
    %524 = vmatpush1.msra.mxu0 0.0
    %525 = vmatprep.subr.mxu0 0.0
    %526 = vmatpush1.msra.mxu0 0.0
    %527 = vmatprep.subr.mxu0 0.0
    %528 = vmatpush1.msra.mxu0 0.0
    %529 = vmatprep.subr.mxu0 0.0
    %530 = vmatpush1.msra.mxu0 0.0
    %531 = vmatprep.subr.mxu0 0.0
    %532 = vmatpush1.msra.mxu0 0.0
    %533 = vmatprep.subr.mxu0 0.0
    %534 = vmatpush1.msra.mxu0 0.0
    %535 = vmatprep.subr.mxu0 0.0
    %536 = vmatpush1.msra.mxu0 0.0
    %537 = vmatprep.subr.mxu0 0.0
    %538 = vmatpush1.msra.mxu0 0.0
    %539 = vmatprep.subr.mxu0 0.0
    %540 = vmatpush1.msra.mxu0 0.0
    %541 = vmatprep.subr.mxu0 0.0
    %542 = vmatpush1.msra.mxu0 0.0
    %543 = vmatprep.subr.mxu0 0.0
    %544 = vmatpush1.msra.mxu0 0.0
    %545 = vmatprep.subr.mxu0 0.0
    %546 = vmatpush1.msra.mxu0 0.0
    %547 = vmatprep.subr.mxu0 0.0
    %548 = vmatpush1.msra.mxu0 0.0
    %549 = vmatprep.subr.mxu0 0.0
    %550 = vmatpush1.msra.mxu0 0.0
    %551 = vmatprep.subr.mxu0 0.0
    %552 = vmatpush1.msra.mxu0 0.0
    %553 = vmatprep.subr.mxu0 0.0
    %554 = vmatpush1.msra.mxu0 0.0
    %555 = vmatprep.subr.mxu0 0.0
    %556 = vmatpush1.msra.mxu0 0.0
    %557 = vmatprep.subr.mxu0 0.0
    %558 = vmatpush1.msra.mxu0 0.0
    %559 = vmatprep.subr.mxu0 0.0
    %560 = vmatpush1.msra.mxu0 0.0
    %561 = vmatprep.mubr.f32.mxu0 0.0
    %562 = vmatmul.mubr.f32.gmra.mrb[0].mxu0 %v495
    %v563 = vpop.f32.mrb[0].mxu0
    %v564 = vadd.f32 0.0, %v563
    %v565 = vpop.f32.mrb[0].mxu0
    %566 = vdwg.mxu0
    %567 = vrot.lane.b32.xlu0 %v234, 120
    %v568 = vpop.permute.xlu0 %567
    %569 = vrot.lane.b32.xlu0 %v226, 88
    %v570 = vpop.permute.xlu0 %569
    %v571 = vsel %vm239, %v568, 0
    %v573 = vsel %vm239, %v570, 0
    %575 = vmatprep.subr.mxu0 0.0
    %576 = vmatpush1.xpose.msra.mxu0 %v573
    %577 = vmatprep.subr.mxu0 0.0
    %578 = vmatpush1.xpose.msra.mxu0 0.0
    %579 = vmatprep.subr.mxu0 0.0
    %580 = vmatpush1.xpose.msra.mxu0 0.0
    %581 = vmatprep.subr.mxu0 0.0
    %582 = vmatpush1.xpose.msra.mxu0 0.0
    %583 = vmatprep.subr.mxu0 0.0
    %584 = vmatpush1.xpose.msra.mxu0 0.0
    %585 = vmatprep.subr.mxu0 0.0
    %586 = vmatpush1.xpose.msra.mxu0 0.0
    %587 = vmatprep.subr.mxu0 0.0
    %588 = vmatpush1.xpose.msra.mxu0 0.0
    %589 = vmatprep.subr.mxu0 0.0
    %590 = vmatpush1.xpose.msra.mxu0 0.0
    %591 = vmatprep.subr.mxu0 0.0
    %592 = vmatpush1.xpose.msra.mxu0 0.0
    %593 = vmatprep.subr.mxu0 0.0
    %594 = vmatpush1.xpose.msra.mxu0 0.0
    %595 = vmatprep.subr.mxu0 0.0
    %596 = vmatpush1.xpose.msra.mxu0 0.0
    %597 = vmatprep.subr.mxu0 0.0
    %598 = vmatpush1.xpose.msra.mxu0 0.0
    %599 = vmatprep.subr.mxu0 0.0
    %600 = vmatpush1.xpose.msra.mxu0 0.0
    %601 = vmatprep.subr.mxu0 0.0
    %602 = vmatpush1.xpose.msra.mxu0 0.0
    %603 = vmatprep.subr.mxu0 0.0
    %604 = vmatpush1.xpose.msra.mxu0 0.0
    %605 = vmatprep.subr.mxu0 0.0
    %606 = vmatpush1.xpose.msra.mxu0 0.0
    %607 = vmatprep.subr.mxu0 0.0
    %608 = vmatpush1.xpose.msra.mxu0 0.0
    %609 = vmatprep.subr.mxu0 0.0
    %610 = vmatpush1.xpose.msra.mxu0 0.0
    %611 = vmatprep.subr.mxu0 0.0
    %612 = vmatpush1.xpose.msra.mxu0 0.0
    %613 = vmatprep.subr.mxu0 0.0
    %614 = vmatpush1.xpose.msra.mxu0 0.0
    %615 = vmatprep.subr.mxu0 0.0
    %616 = vmatpush1.xpose.msra.mxu0 0.0
    %617 = vmatprep.subr.mxu0 0.0
    %618 = vmatpush1.xpose.msra.mxu0 0.0
    %619 = vmatprep.subr.mxu0 0.0
    %620 = vmatpush1.xpose.msra.mxu0 0.0
    %621 = vmatprep.subr.mxu0 0.0
    %622 = vmatpush1.xpose.msra.mxu0 0.0
    %623 = vmatprep.subr.mxu0 0.0
    %624 = vmatpush1.xpose.msra.mxu0 0.0
    %625 = vmatprep.subr.mxu0 0.0
    %626 = vmatpush1.xpose.msra.mxu0 0.0
    %627 = vmatprep.subr.mxu0 0.0
    %628 = vmatpush1.xpose.msra.mxu0 0.0
    %629 = vmatprep.subr.mxu0 0.0
    %630 = vmatpush1.xpose.msra.mxu0 0.0
    %631 = vmatprep.subr.mxu0 0.0
    %632 = vmatpush1.xpose.msra.mxu0 0.0
    %633 = vmatprep.subr.mxu0 0.0
    %634 = vmatpush1.xpose.msra.mxu0 0.0
    %635 = vmatprep.subr.mxu0 0.0
    %636 = vmatpush1.xpose.msra.mxu0 0.0
    %637 = vmatprep.subr.mxu0 0.0
    %638 = vmatpush1.xpose.msra.mxu0 0.0
    %639 = vmatprep.mubr.f32.mxu0 0.0
    %640 = vmatmul.mubr.f32.gmra.mrb[0].mxu0 %v571
    %v641 = vpop.f32.mrb[0].mxu0
    %v642 = vadd.f32 %v35, %v641
    %v643 = vpop.f32.mrb[0].mxu0
    %644 = vdwg.mxu0
    %645 = vrot.lane.b32.xlu0 %v235, 120
    %v646 = vpop.permute.xlu0 %645
    %647 = vrot.lane.b32.xlu0 %v231, 88
    %v648 = vpop.permute.xlu0 %647
    %v649 = vsel %vm239, %v646, 0
    %v651 = vsel %vm239, %v648, 0
    %653 = vmatprep.subr.mxu0 0.0
    %654 = vmatpush1.xpose.msra.mxu0 %v651
    %655 = vmatprep.subr.mxu0 0.0
    %656 = vmatpush1.xpose.msra.mxu0 0.0
    %657 = vmatprep.subr.mxu0 0.0
    %658 = vmatpush1.xpose.msra.mxu0 0.0
    %659 = vmatprep.subr.mxu0 0.0
    %660 = vmatpush1.xpose.msra.mxu0 0.0
    %661 = vmatprep.subr.mxu0 0.0
    %662 = vmatpush1.xpose.msra.mxu0 0.0
    %663 = vmatprep.subr.mxu0 0.0
    %664 = vmatpush1.xpose.msra.mxu0 0.0
    %665 = vmatprep.subr.mxu0 0.0
    %666 = vmatpush1.xpose.msra.mxu0 0.0
    %667 = vmatprep.subr.mxu0 0.0
    %668 = vmatpush1.xpose.msra.mxu0 0.0
    %669 = vmatprep.subr.mxu0 0.0
    %670 = vmatpush1.xpose.msra.mxu0 0.0
    %671 = vmatprep.subr.mxu0 0.0
    %672 = vmatpush1.xpose.msra.mxu0 0.0
    %673 = vmatprep.subr.mxu0 0.0
    %674 = vmatpush1.xpose.msra.mxu0 0.0
    %675 = vmatprep.subr.mxu0 0.0
    %676 = vmatpush1.xpose.msra.mxu0 0.0
    %677 = vmatprep.subr.mxu0 0.0
    %678 = vmatpush1.xpose.msra.mxu0 0.0
    %679 = vmatprep.subr.mxu0 0.0
    %680 = vmatpush1.xpose.msra.mxu0 0.0
    %681 = vmatprep.subr.mxu0 0.0
    %682 = vmatpush1.xpose.msra.mxu0 0.0
    %683 = vmatprep.subr.mxu0 0.0
    %684 = vmatpush1.xpose.msra.mxu0 0.0
    %685 = vmatprep.subr.mxu0 0.0
    %686 = vmatpush1.xpose.msra.mxu0 0.0
    %687 = vmatprep.subr.mxu0 0.0
    %688 = vmatpush1.xpose.msra.mxu0 0.0
    %689 = vmatprep.subr.mxu0 0.0
    %690 = vmatpush1.xpose.msra.mxu0 0.0
    %691 = vmatprep.subr.mxu0 0.0
    %692 = vmatpush1.xpose.msra.mxu0 0.0
    %693 = vmatprep.subr.mxu0 0.0
    %694 = vmatpush1.xpose.msra.mxu0 0.0
    %695 = vmatprep.subr.mxu0 0.0
    %696 = vmatpush1.xpose.msra.mxu0 0.0
    %697 = vmatprep.subr.mxu0 0.0
    %698 = vmatpush1.xpose.msra.mxu0 0.0
    %699 = vmatprep.subr.mxu0 0.0
    %700 = vmatpush1.xpose.msra.mxu0 0.0
    %701 = vmatprep.subr.mxu0 0.0
    %702 = vmatpush1.xpose.msra.mxu0 0.0
    %703 = vmatprep.subr.mxu0 0.0
    %704 = vmatpush1.xpose.msra.mxu0 0.0
    %705 = vmatprep.subr.mxu0 0.0
    %706 = vmatpush1.xpose.msra.mxu0 0.0
    %707 = vmatprep.subr.mxu0 0.0
    %708 = vmatpush1.xpose.msra.mxu0 0.0
    %709 = vmatprep.subr.mxu0 0.0
    %710 = vmatpush1.xpose.msra.mxu0 0.0
    %711 = vmatprep.subr.mxu0 0.0
    %712 = vmatpush1.xpose.msra.mxu0 0.0
    %713 = vmatprep.subr.mxu0 0.0
    %714 = vmatpush1.xpose.msra.mxu0 0.0
    %715 = vmatprep.subr.mxu0 0.0
    %716 = vmatpush1.xpose.msra.mxu0 0.0
    %717 = vmatprep.mubr.f32.mxu0 0.0
    %718 = vmatmul.mubr.f32.gmra.mrb[0].mxu0 %v649
    %v719 = vpop.f32.mrb[0].mxu0
    %v720 = vadd.f32 %v36, %v719
    %v721 = vpop.f32.mrb[0].mxu0
    %722 = vdwg.mxu0
    %v723 = vsel %vm239, %v642, -inf
    %724 = vmax.xlane.f32.xlu0 %v723
    %v725 = vpop.xlane.xlu0 %724
    %v726 = vsel %vm239, %v720, -inf
    %727 = vmax.xlane.f32.xlu0 %v726
    %v728 = vpop.xlane.xlu0 %727
    %v729 = vsub.f32 %v642, %v725
    %v730 = vsub.f32 %v720, %v728
    %v731 = vmul.f32 %v729, 1.442695
    %v732 = vpow.pop %v731
    %v733 = vmul.f32 %v730, 1.442695
    %v734 = vpow.pop %v733
    %v735 = vsel %vm239, %v732, 0.0
    %736 = vadd.xlane.f32.xlu0 %v735
    %v737 = vpop.xlane.xlu0 %736
    %v738 = vsel %vm239, %v734, 0.0
    %739 = vadd.xlane.f32.xlu0 %v738
    %v740 = vpop.xlane.xlu0 %739
    %v741 = vrcp.pop %v737
    %v742 = vrcp.pop %v740
    %v743 = vmul.f32 %v732, %v741
    %v744 = vmul.f32 %v734, %v742
    %745 = vrot.lane.b32.xlu0 %v226, 56
    %v746 = vpop.permute.xlu0 %745
    %v749 = vsel %vm239, %v743, 0
    %751 = vmatprep.subr.mxu0 0.0
    %752 = vmatpush1.msra.mxu0 %v746
    %753 = vmatprep.subr.mxu0 0.0
    %754 = vmatpush1.msra.mxu0 0.0
    %755 = vmatprep.subr.mxu0 0.0
    %756 = vmatpush1.msra.mxu0 0.0
    %757 = vmatprep.subr.mxu0 0.0
    %758 = vmatpush1.msra.mxu0 0.0
    %759 = vmatprep.subr.mxu0 0.0
    %760 = vmatpush1.msra.mxu0 0.0
    %761 = vmatprep.subr.mxu0 0.0
    %762 = vmatpush1.msra.mxu0 0.0
    %763 = vmatprep.subr.mxu0 0.0
    %764 = vmatpush1.msra.mxu0 0.0
    %765 = vmatprep.subr.mxu0 0.0
    %766 = vmatpush1.msra.mxu0 0.0
    %767 = vmatprep.subr.mxu0 0.0
    %768 = vmatpush1.msra.mxu0 0.0
    %769 = vmatprep.subr.mxu0 0.0
    %770 = vmatpush1.msra.mxu0 0.0
    %771 = vmatprep.subr.mxu0 0.0
    %772 = vmatpush1.msra.mxu0 0.0
    %773 = vmatprep.subr.mxu0 0.0
    %774 = vmatpush1.msra.mxu0 0.0
    %775 = vmatprep.subr.mxu0 0.0
    %776 = vmatpush1.msra.mxu0 0.0
    %777 = vmatprep.subr.mxu0 0.0
    %778 = vmatpush1.msra.mxu0 0.0
    %779 = vmatprep.subr.mxu0 0.0
    %780 = vmatpush1.msra.mxu0 0.0
    %781 = vmatprep.subr.mxu0 0.0
    %782 = vmatpush1.msra.mxu0 0.0
    %783 = vmatprep.subr.mxu0 0.0
    %784 = vmatpush1.msra.mxu0 0.0
    %785 = vmatprep.subr.mxu0 0.0
    %786 = vmatpush1.msra.mxu0 0.0
    %787 = vmatprep.subr.mxu0 0.0
    %788 = vmatpush1.msra.mxu0 0.0
    %789 = vmatprep.subr.mxu0 0.0
    %790 = vmatpush1.msra.mxu0 0.0
    %791 = vmatprep.subr.mxu0 0.0
    %792 = vmatpush1.msra.mxu0 0.0
    %793 = vmatprep.subr.mxu0 0.0
    %794 = vmatpush1.msra.mxu0 0.0
    %795 = vmatprep.subr.mxu0 0.0
    %796 = vmatpush1.msra.mxu0 0.0
    %797 = vmatprep.subr.mxu0 0.0
    %798 = vmatpush1.msra.mxu0 0.0
    %799 = vmatprep.subr.mxu0 0.0
    %800 = vmatpush1.msra.mxu0 0.0
    %801 = vmatprep.subr.mxu0 0.0
    %802 = vmatpush1.msra.mxu0 0.0
    %803 = vmatprep.subr.mxu0 0.0
    %804 = vmatpush1.msra.mxu0 0.0
    %805 = vmatprep.subr.mxu0 0.0
    %806 = vmatpush1.msra.mxu0 0.0
    %807 = vmatprep.subr.mxu0 0.0
    %808 = vmatpush1.msra.mxu0 0.0
    %809 = vmatprep.subr.mxu0 0.0
    %810 = vmatpush1.msra.mxu0 0.0
    %811 = vmatprep.subr.mxu0 0.0
    %812 = vmatpush1.msra.mxu0 0.0
    %813 = vmatprep.subr.mxu0 0.0
    %814 = vmatpush1.msra.mxu0 0.0
    %815 = vmatprep.mubr.f32.mxu0 0.0
    %816 = vmatmul.mubr.f32.gmra.mrb[0].mxu0 %v749
    %v817 = vpop.f32.mrb[0].mxu0
    %v818 = vadd.f32 0.0, %v817
    %v819 = vpop.f32.mrb[0].mxu0
    %820 = vdwg.mxu0
    %821 = vrot.lane.b32.xlu0 %v231, 56
    %v822 = vpop.permute.xlu0 %821
    %v825 = vsel %vm239, %v744, 0
    %827 = vmatprep.subr.mxu0 0.0
    %828 = vmatpush1.msra.mxu0 %v822
    %829 = vmatprep.subr.mxu0 0.0
    %830 = vmatpush1.msra.mxu0 0.0
    %831 = vmatprep.subr.mxu0 0.0
    %832 = vmatpush1.msra.mxu0 0.0
    %833 = vmatprep.subr.mxu0 0.0
    %834 = vmatpush1.msra.mxu0 0.0
    %835 = vmatprep.subr.mxu0 0.0
    %836 = vmatpush1.msra.mxu0 0.0
    %837 = vmatprep.subr.mxu0 0.0
    %838 = vmatpush1.msra.mxu0 0.0
    %839 = vmatprep.subr.mxu0 0.0
    %840 = vmatpush1.msra.mxu0 0.0
    %841 = vmatprep.subr.mxu0 0.0
    %842 = vmatpush1.msra.mxu0 0.0
    %843 = vmatprep.subr.mxu0 0.0
    %844 = vmatpush1.msra.mxu0 0.0
    %845 = vmatprep.subr.mxu0 0.0
    %846 = vmatpush1.msra.mxu0 0.0
    %847 = vmatprep.subr.mxu0 0.0
    %848 = vmatpush1.msra.mxu0 0.0
    %849 = vmatprep.subr.mxu0 0.0
    %850 = vmatpush1.msra.mxu0 0.0
    %851 = vmatprep.subr.mxu0 0.0
    %852 = vmatpush1.msra.mxu0 0.0
    %853 = vmatprep.subr.mxu0 0.0
    %854 = vmatpush1.msra.mxu0 0.0
    %855 = vmatprep.subr.mxu0 0.0
    %856 = vmatpush1.msra.mxu0 0.0
    %857 = vmatprep.subr.mxu0 0.0
    %858 = vmatpush1.msra.mxu0 0.0
    %859 = vmatprep.subr.mxu0 0.0
    %860 = vmatpush1.msra.mxu0 0.0
    %861 = vmatprep.subr.mxu0 0.0
    %862 = vmatpush1.msra.mxu0 0.0
    %863 = vmatprep.subr.mxu0 0.0
    %864 = vmatpush1.msra.mxu0 0.0
    %865 = vmatprep.subr.mxu0 0.0
    %866 = vmatpush1.msra.mxu0 0.0
    %867 = vmatprep.subr.mxu0 0.0
    %868 = vmatpush1.msra.mxu0 0.0
    %869 = vmatprep.subr.mxu0 0.0
    %870 = vmatpush1.msra.mxu0 0.0
    %871 = vmatprep.subr.mxu0 0.0
    %872 = vmatpush1.msra.mxu0 0.0
    %873 = vmatprep.subr.mxu0 0.0
    %874 = vmatpush1.msra.mxu0 0.0
    %875 = vmatprep.subr.mxu0 0.0
    %876 = vmatpush1.msra.mxu0 0.0
    %877 = vmatprep.subr.mxu0 0.0
    %878 = vmatpush1.msra.mxu0 0.0
    %879 = vmatprep.subr.mxu0 0.0
    %880 = vmatpush1.msra.mxu0 0.0
    %881 = vmatprep.subr.mxu0 0.0
    %882 = vmatpush1.msra.mxu0 0.0
    %883 = vmatprep.subr.mxu0 0.0
    %884 = vmatpush1.msra.mxu0 0.0
    %885 = vmatprep.subr.mxu0 0.0
    %886 = vmatpush1.msra.mxu0 0.0
    %887 = vmatprep.subr.mxu0 0.0
    %888 = vmatpush1.msra.mxu0 0.0
    %889 = vmatprep.subr.mxu0 0.0
    %890 = vmatpush1.msra.mxu0 0.0
    %891 = vmatprep.mubr.f32.mxu0 0.0
    %892 = vmatmul.mubr.f32.gmra.mrb[0].mxu0 %v825
    %v893 = vpop.f32.mrb[0].mxu0
    %v894 = vadd.f32 0.0, %v893
    %v895 = vpop.f32.mrb[0].mxu0
    %896 = vdwg.mxu0
    %897 = vrot.lane.b32.xlu0 %v234, 112
    %v898 = vpop.permute.xlu0 %897
    %899 = vrot.lane.b32.xlu0 %v226, 80
    %v900 = vpop.permute.xlu0 %899
    %v901 = vsel %vm239, %v898, 0
    %v903 = vsel %vm239, %v900, 0
    %905 = vmatprep.subr.mxu0 0.0
    %906 = vmatpush1.xpose.msra.mxu0 %v903
    %907 = vmatprep.subr.mxu0 0.0
    %908 = vmatpush1.xpose.msra.mxu0 0.0
    %909 = vmatprep.subr.mxu0 0.0
    %910 = vmatpush1.xpose.msra.mxu0 0.0
    %911 = vmatprep.subr.mxu0 0.0
    %912 = vmatpush1.xpose.msra.mxu0 0.0
    %913 = vmatprep.subr.mxu0 0.0
    %914 = vmatpush1.xpose.msra.mxu0 0.0
    %915 = vmatprep.subr.mxu0 0.0
    %916 = vmatpush1.xpose.msra.mxu0 0.0
    %917 = vmatprep.subr.mxu0 0.0
    %918 = vmatpush1.xpose.msra.mxu0 0.0
    %919 = vmatprep.subr.mxu0 0.0
    %920 = vmatpush1.xpose.msra.mxu0 0.0
    %921 = vmatprep.subr.mxu0 0.0
    %922 = vmatpush1.xpose.msra.mxu0 0.0
    %923 = vmatprep.subr.mxu0 0.0
    %924 = vmatpush1.xpose.msra.mxu0 0.0
    %925 = vmatprep.subr.mxu0 0.0
    %926 = vmatpush1.xpose.msra.mxu0 0.0
    %927 = vmatprep.subr.mxu0 0.0
    %928 = vmatpush1.xpose.msra.mxu0 0.0
    %929 = vmatprep.subr.mxu0 0.0
    %930 = vmatpush1.xpose.msra.mxu0 0.0
    %931 = vmatprep.subr.mxu0 0.0
    %932 = vmatpush1.xpose.msra.mxu0 0.0
    %933 = vmatprep.subr.mxu0 0.0
    %934 = vmatpush1.xpose.msra.mxu0 0.0
    %935 = vmatprep.subr.mxu0 0.0
    %936 = vmatpush1.xpose.msra.mxu0 0.0
    %937 = vmatprep.subr.mxu0 0.0
    %938 = vmatpush1.xpose.msra.mxu0 0.0
    %939 = vmatprep.subr.mxu0 0.0
    %940 = vmatpush1.xpose.msra.mxu0 0.0
    %941 = vmatprep.subr.mxu0 0.0
    %942 = vmatpush1.xpose.msra.mxu0 0.0
    %943 = vmatprep.subr.mxu0 0.0
    %944 = vmatpush1.xpose.msra.mxu0 0.0
    %945 = vmatprep.subr.mxu0 0.0
    %946 = vmatpush1.xpose.msra.mxu0 0.0
    %947 = vmatprep.subr.mxu0 0.0
    %948 = vmatpush1.xpose.msra.mxu0 0.0
    %949 = vmatprep.subr.mxu0 0.0
    %950 = vmatpush1.xpose.msra.mxu0 0.0
    %951 = vmatprep.subr.mxu0 0.0
    %952 = vmatpush1.xpose.msra.mxu0 0.0
    %953 = vmatprep.subr.mxu0 0.0
    %954 = vmatpush1.xpose.msra.mxu0 0.0
    %955 = vmatprep.subr.mxu0 0.0
    %956 = vmatpush1.xpose.msra.mxu0 0.0
    %957 = vmatprep.subr.mxu0 0.0
    %958 = vmatpush1.xpose.msra.mxu0 0.0
    %959 = vmatprep.subr.mxu0 0.0
    %960 = vmatpush1.xpose.msra.mxu0 0.0
    %961 = vmatprep.subr.mxu0 0.0
    %962 = vmatpush1.xpose.msra.mxu0 0.0
    %963 = vmatprep.subr.mxu0 0.0
    %964 = vmatpush1.xpose.msra.mxu0 0.0
    %965 = vmatprep.subr.mxu0 0.0
    %966 = vmatpush1.xpose.msra.mxu0 0.0
    %967 = vmatprep.subr.mxu0 0.0
    %968 = vmatpush1.xpose.msra.mxu0 0.0
    %969 = vmatprep.mubr.f32.mxu0 0.0
    %970 = vmatmul.mubr.f32.gmra.mrb[0].mxu0 %v901
    %v971 = vpop.f32.mrb[0].mxu0
    %v972 = vadd.f32 %v35, %v971
    %v973 = vpop.f32.mrb[0].mxu0
    %974 = vdwg.mxu0
    %975 = vrot.lane.b32.xlu0 %v235, 112
    %v976 = vpop.permute.xlu0 %975
    %977 = vrot.lane.b32.xlu0 %v231, 80
    %v978 = vpop.permute.xlu0 %977
    %v979 = vsel %vm239, %v976, 0
    %v981 = vsel %vm239, %v978, 0
    %983 = vmatprep.subr.mxu0 0.0
    %984 = vmatpush1.xpose.msra.mxu0 %v981
    %985 = vmatprep.subr.mxu0 0.0
    %986 = vmatpush1.xpose.msra.mxu0 0.0
    %987 = vmatprep.subr.mxu0 0.0
    %988 = vmatpush1.xpose.msra.mxu0 0.0
    %989 = vmatprep.subr.mxu0 0.0
    %990 = vmatpush1.xpose.msra.mxu0 0.0
    %991 = vmatprep.subr.mxu0 0.0
    %992 = vmatpush1.xpose.msra.mxu0 0.0
    %993 = vmatprep.subr.mxu0 0.0
    %994 = vmatpush1.xpose.msra.mxu0 0.0
    %995 = vmatprep.subr.mxu0 0.0
    %996 = vmatpush1.xpose.msra.mxu0 0.0
    %997 = vmatprep.subr.mxu0 0.0
    %998 = vmatpush1.xpose.msra.mxu0 0.0
    %999 = vmatprep.subr.mxu0 0.0
    %1000 = vmatpush1.xpose.msra.mxu0 0.0
    %1001 = vmatprep.subr.mxu0 0.0
    %1002 = vmatpush1.xpose.msra.mxu0 0.0
    %1003 = vmatprep.subr.mxu0 0.0
    %1004 = vmatpush1.xpose.msra.mxu0 0.0
    %1005 = vmatprep.subr.mxu0 0.0
    %1006 = vmatpush1.xpose.msra.mxu0 0.0
    %1007 = vmatprep.subr.mxu0 0.0
    %1008 = vmatpush1.xpose.msra.mxu0 0.0
    %1009 = vmatprep.subr.mxu0 0.0
    %1010 = vmatpush1.xpose.msra.mxu0 0.0
    %1011 = vmatprep.subr.mxu0 0.0
    %1012 = vmatpush1.xpose.msra.mxu0 0.0
    %1013 = vmatprep.subr.mxu0 0.0
    %1014 = vmatpush1.xpose.msra.mxu0 0.0
    %1015 = vmatprep.subr.mxu0 0.0
    %1016 = vmatpush1.xpose.msra.mxu0 0.0
    %1017 = vmatprep.subr.mxu0 0.0
    %1018 = vmatpush1.xpose.msra.mxu0 0.0
    %1019 = vmatprep.subr.mxu0 0.0
    %1020 = vmatpush1.xpose.msra.mxu0 0.0
    %1021 = vmatprep.subr.mxu0 0.0
    %1022 = vmatpush1.xpose.msra.mxu0 0.0
    %1023 = vmatprep.subr.mxu0 0.0
    %1024 = vmatpush1.xpose.msra.mxu0 0.0
    %1025 = vmatprep.subr.mxu0 0.0
    %1026 = vmatpush1.xpose.msra.mxu0 0.0
    %1027 = vmatprep.subr.mxu0 0.0
    %1028 = vmatpush1.xpose.msra.mxu0 0.0
    %1029 = vmatprep.subr.mxu0 0.0
    %1030 = vmatpush1.xpose.msra.mxu0 0.0
    %1031 = vmatprep.subr.mxu0 0.0
    %1032 = vmatpush1.xpose.msra.mxu0 0.0
    %1033 = vmatprep.subr.mxu0 0.0
    %1034 = vmatpush1.xpose.msra.mxu0 0.0
    %1035 = vmatprep.subr.mxu0 0.0
    %1036 = vmatpush1.xpose.msra.mxu0 0.0
    %1037 = vmatprep.subr.mxu0 0.0
    %1038 = vmatpush1.xpose.msra.mxu0 0.0
    %1039 = vmatprep.subr.mxu0 0.0
    %1040 = vmatpush1.xpose.msra.mxu0 0.0
    %1041 = vmatprep.subr.mxu0 0.0
    %1042 = vmatpush1.xpose.msra.mxu0 0.0
    %1043 = vmatprep.subr.mxu0 0.0
    %1044 = vmatpush1.xpose.msra.mxu0 0.0
    %1045 = vmatprep.subr.mxu0 0.0
    %1046 = vmatpush1.xpose.msra.mxu0 0.0
    %1047 = vmatprep.mubr.f32.mxu0 0.0
    %1048 = vmatmul.mubr.f32.gmra.mrb[0].mxu0 %v979
    %v1049 = vpop.f32.mrb[0].mxu0
    %v1050 = vadd.f32 %v36, %v1049
    %v1051 = vpop.f32.mrb[0].mxu0
    %1052 = vdwg.mxu0
    %v1053 = vsel %vm239, %v972, -inf
    %1054 = vmax.xlane.f32.xlu0 %v1053
    %v1055 = vpop.xlane.xlu0 %1054
    %v1056 = vsel %vm239, %v1050, -inf
    %1057 = vmax.xlane.f32.xlu0 %v1056
    %v1058 = vpop.xlane.xlu0 %1057
    %v1059 = vsub.f32 %v972, %v1055
    %v1060 = vsub.f32 %v1050, %v1058
    %v1061 = vmul.f32 %v1059, 1.442695
    %v1062 = vpow.pop %v1061
    %v1063 = vmul.f32 %v1060, 1.442695
    %v1064 = vpow.pop %v1063
    %v1065 = vsel %vm239, %v1062, 0.0
    %1066 = vadd.xlane.f32.xlu0 %v1065
    %v1067 = vpop.xlane.xlu0 %1066
    %v1068 = vsel %vm239, %v1064, 0.0
    %1069 = vadd.xlane.f32.xlu0 %v1068
    %v1070 = vpop.xlane.xlu0 %1069
    %v1071 = vrcp.pop %v1067
    %v1072 = vrcp.pop %v1070
    %v1073 = vmul.f32 %v1062, %v1071
    %v1074 = vmul.f32 %v1064, %v1072
    %1075 = vrot.lane.b32.xlu0 %v226, 48
    %v1076 = vpop.permute.xlu0 %1075
    %v1079 = vsel %vm239, %v1073, 0
    %1081 = vmatprep.subr.mxu0 0.0
    %1082 = vmatpush1.msra.mxu0 %v1076
    %1083 = vmatprep.subr.mxu0 0.0
    %1084 = vmatpush1.msra.mxu0 0.0
    %1085 = vmatprep.subr.mxu0 0.0
    %1086 = vmatpush1.msra.mxu0 0.0
    %1087 = vmatprep.subr.mxu0 0.0
    %1088 = vmatpush1.msra.mxu0 0.0
    %1089 = vmatprep.subr.mxu0 0.0
    %1090 = vmatpush1.msra.mxu0 0.0
    %1091 = vmatprep.subr.mxu0 0.0
    %1092 = vmatpush1.msra.mxu0 0.0
    %1093 = vmatprep.subr.mxu0 0.0
    %1094 = vmatpush1.msra.mxu0 0.0
    %1095 = vmatprep.subr.mxu0 0.0
    %1096 = vmatpush1.msra.mxu0 0.0
    %1097 = vmatprep.subr.mxu0 0.0
    %1098 = vmatpush1.msra.mxu0 0.0
    %1099 = vmatprep.subr.mxu0 0.0
    %1100 = vmatpush1.msra.mxu0 0.0
    %1101 = vmatprep.subr.mxu0 0.0
    %1102 = vmatpush1.msra.mxu0 0.0
    %1103 = vmatprep.subr.mxu0 0.0
    %1104 = vmatpush1.msra.mxu0 0.0
    %1105 = vmatprep.subr.mxu0 0.0
    %1106 = vmatpush1.msra.mxu0 0.0
    %1107 = vmatprep.subr.mxu0 0.0
    %1108 = vmatpush1.msra.mxu0 0.0
    %1109 = vmatprep.subr.mxu0 0.0
    %1110 = vmatpush1.msra.mxu0 0.0
    %1111 = vmatprep.subr.mxu0 0.0
    %1112 = vmatpush1.msra.mxu0 0.0
    %1113 = vmatprep.subr.mxu0 0.0
    %1114 = vmatpush1.msra.mxu0 0.0
    %1115 = vmatprep.subr.mxu0 0.0
    %1116 = vmatpush1.msra.mxu0 0.0
    %1117 = vmatprep.subr.mxu0 0.0
    %1118 = vmatpush1.msra.mxu0 0.0
    %1119 = vmatprep.subr.mxu0 0.0
    %1120 = vmatpush1.msra.mxu0 0.0
    %1121 = vmatprep.subr.mxu0 0.0
    %1122 = vmatpush1.msra.mxu0 0.0
    %1123 = vmatprep.subr.mxu0 0.0
    %1124 = vmatpush1.msra.mxu0 0.0
    %1125 = vmatprep.subr.mxu0 0.0
    %1126 = vmatpush1.msra.mxu0 0.0
    %1127 = vmatprep.subr.mxu0 0.0
    %1128 = vmatpush1.msra.mxu0 0.0
    %1129 = vmatprep.subr.mxu0 0.0
    %1130 = vmatpush1.msra.mxu0 0.0
    %1131 = vmatprep.subr.mxu0 0.0
    %1132 = vmatpush1.msra.mxu0 0.0
    %1133 = vmatprep.subr.mxu0 0.0
    %1134 = vmatpush1.msra.mxu0 0.0
    %1135 = vmatprep.subr.mxu0 0.0
    %1136 = vmatpush1.msra.mxu0 0.0
    %1137 = vmatprep.subr.mxu0 0.0
    %1138 = vmatpush1.msra.mxu0 0.0
    %1139 = vmatprep.subr.mxu0 0.0
    %1140 = vmatpush1.msra.mxu0 0.0
    %1141 = vmatprep.subr.mxu0 0.0
    %1142 = vmatpush1.msra.mxu0 0.0
    %1143 = vmatprep.subr.mxu0 0.0
    %1144 = vmatpush1.msra.mxu0 0.0
    %1145 = vmatprep.mubr.f32.mxu0 0.0
    %1146 = vmatmul.mubr.f32.gmra.mrb[0].mxu0 %v1079
    %v1147 = vpop.f32.mrb[0].mxu0
    %v1148 = vadd.f32 0.0, %v1147
    %v1149 = vpop.f32.mrb[0].mxu0
    %1150 = vdwg.mxu0
    %1151 = vrot.lane.b32.xlu0 %v231, 48
    %v1152 = vpop.permute.xlu0 %1151
    %v1155 = vsel %vm239, %v1074, 0
    %1157 = vmatprep.subr.mxu0 0.0
    %1158 = vmatpush1.msra.mxu0 %v1152
    %1159 = vmatprep.subr.mxu0 0.0
    %1160 = vmatpush1.msra.mxu0 0.0
    %1161 = vmatprep.subr.mxu0 0.0
    %1162 = vmatpush1.msra.mxu0 0.0
    %1163 = vmatprep.subr.mxu0 0.0
    %1164 = vmatpush1.msra.mxu0 0.0
    %1165 = vmatprep.subr.mxu0 0.0
    %1166 = vmatpush1.msra.mxu0 0.0
    %1167 = vmatprep.subr.mxu0 0.0
    %1168 = vmatpush1.msra.mxu0 0.0
    %1169 = vmatprep.subr.mxu0 0.0
    %1170 = vmatpush1.msra.mxu0 0.0
    %1171 = vmatprep.subr.mxu0 0.0
    %1172 = vmatpush1.msra.mxu0 0.0
    %1173 = vmatprep.subr.mxu0 0.0
    %1174 = vmatpush1.msra.mxu0 0.0
    %1175 = vmatprep.subr.mxu0 0.0
    %1176 = vmatpush1.msra.mxu0 0.0
    %1177 = vmatprep.subr.mxu0 0.0
    %1178 = vmatpush1.msra.mxu0 0.0
    %1179 = vmatprep.subr.mxu0 0.0
    %1180 = vmatpush1.msra.mxu0 0.0
    %1181 = vmatprep.subr.mxu0 0.0
    %1182 = vmatpush1.msra.mxu0 0.0
    %1183 = vmatprep.subr.mxu0 0.0
    %1184 = vmatpush1.msra.mxu0 0.0
    %1185 = vmatprep.subr.mxu0 0.0
    %1186 = vmatpush1.msra.mxu0 0.0
    %1187 = vmatprep.subr.mxu0 0.0
    %1188 = vmatpush1.msra.mxu0 0.0
    %1189 = vmatprep.subr.mxu0 0.0
    %1190 = vmatpush1.msra.mxu0 0.0
    %1191 = vmatprep.subr.mxu0 0.0
    %1192 = vmatpush1.msra.mxu0 0.0
    %1193 = vmatprep.subr.mxu0 0.0
    %1194 = vmatpush1.msra.mxu0 0.0
    %1195 = vmatprep.subr.mxu0 0.0
    %1196 = vmatpush1.msra.mxu0 0.0
    %1197 = vmatprep.subr.mxu0 0.0
    %1198 = vmatpush1.msra.mxu0 0.0
    %1199 = vmatprep.subr.mxu0 0.0
    %1200 = vmatpush1.msra.mxu0 0.0
    %1201 = vmatprep.subr.mxu0 0.0
    %1202 = vmatpush1.msra.mxu0 0.0
    %1203 = vmatprep.subr.mxu0 0.0
    %1204 = vmatpush1.msra.mxu0 0.0
    %1205 = vmatprep.subr.mxu0 0.0
    %1206 = vmatpush1.msra.mxu0 0.0
    %1207 = vmatprep.subr.mxu0 0.0
    %1208 = vmatpush1.msra.mxu0 0.0
    %1209 = vmatprep.subr.mxu0 0.0
    %1210 = vmatpush1.msra.mxu0 0.0
    %1211 = vmatprep.subr.mxu0 0.0
    %1212 = vmatpush1.msra.mxu0 0.0
    %1213 = vmatprep.subr.mxu0 0.0
    %1214 = vmatpush1.msra.mxu0 0.0
    %1215 = vmatprep.subr.mxu0 0.0
    %1216 = vmatpush1.msra.mxu0 0.0
    %1217 = vmatprep.subr.mxu0 0.0
    %1218 = vmatpush1.msra.mxu0 0.0
    %1219 = vmatprep.subr.mxu0 0.0
    %1220 = vmatpush1.msra.mxu0 0.0
    %1221 = vmatprep.mubr.f32.mxu0 0.0
    %1222 = vmatmul.mubr.f32.gmra.mrb[0].mxu0 %v1155
    %v1223 = vpop.f32.mrb[0].mxu0
    %v1224 = vadd.f32 0.0, %v1223
    %v1225 = vpop.f32.mrb[0].mxu0
    %1226 = vdwg.mxu0
    %1227 = vrot.lane.b32.xlu0 %v234, 104
    %v1228 = vpop.permute.xlu0 %1227
    %1229 = vrot.lane.b32.xlu0 %v226, 72
    %v1230 = vpop.permute.xlu0 %1229
    %v1231 = vsel %vm239, %v1228, 0
    %v1233 = vsel %vm239, %v1230, 0
    %1235 = vmatprep.subr.mxu0 0.0
    %1236 = vmatpush1.xpose.msra.mxu0 %v1233
    %1237 = vmatprep.subr.mxu0 0.0
    %1238 = vmatpush1.xpose.msra.mxu0 0.0
    %1239 = vmatprep.subr.mxu0 0.0
    %1240 = vmatpush1.xpose.msra.mxu0 0.0
    %1241 = vmatprep.subr.mxu0 0.0
    %1242 = vmatpush1.xpose.msra.mxu0 0.0
    %1243 = vmatprep.subr.mxu0 0.0
    %1244 = vmatpush1.xpose.msra.mxu0 0.0
    %1245 = vmatprep.subr.mxu0 0.0
    %1246 = vmatpush1.xpose.msra.mxu0 0.0
    %1247 = vmatprep.subr.mxu0 0.0
    %1248 = vmatpush1.xpose.msra.mxu0 0.0
    %1249 = vmatprep.subr.mxu0 0.0
    %1250 = vmatpush1.xpose.msra.mxu0 0.0
    %1251 = vmatprep.subr.mxu0 0.0
    %1252 = vmatpush1.xpose.msra.mxu0 0.0
    %1253 = vmatprep.subr.mxu0 0.0
    %1254 = vmatpush1.xpose.msra.mxu0 0.0
    %1255 = vmatprep.subr.mxu0 0.0
    %1256 = vmatpush1.xpose.msra.mxu0 0.0
    %1257 = vmatprep.subr.mxu0 0.0
    %1258 = vmatpush1.xpose.msra.mxu0 0.0
    %1259 = vmatprep.subr.mxu0 0.0
    %1260 = vmatpush1.xpose.msra.mxu0 0.0
    %1261 = vmatprep.subr.mxu0 0.0
    %1262 = vmatpush1.xpose.msra.mxu0 0.0
    %1263 = vmatprep.subr.mxu0 0.0
    %1264 = vmatpush1.xpose.msra.mxu0 0.0
    %1265 = vmatprep.subr.mxu0 0.0
    %1266 = vmatpush1.xpose.msra.mxu0 0.0
    %1267 = vmatprep.subr.mxu0 0.0
    %1268 = vmatpush1.xpose.msra.mxu0 0.0
    %1269 = vmatprep.subr.mxu0 0.0
    %1270 = vmatpush1.xpose.msra.mxu0 0.0
    %1271 = vmatprep.subr.mxu0 0.0
    %1272 = vmatpush1.xpose.msra.mxu0 0.0
    %1273 = vmatprep.subr.mxu0 0.0
    %1274 = vmatpush1.xpose.msra.mxu0 0.0
    %1275 = vmatprep.subr.mxu0 0.0
    %1276 = vmatpush1.xpose.msra.mxu0 0.0
    %1277 = vmatprep.subr.mxu0 0.0
    %1278 = vmatpush1.xpose.msra.mxu0 0.0
    %1279 = vmatprep.subr.mxu0 0.0
    %1280 = vmatpush1.xpose.msra.mxu0 0.0
    %1281 = vmatprep.subr.mxu0 0.0
    %1282 = vmatpush1.xpose.msra.mxu0 0.0
    %1283 = vmatprep.subr.mxu0 0.0
    %1284 = vmatpush1.xpose.msra.mxu0 0.0
    %1285 = vmatprep.subr.mxu0 0.0
    %1286 = vmatpush1.xpose.msra.mxu0 0.0
    %1287 = vmatprep.subr.mxu0 0.0
    %1288 = vmatpush1.xpose.msra.mxu0 0.0
    %1289 = vmatprep.subr.mxu0 0.0
    %1290 = vmatpush1.xpose.msra.mxu0 0.0
    %1291 = vmatprep.subr.mxu0 0.0
    %1292 = vmatpush1.xpose.msra.mxu0 0.0
    %1293 = vmatprep.subr.mxu0 0.0
    %1294 = vmatpush1.xpose.msra.mxu0 0.0
    %1295 = vmatprep.subr.mxu0 0.0
    %1296 = vmatpush1.xpose.msra.mxu0 0.0
    %1297 = vmatprep.subr.mxu0 0.0
    %1298 = vmatpush1.xpose.msra.mxu0 0.0
    %1299 = vmatprep.mubr.f32.mxu0 0.0
    %1300 = vmatmul.mubr.f32.gmra.mrb[0].mxu0 %v1231
    %v1301 = vpop.f32.mrb[0].mxu0
    %v1302 = vadd.f32 %v35, %v1301
    %v1303 = vpop.f32.mrb[0].mxu0
    %1304 = vdwg.mxu0
    %1305 = vrot.lane.b32.xlu0 %v235, 104
    %v1306 = vpop.permute.xlu0 %1305
    %1307 = vrot.lane.b32.xlu0 %v231, 72
    %v1308 = vpop.permute.xlu0 %1307
    %v1309 = vsel %vm239, %v1306, 0
    %v1311 = vsel %vm239, %v1308, 0
    %1313 = vmatprep.subr.mxu0 0.0
    %1314 = vmatpush1.xpose.msra.mxu0 %v1311
    %1315 = vmatprep.subr.mxu0 0.0
    %1316 = vmatpush1.xpose.msra.mxu0 0.0
    %1317 = vmatprep.subr.mxu0 0.0
    %1318 = vmatpush1.xpose.msra.mxu0 0.0
    %1319 = vmatprep.subr.mxu0 0.0
    %1320 = vmatpush1.xpose.msra.mxu0 0.0
    %1321 = vmatprep.subr.mxu0 0.0
    %1322 = vmatpush1.xpose.msra.mxu0 0.0
    %1323 = vmatprep.subr.mxu0 0.0
    %1324 = vmatpush1.xpose.msra.mxu0 0.0
    %1325 = vmatprep.subr.mxu0 0.0
    %1326 = vmatpush1.xpose.msra.mxu0 0.0
    %1327 = vmatprep.subr.mxu0 0.0
    %1328 = vmatpush1.xpose.msra.mxu0 0.0
    %1329 = vmatprep.subr.mxu0 0.0
    %1330 = vmatpush1.xpose.msra.mxu0 0.0
    %1331 = vmatprep.subr.mxu0 0.0
    %1332 = vmatpush1.xpose.msra.mxu0 0.0
    %1333 = vmatprep.subr.mxu0 0.0
    %1334 = vmatpush1.xpose.msra.mxu0 0.0
    %1335 = vmatprep.subr.mxu0 0.0
    %1336 = vmatpush1.xpose.msra.mxu0 0.0
    %1337 = vmatprep.subr.mxu0 0.0
    %1338 = vmatpush1.xpose.msra.mxu0 0.0
    %1339 = vmatprep.subr.mxu0 0.0
    %1340 = vmatpush1.xpose.msra.mxu0 0.0
    %1341 = vmatprep.subr.mxu0 0.0
    %1342 = vmatpush1.xpose.msra.mxu0 0.0
    %1343 = vmatprep.subr.mxu0 0.0
    %1344 = vmatpush1.xpose.msra.mxu0 0.0
    %1345 = vmatprep.subr.mxu0 0.0
    %1346 = vmatpush1.xpose.msra.mxu0 0.0
    %1347 = vmatprep.subr.mxu0 0.0
    %1348 = vmatpush1.xpose.msra.mxu0 0.0
    %1349 = vmatprep.subr.mxu0 0.0
    %1350 = vmatpush1.xpose.msra.mxu0 0.0
    %1351 = vmatprep.subr.mxu0 0.0
    %1352 = vmatpush1.xpose.msra.mxu0 0.0
    %1353 = vmatprep.subr.mxu0 0.0
    %1354 = vmatpush1.xpose.msra.mxu0 0.0
    %1355 = vmatprep.subr.mxu0 0.0
    %1356 = vmatpush1.xpose.msra.mxu0 0.0
    %1357 = vmatprep.subr.mxu0 0.0
    %1358 = vmatpush1.xpose.msra.mxu0 0.0
    %1359 = vmatprep.subr.mxu0 0.0
    %1360 = vmatpush1.xpose.msra.mxu0 0.0
    %1361 = vmatprep.subr.mxu0 0.0
    %1362 = vmatpush1.xpose.msra.mxu0 0.0
    %1363 = vmatprep.subr.mxu0 0.0
    %1364 = vmatpush1.xpose.msra.mxu0 0.0
    %1365 = vmatprep.subr.mxu0 0.0
    %1366 = vmatpush1.xpose.msra.mxu0 0.0
    %1367 = vmatprep.subr.mxu0 0.0
    %1368 = vmatpush1.xpose.msra.mxu0 0.0
    %1369 = vmatprep.subr.mxu0 0.0
    %1370 = vmatpush1.xpose.msra.mxu0 0.0
    %1371 = vmatprep.subr.mxu0 0.0
    %1372 = vmatpush1.xpose.msra.mxu0 0.0
    %1373 = vmatprep.subr.mxu0 0.0
    %1374 = vmatpush1.xpose.msra.mxu0 0.0
    %1375 = vmatprep.subr.mxu0 0.0
    %1376 = vmatpush1.xpose.msra.mxu0 0.0
    %1377 = vmatprep.mubr.f32.mxu0 0.0
    %1378 = vmatmul.mubr.f32.gmra.mrb[0].mxu0 %v1309
    %v1379 = vpop.f32.mrb[0].mxu0
    %v1380 = vadd.f32 %v36, %v1379
    %v1381 = vpop.f32.mrb[0].mxu0
    %1382 = vdwg.mxu0
    %v1383 = vsel %vm239, %v1302, -inf
    %1384 = vmax.xlane.f32.xlu0 %v1383
    %v1385 = vpop.xlane.xlu0 %1384
    %v1386 = vsel %vm239, %v1380, -inf
    %1387 = vmax.xlane.f32.xlu0 %v1386
    %v1388 = vpop.xlane.xlu0 %1387
    %v1389 = vsub.f32 %v1302, %v1385
    %v1390 = vsub.f32 %v1380, %v1388
    %v1391 = vmul.f32 %v1389, 1.442695
    %v1392 = vpow.pop %v1391
    %v1393 = vmul.f32 %v1390, 1.442695
    %v1394 = vpow.pop %v1393
    %v1395 = vsel %vm239, %v1392, 0.0
    %1396 = vadd.xlane.f32.xlu0 %v1395
    %v1397 = vpop.xlane.xlu0 %1396
    %v1398 = vsel %vm239, %v1394, 0.0
    %1399 = vadd.xlane.f32.xlu0 %v1398
    %v1400 = vpop.xlane.xlu0 %1399
    %v1401 = vrcp.pop %v1397
    %v1402 = vrcp.pop %v1400
    %v1403 = vmul.f32 %v1392, %v1401
    %v1404 = vmul.f32 %v1394, %v1402
    %1405 = vrot.lane.b32.xlu0 %v226, 40
    %v1406 = vpop.permute.xlu0 %1405
    %v1409 = vsel %vm239, %v1403, 0
    %1411 = vmatprep.subr.mxu0 0.0
    %1412 = vmatpush1.msra.mxu0 %v1406
    %1413 = vmatprep.subr.mxu0 0.0
    %1414 = vmatpush1.msra.mxu0 0.0
    %1415 = vmatprep.subr.mxu0 0.0
    %1416 = vmatpush1.msra.mxu0 0.0
    %1417 = vmatprep.subr.mxu0 0.0
    %1418 = vmatpush1.msra.mxu0 0.0
    %1419 = vmatprep.subr.mxu0 0.0
    %1420 = vmatpush1.msra.mxu0 0.0
    %1421 = vmatprep.subr.mxu0 0.0
    %1422 = vmatpush1.msra.mxu0 0.0
    %1423 = vmatprep.subr.mxu0 0.0
    %1424 = vmatpush1.msra.mxu0 0.0
    %1425 = vmatprep.subr.mxu0 0.0
    %1426 = vmatpush1.msra.mxu0 0.0
    %1427 = vmatprep.subr.mxu0 0.0
    %1428 = vmatpush1.msra.mxu0 0.0
    %1429 = vmatprep.subr.mxu0 0.0
    %1430 = vmatpush1.msra.mxu0 0.0
    %1431 = vmatprep.subr.mxu0 0.0
    %1432 = vmatpush1.msra.mxu0 0.0
    %1433 = vmatprep.subr.mxu0 0.0
    %1434 = vmatpush1.msra.mxu0 0.0
    %1435 = vmatprep.subr.mxu0 0.0
    %1436 = vmatpush1.msra.mxu0 0.0
    %1437 = vmatprep.subr.mxu0 0.0
    %1438 = vmatpush1.msra.mxu0 0.0
    %1439 = vmatprep.subr.mxu0 0.0
    %1440 = vmatpush1.msra.mxu0 0.0
    %1441 = vmatprep.subr.mxu0 0.0
    %1442 = vmatpush1.msra.mxu0 0.0
    %1443 = vmatprep.subr.mxu0 0.0
    %1444 = vmatpush1.msra.mxu0 0.0
    %1445 = vmatprep.subr.mxu0 0.0
    %1446 = vmatpush1.msra.mxu0 0.0
    %1447 = vmatprep.subr.mxu0 0.0
    %1448 = vmatpush1.msra.mxu0 0.0
    %1449 = vmatprep.subr.mxu0 0.0
    %1450 = vmatpush1.msra.mxu0 0.0
    %1451 = vmatprep.subr.mxu0 0.0
    %1452 = vmatpush1.msra.mxu0 0.0
    %1453 = vmatprep.subr.mxu0 0.0
    %1454 = vmatpush1.msra.mxu0 0.0
    %1455 = vmatprep.subr.mxu0 0.0
    %1456 = vmatpush1.msra.mxu0 0.0
    %1457 = vmatprep.subr.mxu0 0.0
    %1458 = vmatpush1.msra.mxu0 0.0
    %1459 = vmatprep.subr.mxu0 0.0
    %1460 = vmatpush1.msra.mxu0 0.0
    %1461 = vmatprep.subr.mxu0 0.0
    %1462 = vmatpush1.msra.mxu0 0.0
    %1463 = vmatprep.subr.mxu0 0.0
    %1464 = vmatpush1.msra.mxu0 0.0
    %1465 = vmatprep.subr.mxu0 0.0
    %1466 = vmatpush1.msra.mxu0 0.0
    %1467 = vmatprep.subr.mxu0 0.0
    %1468 = vmatpush1.msra.mxu0 0.0
    %1469 = vmatprep.subr.mxu0 0.0
    %1470 = vmatpush1.msra.mxu0 0.0
    %1471 = vmatprep.subr.mxu0 0.0
    %1472 = vmatpush1.msra.mxu0 0.0
    %1473 = vmatprep.subr.mxu0 0.0
    %1474 = vmatpush1.msra.mxu0 0.0
    %1475 = vmatprep.mubr.f32.mxu0 0.0
    %1476 = vmatmul.mubr.f32.gmra.mrb[0].mxu0 %v1409
    %v1477 = vpop.f32.mrb[0].mxu0
    %v1478 = vadd.f32 0.0, %v1477
    %v1479 = vpop.f32.mrb[0].mxu0
    %1480 = vdwg.mxu0
    %1481 = vrot.lane.b32.xlu0 %v231, 40
    %v1482 = vpop.permute.xlu0 %1481
    %v1485 = vsel %vm239, %v1404, 0
    %1487 = vmatprep.subr.mxu0 0.0
    %1488 = vmatpush1.msra.mxu0 %v1482
    %1489 = vmatprep.subr.mxu0 0.0
    %1490 = vmatpush1.msra.mxu0 0.0
    %1491 = vmatprep.subr.mxu0 0.0
    %1492 = vmatpush1.msra.mxu0 0.0
    %1493 = vmatprep.subr.mxu0 0.0
    %1494 = vmatpush1.msra.mxu0 0.0
    %1495 = vmatprep.subr.mxu0 0.0
    %1496 = vmatpush1.msra.mxu0 0.0
    %1497 = vmatprep.subr.mxu0 0.0
    %1498 = vmatpush1.msra.mxu0 0.0
    %1499 = vmatprep.subr.mxu0 0.0
    %1500 = vmatpush1.msra.mxu0 0.0
    %1501 = vmatprep.subr.mxu0 0.0
    %1502 = vmatpush1.msra.mxu0 0.0
    %1503 = vmatprep.subr.mxu0 0.0
    %1504 = vmatpush1.msra.mxu0 0.0
    %1505 = vmatprep.subr.mxu0 0.0
    %1506 = vmatpush1.msra.mxu0 0.0
    %1507 = vmatprep.subr.mxu0 0.0
    %1508 = vmatpush1.msra.mxu0 0.0
    %1509 = vmatprep.subr.mxu0 0.0
    %1510 = vmatpush1.msra.mxu0 0.0
    %1511 = vmatprep.subr.mxu0 0.0
    %1512 = vmatpush1.msra.mxu0 0.0
    %1513 = vmatprep.subr.mxu0 0.0
    %1514 = vmatpush1.msra.mxu0 0.0
    %1515 = vmatprep.subr.mxu0 0.0
    %1516 = vmatpush1.msra.mxu0 0.0
    %1517 = vmatprep.subr.mxu0 0.0
    %1518 = vmatpush1.msra.mxu0 0.0
    %1519 = vmatprep.subr.mxu0 0.0
    %1520 = vmatpush1.msra.mxu0 0.0
    %1521 = vmatprep.subr.mxu0 0.0
    %1522 = vmatpush1.msra.mxu0 0.0
    %1523 = vmatprep.subr.mxu0 0.0
    %1524 = vmatpush1.msra.mxu0 0.0
    %1525 = vmatprep.subr.mxu0 0.0
    %1526 = vmatpush1.msra.mxu0 0.0
    %1527 = vmatprep.subr.mxu0 0.0
    %1528 = vmatpush1.msra.mxu0 0.0
    %1529 = vmatprep.subr.mxu0 0.0
    %1530 = vmatpush1.msra.mxu0 0.0
    %1531 = vmatprep.subr.mxu0 0.0
    %1532 = vmatpush1.msra.mxu0 0.0
    %1533 = vmatprep.subr.mxu0 0.0
    %1534 = vmatpush1.msra.mxu0 0.0
    %1535 = vmatprep.subr.mxu0 0.0
    %1536 = vmatpush1.msra.mxu0 0.0
    %1537 = vmatprep.subr.mxu0 0.0
    %1538 = vmatpush1.msra.mxu0 0.0
    %1539 = vmatprep.subr.mxu0 0.0
    %1540 = vmatpush1.msra.mxu0 0.0
    %1541 = vmatprep.subr.mxu0 0.0
    %1542 = vmatpush1.msra.mxu0 0.0
    %1543 = vmatprep.subr.mxu0 0.0
    %1544 = vmatpush1.msra.mxu0 0.0
    %1545 = vmatprep.subr.mxu0 0.0
    %1546 = vmatpush1.msra.mxu0 0.0
    %1547 = vmatprep.subr.mxu0 0.0
    %1548 = vmatpush1.msra.mxu0 0.0
    %1549 = vmatprep.subr.mxu0 0.0
    %1550 = vmatpush1.msra.mxu0 0.0
    %1551 = vmatprep.mubr.f32.mxu0 0.0
    %1552 = vmatmul.mubr.f32.gmra.mrb[0].mxu0 %v1485
    %v1553 = vpop.f32.mrb[0].mxu0
    %v1554 = vadd.f32 0.0, %v1553
    %v1555 = vpop.f32.mrb[0].mxu0
    %1556 = vdwg.mxu0
    %1559 = vrot.lane.b32.xlu0 %v818, 8
    %v1560 = vpop.permute.xlu0 %1559
    %1561 = vrot.lane.b32.xlu0 %v894, 8
    %v1562 = vpop.permute.xlu0 %1561
    %1567 = vrot.lane.b32.xlu0 %v1148, 16
    %v1568 = vpop.permute.xlu0 %1567
    %1569 = vrot.lane.b32.xlu0 %v1224, 16
    %v1570 = vpop.permute.xlu0 %1569
    %1575 = vrot.lane.b32.xlu0 %v1478, 24
    %v1576 = vpop.permute.xlu0 %1575
    %1577 = vrot.lane.b32.xlu0 %v1554, 24
    %v1578 = vpop.permute.xlu0 %1577
    %v1581 = vsel %vm239, %v488, %v1560
    %v1582 = vsel %vm239, %v564, %v1562
    %vm1583 = vcmask 130048
    %v1584 = vsel %vm1583, %v1581, %v1568
    %v1585 = vsel %vm1583, %v1582, %v1570
    %vm1586 = vcmask 195584
    %v1587 = vsel %vm1586, %v1584, %v1576
    %v1588 = vsel %vm1586, %v1585, %v1578
    %v1589 = vld [vmem:[#allocation2 + $0x20] sm:$0xff]
    %v1590 = vld [vmem:[#allocation2 + $0x28] sm:$0xff]
    %v1591 = vld [vmem:[#allocation2 + $0x30] sm:$0xff]
    %v1592 = vld [vmem:[#allocation2 + $0x38] sm:$0xff]
    %v1593 = vld [vmem:[#allocation2 + $0x1e1] sm:$0x1]
    %v1594 = vlaneseq
    %v1595 = vshrl.u32 %v1594, 7
    %v1596 = vsub.s32 0, %v1595
    %v1597 = vrot.slane %v1593, %v1596
    %v1599 = vsel %vm46, %v1587, 0
    %v1602 = vsel %vm46, %v1588, 0
    %1604 = vmatprep.subr.mxu0 0.0
    %1605 = vmatpush1.msra.mxu0 %v1589
    %1606 = vmatprep.subr.mxu0 0.0
    %1607 = vmatpush1.msra.mxu0 %v1590
    %1608 = vmatprep.subr.mxu0 0.0
    %1609 = vmatpush1.msra.mxu0 %v1591
    %1610 = vmatprep.subr.mxu0 0.0
    %1611 = vmatpush1.msra.mxu0 %v1592
    %1612 = vmatprep.subr.mxu0 0.0
    %1613 = vmatpush1.msra.mxu0 0.0
    %1614 = vmatprep.subr.mxu0 0.0
    %1615 = vmatpush1.msra.mxu0 0.0
    %1616 = vmatprep.subr.mxu0 0.0
    %1617 = vmatpush1.msra.mxu0 0.0
    %1618 = vmatprep.subr.mxu0 0.0
    %1619 = vmatpush1.msra.mxu0 0.0
    %1620 = vmatprep.subr.mxu0 0.0
    %1621 = vmatpush1.msra.mxu0 0.0
    %1622 = vmatprep.subr.mxu0 0.0
    %1623 = vmatpush1.msra.mxu0 0.0
    %1624 = vmatprep.subr.mxu0 0.0
    %1625 = vmatpush1.msra.mxu0 0.0
    %1626 = vmatprep.subr.mxu0 0.0
    %1627 = vmatpush1.msra.mxu0 0.0
    %1628 = vmatprep.subr.mxu0 0.0
    %1629 = vmatpush1.msra.mxu0 0.0
    %1630 = vmatprep.subr.mxu0 0.0
    %1631 = vmatpush1.msra.mxu0 0.0
    %1632 = vmatprep.subr.mxu0 0.0
    %1633 = vmatpush1.msra.mxu0 0.0
    %1634 = vmatprep.subr.mxu0 0.0
    %1635 = vmatpush1.msra.mxu0 0.0
    %1636 = vmatprep.subr.mxu0 0.0
    %1637 = vmatpush1.msra.mxu0 0.0
    %1638 = vmatprep.subr.mxu0 0.0
    %1639 = vmatpush1.msra.mxu0 0.0
    %1640 = vmatprep.subr.mxu0 0.0
    %1641 = vmatpush1.msra.mxu0 0.0
    %1642 = vmatprep.subr.mxu0 0.0
    %1643 = vmatpush1.msra.mxu0 0.0
    %1644 = vmatprep.subr.mxu0 0.0
    %1645 = vmatpush1.msra.mxu0 0.0
    %1646 = vmatprep.subr.mxu0 0.0
    %1647 = vmatpush1.msra.mxu0 0.0
    %1648 = vmatprep.subr.mxu0 0.0
    %1649 = vmatpush1.msra.mxu0 0.0
    %1650 = vmatprep.subr.mxu0 0.0
    %1651 = vmatpush1.msra.mxu0 0.0
    %1652 = vmatprep.subr.mxu0 0.0
    %1653 = vmatpush1.msra.mxu0 0.0
    %1654 = vmatprep.subr.mxu0 0.0
    %1655 = vmatpush1.msra.mxu0 0.0
    %1656 = vmatprep.subr.mxu0 0.0
    %1657 = vmatpush1.msra.mxu0 0.0
    %1658 = vmatprep.subr.mxu0 0.0
    %1659 = vmatpush1.msra.mxu0 0.0
    %1660 = vmatprep.subr.mxu0 0.0
    %1661 = vmatpush1.msra.mxu0 0.0
    %1662 = vmatprep.subr.mxu0 0.0
    %1663 = vmatpush1.msra.mxu0 0.0
    %1664 = vmatprep.subr.mxu0 0.0
    %1665 = vmatpush1.msra.mxu0 0.0
    %1666 = vmatprep.subr.mxu0 0.0
    %1667 = vmatpush1.msra.mxu0 0.0
    %1668 = vmatprep.mubr.f32.mxu0 0.0
    %1669 = vmatmul.mubr.f32.gmra.mrb[0].mxu0 %v1599
    %v1670 = vpop.f32.mrb[0].mxu0
    %v1671 = vadd.f32 %v1597, %v1670
    %v1672 = vpop.f32.mrb[0].mxu0
    %1673 = vmatprep.mubr.f32.mxu0 0.0
    %1674 = vmatmul.mubr.f32.gmra.mrb[0].mxu0 %v1602
    %v1675 = vpop.f32.mrb[0].mxu0
    %v1676 = vadd.f32 %v1597, %v1675
    %v1677 = vpop.f32.mrb[0].mxu0
    %1678 = vdwg.mxu0
    %v1679 = vadd.f32 %v1671, %v29
    %v1680 = vadd.f32 %v1676, %v30
    %v1681 = vld [vmem:[#allocation2 + $0x1e2] sm:$0x1]
    %v1682 = vld [vmem:[#allocation2 + $0x1e3] sm:$0x1]
    %v1683 = vsel %vm46, %v1679, 0.0
    %1684 = vadd.xlane.f32.xlu0 %v1683
    %v1685 = vpop.xlane.xlu0 %1684
    %v1686 = vsel %vm46, %v1680, 0.0
    %1687 = vadd.xlane.f32.xlu0 %v1686
    %v1688 = vpop.xlane.xlu0 %1687
    %v1689 = vrcp.pop 32.0
    %v1690 = vmul.f32 %v1685, %v1689
    %v1691 = vmul.f32 %v1688, %v1689
    %v1692 = vsub.f32 %v1679, %v1690
    %v1693 = vsub.f32 %v1680, %v1691
    %v1694 = vmul.f32 %v1692, %v1692
    %v1695 = vmul.f32 %v1693, %v1693
    %v1696 = vsel %vm46, %v1694, 0.0
    %1697 = vadd.xlane.f32.xlu0 %v1696
    %v1698 = vpop.xlane.xlu0 %1697
    %v1699 = vsel %vm46, %v1695, 0.0
    %1700 = vadd.xlane.f32.xlu0 %v1699
    %v1701 = vpop.xlane.xlu0 %1700
    %v1702 = vmul.f32 %v1698, %v1689
    %v1703 = vmul.f32 %v1701, %v1689
    %v1704 = vadd.f32 %v1702, 1e-05
    %v1705 = vadd.f32 %v1703, 1e-05
    %v1706 = vrsqrt.pop %v1704
    %v1707 = vrsqrt.pop %v1705
    %v1708 = vmul.f32 %v1692, %v1706
    %v1709 = vmul.f32 %v1693, %v1707
    %v1710 = vlaneseq
    %v1711 = vshrl.u32 %v1710, 7
    %v1712 = vsub.s32 0, %v1711
    %v1713 = vrot.slane %v1681, %v1712
    %v1714 = vmul.f32 %v1708, %v1713
    %v1715 = vmul.f32 %v1709, %v1713
    %v1716 = vlaneseq
    %v1717 = vshrl.u32 %v1716, 7
    %v1718 = vsub.s32 0, %v1717
    %v1719 = vrot.slane %v1682, %v1718
    %v1720 = vadd.f32 %v1714, %v1719
    %v1721 = vadd.f32 %v1715, %v1719
    %v1722 = vld [vmem:[#allocation2 + $0x40] sm:$0xff]
    %v1723 = vld [vmem:[#allocation2 + $0x48] sm:$0xff]
    %v1724 = vld [vmem:[#allocation2 + $0x50] sm:$0xff]
    %v1725 = vld [vmem:[#allocation2 + $0x58] sm:$0xff]
    %v1726 = vld [vmem:[#allocation2 + $0x1e4] sm:$0x1]
    %v1727 = vlaneseq
    %v1728 = vshrl.u32 %v1727, 7
    %v1729 = vsub.s32 0, %v1728
    %v1730 = vrot.slane %v1726, %v1729
    %v1732 = vsel %vm46, %v1720, 0
    %v1735 = vsel %vm46, %v1721, 0
    %1737 = vmatprep.subr.mxu0 0.0
    %1738 = vmatpush1.msra.mxu0 %v1722
    %1739 = vmatprep.subr.mxu0 0.0
    %1740 = vmatpush1.msra.mxu0 %v1723
    %1741 = vmatprep.subr.mxu0 0.0
    %1742 = vmatpush1.msra.mxu0 %v1724
    %1743 = vmatprep.subr.mxu0 0.0
    %1744 = vmatpush1.msra.mxu0 %v1725
    %1745 = vmatprep.subr.mxu0 0.0
    %1746 = vmatpush1.msra.mxu0 0.0
    %1747 = vmatprep.subr.mxu0 0.0
    %1748 = vmatpush1.msra.mxu0 0.0
    %1749 = vmatprep.subr.mxu0 0.0
    %1750 = vmatpush1.msra.mxu0 0.0
    %1751 = vmatprep.subr.mxu0 0.0
    %1752 = vmatpush1.msra.mxu0 0.0
    %1753 = vmatprep.subr.mxu0 0.0
    %1754 = vmatpush1.msra.mxu0 0.0
    %1755 = vmatprep.subr.mxu0 0.0
    %1756 = vmatpush1.msra.mxu0 0.0
    %1757 = vmatprep.subr.mxu0 0.0
    %1758 = vmatpush1.msra.mxu0 0.0
    %1759 = vmatprep.subr.mxu0 0.0
    %1760 = vmatpush1.msra.mxu0 0.0
    %1761 = vmatprep.subr.mxu0 0.0
    %1762 = vmatpush1.msra.mxu0 0.0
    %1763 = vmatprep.subr.mxu0 0.0
    %1764 = vmatpush1.msra.mxu0 0.0
    %1765 = vmatprep.subr.mxu0 0.0
    %1766 = vmatpush1.msra.mxu0 0.0
    %1767 = vmatprep.subr.mxu0 0.0
    %1768 = vmatpush1.msra.mxu0 0.0
    %1769 = vmatprep.subr.mxu0 0.0
    %1770 = vmatpush1.msra.mxu0 0.0
    %1771 = vmatprep.subr.mxu0 0.0
    %1772 = vmatpush1.msra.mxu0 0.0
    %1773 = vmatprep.subr.mxu0 0.0
    %1774 = vmatpush1.msra.mxu0 0.0
    %1775 = vmatprep.subr.mxu0 0.0
    %1776 = vmatpush1.msra.mxu0 0.0
    %1777 = vmatprep.subr.mxu0 0.0
    %1778 = vmatpush1.msra.mxu0 0.0
    %1779 = vmatprep.subr.mxu0 0.0
    %1780 = vmatpush1.msra.mxu0 0.0
    %1781 = vmatprep.subr.mxu0 0.0
    %1782 = vmatpush1.msra.mxu0 0.0
    %1783 = vmatprep.subr.mxu0 0.0
    %1784 = vmatpush1.msra.mxu0 0.0
    %1785 = vmatprep.subr.mxu0 0.0
    %1786 = vmatpush1.msra.mxu0 0.0
    %1787 = vmatprep.subr.mxu0 0.0
    %1788 = vmatpush1.msra.mxu0 0.0
    %1789 = vmatprep.subr.mxu0 0.0
    %1790 = vmatpush1.msra.mxu0 0.0
    %1791 = vmatprep.subr.mxu0 0.0
    %1792 = vmatpush1.msra.mxu0 0.0
    %1793 = vmatprep.subr.mxu0 0.0
    %1794 = vmatpush1.msra.mxu0 0.0
    %1795 = vmatprep.subr.mxu0 0.0
    %1796 = vmatpush1.msra.mxu0 0.0
    %1797 = vmatprep.subr.mxu0 0.0
    %1798 = vmatpush1.msra.mxu0 0.0
    %1799 = vmatprep.subr.mxu0 0.0
    %1800 = vmatpush1.msra.mxu0 0.0
    %1801 = vmatprep.mubr.f32.mxu0 0.0
    %1802 = vmatmul.mubr.f32.gmra.mrb[0].mxu0 %v1732
    %v1803 = vpop.f32.mrb[0].mxu0
    %v1804 = vadd.f32 %v1730, %v1803
    %v1805 = vpop.f32.mrb[0].mxu0
    %1806 = vmatprep.mubr.f32.mxu0 0.0
    %1807 = vmatmul.mubr.f32.gmra.mrb[0].mxu0 %v1735
    %v1808 = vpop.f32.mrb[0].mxu0
    %v1809 = vadd.f32 %v1730, %v1808
    %v1810 = vpop.f32.mrb[0].mxu0
    %1811 = vdwg.mxu0
    %v1812 = vmul.f32 %v1804, 0.35355338
    %v1813 = vmul.f32 %v1809, 0.35355338
    %1815 = vrot.lane.b32.xlu0 %v35, 120
    %v1816 = vpop.permute.xlu0 %1815
    %v1819 = vsel %vm239, %v1812, 0
    %v1822 = vsel %vm239, %v126, 0
    %v1825 = vsel %vm239, %v131, 0
    %1827 = vmatprep.subr.mxu0 0.0
    %1828 = vmatpush1.xpose.msra.mxu0 %v1822
    %1829 = vmatprep.subr.mxu0 0.0
    %1830 = vmatpush1.xpose.msra.mxu0 %v1825
    %1831 = vmatprep.subr.mxu0 0.0
    %1832 = vmatpush1.xpose.msra.mxu0 0.0
    %1833 = vmatprep.subr.mxu0 0.0
    %1834 = vmatpush1.xpose.msra.mxu0 0.0
    %1835 = vmatprep.subr.mxu0 0.0
    %1836 = vmatpush1.xpose.msra.mxu0 0.0
    %1837 = vmatprep.subr.mxu0 0.0
    %1838 = vmatpush1.xpose.msra.mxu0 0.0
    %1839 = vmatprep.subr.mxu0 0.0
    %1840 = vmatpush1.xpose.msra.mxu0 0.0
    %1841 = vmatprep.subr.mxu0 0.0
    %1842 = vmatpush1.xpose.msra.mxu0 0.0
    %1843 = vmatprep.subr.mxu0 0.0
    %1844 = vmatpush1.xpose.msra.mxu0 0.0
    %1845 = vmatprep.subr.mxu0 0.0
    %1846 = vmatpush1.xpose.msra.mxu0 0.0
    %1847 = vmatprep.subr.mxu0 0.0
    %1848 = vmatpush1.xpose.msra.mxu0 0.0
    %1849 = vmatprep.subr.mxu0 0.0
    %1850 = vmatpush1.xpose.msra.mxu0 0.0
    %1851 = vmatprep.subr.mxu0 0.0
    %1852 = vmatpush1.xpose.msra.mxu0 0.0
    %1853 = vmatprep.subr.mxu0 0.0
    %1854 = vmatpush1.xpose.msra.mxu0 0.0
    %1855 = vmatprep.subr.mxu0 0.0
    %1856 = vmatpush1.xpose.msra.mxu0 0.0
    %1857 = vmatprep.subr.mxu0 0.0
    %1858 = vmatpush1.xpose.msra.mxu0 0.0
    %1859 = vmatprep.subr.mxu0 0.0
    %1860 = vmatpush1.xpose.msra.mxu0 0.0
    %1861 = vmatprep.subr.mxu0 0.0
    %1862 = vmatpush1.xpose.msra.mxu0 0.0
    %1863 = vmatprep.subr.mxu0 0.0
    %1864 = vmatpush1.xpose.msra.mxu0 0.0
    %1865 = vmatprep.subr.mxu0 0.0
    %1866 = vmatpush1.xpose.msra.mxu0 0.0
    %1867 = vmatprep.subr.mxu0 0.0
    %1868 = vmatpush1.xpose.msra.mxu0 0.0
    %1869 = vmatprep.subr.mxu0 0.0
    %1870 = vmatpush1.xpose.msra.mxu0 0.0
    %1871 = vmatprep.subr.mxu0 0.0
    %1872 = vmatpush1.xpose.msra.mxu0 0.0
    %1873 = vmatprep.subr.mxu0 0.0
    %1874 = vmatpush1.xpose.msra.mxu0 0.0
    %1875 = vmatprep.subr.mxu0 0.0
    %1876 = vmatpush1.xpose.msra.mxu0 0.0
    %1877 = vmatprep.subr.mxu0 0.0
    %1878 = vmatpush1.xpose.msra.mxu0 0.0
    %1879 = vmatprep.subr.mxu0 0.0
    %1880 = vmatpush1.xpose.msra.mxu0 0.0
    %1881 = vmatprep.subr.mxu0 0.0
    %1882 = vmatpush1.xpose.msra.mxu0 0.0
    %1883 = vmatprep.subr.mxu0 0.0
    %1884 = vmatpush1.xpose.msra.mxu0 0.0
    %1885 = vmatprep.subr.mxu0 0.0
    %1886 = vmatpush1.xpose.msra.mxu0 0.0
    %1887 = vmatprep.subr.mxu0 0.0
    %1888 = vmatpush1.xpose.msra.mxu0 0.0
    %1889 = vmatprep.subr.mxu0 0.0
    %1890 = vmatpush1.xpose.msra.mxu0 0.0
    %1891 = vmatprep.mubr.f32.mxu0 0.0
    %1892 = vmatmul.mubr.f32.gmra.mrb[0].mxu0 %v1819
    %v1893 = vpop.f32.mrb[0].mxu0
    %v1894 = vadd.f32 %v1816, %v1893
    %v1895 = vpop.f32.mrb[0].mxu0
    %1896 = vdwg.mxu0
    %1898 = vrot.lane.b32.xlu0 %v36, 120
    %v1899 = vpop.permute.xlu0 %1898
    %v1902 = vsel %vm239, %v1813, 0
    %v1905 = vsel %vm239, %v136, 0
    %v1908 = vsel %vm239, %v141, 0
    %1910 = vmatprep.subr.mxu0 0.0
    %1911 = vmatpush1.xpose.msra.mxu0 %v1905
    %1912 = vmatprep.subr.mxu0 0.0
    %1913 = vmatpush1.xpose.msra.mxu0 %v1908
    %1914 = vmatprep.subr.mxu0 0.0
    %1915 = vmatpush1.xpose.msra.mxu0 0.0
    %1916 = vmatprep.subr.mxu0 0.0
    %1917 = vmatpush1.xpose.msra.mxu0 0.0
    %1918 = vmatprep.subr.mxu0 0.0
    %1919 = vmatpush1.xpose.msra.mxu0 0.0
    %1920 = vmatprep.subr.mxu0 0.0
    %1921 = vmatpush1.xpose.msra.mxu0 0.0
    %1922 = vmatprep.subr.mxu0 0.0
    %1923 = vmatpush1.xpose.msra.mxu0 0.0
    %1924 = vmatprep.subr.mxu0 0.0
    %1925 = vmatpush1.xpose.msra.mxu0 0.0
    %1926 = vmatprep.subr.mxu0 0.0
    %1927 = vmatpush1.xpose.msra.mxu0 0.0
    %1928 = vmatprep.subr.mxu0 0.0
    %1929 = vmatpush1.xpose.msra.mxu0 0.0
    %1930 = vmatprep.subr.mxu0 0.0
    %1931 = vmatpush1.xpose.msra.mxu0 0.0
    %1932 = vmatprep.subr.mxu0 0.0
    %1933 = vmatpush1.xpose.msra.mxu0 0.0
    %1934 = vmatprep.subr.mxu0 0.0
    %1935 = vmatpush1.xpose.msra.mxu0 0.0
    %1936 = vmatprep.subr.mxu0 0.0
    %1937 = vmatpush1.xpose.msra.mxu0 0.0
    %1938 = vmatprep.subr.mxu0 0.0
    %1939 = vmatpush1.xpose.msra.mxu0 0.0
    %1940 = vmatprep.subr.mxu0 0.0
    %1941 = vmatpush1.xpose.msra.mxu0 0.0
    %1942 = vmatprep.subr.mxu0 0.0
    %1943 = vmatpush1.xpose.msra.mxu0 0.0
    %1944 = vmatprep.subr.mxu0 0.0
    %1945 = vmatpush1.xpose.msra.mxu0 0.0
    %1946 = vmatprep.subr.mxu0 0.0
    %1947 = vmatpush1.xpose.msra.mxu0 0.0
    %1948 = vmatprep.subr.mxu0 0.0
    %1949 = vmatpush1.xpose.msra.mxu0 0.0
    %1950 = vmatprep.subr.mxu0 0.0
    %1951 = vmatpush1.xpose.msra.mxu0 0.0
    %1952 = vmatprep.subr.mxu0 0.0
    %1953 = vmatpush1.xpose.msra.mxu0 0.0
    %1954 = vmatprep.subr.mxu0 0.0
    %1955 = vmatpush1.xpose.msra.mxu0 0.0
    %1956 = vmatprep.subr.mxu0 0.0
    %1957 = vmatpush1.xpose.msra.mxu0 0.0
    %1958 = vmatprep.subr.mxu0 0.0
    %1959 = vmatpush1.xpose.msra.mxu0 0.0
    %1960 = vmatprep.subr.mxu0 0.0
    %1961 = vmatpush1.xpose.msra.mxu0 0.0
    %1962 = vmatprep.subr.mxu0 0.0
    %1963 = vmatpush1.xpose.msra.mxu0 0.0
    %1964 = vmatprep.subr.mxu0 0.0
    %1965 = vmatpush1.xpose.msra.mxu0 0.0
    %1966 = vmatprep.subr.mxu0 0.0
    %1967 = vmatpush1.xpose.msra.mxu0 0.0
    %1968 = vmatprep.subr.mxu0 0.0
    %1969 = vmatpush1.xpose.msra.mxu0 0.0
    %1970 = vmatprep.subr.mxu0 0.0
    %1971 = vmatpush1.xpose.msra.mxu0 0.0
    %1972 = vmatprep.subr.mxu0 0.0
    %1973 = vmatpush1.xpose.msra.mxu0 0.0
    %1974 = vmatprep.mubr.f32.mxu0 0.0
    %1975 = vmatmul.mubr.f32.gmra.mrb[0].mxu0 %v1902
    %v1976 = vpop.f32.mrb[0].mxu0
    %v1977 = vadd.f32 %v1899, %v1976
    %v1978 = vpop.f32.mrb[0].mxu0
    %1979 = vdwg.mxu0
    %v1980 = vsel %vm1583, %v1894, -inf
    %1981 = vmax.xlane.f32.xlu0 %v1980
    %v1982 = vpop.xlane.xlu0 %1981
    %v1983 = vsel %vm1583, %v1977, -inf
    %1984 = vmax.xlane.f32.xlu0 %v1983
    %v1985 = vpop.xlane.xlu0 %1984
    %v1986 = vsub.f32 %v1894, %v1982
    %v1987 = vsub.f32 %v1977, %v1985
    %v1988 = vmul.f32 %v1986, 1.442695
    %v1989 = vpow.pop %v1988
    %v1990 = vmul.f32 %v1987, 1.442695
    %v1991 = vpow.pop %v1990
    %v1992 = vsel %vm1583, %v1989, 0.0
    %1993 = vadd.xlane.f32.xlu0 %v1992
    %v1994 = vpop.xlane.xlu0 %1993
    %v1995 = vsel %vm1583, %v1991, 0.0
    %1996 = vadd.xlane.f32.xlu0 %v1995
    %v1997 = vpop.xlane.xlu0 %1996
    %v1998 = vrcp.pop %v1994
    %v1999 = vrcp.pop %v1997
    %v2000 = vmul.f32 %v1989, %v1998
    %v2001 = vmul.f32 %v1991, %v1999
    %2002 = vrot.lane.b32.xlu0 %v126, 96
    %v2003 = vpop.permute.xlu0 %2002
    %2004 = vrot.lane.b32.xlu0 %v131, 96
    %v2005 = vpop.permute.xlu0 %2004
    %v2009 = vsel %vm1583, %v2000, 0
    %2011 = vmatprep.subr.mxu0 0.0
    %2012 = vmatpush1.msra.mxu0 %v2003
    %2013 = vmatprep.subr.mxu0 0.0
    %2014 = vmatpush1.msra.mxu0 %v2005
    %2015 = vmatprep.subr.mxu0 0.0
    %2016 = vmatpush1.msra.mxu0 0.0
    %2017 = vmatprep.subr.mxu0 0.0
    %2018 = vmatpush1.msra.mxu0 0.0
    %2019 = vmatprep.subr.mxu0 0.0
    %2020 = vmatpush1.msra.mxu0 0.0
    %2021 = vmatprep.subr.mxu0 0.0
    %2022 = vmatpush1.msra.mxu0 0.0
    %2023 = vmatprep.subr.mxu0 0.0
    %2024 = vmatpush1.msra.mxu0 0.0
    %2025 = vmatprep.subr.mxu0 0.0
    %2026 = vmatpush1.msra.mxu0 0.0
    %2027 = vmatprep.subr.mxu0 0.0
    %2028 = vmatpush1.msra.mxu0 0.0
    %2029 = vmatprep.subr.mxu0 0.0
    %2030 = vmatpush1.msra.mxu0 0.0
    %2031 = vmatprep.subr.mxu0 0.0
    %2032 = vmatpush1.msra.mxu0 0.0
    %2033 = vmatprep.subr.mxu0 0.0
    %2034 = vmatpush1.msra.mxu0 0.0
    %2035 = vmatprep.subr.mxu0 0.0
    %2036 = vmatpush1.msra.mxu0 0.0
    %2037 = vmatprep.subr.mxu0 0.0
    %2038 = vmatpush1.msra.mxu0 0.0
    %2039 = vmatprep.subr.mxu0 0.0
    %2040 = vmatpush1.msra.mxu0 0.0
    %2041 = vmatprep.subr.mxu0 0.0
    %2042 = vmatpush1.msra.mxu0 0.0
    %2043 = vmatprep.subr.mxu0 0.0
    %2044 = vmatpush1.msra.mxu0 0.0
    %2045 = vmatprep.subr.mxu0 0.0
    %2046 = vmatpush1.msra.mxu0 0.0
    %2047 = vmatprep.subr.mxu0 0.0
    %2048 = vmatpush1.msra.mxu0 0.0
    %2049 = vmatprep.subr.mxu0 0.0
    %2050 = vmatpush1.msra.mxu0 0.0
    %2051 = vmatprep.subr.mxu0 0.0
    %2052 = vmatpush1.msra.mxu0 0.0
    %2053 = vmatprep.subr.mxu0 0.0
    %2054 = vmatpush1.msra.mxu0 0.0
    %2055 = vmatprep.subr.mxu0 0.0
    %2056 = vmatpush1.msra.mxu0 0.0
    %2057 = vmatprep.subr.mxu0 0.0
    %2058 = vmatpush1.msra.mxu0 0.0
    %2059 = vmatprep.subr.mxu0 0.0
    %2060 = vmatpush1.msra.mxu0 0.0
    %2061 = vmatprep.subr.mxu0 0.0
    %2062 = vmatpush1.msra.mxu0 0.0
    %2063 = vmatprep.subr.mxu0 0.0
    %2064 = vmatpush1.msra.mxu0 0.0
    %2065 = vmatprep.subr.mxu0 0.0
    %2066 = vmatpush1.msra.mxu0 0.0
    %2067 = vmatprep.subr.mxu0 0.0
    %2068 = vmatpush1.msra.mxu0 0.0
    %2069 = vmatprep.subr.mxu0 0.0
    %2070 = vmatpush1.msra.mxu0 0.0
    %2071 = vmatprep.subr.mxu0 0.0
    %2072 = vmatpush1.msra.mxu0 0.0
    %2073 = vmatprep.subr.mxu0 0.0
    %2074 = vmatpush1.msra.mxu0 0.0
    %2075 = vmatprep.mubr.f32.mxu0 0.0
    %2076 = vmatmul.mubr.f32.gmra.mrb[0].mxu0 %v2009
    %v2077 = vpop.f32.mrb[0].mxu0
    %v2078 = vadd.f32 0.0, %v2077
    %v2079 = vpop.f32.mrb[0].mxu0
    %2080 = vdwg.mxu0
    %2081 = vrot.lane.b32.xlu0 %v136, 96
    %v2082 = vpop.permute.xlu0 %2081
    %2083 = vrot.lane.b32.xlu0 %v141, 96
    %v2084 = vpop.permute.xlu0 %2083
    %v2088 = vsel %vm1583, %v2001, 0
    %2090 = vmatprep.subr.mxu0 0.0
    %2091 = vmatpush1.msra.mxu0 %v2082
    %2092 = vmatprep.subr.mxu0 0.0
    %2093 = vmatpush1.msra.mxu0 %v2084
    %2094 = vmatprep.subr.mxu0 0.0
    %2095 = vmatpush1.msra.mxu0 0.0
    %2096 = vmatprep.subr.mxu0 0.0
    %2097 = vmatpush1.msra.mxu0 0.0
    %2098 = vmatprep.subr.mxu0 0.0
    %2099 = vmatpush1.msra.mxu0 0.0
    %2100 = vmatprep.subr.mxu0 0.0
    %2101 = vmatpush1.msra.mxu0 0.0
    %2102 = vmatprep.subr.mxu0 0.0
    %2103 = vmatpush1.msra.mxu0 0.0
    %2104 = vmatprep.subr.mxu0 0.0
    %2105 = vmatpush1.msra.mxu0 0.0
    %2106 = vmatprep.subr.mxu0 0.0
    %2107 = vmatpush1.msra.mxu0 0.0
    %2108 = vmatprep.subr.mxu0 0.0
    %2109 = vmatpush1.msra.mxu0 0.0
    %2110 = vmatprep.subr.mxu0 0.0
    %2111 = vmatpush1.msra.mxu0 0.0
    %2112 = vmatprep.subr.mxu0 0.0
    %2113 = vmatpush1.msra.mxu0 0.0
    %2114 = vmatprep.subr.mxu0 0.0
    %2115 = vmatpush1.msra.mxu0 0.0
    %2116 = vmatprep.subr.mxu0 0.0
    %2117 = vmatpush1.msra.mxu0 0.0
    %2118 = vmatprep.subr.mxu0 0.0
    %2119 = vmatpush1.msra.mxu0 0.0
    %2120 = vmatprep.subr.mxu0 0.0
    %2121 = vmatpush1.msra.mxu0 0.0
    %2122 = vmatprep.subr.mxu0 0.0
    %2123 = vmatpush1.msra.mxu0 0.0
    %2124 = vmatprep.subr.mxu0 0.0
    %2125 = vmatpush1.msra.mxu0 0.0
    %2126 = vmatprep.subr.mxu0 0.0
    %2127 = vmatpush1.msra.mxu0 0.0
    %2128 = vmatprep.subr.mxu0 0.0
    %2129 = vmatpush1.msra.mxu0 0.0
    %2130 = vmatprep.subr.mxu0 0.0
    %2131 = vmatpush1.msra.mxu0 0.0
    %2132 = vmatprep.subr.mxu0 0.0
    %2133 = vmatpush1.msra.mxu0 0.0
    %2134 = vmatprep.subr.mxu0 0.0
    %2135 = vmatpush1.msra.mxu0 0.0
    %2136 = vmatprep.subr.mxu0 0.0
    %2137 = vmatpush1.msra.mxu0 0.0
    %2138 = vmatprep.subr.mxu0 0.0
    %2139 = vmatpush1.msra.mxu0 0.0
    %2140 = vmatprep.subr.mxu0 0.0
    %2141 = vmatpush1.msra.mxu0 0.0
    %2142 = vmatprep.subr.mxu0 0.0
    %2143 = vmatpush1.msra.mxu0 0.0
    %2144 = vmatprep.subr.mxu0 0.0
    %2145 = vmatpush1.msra.mxu0 0.0
    %2146 = vmatprep.subr.mxu0 0.0
    %2147 = vmatpush1.msra.mxu0 0.0
    %2148 = vmatprep.subr.mxu0 0.0
    %2149 = vmatpush1.msra.mxu0 0.0
    %2150 = vmatprep.subr.mxu0 0.0
    %2151 = vmatpush1.msra.mxu0 0.0
    %2152 = vmatprep.subr.mxu0 0.0
    %2153 = vmatpush1.msra.mxu0 0.0
    %2154 = vmatprep.mubr.f32.mxu0 0.0
    %2155 = vmatmul.mubr.f32.gmra.mrb[0].mxu0 %v2088
    %v2156 = vpop.f32.mrb[0].mxu0
    %v2157 = vadd.f32 0.0, %v2156
    %v2158 = vpop.f32.mrb[0].mxu0
    %2159 = vdwg.mxu0
    %2160 = vrot.lane.b32.xlu0 %v1812, 120
    %v2161 = vpop.permute.xlu0 %2160
    %2162 = vrot.lane.b32.xlu0 %v126, 120
    %v2163 = vpop.permute.xlu0 %2162
    %2164 = vrot.lane.b32.xlu0 %v131, 120
    %v2165 = vpop.permute.xlu0 %2164
    %v2166 = vsel %vm239, %v2161, 0
    %v2168 = vsel %vm239, %v2163, 0
    %v2170 = vsel %vm239, %v2165, 0
    %2172 = vmatprep.subr.mxu0 0.0
    %2173 = vmatpush1.xpose.msra.mxu0 %v2168
    %2174 = vmatprep.subr.mxu0 0.0
    %2175 = vmatpush1.xpose.msra.mxu0 %v2170
    %2176 = vmatprep.subr.mxu0 0.0
    %2177 = vmatpush1.xpose.msra.mxu0 0.0
    %2178 = vmatprep.subr.mxu0 0.0
    %2179 = vmatpush1.xpose.msra.mxu0 0.0
    %2180 = vmatprep.subr.mxu0 0.0
    %2181 = vmatpush1.xpose.msra.mxu0 0.0
    %2182 = vmatprep.subr.mxu0 0.0
    %2183 = vmatpush1.xpose.msra.mxu0 0.0
    %2184 = vmatprep.subr.mxu0 0.0
    %2185 = vmatpush1.xpose.msra.mxu0 0.0
    %2186 = vmatprep.subr.mxu0 0.0
    %2187 = vmatpush1.xpose.msra.mxu0 0.0
    %2188 = vmatprep.subr.mxu0 0.0
    %2189 = vmatpush1.xpose.msra.mxu0 0.0
    %2190 = vmatprep.subr.mxu0 0.0
    %2191 = vmatpush1.xpose.msra.mxu0 0.0
    %2192 = vmatprep.subr.mxu0 0.0
    %2193 = vmatpush1.xpose.msra.mxu0 0.0
    %2194 = vmatprep.subr.mxu0 0.0
    %2195 = vmatpush1.xpose.msra.mxu0 0.0
    %2196 = vmatprep.subr.mxu0 0.0
    %2197 = vmatpush1.xpose.msra.mxu0 0.0
    %2198 = vmatprep.subr.mxu0 0.0
    %2199 = vmatpush1.xpose.msra.mxu0 0.0
    %2200 = vmatprep.subr.mxu0 0.0
    %2201 = vmatpush1.xpose.msra.mxu0 0.0
    %2202 = vmatprep.subr.mxu0 0.0
    %2203 = vmatpush1.xpose.msra.mxu0 0.0
    %2204 = vmatprep.subr.mxu0 0.0
    %2205 = vmatpush1.xpose.msra.mxu0 0.0
    %2206 = vmatprep.subr.mxu0 0.0
    %2207 = vmatpush1.xpose.msra.mxu0 0.0
    %2208 = vmatprep.subr.mxu0 0.0
    %2209 = vmatpush1.xpose.msra.mxu0 0.0
    %2210 = vmatprep.subr.mxu0 0.0
    %2211 = vmatpush1.xpose.msra.mxu0 0.0
    %2212 = vmatprep.subr.mxu0 0.0
    %2213 = vmatpush1.xpose.msra.mxu0 0.0
    %2214 = vmatprep.subr.mxu0 0.0
    %2215 = vmatpush1.xpose.msra.mxu0 0.0
    %2216 = vmatprep.subr.mxu0 0.0
    %2217 = vmatpush1.xpose.msra.mxu0 0.0
    %2218 = vmatprep.subr.mxu0 0.0
    %2219 = vmatpush1.xpose.msra.mxu0 0.0
    %2220 = vmatprep.subr.mxu0 0.0
    %2221 = vmatpush1.xpose.msra.mxu0 0.0
    %2222 = vmatprep.subr.mxu0 0.0
    %2223 = vmatpush1.xpose.msra.mxu0 0.0
    %2224 = vmatprep.subr.mxu0 0.0
    %2225 = vmatpush1.xpose.msra.mxu0 0.0
    %2226 = vmatprep.subr.mxu0 0.0
    %2227 = vmatpush1.xpose.msra.mxu0 0.0
    %2228 = vmatprep.subr.mxu0 0.0
    %2229 = vmatpush1.xpose.msra.mxu0 0.0
    %2230 = vmatprep.subr.mxu0 0.0
    %2231 = vmatpush1.xpose.msra.mxu0 0.0
    %2232 = vmatprep.subr.mxu0 0.0
    %2233 = vmatpush1.xpose.msra.mxu0 0.0
    %2234 = vmatprep.subr.mxu0 0.0
    %2235 = vmatpush1.xpose.msra.mxu0 0.0
    %2236 = vmatprep.mubr.f32.mxu0 0.0
    %2237 = vmatmul.mubr.f32.gmra.mrb[0].mxu0 %v2166
    %v2238 = vpop.f32.mrb[0].mxu0
    %v2239 = vadd.f32 %v1816, %v2238
    %v2240 = vpop.f32.mrb[0].mxu0
    %2241 = vdwg.mxu0
    %2242 = vrot.lane.b32.xlu0 %v1813, 120
    %v2243 = vpop.permute.xlu0 %2242
    %2244 = vrot.lane.b32.xlu0 %v136, 120
    %v2245 = vpop.permute.xlu0 %2244
    %2246 = vrot.lane.b32.xlu0 %v141, 120
    %v2247 = vpop.permute.xlu0 %2246
    %v2248 = vsel %vm239, %v2243, 0
    %v2250 = vsel %vm239, %v2245, 0
    %v2252 = vsel %vm239, %v2247, 0
    %2254 = vmatprep.subr.mxu0 0.0
    %2255 = vmatpush1.xpose.msra.mxu0 %v2250
    %2256 = vmatprep.subr.mxu0 0.0
    %2257 = vmatpush1.xpose.msra.mxu0 %v2252
    %2258 = vmatprep.subr.mxu0 0.0
    %2259 = vmatpush1.xpose.msra.mxu0 0.0
    %2260 = vmatprep.subr.mxu0 0.0
    %2261 = vmatpush1.xpose.msra.mxu0 0.0
    %2262 = vmatprep.subr.mxu0 0.0
    %2263 = vmatpush1.xpose.msra.mxu0 0.0
    %2264 = vmatprep.subr.mxu0 0.0
    %2265 = vmatpush1.xpose.msra.mxu0 0.0
    %2266 = vmatprep.subr.mxu0 0.0
    %2267 = vmatpush1.xpose.msra.mxu0 0.0
    %2268 = vmatprep.subr.mxu0 0.0
    %2269 = vmatpush1.xpose.msra.mxu0 0.0
    %2270 = vmatprep.subr.mxu0 0.0
    %2271 = vmatpush1.xpose.msra.mxu0 0.0
    %2272 = vmatprep.subr.mxu0 0.0
    %2273 = vmatpush1.xpose.msra.mxu0 0.0
    %2274 = vmatprep.subr.mxu0 0.0
    %2275 = vmatpush1.xpose.msra.mxu0 0.0
    %2276 = vmatprep.subr.mxu0 0.0
    %2277 = vmatpush1.xpose.msra.mxu0 0.0
    %2278 = vmatprep.subr.mxu0 0.0
    %2279 = vmatpush1.xpose.msra.mxu0 0.0
    %2280 = vmatprep.subr.mxu0 0.0
    %2281 = vmatpush1.xpose.msra.mxu0 0.0
    %2282 = vmatprep.subr.mxu0 0.0
    %2283 = vmatpush1.xpose.msra.mxu0 0.0
    %2284 = vmatprep.subr.mxu0 0.0
    %2285 = vmatpush1.xpose.msra.mxu0 0.0
    %2286 = vmatprep.subr.mxu0 0.0
    %2287 = vmatpush1.xpose.msra.mxu0 0.0
    %2288 = vmatprep.subr.mxu0 0.0
    %2289 = vmatpush1.xpose.msra.mxu0 0.0
    %2290 = vmatprep.subr.mxu0 0.0
    %2291 = vmatpush1.xpose.msra.mxu0 0.0
    %2292 = vmatprep.subr.mxu0 0.0
    %2293 = vmatpush1.xpose.msra.mxu0 0.0
    %2294 = vmatprep.subr.mxu0 0.0
    %2295 = vmatpush1.xpose.msra.mxu0 0.0
    %2296 = vmatprep.subr.mxu0 0.0
    %2297 = vmatpush1.xpose.msra.mxu0 0.0
    %2298 = vmatprep.subr.mxu0 0.0
    %2299 = vmatpush1.xpose.msra.mxu0 0.0
    %2300 = vmatprep.subr.mxu0 0.0
    %2301 = vmatpush1.xpose.msra.mxu0 0.0
    %2302 = vmatprep.subr.mxu0 0.0
    %2303 = vmatpush1.xpose.msra.mxu0 0.0
    %2304 = vmatprep.subr.mxu0 0.0
    %2305 = vmatpush1.xpose.msra.mxu0 0.0
    %2306 = vmatprep.subr.mxu0 0.0
    %2307 = vmatpush1.xpose.msra.mxu0 0.0
    %2308 = vmatprep.subr.mxu0 0.0
    %2309 = vmatpush1.xpose.msra.mxu0 0.0
    %2310 = vmatprep.subr.mxu0 0.0
    %2311 = vmatpush1.xpose.msra.mxu0 0.0
    %2312 = vmatprep.subr.mxu0 0.0
    %2313 = vmatpush1.xpose.msra.mxu0 0.0
    %2314 = vmatprep.subr.mxu0 0.0
    %2315 = vmatpush1.xpose.msra.mxu0 0.0
    %2316 = vmatprep.subr.mxu0 0.0
    %2317 = vmatpush1.xpose.msra.mxu0 0.0
    %2318 = vmatprep.mubr.f32.mxu0 0.0
    %2319 = vmatmul.mubr.f32.gmra.mrb[0].mxu0 %v2248
    %v2320 = vpop.f32.mrb[0].mxu0
    %v2321 = vadd.f32 %v1899, %v2320
    %v2322 = vpop.f32.mrb[0].mxu0
    %2323 = vdwg.mxu0
    %v2324 = vsel %vm1583, %v2239, -inf
    %2325 = vmax.xlane.f32.xlu0 %v2324
    %v2326 = vpop.xlane.xlu0 %2325
    %v2327 = vsel %vm1583, %v2321, -inf
    %2328 = vmax.xlane.f32.xlu0 %v2327
    %v2329 = vpop.xlane.xlu0 %2328
    %v2330 = vsub.f32 %v2239, %v2326
    %v2331 = vsub.f32 %v2321, %v2329
    %v2332 = vmul.f32 %v2330, 1.442695
    %v2333 = vpow.pop %v2332
    %v2334 = vmul.f32 %v2331, 1.442695
    %v2335 = vpow.pop %v2334
    %v2336 = vsel %vm1583, %v2333, 0.0
    %2337 = vadd.xlane.f32.xlu0 %v2336
    %v2338 = vpop.xlane.xlu0 %2337
    %v2339 = vsel %vm1583, %v2335, 0.0
    %2340 = vadd.xlane.f32.xlu0 %v2339
    %v2341 = vpop.xlane.xlu0 %2340
    %v2342 = vrcp.pop %v2338
    %v2343 = vrcp.pop %v2341
    %v2344 = vmul.f32 %v2333, %v2342
    %v2345 = vmul.f32 %v2335, %v2343
    %2346 = vrot.lane.b32.xlu0 %v126, 88
    %v2347 = vpop.permute.xlu0 %2346
    %2348 = vrot.lane.b32.xlu0 %v131, 88
    %v2349 = vpop.permute.xlu0 %2348
    %v2353 = vsel %vm1583, %v2344, 0
    %2355 = vmatprep.subr.mxu0 0.0
    %2356 = vmatpush1.msra.mxu0 %v2347
    %2357 = vmatprep.subr.mxu0 0.0
    %2358 = vmatpush1.msra.mxu0 %v2349
    %2359 = vmatprep.subr.mxu0 0.0
    %2360 = vmatpush1.msra.mxu0 0.0
    %2361 = vmatprep.subr.mxu0 0.0
    %2362 = vmatpush1.msra.mxu0 0.0
    %2363 = vmatprep.subr.mxu0 0.0
    %2364 = vmatpush1.msra.mxu0 0.0
    %2365 = vmatprep.subr.mxu0 0.0
    %2366 = vmatpush1.msra.mxu0 0.0
    %2367 = vmatprep.subr.mxu0 0.0
    %2368 = vmatpush1.msra.mxu0 0.0
    %2369 = vmatprep.subr.mxu0 0.0
    %2370 = vmatpush1.msra.mxu0 0.0
    %2371 = vmatprep.subr.mxu0 0.0
    %2372 = vmatpush1.msra.mxu0 0.0
    %2373 = vmatprep.subr.mxu0 0.0
    %2374 = vmatpush1.msra.mxu0 0.0
    %2375 = vmatprep.subr.mxu0 0.0
    %2376 = vmatpush1.msra.mxu0 0.0
    %2377 = vmatprep.subr.mxu0 0.0
    %2378 = vmatpush1.msra.mxu0 0.0
    %2379 = vmatprep.subr.mxu0 0.0
    %2380 = vmatpush1.msra.mxu0 0.0
    %2381 = vmatprep.subr.mxu0 0.0
    %2382 = vmatpush1.msra.mxu0 0.0
    %2383 = vmatprep.subr.mxu0 0.0
    %2384 = vmatpush1.msra.mxu0 0.0
    %2385 = vmatprep.subr.mxu0 0.0
    %2386 = vmatpush1.msra.mxu0 0.0
    %2387 = vmatprep.subr.mxu0 0.0
    %2388 = vmatpush1.msra.mxu0 0.0
    %2389 = vmatprep.subr.mxu0 0.0
    %2390 = vmatpush1.msra.mxu0 0.0
    %2391 = vmatprep.subr.mxu0 0.0
    %2392 = vmatpush1.msra.mxu0 0.0
    %2393 = vmatprep.subr.mxu0 0.0
    %2394 = vmatpush1.msra.mxu0 0.0
    %2395 = vmatprep.subr.mxu0 0.0
    %2396 = vmatpush1.msra.mxu0 0.0
    %2397 = vmatprep.subr.mxu0 0.0
    %2398 = vmatpush1.msra.mxu0 0.0
    %2399 = vmatprep.subr.mxu0 0.0
    %2400 = vmatpush1.msra.mxu0 0.0
    %2401 = vmatprep.subr.mxu0 0.0
    %2402 = vmatpush1.msra.mxu0 0.0
    %2403 = vmatprep.subr.mxu0 0.0
    %2404 = vmatpush1.msra.mxu0 0.0
    %2405 = vmatprep.subr.mxu0 0.0
    %2406 = vmatpush1.msra.mxu0 0.0
    %2407 = vmatprep.subr.mxu0 0.0
    %2408 = vmatpush1.msra.mxu0 0.0
    %2409 = vmatprep.subr.mxu0 0.0
    %2410 = vmatpush1.msra.mxu0 0.0
    %2411 = vmatprep.subr.mxu0 0.0
    %2412 = vmatpush1.msra.mxu0 0.0
    %2413 = vmatprep.subr.mxu0 0.0
    %2414 = vmatpush1.msra.mxu0 0.0
    %2415 = vmatprep.subr.mxu0 0.0
    %2416 = vmatpush1.msra.mxu0 0.0
    %2417 = vmatprep.subr.mxu0 0.0
    %2418 = vmatpush1.msra.mxu0 0.0
    %2419 = vmatprep.mubr.f32.mxu0 0.0
    %2420 = vmatmul.mubr.f32.gmra.mrb[0].mxu0 %v2353
    %v2421 = vpop.f32.mrb[0].mxu0
    %v2422 = vadd.f32 0.0, %v2421
    %v2423 = vpop.f32.mrb[0].mxu0
    %2424 = vdwg.mxu0
    %2425 = vrot.lane.b32.xlu0 %v136, 88
    %v2426 = vpop.permute.xlu0 %2425
    %2427 = vrot.lane.b32.xlu0 %v141, 88
    %v2428 = vpop.permute.xlu0 %2427
    %v2432 = vsel %vm1583, %v2345, 0
    %2434 = vmatprep.subr.mxu0 0.0
    %2435 = vmatpush1.msra.mxu0 %v2426
    %2436 = vmatprep.subr.mxu0 0.0
    %2437 = vmatpush1.msra.mxu0 %v2428
    %2438 = vmatprep.subr.mxu0 0.0
    %2439 = vmatpush1.msra.mxu0 0.0
    %2440 = vmatprep.subr.mxu0 0.0
    %2441 = vmatpush1.msra.mxu0 0.0
    %2442 = vmatprep.subr.mxu0 0.0
    %2443 = vmatpush1.msra.mxu0 0.0
    %2444 = vmatprep.subr.mxu0 0.0
    %2445 = vmatpush1.msra.mxu0 0.0
    %2446 = vmatprep.subr.mxu0 0.0
    %2447 = vmatpush1.msra.mxu0 0.0
    %2448 = vmatprep.subr.mxu0 0.0
    %2449 = vmatpush1.msra.mxu0 0.0
    %2450 = vmatprep.subr.mxu0 0.0
    %2451 = vmatpush1.msra.mxu0 0.0
    %2452 = vmatprep.subr.mxu0 0.0
    %2453 = vmatpush1.msra.mxu0 0.0
    %2454 = vmatprep.subr.mxu0 0.0
    %2455 = vmatpush1.msra.mxu0 0.0
    %2456 = vmatprep.subr.mxu0 0.0
    %2457 = vmatpush1.msra.mxu0 0.0
    %2458 = vmatprep.subr.mxu0 0.0
    %2459 = vmatpush1.msra.mxu0 0.0
    %2460 = vmatprep.subr.mxu0 0.0
    %2461 = vmatpush1.msra.mxu0 0.0
    %2462 = vmatprep.subr.mxu0 0.0
    %2463 = vmatpush1.msra.mxu0 0.0
    %2464 = vmatprep.subr.mxu0 0.0
    %2465 = vmatpush1.msra.mxu0 0.0
    %2466 = vmatprep.subr.mxu0 0.0
    %2467 = vmatpush1.msra.mxu0 0.0
    %2468 = vmatprep.subr.mxu0 0.0
    %2469 = vmatpush1.msra.mxu0 0.0
    %2470 = vmatprep.subr.mxu0 0.0
    %2471 = vmatpush1.msra.mxu0 0.0
    %2472 = vmatprep.subr.mxu0 0.0
    %2473 = vmatpush1.msra.mxu0 0.0
    %2474 = vmatprep.subr.mxu0 0.0
    %2475 = vmatpush1.msra.mxu0 0.0
    %2476 = vmatprep.subr.mxu0 0.0
    %2477 = vmatpush1.msra.mxu0 0.0
    %2478 = vmatprep.subr.mxu0 0.0
    %2479 = vmatpush1.msra.mxu0 0.0
    %2480 = vmatprep.subr.mxu0 0.0
    %2481 = vmatpush1.msra.mxu0 0.0
    %2482 = vmatprep.subr.mxu0 0.0
    %2483 = vmatpush1.msra.mxu0 0.0
    %2484 = vmatprep.subr.mxu0 0.0
    %2485 = vmatpush1.msra.mxu0 0.0
    %2486 = vmatprep.subr.mxu0 0.0
    %2487 = vmatpush1.msra.mxu0 0.0
    %2488 = vmatprep.subr.mxu0 0.0
    %2489 = vmatpush1.msra.mxu0 0.0
    %2490 = vmatprep.subr.mxu0 0.0
    %2491 = vmatpush1.msra.mxu0 0.0
    %2492 = vmatprep.subr.mxu0 0.0
    %2493 = vmatpush1.msra.mxu0 0.0
    %2494 = vmatprep.subr.mxu0 0.0
    %2495 = vmatpush1.msra.mxu0 0.0
    %2496 = vmatprep.subr.mxu0 0.0
    %2497 = vmatpush1.msra.mxu0 0.0
    %2498 = vmatprep.mubr.f32.mxu0 0.0
    %2499 = vmatmul.mubr.f32.gmra.mrb[0].mxu0 %v2432
    %v2500 = vpop.f32.mrb[0].mxu0
    %v2501 = vadd.f32 0.0, %v2500
    %v2502 = vpop.f32.mrb[0].mxu0
    %2503 = vdwg.mxu0
    %2504 = vrot.lane.b32.xlu0 %v1812, 112
    %v2505 = vpop.permute.xlu0 %2504
    %2506 = vrot.lane.b32.xlu0 %v126, 112
    %v2507 = vpop.permute.xlu0 %2506
    %2508 = vrot.lane.b32.xlu0 %v131, 112
    %v2509 = vpop.permute.xlu0 %2508
    %v2510 = vsel %vm239, %v2505, 0
    %v2512 = vsel %vm239, %v2507, 0
    %v2514 = vsel %vm239, %v2509, 0
    %2516 = vmatprep.subr.mxu0 0.0
    %2517 = vmatpush1.xpose.msra.mxu0 %v2512
    %2518 = vmatprep.subr.mxu0 0.0
    %2519 = vmatpush1.xpose.msra.mxu0 %v2514
    %2520 = vmatprep.subr.mxu0 0.0
    %2521 = vmatpush1.xpose.msra.mxu0 0.0
    %2522 = vmatprep.subr.mxu0 0.0
    %2523 = vmatpush1.xpose.msra.mxu0 0.0
    %2524 = vmatprep.subr.mxu0 0.0
    %2525 = vmatpush1.xpose.msra.mxu0 0.0
    %2526 = vmatprep.subr.mxu0 0.0
    %2527 = vmatpush1.xpose.msra.mxu0 0.0
    %2528 = vmatprep.subr.mxu0 0.0
    %2529 = vmatpush1.xpose.msra.mxu0 0.0
    %2530 = vmatprep.subr.mxu0 0.0
    %2531 = vmatpush1.xpose.msra.mxu0 0.0
    %2532 = vmatprep.subr.mxu0 0.0
    %2533 = vmatpush1.xpose.msra.mxu0 0.0
    %2534 = vmatprep.subr.mxu0 0.0
    %2535 = vmatpush1.xpose.msra.mxu0 0.0
    %2536 = vmatprep.subr.mxu0 0.0
    %2537 = vmatpush1.xpose.msra.mxu0 0.0
    %2538 = vmatprep.subr.mxu0 0.0
    %2539 = vmatpush1.xpose.msra.mxu0 0.0
    %2540 = vmatprep.subr.mxu0 0.0
    %2541 = vmatpush1.xpose.msra.mxu0 0.0
    %2542 = vmatprep.subr.mxu0 0.0
    %2543 = vmatpush1.xpose.msra.mxu0 0.0
    %2544 = vmatprep.subr.mxu0 0.0
    %2545 = vmatpush1.xpose.msra.mxu0 0.0
    %2546 = vmatprep.subr.mxu0 0.0
    %2547 = vmatpush1.xpose.msra.mxu0 0.0
    %2548 = vmatprep.subr.mxu0 0.0
    %2549 = vmatpush1.xpose.msra.mxu0 0.0
    %2550 = vmatprep.subr.mxu0 0.0
    %2551 = vmatpush1.xpose.msra.mxu0 0.0
    %2552 = vmatprep.subr.mxu0 0.0
    %2553 = vmatpush1.xpose.msra.mxu0 0.0
    %2554 = vmatprep.subr.mxu0 0.0
    %2555 = vmatpush1.xpose.msra.mxu0 0.0
    %2556 = vmatprep.subr.mxu0 0.0
    %2557 = vmatpush1.xpose.msra.mxu0 0.0
    %2558 = vmatprep.subr.mxu0 0.0
    %2559 = vmatpush1.xpose.msra.mxu0 0.0
    %2560 = vmatprep.subr.mxu0 0.0
    %2561 = vmatpush1.xpose.msra.mxu0 0.0
    %2562 = vmatprep.subr.mxu0 0.0
    %2563 = vmatpush1.xpose.msra.mxu0 0.0
    %2564 = vmatprep.subr.mxu0 0.0
    %2565 = vmatpush1.xpose.msra.mxu0 0.0
    %2566 = vmatprep.subr.mxu0 0.0
    %2567 = vmatpush1.xpose.msra.mxu0 0.0
    %2568 = vmatprep.subr.mxu0 0.0
    %2569 = vmatpush1.xpose.msra.mxu0 0.0
    %2570 = vmatprep.subr.mxu0 0.0
    %2571 = vmatpush1.xpose.msra.mxu0 0.0
    %2572 = vmatprep.subr.mxu0 0.0
    %2573 = vmatpush1.xpose.msra.mxu0 0.0
    %2574 = vmatprep.subr.mxu0 0.0
    %2575 = vmatpush1.xpose.msra.mxu0 0.0
    %2576 = vmatprep.subr.mxu0 0.0
    %2577 = vmatpush1.xpose.msra.mxu0 0.0
    %2578 = vmatprep.subr.mxu0 0.0
    %2579 = vmatpush1.xpose.msra.mxu0 0.0
    %2580 = vmatprep.mubr.f32.mxu0 0.0
    %2581 = vmatmul.mubr.f32.gmra.mrb[0].mxu0 %v2510
    %v2582 = vpop.f32.mrb[0].mxu0
    %v2583 = vadd.f32 %v1816, %v2582
    %v2584 = vpop.f32.mrb[0].mxu0
    %2585 = vdwg.mxu0
    %2586 = vrot.lane.b32.xlu0 %v1813, 112
    %v2587 = vpop.permute.xlu0 %2586
    %2588 = vrot.lane.b32.xlu0 %v136, 112
    %v2589 = vpop.permute.xlu0 %2588
    %2590 = vrot.lane.b32.xlu0 %v141, 112
    %v2591 = vpop.permute.xlu0 %2590
    %v2592 = vsel %vm239, %v2587, 0
    %v2594 = vsel %vm239, %v2589, 0
    %v2596 = vsel %vm239, %v2591, 0
    %2598 = vmatprep.subr.mxu0 0.0
    %2599 = vmatpush1.xpose.msra.mxu0 %v2594
    %2600 = vmatprep.subr.mxu0 0.0
    %2601 = vmatpush1.xpose.msra.mxu0 %v2596
    %2602 = vmatprep.subr.mxu0 0.0
    %2603 = vmatpush1.xpose.msra.mxu0 0.0
    %2604 = vmatprep.subr.mxu0 0.0
    %2605 = vmatpush1.xpose.msra.mxu0 0.0
    %2606 = vmatprep.subr.mxu0 0.0
    %2607 = vmatpush1.xpose.msra.mxu0 0.0
    %2608 = vmatprep.subr.mxu0 0.0
    %2609 = vmatpush1.xpose.msra.mxu0 0.0
    %2610 = vmatprep.subr.mxu0 0.0
    %2611 = vmatpush1.xpose.msra.mxu0 0.0
    %2612 = vmatprep.subr.mxu0 0.0
    %2613 = vmatpush1.xpose.msra.mxu0 0.0
    %2614 = vmatprep.subr.mxu0 0.0
    %2615 = vmatpush1.xpose.msra.mxu0 0.0
    %2616 = vmatprep.subr.mxu0 0.0
    %2617 = vmatpush1.xpose.msra.mxu0 0.0
    %2618 = vmatprep.subr.mxu0 0.0
    %2619 = vmatpush1.xpose.msra.mxu0 0.0
    %2620 = vmatprep.subr.mxu0 0.0
    %2621 = vmatpush1.xpose.msra.mxu0 0.0
    %2622 = vmatprep.subr.mxu0 0.0
    %2623 = vmatpush1.xpose.msra.mxu0 0.0
    %2624 = vmatprep.subr.mxu0 0.0
    %2625 = vmatpush1.xpose.msra.mxu0 0.0
    %2626 = vmatprep.subr.mxu0 0.0
    %2627 = vmatpush1.xpose.msra.mxu0 0.0
    %2628 = vmatprep.subr.mxu0 0.0
    %2629 = vmatpush1.xpose.msra.mxu0 0.0
    %2630 = vmatprep.subr.mxu0 0.0
    %2631 = vmatpush1.xpose.msra.mxu0 0.0
    %2632 = vmatprep.subr.mxu0 0.0
    %2633 = vmatpush1.xpose.msra.mxu0 0.0
    %2634 = vmatprep.subr.mxu0 0.0
    %2635 = vmatpush1.xpose.msra.mxu0 0.0
    %2636 = vmatprep.subr.mxu0 0.0
    %2637 = vmatpush1.xpose.msra.mxu0 0.0
    %2638 = vmatprep.subr.mxu0 0.0
    %2639 = vmatpush1.xpose.msra.mxu0 0.0
    %2640 = vmatprep.subr.mxu0 0.0
    %2641 = vmatpush1.xpose.msra.mxu0 0.0
    %2642 = vmatprep.subr.mxu0 0.0
    %2643 = vmatpush1.xpose.msra.mxu0 0.0
    %2644 = vmatprep.subr.mxu0 0.0
    %2645 = vmatpush1.xpose.msra.mxu0 0.0
    %2646 = vmatprep.subr.mxu0 0.0
    %2647 = vmatpush1.xpose.msra.mxu0 0.0
    %2648 = vmatprep.subr.mxu0 0.0
    %2649 = vmatpush1.xpose.msra.mxu0 0.0
    %2650 = vmatprep.subr.mxu0 0.0
    %2651 = vmatpush1.xpose.msra.mxu0 0.0
    %2652 = vmatprep.subr.mxu0 0.0
    %2653 = vmatpush1.xpose.msra.mxu0 0.0
    %2654 = vmatprep.subr.mxu0 0.0
    %2655 = vmatpush1.xpose.msra.mxu0 0.0
    %2656 = vmatprep.subr.mxu0 0.0
    %2657 = vmatpush1.xpose.msra.mxu0 0.0
    %2658 = vmatprep.subr.mxu0 0.0
    %2659 = vmatpush1.xpose.msra.mxu0 0.0
    %2660 = vmatprep.subr.mxu0 0.0
    %2661 = vmatpush1.xpose.msra.mxu0 0.0
    %2662 = vmatprep.mubr.f32.mxu0 0.0
    %2663 = vmatmul.mubr.f32.gmra.mrb[0].mxu0 %v2592
    %v2664 = vpop.f32.mrb[0].mxu0
    %v2665 = vadd.f32 %v1899, %v2664
    %v2666 = vpop.f32.mrb[0].mxu0
    %2667 = vdwg.mxu0
    %v2668 = vsel %vm1583, %v2583, -inf
    %2669 = vmax.xlane.f32.xlu0 %v2668
    %v2670 = vpop.xlane.xlu0 %2669
    %v2671 = vsel %vm1583, %v2665, -inf
    %2672 = vmax.xlane.f32.xlu0 %v2671
    %v2673 = vpop.xlane.xlu0 %2672
    %v2674 = vsub.f32 %v2583, %v2670
    %v2675 = vsub.f32 %v2665, %v2673
    %v2676 = vmul.f32 %v2674, 1.442695
    %v2677 = vpow.pop %v2676
    %v2678 = vmul.f32 %v2675, 1.442695
    %v2679 = vpow.pop %v2678
    %v2680 = vsel %vm1583, %v2677, 0.0
    %2681 = vadd.xlane.f32.xlu0 %v2680
    %v2682 = vpop.xlane.xlu0 %2681
    %v2683 = vsel %vm1583, %v2679, 0.0
    %2684 = vadd.xlane.f32.xlu0 %v2683
    %v2685 = vpop.xlane.xlu0 %2684
    %v2686 = vrcp.pop %v2682
    %v2687 = vrcp.pop %v2685
    %v2688 = vmul.f32 %v2677, %v2686
    %v2689 = vmul.f32 %v2679, %v2687
    %2690 = vrot.lane.b32.xlu0 %v126, 80
    %v2691 = vpop.permute.xlu0 %2690
    %2692 = vrot.lane.b32.xlu0 %v131, 80
    %v2693 = vpop.permute.xlu0 %2692
    %v2697 = vsel %vm1583, %v2688, 0
    %2699 = vmatprep.subr.mxu0 0.0
    %2700 = vmatpush1.msra.mxu0 %v2691
    %2701 = vmatprep.subr.mxu0 0.0
    %2702 = vmatpush1.msra.mxu0 %v2693
    %2703 = vmatprep.subr.mxu0 0.0
    %2704 = vmatpush1.msra.mxu0 0.0
    %2705 = vmatprep.subr.mxu0 0.0
    %2706 = vmatpush1.msra.mxu0 0.0
    %2707 = vmatprep.subr.mxu0 0.0
    %2708 = vmatpush1.msra.mxu0 0.0
    %2709 = vmatprep.subr.mxu0 0.0
    %2710 = vmatpush1.msra.mxu0 0.0
    %2711 = vmatprep.subr.mxu0 0.0
    %2712 = vmatpush1.msra.mxu0 0.0
    %2713 = vmatprep.subr.mxu0 0.0
    %2714 = vmatpush1.msra.mxu0 0.0
    %2715 = vmatprep.subr.mxu0 0.0
    %2716 = vmatpush1.msra.mxu0 0.0
    %2717 = vmatprep.subr.mxu0 0.0
    %2718 = vmatpush1.msra.mxu0 0.0
    %2719 = vmatprep.subr.mxu0 0.0
    %2720 = vmatpush1.msra.mxu0 0.0
    %2721 = vmatprep.subr.mxu0 0.0
    %2722 = vmatpush1.msra.mxu0 0.0
    %2723 = vmatprep.subr.mxu0 0.0
    %2724 = vmatpush1.msra.mxu0 0.0
    %2725 = vmatprep.subr.mxu0 0.0
    %2726 = vmatpush1.msra.mxu0 0.0
    %2727 = vmatprep.subr.mxu0 0.0
    %2728 = vmatpush1.msra.mxu0 0.0
    %2729 = vmatprep.subr.mxu0 0.0
    %2730 = vmatpush1.msra.mxu0 0.0
    %2731 = vmatprep.subr.mxu0 0.0
    %2732 = vmatpush1.msra.mxu0 0.0
    %2733 = vmatprep.subr.mxu0 0.0
    %2734 = vmatpush1.msra.mxu0 0.0
    %2735 = vmatprep.subr.mxu0 0.0
    %2736 = vmatpush1.msra.mxu0 0.0
    %2737 = vmatprep.subr.mxu0 0.0
    %2738 = vmatpush1.msra.mxu0 0.0
    %2739 = vmatprep.subr.mxu0 0.0
    %2740 = vmatpush1.msra.mxu0 0.0
    %2741 = vmatprep.subr.mxu0 0.0
    %2742 = vmatpush1.msra.mxu0 0.0
    %2743 = vmatprep.subr.mxu0 0.0
    %2744 = vmatpush1.msra.mxu0 0.0
    %2745 = vmatprep.subr.mxu0 0.0
    %2746 = vmatpush1.msra.mxu0 0.0
    %2747 = vmatprep.subr.mxu0 0.0
    %2748 = vmatpush1.msra.mxu0 0.0
    %2749 = vmatprep.subr.mxu0 0.0
    %2750 = vmatpush1.msra.mxu0 0.0
    %2751 = vmatprep.subr.mxu0 0.0
    %2752 = vmatpush1.msra.mxu0 0.0
    %2753 = vmatprep.subr.mxu0 0.0
    %2754 = vmatpush1.msra.mxu0 0.0
    %2755 = vmatprep.subr.mxu0 0.0
    %2756 = vmatpush1.msra.mxu0 0.0
    %2757 = vmatprep.subr.mxu0 0.0
    %2758 = vmatpush1.msra.mxu0 0.0
    %2759 = vmatprep.subr.mxu0 0.0
    %2760 = vmatpush1.msra.mxu0 0.0
    %2761 = vmatprep.subr.mxu0 0.0
    %2762 = vmatpush1.msra.mxu0 0.0
    %2763 = vmatprep.mubr.f32.mxu0 0.0
    %2764 = vmatmul.mubr.f32.gmra.mrb[0].mxu0 %v2697
    %v2765 = vpop.f32.mrb[0].mxu0
    %v2766 = vadd.f32 0.0, %v2765
    %v2767 = vpop.f32.mrb[0].mxu0
    %2768 = vdwg.mxu0
    %2769 = vrot.lane.b32.xlu0 %v136, 80
    %v2770 = vpop.permute.xlu0 %2769
    %2771 = vrot.lane.b32.xlu0 %v141, 80
    %v2772 = vpop.permute.xlu0 %2771
    %v2776 = vsel %vm1583, %v2689, 0
    %2778 = vmatprep.subr.mxu0 0.0
    %2779 = vmatpush1.msra.mxu0 %v2770
    %2780 = vmatprep.subr.mxu0 0.0
    %2781 = vmatpush1.msra.mxu0 %v2772
    %2782 = vmatprep.subr.mxu0 0.0
    %2783 = vmatpush1.msra.mxu0 0.0
    %2784 = vmatprep.subr.mxu0 0.0
    %2785 = vmatpush1.msra.mxu0 0.0
    %2786 = vmatprep.subr.mxu0 0.0
    %2787 = vmatpush1.msra.mxu0 0.0
    %2788 = vmatprep.subr.mxu0 0.0
    %2789 = vmatpush1.msra.mxu0 0.0
    %2790 = vmatprep.subr.mxu0 0.0
    %2791 = vmatpush1.msra.mxu0 0.0
    %2792 = vmatprep.subr.mxu0 0.0
    %2793 = vmatpush1.msra.mxu0 0.0
    %2794 = vmatprep.subr.mxu0 0.0
    %2795 = vmatpush1.msra.mxu0 0.0
    %2796 = vmatprep.subr.mxu0 0.0
    %2797 = vmatpush1.msra.mxu0 0.0
    %2798 = vmatprep.subr.mxu0 0.0
    %2799 = vmatpush1.msra.mxu0 0.0
    %2800 = vmatprep.subr.mxu0 0.0
    %2801 = vmatpush1.msra.mxu0 0.0
    %2802 = vmatprep.subr.mxu0 0.0
    %2803 = vmatpush1.msra.mxu0 0.0
    %2804 = vmatprep.subr.mxu0 0.0
    %2805 = vmatpush1.msra.mxu0 0.0
    %2806 = vmatprep.subr.mxu0 0.0
    %2807 = vmatpush1.msra.mxu0 0.0
    %2808 = vmatprep.subr.mxu0 0.0
    %2809 = vmatpush1.msra.mxu0 0.0
    %2810 = vmatprep.subr.mxu0 0.0
    %2811 = vmatpush1.msra.mxu0 0.0
    %2812 = vmatprep.subr.mxu0 0.0
    %2813 = vmatpush1.msra.mxu0 0.0
    %2814 = vmatprep.subr.mxu0 0.0
    %2815 = vmatpush1.msra.mxu0 0.0
    %2816 = vmatprep.subr.mxu0 0.0
    %2817 = vmatpush1.msra.mxu0 0.0
    %2818 = vmatprep.subr.mxu0 0.0
    %2819 = vmatpush1.msra.mxu0 0.0
    %2820 = vmatprep.subr.mxu0 0.0
    %2821 = vmatpush1.msra.mxu0 0.0
    %2822 = vmatprep.subr.mxu0 0.0
    %2823 = vmatpush1.msra.mxu0 0.0
    %2824 = vmatprep.subr.mxu0 0.0
    %2825 = vmatpush1.msra.mxu0 0.0
    %2826 = vmatprep.subr.mxu0 0.0
    %2827 = vmatpush1.msra.mxu0 0.0
    %2828 = vmatprep.subr.mxu0 0.0
    %2829 = vmatpush1.msra.mxu0 0.0
    %2830 = vmatprep.subr.mxu0 0.0
    %2831 = vmatpush1.msra.mxu0 0.0
    %2832 = vmatprep.subr.mxu0 0.0
    %2833 = vmatpush1.msra.mxu0 0.0
    %2834 = vmatprep.subr.mxu0 0.0
    %2835 = vmatpush1.msra.mxu0 0.0
    %2836 = vmatprep.subr.mxu0 0.0
    %2837 = vmatpush1.msra.mxu0 0.0
    %2838 = vmatprep.subr.mxu0 0.0
    %2839 = vmatpush1.msra.mxu0 0.0
    %2840 = vmatprep.subr.mxu0 0.0
    %2841 = vmatpush1.msra.mxu0 0.0
    %2842 = vmatprep.mubr.f32.mxu0 0.0
    %2843 = vmatmul.mubr.f32.gmra.mrb[0].mxu0 %v2776
    %v2844 = vpop.f32.mrb[0].mxu0
    %v2845 = vadd.f32 0.0, %v2844
    %v2846 = vpop.f32.mrb[0].mxu0
    %2847 = vdwg.mxu0
    %2848 = vrot.lane.b32.xlu0 %v1812, 104
    %v2849 = vpop.permute.xlu0 %2848
    %2850 = vrot.lane.b32.xlu0 %v126, 104
    %v2851 = vpop.permute.xlu0 %2850
    %2852 = vrot.lane.b32.xlu0 %v131, 104
    %v2853 = vpop.permute.xlu0 %2852
    %v2854 = vsel %vm239, %v2849, 0
    %v2856 = vsel %vm239, %v2851, 0
    %v2858 = vsel %vm239, %v2853, 0
    %2860 = vmatprep.subr.mxu0 0.0
    %2861 = vmatpush1.xpose.msra.mxu0 %v2856
    %2862 = vmatprep.subr.mxu0 0.0
    %2863 = vmatpush1.xpose.msra.mxu0 %v2858
    %2864 = vmatprep.subr.mxu0 0.0
    %2865 = vmatpush1.xpose.msra.mxu0 0.0
    %2866 = vmatprep.subr.mxu0 0.0
    %2867 = vmatpush1.xpose.msra.mxu0 0.0
    %2868 = vmatprep.subr.mxu0 0.0
    %2869 = vmatpush1.xpose.msra.mxu0 0.0
    %2870 = vmatprep.subr.mxu0 0.0
    %2871 = vmatpush1.xpose.msra.mxu0 0.0
    %2872 = vmatprep.subr.mxu0 0.0
    %2873 = vmatpush1.xpose.msra.mxu0 0.0
    %2874 = vmatprep.subr.mxu0 0.0
    %2875 = vmatpush1.xpose.msra.mxu0 0.0
    %2876 = vmatprep.subr.mxu0 0.0
    %2877 = vmatpush1.xpose.msra.mxu0 0.0
    %2878 = vmatprep.subr.mxu0 0.0
    %2879 = vmatpush1.xpose.msra.mxu0 0.0
    %2880 = vmatprep.subr.mxu0 0.0
    %2881 = vmatpush1.xpose.msra.mxu0 0.0
    %2882 = vmatprep.subr.mxu0 0.0
    %2883 = vmatpush1.xpose.msra.mxu0 0.0
    %2884 = vmatprep.subr.mxu0 0.0
    %2885 = vmatpush1.xpose.msra.mxu0 0.0
    %2886 = vmatprep.subr.mxu0 0.0
    %2887 = vmatpush1.xpose.msra.mxu0 0.0
    %2888 = vmatprep.subr.mxu0 0.0
    %2889 = vmatpush1.xpose.msra.mxu0 0.0
    %2890 = vmatprep.subr.mxu0 0.0
    %2891 = vmatpush1.xpose.msra.mxu0 0.0
    %2892 = vmatprep.subr.mxu0 0.0
    %2893 = vmatpush1.xpose.msra.mxu0 0.0
    %2894 = vmatprep.subr.mxu0 0.0
    %2895 = vmatpush1.xpose.msra.mxu0 0.0
    %2896 = vmatprep.subr.mxu0 0.0
    %2897 = vmatpush1.xpose.msra.mxu0 0.0
    %2898 = vmatprep.subr.mxu0 0.0
    %2899 = vmatpush1.xpose.msra.mxu0 0.0
    %2900 = vmatprep.subr.mxu0 0.0
    %2901 = vmatpush1.xpose.msra.mxu0 0.0
    %2902 = vmatprep.subr.mxu0 0.0
    %2903 = vmatpush1.xpose.msra.mxu0 0.0
    %2904 = vmatprep.subr.mxu0 0.0
    %2905 = vmatpush1.xpose.msra.mxu0 0.0
    %2906 = vmatprep.subr.mxu0 0.0
    %2907 = vmatpush1.xpose.msra.mxu0 0.0
    %2908 = vmatprep.subr.mxu0 0.0
    %2909 = vmatpush1.xpose.msra.mxu0 0.0
    %2910 = vmatprep.subr.mxu0 0.0
    %2911 = vmatpush1.xpose.msra.mxu0 0.0
    %2912 = vmatprep.subr.mxu0 0.0
    %2913 = vmatpush1.xpose.msra.mxu0 0.0
    %2914 = vmatprep.subr.mxu0 0.0
    %2915 = vmatpush1.xpose.msra.mxu0 0.0
    %2916 = vmatprep.subr.mxu0 0.0
    %2917 = vmatpush1.xpose.msra.mxu0 0.0
    %2918 = vmatprep.subr.mxu0 0.0
    %2919 = vmatpush1.xpose.msra.mxu0 0.0
    %2920 = vmatprep.subr.mxu0 0.0
    %2921 = vmatpush1.xpose.msra.mxu0 0.0
    %2922 = vmatprep.subr.mxu0 0.0
    %2923 = vmatpush1.xpose.msra.mxu0 0.0
    %2924 = vmatprep.mubr.f32.mxu0 0.0
    %2925 = vmatmul.mubr.f32.gmra.mrb[0].mxu0 %v2854
    %v2926 = vpop.f32.mrb[0].mxu0
    %v2927 = vadd.f32 %v1816, %v2926
    %v2928 = vpop.f32.mrb[0].mxu0
    %2929 = vdwg.mxu0
    %2930 = vrot.lane.b32.xlu0 %v1813, 104
    %v2931 = vpop.permute.xlu0 %2930
    %2932 = vrot.lane.b32.xlu0 %v136, 104
    %v2933 = vpop.permute.xlu0 %2932
    %2934 = vrot.lane.b32.xlu0 %v141, 104
    %v2935 = vpop.permute.xlu0 %2934
    %v2936 = vsel %vm239, %v2931, 0
    %v2938 = vsel %vm239, %v2933, 0
    %v2940 = vsel %vm239, %v2935, 0
    %2942 = vmatprep.subr.mxu0 0.0
    %2943 = vmatpush1.xpose.msra.mxu0 %v2938
    %2944 = vmatprep.subr.mxu0 0.0
    %2945 = vmatpush1.xpose.msra.mxu0 %v2940
    %2946 = vmatprep.subr.mxu0 0.0
    %2947 = vmatpush1.xpose.msra.mxu0 0.0
    %2948 = vmatprep.subr.mxu0 0.0
    %2949 = vmatpush1.xpose.msra.mxu0 0.0
    %2950 = vmatprep.subr.mxu0 0.0
    %2951 = vmatpush1.xpose.msra.mxu0 0.0
    %2952 = vmatprep.subr.mxu0 0.0
    %2953 = vmatpush1.xpose.msra.mxu0 0.0
    %2954 = vmatprep.subr.mxu0 0.0
    %2955 = vmatpush1.xpose.msra.mxu0 0.0
    %2956 = vmatprep.subr.mxu0 0.0
    %2957 = vmatpush1.xpose.msra.mxu0 0.0
    %2958 = vmatprep.subr.mxu0 0.0
    %2959 = vmatpush1.xpose.msra.mxu0 0.0
    %2960 = vmatprep.subr.mxu0 0.0
    %2961 = vmatpush1.xpose.msra.mxu0 0.0
    %2962 = vmatprep.subr.mxu0 0.0
    %2963 = vmatpush1.xpose.msra.mxu0 0.0
    %2964 = vmatprep.subr.mxu0 0.0
    %2965 = vmatpush1.xpose.msra.mxu0 0.0
    %2966 = vmatprep.subr.mxu0 0.0
    %2967 = vmatpush1.xpose.msra.mxu0 0.0
    %2968 = vmatprep.subr.mxu0 0.0
    %2969 = vmatpush1.xpose.msra.mxu0 0.0
    %2970 = vmatprep.subr.mxu0 0.0
    %2971 = vmatpush1.xpose.msra.mxu0 0.0
    %2972 = vmatprep.subr.mxu0 0.0
    %2973 = vmatpush1.xpose.msra.mxu0 0.0
    %2974 = vmatprep.subr.mxu0 0.0
    %2975 = vmatpush1.xpose.msra.mxu0 0.0
    %2976 = vmatprep.subr.mxu0 0.0
    %2977 = vmatpush1.xpose.msra.mxu0 0.0
    %2978 = vmatprep.subr.mxu0 0.0
    %2979 = vmatpush1.xpose.msra.mxu0 0.0
    %2980 = vmatprep.subr.mxu0 0.0
    %2981 = vmatpush1.xpose.msra.mxu0 0.0
    %2982 = vmatprep.subr.mxu0 0.0
    %2983 = vmatpush1.xpose.msra.mxu0 0.0
    %2984 = vmatprep.subr.mxu0 0.0
    %2985 = vmatpush1.xpose.msra.mxu0 0.0
    %2986 = vmatprep.subr.mxu0 0.0
    %2987 = vmatpush1.xpose.msra.mxu0 0.0
    %2988 = vmatprep.subr.mxu0 0.0
    %2989 = vmatpush1.xpose.msra.mxu0 0.0
    %2990 = vmatprep.subr.mxu0 0.0
    %2991 = vmatpush1.xpose.msra.mxu0 0.0
    %2992 = vmatprep.subr.mxu0 0.0
    %2993 = vmatpush1.xpose.msra.mxu0 0.0
    %2994 = vmatprep.subr.mxu0 0.0
    %2995 = vmatpush1.xpose.msra.mxu0 0.0
    %2996 = vmatprep.subr.mxu0 0.0
    %2997 = vmatpush1.xpose.msra.mxu0 0.0
    %2998 = vmatprep.subr.mxu0 0.0
    %2999 = vmatpush1.xpose.msra.mxu0 0.0
    %3000 = vmatprep.subr.mxu0 0.0
    %3001 = vmatpush1.xpose.msra.mxu0 0.0
    %3002 = vmatprep.subr.mxu0 0.0
    %3003 = vmatpush1.xpose.msra.mxu0 0.0
    %3004 = vmatprep.subr.mxu0 0.0
    %3005 = vmatpush1.xpose.msra.mxu0 0.0
    %3006 = vmatprep.mubr.f32.mxu0 0.0
    %3007 = vmatmul.mubr.f32.gmra.mrb[0].mxu0 %v2936
    %v3008 = vpop.f32.mrb[0].mxu0
    %v3009 = vadd.f32 %v1899, %v3008
    %v3010 = vpop.f32.mrb[0].mxu0
    %3011 = vdwg.mxu0
    %v3012 = vsel %vm1583, %v2927, -inf
    %3013 = vmax.xlane.f32.xlu0 %v3012
    %v3014 = vpop.xlane.xlu0 %3013
    %v3015 = vsel %vm1583, %v3009, -inf
    %3016 = vmax.xlane.f32.xlu0 %v3015
    %v3017 = vpop.xlane.xlu0 %3016
    %v3018 = vsub.f32 %v2927, %v3014
    %v3019 = vsub.f32 %v3009, %v3017
    %v3020 = vmul.f32 %v3018, 1.442695
    %v3021 = vpow.pop %v3020
    %v3022 = vmul.f32 %v3019, 1.442695
    %v3023 = vpow.pop %v3022
    %v3024 = vsel %vm1583, %v3021, 0.0
    %3025 = vadd.xlane.f32.xlu0 %v3024
    %v3026 = vpop.xlane.xlu0 %3025
    %v3027 = vsel %vm1583, %v3023, 0.0
    %3028 = vadd.xlane.f32.xlu0 %v3027
    %v3029 = vpop.xlane.xlu0 %3028
    %v3030 = vrcp.pop %v3026
    %v3031 = vrcp.pop %v3029
    %v3032 = vmul.f32 %v3021, %v3030
    %v3033 = vmul.f32 %v3023, %v3031
    %3034 = vrot.lane.b32.xlu0 %v126, 72
    %v3035 = vpop.permute.xlu0 %3034
    %3036 = vrot.lane.b32.xlu0 %v131, 72
    %v3037 = vpop.permute.xlu0 %3036
    %v3041 = vsel %vm1583, %v3032, 0
    %3043 = vmatprep.subr.mxu0 0.0
    %3044 = vmatpush1.msra.mxu0 %v3035
    %3045 = vmatprep.subr.mxu0 0.0
    %3046 = vmatpush1.msra.mxu0 %v3037
    %3047 = vmatprep.subr.mxu0 0.0
    %3048 = vmatpush1.msra.mxu0 0.0
    %3049 = vmatprep.subr.mxu0 0.0
    %3050 = vmatpush1.msra.mxu0 0.0
    %3051 = vmatprep.subr.mxu0 0.0
    %3052 = vmatpush1.msra.mxu0 0.0
    %3053 = vmatprep.subr.mxu0 0.0
    %3054 = vmatpush1.msra.mxu0 0.0
    %3055 = vmatprep.subr.mxu0 0.0
    %3056 = vmatpush1.msra.mxu0 0.0
    %3057 = vmatprep.subr.mxu0 0.0
    %3058 = vmatpush1.msra.mxu0 0.0
    %3059 = vmatprep.subr.mxu0 0.0
    %3060 = vmatpush1.msra.mxu0 0.0
    %3061 = vmatprep.subr.mxu0 0.0
    %3062 = vmatpush1.msra.mxu0 0.0
    %3063 = vmatprep.subr.mxu0 0.0
    %3064 = vmatpush1.msra.mxu0 0.0
    %3065 = vmatprep.subr.mxu0 0.0
    %3066 = vmatpush1.msra.mxu0 0.0
    %3067 = vmatprep.subr.mxu0 0.0
    %3068 = vmatpush1.msra.mxu0 0.0
    %3069 = vmatprep.subr.mxu0 0.0
    %3070 = vmatpush1.msra.mxu0 0.0
    %3071 = vmatprep.subr.mxu0 0.0
    %3072 = vmatpush1.msra.mxu0 0.0
    %3073 = vmatprep.subr.mxu0 0.0
    %3074 = vmatpush1.msra.mxu0 0.0
    %3075 = vmatprep.subr.mxu0 0.0
    %3076 = vmatpush1.msra.mxu0 0.0
    %3077 = vmatprep.subr.mxu0 0.0
    %3078 = vmatpush1.msra.mxu0 0.0
    %3079 = vmatprep.subr.mxu0 0.0
    %3080 = vmatpush1.msra.mxu0 0.0
    %3081 = vmatprep.subr.mxu0 0.0
    %3082 = vmatpush1.msra.mxu0 0.0
    %3083 = vmatprep.subr.mxu0 0.0
    %3084 = vmatpush1.msra.mxu0 0.0
    %3085 = vmatprep.subr.mxu0 0.0
    %3086 = vmatpush1.msra.mxu0 0.0
    %3087 = vmatprep.subr.mxu0 0.0
    %3088 = vmatpush1.msra.mxu0 0.0
    %3089 = vmatprep.subr.mxu0 0.0
    %3090 = vmatpush1.msra.mxu0 0.0
    %3091 = vmatprep.subr.mxu0 0.0
    %3092 = vmatpush1.msra.mxu0 0.0
    %3093 = vmatprep.subr.mxu0 0.0
    %3094 = vmatpush1.msra.mxu0 0.0
    %3095 = vmatprep.subr.mxu0 0.0
    %3096 = vmatpush1.msra.mxu0 0.0
    %3097 = vmatprep.subr.mxu0 0.0
    %3098 = vmatpush1.msra.mxu0 0.0
    %3099 = vmatprep.subr.mxu0 0.0
    %3100 = vmatpush1.msra.mxu0 0.0
    %3101 = vmatprep.subr.mxu0 0.0
    %3102 = vmatpush1.msra.mxu0 0.0
    %3103 = vmatprep.subr.mxu0 0.0
    %3104 = vmatpush1.msra.mxu0 0.0
    %3105 = vmatprep.subr.mxu0 0.0
    %3106 = vmatpush1.msra.mxu0 0.0
    %3107 = vmatprep.mubr.f32.mxu0 0.0
    %3108 = vmatmul.mubr.f32.gmra.mrb[0].mxu0 %v3041
    %v3109 = vpop.f32.mrb[0].mxu0
    %v3110 = vadd.f32 0.0, %v3109
    %v3111 = vpop.f32.mrb[0].mxu0
    %3112 = vdwg.mxu0
    %3113 = vrot.lane.b32.xlu0 %v136, 72
    %v3114 = vpop.permute.xlu0 %3113
    %3115 = vrot.lane.b32.xlu0 %v141, 72
    %v3116 = vpop.permute.xlu0 %3115
    %v3120 = vsel %vm1583, %v3033, 0
    %3122 = vmatprep.subr.mxu0 0.0
    %3123 = vmatpush1.msra.mxu0 %v3114
    %3124 = vmatprep.subr.mxu0 0.0
    %3125 = vmatpush1.msra.mxu0 %v3116
    %3126 = vmatprep.subr.mxu0 0.0
    %3127 = vmatpush1.msra.mxu0 0.0
    %3128 = vmatprep.subr.mxu0 0.0
    %3129 = vmatpush1.msra.mxu0 0.0
    %3130 = vmatprep.subr.mxu0 0.0
    %3131 = vmatpush1.msra.mxu0 0.0
    %3132 = vmatprep.subr.mxu0 0.0
    %3133 = vmatpush1.msra.mxu0 0.0
    %3134 = vmatprep.subr.mxu0 0.0
    %3135 = vmatpush1.msra.mxu0 0.0
    %3136 = vmatprep.subr.mxu0 0.0
    %3137 = vmatpush1.msra.mxu0 0.0
    %3138 = vmatprep.subr.mxu0 0.0
    %3139 = vmatpush1.msra.mxu0 0.0
    %3140 = vmatprep.subr.mxu0 0.0
    %3141 = vmatpush1.msra.mxu0 0.0
    %3142 = vmatprep.subr.mxu0 0.0
    %3143 = vmatpush1.msra.mxu0 0.0
    %3144 = vmatprep.subr.mxu0 0.0
    %3145 = vmatpush1.msra.mxu0 0.0
    %3146 = vmatprep.subr.mxu0 0.0
    %3147 = vmatpush1.msra.mxu0 0.0
    %3148 = vmatprep.subr.mxu0 0.0
    %3149 = vmatpush1.msra.mxu0 0.0
    %3150 = vmatprep.subr.mxu0 0.0
    %3151 = vmatpush1.msra.mxu0 0.0
    %3152 = vmatprep.subr.mxu0 0.0
    %3153 = vmatpush1.msra.mxu0 0.0
    %3154 = vmatprep.subr.mxu0 0.0
    %3155 = vmatpush1.msra.mxu0 0.0
    %3156 = vmatprep.subr.mxu0 0.0
    %3157 = vmatpush1.msra.mxu0 0.0
    %3158 = vmatprep.subr.mxu0 0.0
    %3159 = vmatpush1.msra.mxu0 0.0
    %3160 = vmatprep.subr.mxu0 0.0
    %3161 = vmatpush1.msra.mxu0 0.0
    %3162 = vmatprep.subr.mxu0 0.0
    %3163 = vmatpush1.msra.mxu0 0.0
    %3164 = vmatprep.subr.mxu0 0.0
    %3165 = vmatpush1.msra.mxu0 0.0
    %3166 = vmatprep.subr.mxu0 0.0
    %3167 = vmatpush1.msra.mxu0 0.0
    %3168 = vmatprep.subr.mxu0 0.0
    %3169 = vmatpush1.msra.mxu0 0.0
    %3170 = vmatprep.subr.mxu0 0.0
    %3171 = vmatpush1.msra.mxu0 0.0
    %3172 = vmatprep.subr.mxu0 0.0
    %3173 = vmatpush1.msra.mxu0 0.0
    %3174 = vmatprep.subr.mxu0 0.0
    %3175 = vmatpush1.msra.mxu0 0.0
    %3176 = vmatprep.subr.mxu0 0.0
    %3177 = vmatpush1.msra.mxu0 0.0
    %3178 = vmatprep.subr.mxu0 0.0
    %3179 = vmatpush1.msra.mxu0 0.0
    %3180 = vmatprep.subr.mxu0 0.0
    %3181 = vmatpush1.msra.mxu0 0.0
    %3182 = vmatprep.subr.mxu0 0.0
    %3183 = vmatpush1.msra.mxu0 0.0
    %3184 = vmatprep.subr.mxu0 0.0
    %3185 = vmatpush1.msra.mxu0 0.0
    %3186 = vmatprep.mubr.f32.mxu0 0.0
    %3187 = vmatmul.mubr.f32.gmra.mrb[0].mxu0 %v3120
    %v3188 = vpop.f32.mrb[0].mxu0
    %v3189 = vadd.f32 0.0, %v3188
    %v3190 = vpop.f32.mrb[0].mxu0
    %3191 = vdwg.mxu0
    %3194 = vrot.lane.b32.xlu0 %v2422, 8
    %v3195 = vpop.permute.xlu0 %3194
    %3196 = vrot.lane.b32.xlu0 %v2501, 8
    %v3197 = vpop.permute.xlu0 %3196
    %3202 = vrot.lane.b32.xlu0 %v2766, 16
    %v3203 = vpop.permute.xlu0 %3202
    %3204 = vrot.lane.b32.xlu0 %v2845, 16
    %v3205 = vpop.permute.xlu0 %3204
    %3210 = vrot.lane.b32.xlu0 %v3110, 24
    %v3211 = vpop.permute.xlu0 %3210
    %3212 = vrot.lane.b32.xlu0 %v3189, 24
    %v3213 = vpop.permute.xlu0 %3212
    %v3216 = vsel %vm239, %v2078, %v3195
    %v3217 = vsel %vm239, %v2157, %v3197
    %v3218 = vsel %vm1583, %v3216, %v3203
    %v3219 = vsel %vm1583, %v3217, %v3205
    %v3220 = vsel %vm1586, %v3218, %v3211
    %v3221 = vsel %vm1586, %v3219, %v3213
    %v3222 = vld [vmem:[#allocation2 + $0x60] sm:$0xff]
    %v3223 = vld [vmem:[#allocation2 + $0x68] sm:$0xff]
    %v3224 = vld [vmem:[#allocation2 + $0x70] sm:$0xff]
    %v3225 = vld [vmem:[#allocation2 + $0x78] sm:$0xff]
    %v3226 = vld [vmem:[#allocation2 + $0x1e5] sm:$0x1]
    %v3227 = vlaneseq
    %v3228 = vshrl.u32 %v3227, 7
    %v3229 = vsub.s32 0, %v3228
    %v3230 = vrot.slane %v3226, %v3229
    %v3232 = vsel %vm46, %v3220, 0
    %v3235 = vsel %vm46, %v3221, 0
    %3237 = vmatprep.subr.mxu0 0.0
    %3238 = vmatpush1.msra.mxu0 %v3222
    %3239 = vmatprep.subr.mxu0 0.0
    %3240 = vmatpush1.msra.mxu0 %v3223
    %3241 = vmatprep.subr.mxu0 0.0
    %3242 = vmatpush1.msra.mxu0 %v3224
    %3243 = vmatprep.subr.mxu0 0.0
    %3244 = vmatpush1.msra.mxu0 %v3225
    %3245 = vmatprep.subr.mxu0 0.0
    %3246 = vmatpush1.msra.mxu0 0.0
    %3247 = vmatprep.subr.mxu0 0.0
    %3248 = vmatpush1.msra.mxu0 0.0
    %3249 = vmatprep.subr.mxu0 0.0
    %3250 = vmatpush1.msra.mxu0 0.0
    %3251 = vmatprep.subr.mxu0 0.0
    %3252 = vmatpush1.msra.mxu0 0.0
    %3253 = vmatprep.subr.mxu0 0.0
    %3254 = vmatpush1.msra.mxu0 0.0
    %3255 = vmatprep.subr.mxu0 0.0
    %3256 = vmatpush1.msra.mxu0 0.0
    %3257 = vmatprep.subr.mxu0 0.0
    %3258 = vmatpush1.msra.mxu0 0.0
    %3259 = vmatprep.subr.mxu0 0.0
    %3260 = vmatpush1.msra.mxu0 0.0
    %3261 = vmatprep.subr.mxu0 0.0
    %3262 = vmatpush1.msra.mxu0 0.0
    %3263 = vmatprep.subr.mxu0 0.0
    %3264 = vmatpush1.msra.mxu0 0.0
    %3265 = vmatprep.subr.mxu0 0.0
    %3266 = vmatpush1.msra.mxu0 0.0
    %3267 = vmatprep.subr.mxu0 0.0
    %3268 = vmatpush1.msra.mxu0 0.0
    %3269 = vmatprep.subr.mxu0 0.0
    %3270 = vmatpush1.msra.mxu0 0.0
    %3271 = vmatprep.subr.mxu0 0.0
    %3272 = vmatpush1.msra.mxu0 0.0
    %3273 = vmatprep.subr.mxu0 0.0
    %3274 = vmatpush1.msra.mxu0 0.0
    %3275 = vmatprep.subr.mxu0 0.0
    %3276 = vmatpush1.msra.mxu0 0.0
    %3277 = vmatprep.subr.mxu0 0.0
    %3278 = vmatpush1.msra.mxu0 0.0
    %3279 = vmatprep.subr.mxu0 0.0
    %3280 = vmatpush1.msra.mxu0 0.0
    %3281 = vmatprep.subr.mxu0 0.0
    %3282 = vmatpush1.msra.mxu0 0.0
    %3283 = vmatprep.subr.mxu0 0.0
    %3284 = vmatpush1.msra.mxu0 0.0
    %3285 = vmatprep.subr.mxu0 0.0
    %3286 = vmatpush1.msra.mxu0 0.0
    %3287 = vmatprep.subr.mxu0 0.0
    %3288 = vmatpush1.msra.mxu0 0.0
    %3289 = vmatprep.subr.mxu0 0.0
    %3290 = vmatpush1.msra.mxu0 0.0
    %3291 = vmatprep.subr.mxu0 0.0
    %3292 = vmatpush1.msra.mxu0 0.0
    %3293 = vmatprep.subr.mxu0 0.0
    %3294 = vmatpush1.msra.mxu0 0.0
    %3295 = vmatprep.subr.mxu0 0.0
    %3296 = vmatpush1.msra.mxu0 0.0
    %3297 = vmatprep.subr.mxu0 0.0
    %3298 = vmatpush1.msra.mxu0 0.0
    %3299 = vmatprep.subr.mxu0 0.0
    %3300 = vmatpush1.msra.mxu0 0.0
    %3301 = vmatprep.mubr.f32.mxu0 0.0
    %3302 = vmatmul.mubr.f32.gmra.mrb[0].mxu0 %v3232
    %v3303 = vpop.f32.mrb[0].mxu0
    %v3304 = vadd.f32 %v3230, %v3303
    %v3305 = vpop.f32.mrb[0].mxu0
    %3306 = vmatprep.mubr.f32.mxu0 0.0
    %3307 = vmatmul.mubr.f32.gmra.mrb[0].mxu0 %v3235
    %v3308 = vpop.f32.mrb[0].mxu0
    %v3309 = vadd.f32 %v3230, %v3308
    %v3310 = vpop.f32.mrb[0].mxu0
    %3311 = vdwg.mxu0
    %v3312 = vadd.f32 %v3304, %v1720
    %v3313 = vadd.f32 %v3309, %v1721
    %v3314 = vld [vmem:[#allocation2 + $0x1e6] sm:$0x1]
    %v3315 = vld [vmem:[#allocation2 + $0x1e7] sm:$0x1]
    %v3316 = vsel %vm46, %v3312, 0.0
    %3317 = vadd.xlane.f32.xlu0 %v3316
    %v3318 = vpop.xlane.xlu0 %3317
    %v3319 = vsel %vm46, %v3313, 0.0
    %3320 = vadd.xlane.f32.xlu0 %v3319
    %v3321 = vpop.xlane.xlu0 %3320
    %v3322 = vmul.f32 %v3318, %v1689
    %v3323 = vmul.f32 %v3321, %v1689
    %v3324 = vsub.f32 %v3312, %v3322
    %v3325 = vsub.f32 %v3313, %v3323
    %v3326 = vmul.f32 %v3324, %v3324
    %v3327 = vmul.f32 %v3325, %v3325
    %v3328 = vsel %vm46, %v3326, 0.0
    %3329 = vadd.xlane.f32.xlu0 %v3328
    %v3330 = vpop.xlane.xlu0 %3329
    %v3331 = vsel %vm46, %v3327, 0.0
    %3332 = vadd.xlane.f32.xlu0 %v3331
    %v3333 = vpop.xlane.xlu0 %3332
    %v3334 = vmul.f32 %v3330, %v1689
    %v3335 = vmul.f32 %v3333, %v1689
    %v3336 = vadd.f32 %v3334, 1e-05
    %v3337 = vadd.f32 %v3335, 1e-05
    %v3338 = vrsqrt.pop %v3336
    %v3339 = vrsqrt.pop %v3337
    %v3340 = vmul.f32 %v3324, %v3338
    %v3341 = vmul.f32 %v3325, %v3339
    %v3342 = vlaneseq
    %v3343 = vshrl.u32 %v3342, 7
    %v3344 = vsub.s32 0, %v3343
    %v3345 = vrot.slane %v3314, %v3344
    %v3346 = vmul.f32 %v3340, %v3345
    %v3347 = vmul.f32 %v3341, %v3345
    %v3348 = vlaneseq
    %v3349 = vshrl.u32 %v3348, 7
    %v3350 = vsub.s32 0, %v3349
    %v3351 = vrot.slane %v3315, %v3350
    %v3352 = vadd.f32 %v3346, %v3351
    %v3353 = vadd.f32 %v3347, %v3351
    %v3354 = vld [vmem:[#allocation2 + $0x80] sm:$0xff]
    %v3355 = vld [vmem:[#allocation2 + $0x88] sm:$0xff]
    %v3356 = vld [vmem:[#allocation2 + $0x90] sm:$0xff]
    %v3357 = vld [vmem:[#allocation2 + $0x98] sm:$0xff]
    %v3358 = vld [vmem:[#allocation2 + $0x1e8] sm:$0x1]
    %v3359 = vlaneseq
    %v3360 = vshrl.u32 %v3359, 7
    %v3361 = vsub.s32 0, %v3360
    %v3362 = vrot.slane %v3358, %v3361
    %v3364 = vsel %vm46, %v3352, 0
    %v3367 = vsel %vm46, %v3353, 0
    %3369 = vmatprep.subr.mxu0 0.0
    %3370 = vmatpush1.msra.mxu0 %v3354
    %3371 = vmatprep.subr.mxu0 0.0
    %3372 = vmatpush1.msra.mxu0 %v3355
    %3373 = vmatprep.subr.mxu0 0.0
    %3374 = vmatpush1.msra.mxu0 %v3356
    %3375 = vmatprep.subr.mxu0 0.0
    %3376 = vmatpush1.msra.mxu0 %v3357
    %3377 = vmatprep.subr.mxu0 0.0
    %3378 = vmatpush1.msra.mxu0 0.0
    %3379 = vmatprep.subr.mxu0 0.0
    %3380 = vmatpush1.msra.mxu0 0.0
    %3381 = vmatprep.subr.mxu0 0.0
    %3382 = vmatpush1.msra.mxu0 0.0
    %3383 = vmatprep.subr.mxu0 0.0
    %3384 = vmatpush1.msra.mxu0 0.0
    %3385 = vmatprep.subr.mxu0 0.0
    %3386 = vmatpush1.msra.mxu0 0.0
    %3387 = vmatprep.subr.mxu0 0.0
    %3388 = vmatpush1.msra.mxu0 0.0
    %3389 = vmatprep.subr.mxu0 0.0
    %3390 = vmatpush1.msra.mxu0 0.0
    %3391 = vmatprep.subr.mxu0 0.0
    %3392 = vmatpush1.msra.mxu0 0.0
    %3393 = vmatprep.subr.mxu0 0.0
    %3394 = vmatpush1.msra.mxu0 0.0
    %3395 = vmatprep.subr.mxu0 0.0
    %3396 = vmatpush1.msra.mxu0 0.0
    %3397 = vmatprep.subr.mxu0 0.0
    %3398 = vmatpush1.msra.mxu0 0.0
    %3399 = vmatprep.subr.mxu0 0.0
    %3400 = vmatpush1.msra.mxu0 0.0
    %3401 = vmatprep.subr.mxu0 0.0
    %3402 = vmatpush1.msra.mxu0 0.0
    %3403 = vmatprep.subr.mxu0 0.0
    %3404 = vmatpush1.msra.mxu0 0.0
    %3405 = vmatprep.subr.mxu0 0.0
    %3406 = vmatpush1.msra.mxu0 0.0
    %3407 = vmatprep.subr.mxu0 0.0
    %3408 = vmatpush1.msra.mxu0 0.0
    %3409 = vmatprep.subr.mxu0 0.0
    %3410 = vmatpush1.msra.mxu0 0.0
    %3411 = vmatprep.subr.mxu0 0.0
    %3412 = vmatpush1.msra.mxu0 0.0
    %3413 = vmatprep.subr.mxu0 0.0
    %3414 = vmatpush1.msra.mxu0 0.0
    %3415 = vmatprep.subr.mxu0 0.0
    %3416 = vmatpush1.msra.mxu0 0.0
    %3417 = vmatprep.subr.mxu0 0.0
    %3418 = vmatpush1.msra.mxu0 0.0
    %3419 = vmatprep.subr.mxu0 0.0
    %3420 = vmatpush1.msra.mxu0 0.0
    %3421 = vmatprep.subr.mxu0 0.0
    %3422 = vmatpush1.msra.mxu0 0.0
    %3423 = vmatprep.subr.mxu0 0.0
    %3424 = vmatpush1.msra.mxu0 0.0
    %3425 = vmatprep.subr.mxu0 0.0
    %3426 = vmatpush1.msra.mxu0 0.0
    %3427 = vmatprep.subr.mxu0 0.0
    %3428 = vmatpush1.msra.mxu0 0.0
    %3429 = vmatprep.subr.mxu0 0.0
    %3430 = vmatpush1.msra.mxu0 0.0
    %3431 = vmatprep.subr.mxu0 0.0
    %3432 = vmatpush1.msra.mxu0 0.0
    %3433 = vmatprep.mubr.f32.mxu0 0.0
    %3434 = vmatmul.mubr.f32.gmra.mrb[0].mxu0 %v3364
    %v3435 = vpop.f32.mrb[0].mxu0
    %v3436 = vadd.f32 %v3362, %v3435
    %v3437 = vpop.f32.mrb[0].mxu0
    %3438 = vmatprep.mubr.f32.mxu0 0.0
    %3439 = vmatmul.mubr.f32.gmra.mrb[0].mxu0 %v3367
    %v3440 = vpop.f32.mrb[0].mxu0
    %v3441 = vadd.f32 %v3362, %v3440
    %v3442 = vpop.f32.mrb[0].mxu0
    %3443 = vdwg.mxu0
    %v3444 = vmax.f32 %v3436, 0.0
    %v3445 = vmax.f32 %v3441, 0.0
    %v3446 = vld [vmem:[#allocation2 + $0xa0] sm:$0xff]
    %v3447 = vld [vmem:[#allocation2 + $0xa8] sm:$0xff]
    %v3448 = vld [vmem:[#allocation2 + $0xb0] sm:$0xff]
    %v3449 = vld [vmem:[#allocation2 + $0xb8] sm:$0xff]
    %v3450 = vld [vmem:[#allocation2 + $0xc0] sm:$0xff]
    %v3451 = vld [vmem:[#allocation2 + $0xc8] sm:$0xff]
    %v3452 = vld [vmem:[#allocation2 + $0xd0] sm:$0xff]
    %v3453 = vld [vmem:[#allocation2 + $0xd8] sm:$0xff]
    %v3454 = vld [vmem:[#allocation2 + $0x1e9] sm:$0x1]
    %v3455 = vlaneseq
    %v3456 = vshrl.u32 %v3455, 7
    %v3457 = vsub.s32 0, %v3456
    %v3458 = vrot.slane %v3454, %v3457
    %vm3459 = vcmask 523264
    %v3461 = vsel %vm3459, %v3444, 0
    %v3464 = vsel %vm3459, %v3445, 0
    %3466 = vmatprep.subr.mxu0 0.0
    %3467 = vmatpush1.msra.mxu0 %v3446
    %3468 = vmatprep.subr.mxu0 0.0
    %3469 = vmatpush1.msra.mxu0 %v3447
    %3470 = vmatprep.subr.mxu0 0.0
    %3471 = vmatpush1.msra.mxu0 %v3448
    %3472 = vmatprep.subr.mxu0 0.0
    %3473 = vmatpush1.msra.mxu0 %v3449
    %3474 = vmatprep.subr.mxu0 0.0
    %3475 = vmatpush1.msra.mxu0 %v3450
    %3476 = vmatprep.subr.mxu0 0.0
    %3477 = vmatpush1.msra.mxu0 %v3451
    %3478 = vmatprep.subr.mxu0 0.0
    %3479 = vmatpush1.msra.mxu0 %v3452
    %3480 = vmatprep.subr.mxu0 0.0
    %3481 = vmatpush1.msra.mxu0 %v3453
    %3482 = vmatprep.subr.mxu0 0.0
    %3483 = vmatpush1.msra.mxu0 0.0
    %3484 = vmatprep.subr.mxu0 0.0
    %3485 = vmatpush1.msra.mxu0 0.0
    %3486 = vmatprep.subr.mxu0 0.0
    %3487 = vmatpush1.msra.mxu0 0.0
    %3488 = vmatprep.subr.mxu0 0.0
    %3489 = vmatpush1.msra.mxu0 0.0
    %3490 = vmatprep.subr.mxu0 0.0
    %3491 = vmatpush1.msra.mxu0 0.0
    %3492 = vmatprep.subr.mxu0 0.0
    %3493 = vmatpush1.msra.mxu0 0.0
    %3494 = vmatprep.subr.mxu0 0.0
    %3495 = vmatpush1.msra.mxu0 0.0
    %3496 = vmatprep.subr.mxu0 0.0
    %3497 = vmatpush1.msra.mxu0 0.0
    %3498 = vmatprep.subr.mxu0 0.0
    %3499 = vmatpush1.msra.mxu0 0.0
    %3500 = vmatprep.subr.mxu0 0.0
    %3501 = vmatpush1.msra.mxu0 0.0
    %3502 = vmatprep.subr.mxu0 0.0
    %3503 = vmatpush1.msra.mxu0 0.0
    %3504 = vmatprep.subr.mxu0 0.0
    %3505 = vmatpush1.msra.mxu0 0.0
    %3506 = vmatprep.subr.mxu0 0.0
    %3507 = vmatpush1.msra.mxu0 0.0
    %3508 = vmatprep.subr.mxu0 0.0
    %3509 = vmatpush1.msra.mxu0 0.0
    %3510 = vmatprep.subr.mxu0 0.0
    %3511 = vmatpush1.msra.mxu0 0.0
    %3512 = vmatprep.subr.mxu0 0.0
    %3513 = vmatpush1.msra.mxu0 0.0
    %3514 = vmatprep.subr.mxu0 0.0
    %3515 = vmatpush1.msra.mxu0 0.0
    %3516 = vmatprep.subr.mxu0 0.0
    %3517 = vmatpush1.msra.mxu0 0.0
    %3518 = vmatprep.subr.mxu0 0.0
    %3519 = vmatpush1.msra.mxu0 0.0
    %3520 = vmatprep.subr.mxu0 0.0
    %3521 = vmatpush1.msra.mxu0 0.0
    %3522 = vmatprep.subr.mxu0 0.0
    %3523 = vmatpush1.msra.mxu0 0.0
    %3524 = vmatprep.subr.mxu0 0.0
    %3525 = vmatpush1.msra.mxu0 0.0
    %3526 = vmatprep.subr.mxu0 0.0
    %3527 = vmatpush1.msra.mxu0 0.0
    %3528 = vmatprep.subr.mxu0 0.0
    %3529 = vmatpush1.msra.mxu0 0.0
    %3530 = vmatprep.mubr.f32.mxu0 0.0
    %3531 = vmatmul.mubr.f32.gmra.mrb[0].mxu0 %v3461
    %v3532 = vpop.f32.mrb[0].mxu0
    %v3533 = vadd.f32 %v3458, %v3532
    %v3534 = vpop.f32.mrb[0].mxu0
    %3535 = vmatprep.mubr.f32.mxu0 0.0
    %3536 = vmatmul.mubr.f32.gmra.mrb[0].mxu0 %v3464
    %v3537 = vpop.f32.mrb[0].mxu0
    %v3538 = vadd.f32 %v3458, %v3537
    %v3539 = vpop.f32.mrb[0].mxu0
    %3540 = vdwg.mxu0
    %v3541 = vadd.f32 %v3533, %v3352
    %v3542 = vadd.f32 %v3538, %v3353
    %v3543 = vld [vmem:[#allocation2 + $0x1ea] sm:$0x1]
    %v3544 = vld [vmem:[#allocation2 + $0x1eb] sm:$0x1]
    %v3545 = vsel %vm46, %v3541, 0.0
    %3546 = vadd.xlane.f32.xlu0 %v3545
    %v3547 = vpop.xlane.xlu0 %3546
    %v3548 = vsel %vm46, %v3542, 0.0
    %3549 = vadd.xlane.f32.xlu0 %v3548
    %v3550 = vpop.xlane.xlu0 %3549
    %v3551 = vmul.f32 %v3547, %v1689
    %v3552 = vmul.f32 %v3550, %v1689
    %v3553 = vsub.f32 %v3541, %v3551
    %v3554 = vsub.f32 %v3542, %v3552
    %v3555 = vmul.f32 %v3553, %v3553
    %v3556 = vmul.f32 %v3554, %v3554
    %v3557 = vsel %vm46, %v3555, 0.0
    %3558 = vadd.xlane.f32.xlu0 %v3557
    %v3559 = vpop.xlane.xlu0 %3558
    %v3560 = vsel %vm46, %v3556, 0.0
    %3561 = vadd.xlane.f32.xlu0 %v3560
    %v3562 = vpop.xlane.xlu0 %3561
    %v3563 = vmul.f32 %v3559, %v1689
    %v3564 = vmul.f32 %v3562, %v1689
    %v3565 = vadd.f32 %v3563, 1e-05
    %v3566 = vadd.f32 %v3564, 1e-05
    %v3567 = vrsqrt.pop %v3565
    %v3568 = vrsqrt.pop %v3566
    %v3569 = vmul.f32 %v3553, %v3567
    %v3570 = vmul.f32 %v3554, %v3568
    %v3571 = vlaneseq
    %v3572 = vshrl.u32 %v3571, 7
    %v3573 = vsub.s32 0, %v3572
    %v3574 = vrot.slane %v3543, %v3573
    %v3575 = vmul.f32 %v3569, %v3574
    %v3576 = vmul.f32 %v3570, %v3574
    %v3577 = vlaneseq
    %v3578 = vshrl.u32 %v3577, 7
    %v3579 = vsub.s32 0, %v3578
    %v3580 = vrot.slane %v3544, %v3579
    %v3581 = vadd.f32 %v3575, %v3580
    %v3582 = vadd.f32 %v3576, %v3580
    %v3583 = vld [vmem:[#allocation2 + $0xe0] sm:$0xff]
    %v3584 = vld [vmem:[#allocation2 + $0xe8] sm:$0xff]
    %v3585 = vld [vmem:[#allocation2 + $0xf0] sm:$0xff]
    %v3586 = vld [vmem:[#allocation2 + $0xf8] sm:$0xff]
    %v3587 = vld [vmem:[#allocation2 + $0x1ec] sm:$0x1]
    %v3588 = vlaneseq
    %v3589 = vshrl.u32 %v3588, 7
    %v3590 = vsub.s32 0, %v3589
    %v3591 = vrot.slane %v3587, %v3590
    %v3593 = vsel %vm46, %v3581, 0
    %v3596 = vsel %vm46, %v3582, 0
    %3598 = vmatprep.subr.mxu0 0.0
    %3599 = vmatpush1.msra.mxu0 %v3583
    %3600 = vmatprep.subr.mxu0 0.0
    %3601 = vmatpush1.msra.mxu0 %v3584
    %3602 = vmatprep.subr.mxu0 0.0
    %3603 = vmatpush1.msra.mxu0 %v3585
    %3604 = vmatprep.subr.mxu0 0.0
    %3605 = vmatpush1.msra.mxu0 %v3586
    %3606 = vmatprep.subr.mxu0 0.0
    %3607 = vmatpush1.msra.mxu0 0.0
    %3608 = vmatprep.subr.mxu0 0.0
    %3609 = vmatpush1.msra.mxu0 0.0
    %3610 = vmatprep.subr.mxu0 0.0
    %3611 = vmatpush1.msra.mxu0 0.0
    %3612 = vmatprep.subr.mxu0 0.0
    %3613 = vmatpush1.msra.mxu0 0.0
    %3614 = vmatprep.subr.mxu0 0.0
    %3615 = vmatpush1.msra.mxu0 0.0
    %3616 = vmatprep.subr.mxu0 0.0
    %3617 = vmatpush1.msra.mxu0 0.0
    %3618 = vmatprep.subr.mxu0 0.0
    %3619 = vmatpush1.msra.mxu0 0.0
    %3620 = vmatprep.subr.mxu0 0.0
    %3621 = vmatpush1.msra.mxu0 0.0
    %3622 = vmatprep.subr.mxu0 0.0
    %3623 = vmatpush1.msra.mxu0 0.0
    %3624 = vmatprep.subr.mxu0 0.0
    %3625 = vmatpush1.msra.mxu0 0.0
    %3626 = vmatprep.subr.mxu0 0.0
    %3627 = vmatpush1.msra.mxu0 0.0
    %3628 = vmatprep.subr.mxu0 0.0
    %3629 = vmatpush1.msra.mxu0 0.0
    %3630 = vmatprep.subr.mxu0 0.0
    %3631 = vmatpush1.msra.mxu0 0.0
    %3632 = vmatprep.subr.mxu0 0.0
    %3633 = vmatpush1.msra.mxu0 0.0
    %3634 = vmatprep.subr.mxu0 0.0
    %3635 = vmatpush1.msra.mxu0 0.0
    %3636 = vmatprep.subr.mxu0 0.0
    %3637 = vmatpush1.msra.mxu0 0.0
    %3638 = vmatprep.subr.mxu0 0.0
    %3639 = vmatpush1.msra.mxu0 0.0
    %3640 = vmatprep.subr.mxu0 0.0
    %3641 = vmatpush1.msra.mxu0 0.0
    %3642 = vmatprep.subr.mxu0 0.0
    %3643 = vmatpush1.msra.mxu0 0.0
    %3644 = vmatprep.subr.mxu0 0.0
    %3645 = vmatpush1.msra.mxu0 0.0
    %3646 = vmatprep.subr.mxu0 0.0
    %3647 = vmatpush1.msra.mxu0 0.0
    %3648 = vmatprep.subr.mxu0 0.0
    %3649 = vmatpush1.msra.mxu0 0.0
    %3650 = vmatprep.subr.mxu0 0.0
    %3651 = vmatpush1.msra.mxu0 0.0
    %3652 = vmatprep.subr.mxu0 0.0
    %3653 = vmatpush1.msra.mxu0 0.0
    %3654 = vmatprep.subr.mxu0 0.0
    %3655 = vmatpush1.msra.mxu0 0.0
    %3656 = vmatprep.subr.mxu0 0.0
    %3657 = vmatpush1.msra.mxu0 0.0
    %3658 = vmatprep.subr.mxu0 0.0
    %3659 = vmatpush1.msra.mxu0 0.0
    %3660 = vmatprep.subr.mxu0 0.0
    %3661 = vmatpush1.msra.mxu0 0.0
    %3662 = vmatprep.mubr.f32.mxu0 0.0
    %3663 = vmatmul.mubr.f32.gmra.mrb[0].mxu0 %v3593
    %v3664 = vpop.f32.mrb[0].mxu0
    %v3665 = vadd.f32 %v3591, %v3664
    %v3666 = vpop.f32.mrb[0].mxu0
    %3667 = vmatprep.mubr.f32.mxu0 0.0
    %3668 = vmatmul.mubr.f32.gmra.mrb[0].mxu0 %v3596
    %v3669 = vpop.f32.mrb[0].mxu0
    %v3670 = vadd.f32 %v3591, %v3669
    %v3671 = vpop.f32.mrb[0].mxu0
    %3672 = vdwg.mxu0
    %v3673 = vmul.f32 %v3665, 0.35355338
    %v3674 = vmul.f32 %v3670, 0.35355338
    %3676 = vrot.lane.b32.xlu0 %v3665, 96
    %v3677 = vpop.permute.xlu0 %3676
    %v3679 = vsel %vm239, %v3673, 0
    %v3681 = vsel %vm239, %v3677, 0
    %3683 = vmatprep.subr.mxu0 0.0
    %3684 = vmatpush1.xpose.msra.mxu0 %v3681
    %3685 = vmatprep.subr.mxu0 0.0
    %3686 = vmatpush1.xpose.msra.mxu0 0.0
    %3687 = vmatprep.subr.mxu0 0.0
    %3688 = vmatpush1.xpose.msra.mxu0 0.0
    %3689 = vmatprep.subr.mxu0 0.0
    %3690 = vmatpush1.xpose.msra.mxu0 0.0
    %3691 = vmatprep.subr.mxu0 0.0
    %3692 = vmatpush1.xpose.msra.mxu0 0.0
    %3693 = vmatprep.subr.mxu0 0.0
    %3694 = vmatpush1.xpose.msra.mxu0 0.0
    %3695 = vmatprep.subr.mxu0 0.0
    %3696 = vmatpush1.xpose.msra.mxu0 0.0
    %3697 = vmatprep.subr.mxu0 0.0
    %3698 = vmatpush1.xpose.msra.mxu0 0.0
    %3699 = vmatprep.subr.mxu0 0.0
    %3700 = vmatpush1.xpose.msra.mxu0 0.0
    %3701 = vmatprep.subr.mxu0 0.0
    %3702 = vmatpush1.xpose.msra.mxu0 0.0
    %3703 = vmatprep.subr.mxu0 0.0
    %3704 = vmatpush1.xpose.msra.mxu0 0.0
    %3705 = vmatprep.subr.mxu0 0.0
    %3706 = vmatpush1.xpose.msra.mxu0 0.0
    %3707 = vmatprep.subr.mxu0 0.0
    %3708 = vmatpush1.xpose.msra.mxu0 0.0
    %3709 = vmatprep.subr.mxu0 0.0
    %3710 = vmatpush1.xpose.msra.mxu0 0.0
    %3711 = vmatprep.subr.mxu0 0.0
    %3712 = vmatpush1.xpose.msra.mxu0 0.0
    %3713 = vmatprep.subr.mxu0 0.0
    %3714 = vmatpush1.xpose.msra.mxu0 0.0
    %3715 = vmatprep.subr.mxu0 0.0
    %3716 = vmatpush1.xpose.msra.mxu0 0.0
    %3717 = vmatprep.subr.mxu0 0.0
    %3718 = vmatpush1.xpose.msra.mxu0 0.0
    %3719 = vmatprep.subr.mxu0 0.0
    %3720 = vmatpush1.xpose.msra.mxu0 0.0
    %3721 = vmatprep.subr.mxu0 0.0
    %3722 = vmatpush1.xpose.msra.mxu0 0.0
    %3723 = vmatprep.subr.mxu0 0.0
    %3724 = vmatpush1.xpose.msra.mxu0 0.0
    %3725 = vmatprep.subr.mxu0 0.0
    %3726 = vmatpush1.xpose.msra.mxu0 0.0
    %3727 = vmatprep.subr.mxu0 0.0
    %3728 = vmatpush1.xpose.msra.mxu0 0.0
    %3729 = vmatprep.subr.mxu0 0.0
    %3730 = vmatpush1.xpose.msra.mxu0 0.0
    %3731 = vmatprep.subr.mxu0 0.0
    %3732 = vmatpush1.xpose.msra.mxu0 0.0
    %3733 = vmatprep.subr.mxu0 0.0
    %3734 = vmatpush1.xpose.msra.mxu0 0.0
    %3735 = vmatprep.subr.mxu0 0.0
    %3736 = vmatpush1.xpose.msra.mxu0 0.0
    %3737 = vmatprep.subr.mxu0 0.0
    %3738 = vmatpush1.xpose.msra.mxu0 0.0
    %3739 = vmatprep.subr.mxu0 0.0
    %3740 = vmatpush1.xpose.msra.mxu0 0.0
    %3741 = vmatprep.subr.mxu0 0.0
    %3742 = vmatpush1.xpose.msra.mxu0 0.0
    %3743 = vmatprep.subr.mxu0 0.0
    %3744 = vmatpush1.xpose.msra.mxu0 0.0
    %3745 = vmatprep.subr.mxu0 0.0
    %3746 = vmatpush1.xpose.msra.mxu0 0.0
    %3747 = vmatprep.mubr.f32.mxu0 0.0
    %3748 = vmatmul.mubr.f32.gmra.mrb[0].mxu0 %v3679
    %v3749 = vpop.f32.mrb[0].mxu0
    %v3750 = vadd.f32 %v35, %v3749
    %v3751 = vpop.f32.mrb[0].mxu0
    %3752 = vdwg.mxu0
    %3754 = vrot.lane.b32.xlu0 %v3670, 96
    %v3755 = vpop.permute.xlu0 %3754
    %v3757 = vsel %vm239, %v3674, 0
    %v3759 = vsel %vm239, %v3755, 0
    %3761 = vmatprep.subr.mxu0 0.0
    %3762 = vmatpush1.xpose.msra.mxu0 %v3759
    %3763 = vmatprep.subr.mxu0 0.0
    %3764 = vmatpush1.xpose.msra.mxu0 0.0
    %3765 = vmatprep.subr.mxu0 0.0
    %3766 = vmatpush1.xpose.msra.mxu0 0.0
    %3767 = vmatprep.subr.mxu0 0.0
    %3768 = vmatpush1.xpose.msra.mxu0 0.0
    %3769 = vmatprep.subr.mxu0 0.0
    %3770 = vmatpush1.xpose.msra.mxu0 0.0
    %3771 = vmatprep.subr.mxu0 0.0
    %3772 = vmatpush1.xpose.msra.mxu0 0.0
    %3773 = vmatprep.subr.mxu0 0.0
    %3774 = vmatpush1.xpose.msra.mxu0 0.0
    %3775 = vmatprep.subr.mxu0 0.0
    %3776 = vmatpush1.xpose.msra.mxu0 0.0
    %3777 = vmatprep.subr.mxu0 0.0
    %3778 = vmatpush1.xpose.msra.mxu0 0.0
    %3779 = vmatprep.subr.mxu0 0.0
    %3780 = vmatpush1.xpose.msra.mxu0 0.0
    %3781 = vmatprep.subr.mxu0 0.0
    %3782 = vmatpush1.xpose.msra.mxu0 0.0
    %3783 = vmatprep.subr.mxu0 0.0
    %3784 = vmatpush1.xpose.msra.mxu0 0.0
    %3785 = vmatprep.subr.mxu0 0.0
    %3786 = vmatpush1.xpose.msra.mxu0 0.0
    %3787 = vmatprep.subr.mxu0 0.0
    %3788 = vmatpush1.xpose.msra.mxu0 0.0
    %3789 = vmatprep.subr.mxu0 0.0
    %3790 = vmatpush1.xpose.msra.mxu0 0.0
    %3791 = vmatprep.subr.mxu0 0.0
    %3792 = vmatpush1.xpose.msra.mxu0 0.0
    %3793 = vmatprep.subr.mxu0 0.0
    %3794 = vmatpush1.xpose.msra.mxu0 0.0
    %3795 = vmatprep.subr.mxu0 0.0
    %3796 = vmatpush1.xpose.msra.mxu0 0.0
    %3797 = vmatprep.subr.mxu0 0.0
    %3798 = vmatpush1.xpose.msra.mxu0 0.0
    %3799 = vmatprep.subr.mxu0 0.0
    %3800 = vmatpush1.xpose.msra.mxu0 0.0
    %3801 = vmatprep.subr.mxu0 0.0
    %3802 = vmatpush1.xpose.msra.mxu0 0.0
    %3803 = vmatprep.subr.mxu0 0.0
    %3804 = vmatpush1.xpose.msra.mxu0 0.0
    %3805 = vmatprep.subr.mxu0 0.0
    %3806 = vmatpush1.xpose.msra.mxu0 0.0
    %3807 = vmatprep.subr.mxu0 0.0
    %3808 = vmatpush1.xpose.msra.mxu0 0.0
    %3809 = vmatprep.subr.mxu0 0.0
    %3810 = vmatpush1.xpose.msra.mxu0 0.0
    %3811 = vmatprep.subr.mxu0 0.0
    %3812 = vmatpush1.xpose.msra.mxu0 0.0
    %3813 = vmatprep.subr.mxu0 0.0
    %3814 = vmatpush1.xpose.msra.mxu0 0.0
    %3815 = vmatprep.subr.mxu0 0.0
    %3816 = vmatpush1.xpose.msra.mxu0 0.0
    %3817 = vmatprep.subr.mxu0 0.0
    %3818 = vmatpush1.xpose.msra.mxu0 0.0
    %3819 = vmatprep.subr.mxu0 0.0
    %3820 = vmatpush1.xpose.msra.mxu0 0.0
    %3821 = vmatprep.subr.mxu0 0.0
    %3822 = vmatpush1.xpose.msra.mxu0 0.0
    %3823 = vmatprep.subr.mxu0 0.0
    %3824 = vmatpush1.xpose.msra.mxu0 0.0
    %3825 = vmatprep.mubr.f32.mxu0 0.0
    %3826 = vmatmul.mubr.f32.gmra.mrb[0].mxu0 %v3757
    %v3827 = vpop.f32.mrb[0].mxu0
    %v3828 = vadd.f32 %v36, %v3827
    %v3829 = vpop.f32.mrb[0].mxu0
    %3830 = vdwg.mxu0
    %v3831 = vsel %vm239, %v3750, -inf
    %3832 = vmax.xlane.f32.xlu0 %v3831
    %v3833 = vpop.xlane.xlu0 %3832
    %v3834 = vsel %vm239, %v3828, -inf
    %3835 = vmax.xlane.f32.xlu0 %v3834
    %v3836 = vpop.xlane.xlu0 %3835
    %v3837 = vsub.f32 %v3750, %v3833
    %v3838 = vsub.f32 %v3828, %v3836
    %v3839 = vmul.f32 %v3837, 1.442695
    %v3840 = vpow.pop %v3839
    %v3841 = vmul.f32 %v3838, 1.442695
    %v3842 = vpow.pop %v3841
    %v3843 = vsel %vm239, %v3840, 0.0
    %3844 = vadd.xlane.f32.xlu0 %v3843
    %v3845 = vpop.xlane.xlu0 %3844
    %v3846 = vsel %vm239, %v3842, 0.0
    %3847 = vadd.xlane.f32.xlu0 %v3846
    %v3848 = vpop.xlane.xlu0 %3847
    %v3849 = vrcp.pop %v3845
    %v3850 = vrcp.pop %v3848
    %v3851 = vmul.f32 %v3840, %v3849
    %v3852 = vmul.f32 %v3842, %v3850
    %3853 = vrot.lane.b32.xlu0 %v3665, 64
    %v3854 = vpop.permute.xlu0 %3853
    %v3857 = vsel %vm239, %v3851, 0
    %3859 = vmatprep.subr.mxu0 0.0
    %3860 = vmatpush1.msra.mxu0 %v3854
    %3861 = vmatprep.subr.mxu0 0.0
    %3862 = vmatpush1.msra.mxu0 0.0
    %3863 = vmatprep.subr.mxu0 0.0
    %3864 = vmatpush1.msra.mxu0 0.0
    %3865 = vmatprep.subr.mxu0 0.0
    %3866 = vmatpush1.msra.mxu0 0.0
    %3867 = vmatprep.subr.mxu0 0.0
    %3868 = vmatpush1.msra.mxu0 0.0
    %3869 = vmatprep.subr.mxu0 0.0
    %3870 = vmatpush1.msra.mxu0 0.0
    %3871 = vmatprep.subr.mxu0 0.0
    %3872 = vmatpush1.msra.mxu0 0.0
    %3873 = vmatprep.subr.mxu0 0.0
    %3874 = vmatpush1.msra.mxu0 0.0
    %3875 = vmatprep.subr.mxu0 0.0
    %3876 = vmatpush1.msra.mxu0 0.0
    %3877 = vmatprep.subr.mxu0 0.0
    %3878 = vmatpush1.msra.mxu0 0.0
    %3879 = vmatprep.subr.mxu0 0.0
    %3880 = vmatpush1.msra.mxu0 0.0
    %3881 = vmatprep.subr.mxu0 0.0
    %3882 = vmatpush1.msra.mxu0 0.0
    %3883 = vmatprep.subr.mxu0 0.0
    %3884 = vmatpush1.msra.mxu0 0.0
    %3885 = vmatprep.subr.mxu0 0.0
    %3886 = vmatpush1.msra.mxu0 0.0
    %3887 = vmatprep.subr.mxu0 0.0
    %3888 = vmatpush1.msra.mxu0 0.0
    %3889 = vmatprep.subr.mxu0 0.0
    %3890 = vmatpush1.msra.mxu0 0.0
    %3891 = vmatprep.subr.mxu0 0.0
    %3892 = vmatpush1.msra.mxu0 0.0
    %3893 = vmatprep.subr.mxu0 0.0
    %3894 = vmatpush1.msra.mxu0 0.0
    %3895 = vmatprep.subr.mxu0 0.0
    %3896 = vmatpush1.msra.mxu0 0.0
    %3897 = vmatprep.subr.mxu0 0.0
    %3898 = vmatpush1.msra.mxu0 0.0
    %3899 = vmatprep.subr.mxu0 0.0
    %3900 = vmatpush1.msra.mxu0 0.0
    %3901 = vmatprep.subr.mxu0 0.0
    %3902 = vmatpush1.msra.mxu0 0.0
    %3903 = vmatprep.subr.mxu0 0.0
    %3904 = vmatpush1.msra.mxu0 0.0
    %3905 = vmatprep.subr.mxu0 0.0
    %3906 = vmatpush1.msra.mxu0 0.0
    %3907 = vmatprep.subr.mxu0 0.0
    %3908 = vmatpush1.msra.mxu0 0.0
    %3909 = vmatprep.subr.mxu0 0.0
    %3910 = vmatpush1.msra.mxu0 0.0
    %3911 = vmatprep.subr.mxu0 0.0
    %3912 = vmatpush1.msra.mxu0 0.0
    %3913 = vmatprep.subr.mxu0 0.0
    %3914 = vmatpush1.msra.mxu0 0.0
    %3915 = vmatprep.subr.mxu0 0.0
    %3916 = vmatpush1.msra.mxu0 0.0
    %3917 = vmatprep.subr.mxu0 0.0
    %3918 = vmatpush1.msra.mxu0 0.0
    %3919 = vmatprep.subr.mxu0 0.0
    %3920 = vmatpush1.msra.mxu0 0.0
    %3921 = vmatprep.subr.mxu0 0.0
    %3922 = vmatpush1.msra.mxu0 0.0
    %3923 = vmatprep.mubr.f32.mxu0 0.0
    %3924 = vmatmul.mubr.f32.gmra.mrb[0].mxu0 %v3857
    %v3925 = vpop.f32.mrb[0].mxu0
    %v3926 = vadd.f32 0.0, %v3925
    %v3927 = vpop.f32.mrb[0].mxu0
    %3928 = vdwg.mxu0
    %3929 = vrot.lane.b32.xlu0 %v3670, 64
    %v3930 = vpop.permute.xlu0 %3929
    %v3933 = vsel %vm239, %v3852, 0
    %3935 = vmatprep.subr.mxu0 0.0
    %3936 = vmatpush1.msra.mxu0 %v3930
    %3937 = vmatprep.subr.mxu0 0.0
    %3938 = vmatpush1.msra.mxu0 0.0
    %3939 = vmatprep.subr.mxu0 0.0
    %3940 = vmatpush1.msra.mxu0 0.0
    %3941 = vmatprep.subr.mxu0 0.0
    %3942 = vmatpush1.msra.mxu0 0.0
    %3943 = vmatprep.subr.mxu0 0.0
    %3944 = vmatpush1.msra.mxu0 0.0
    %3945 = vmatprep.subr.mxu0 0.0
    %3946 = vmatpush1.msra.mxu0 0.0
    %3947 = vmatprep.subr.mxu0 0.0
    %3948 = vmatpush1.msra.mxu0 0.0
    %3949 = vmatprep.subr.mxu0 0.0
    %3950 = vmatpush1.msra.mxu0 0.0
    %3951 = vmatprep.subr.mxu0 0.0
    %3952 = vmatpush1.msra.mxu0 0.0
    %3953 = vmatprep.subr.mxu0 0.0
    %3954 = vmatpush1.msra.mxu0 0.0
    %3955 = vmatprep.subr.mxu0 0.0
    %3956 = vmatpush1.msra.mxu0 0.0
    %3957 = vmatprep.subr.mxu0 0.0
    %3958 = vmatpush1.msra.mxu0 0.0
    %3959 = vmatprep.subr.mxu0 0.0
    %3960 = vmatpush1.msra.mxu0 0.0
    %3961 = vmatprep.subr.mxu0 0.0
    %3962 = vmatpush1.msra.mxu0 0.0
    %3963 = vmatprep.subr.mxu0 0.0
    %3964 = vmatpush1.msra.mxu0 0.0
    %3965 = vmatprep.subr.mxu0 0.0
    %3966 = vmatpush1.msra.mxu0 0.0
    %3967 = vmatprep.subr.mxu0 0.0
    %3968 = vmatpush1.msra.mxu0 0.0
    %3969 = vmatprep.subr.mxu0 0.0
    %3970 = vmatpush1.msra.mxu0 0.0
    %3971 = vmatprep.subr.mxu0 0.0
    %3972 = vmatpush1.msra.mxu0 0.0
    %3973 = vmatprep.subr.mxu0 0.0
    %3974 = vmatpush1.msra.mxu0 0.0
    %3975 = vmatprep.subr.mxu0 0.0
    %3976 = vmatpush1.msra.mxu0 0.0
    %3977 = vmatprep.subr.mxu0 0.0
    %3978 = vmatpush1.msra.mxu0 0.0
    %3979 = vmatprep.subr.mxu0 0.0
    %3980 = vmatpush1.msra.mxu0 0.0
    %3981 = vmatprep.subr.mxu0 0.0
    %3982 = vmatpush1.msra.mxu0 0.0
    %3983 = vmatprep.subr.mxu0 0.0
    %3984 = vmatpush1.msra.mxu0 0.0
    %3985 = vmatprep.subr.mxu0 0.0
    %3986 = vmatpush1.msra.mxu0 0.0
    %3987 = vmatprep.subr.mxu0 0.0
    %3988 = vmatpush1.msra.mxu0 0.0
    %3989 = vmatprep.subr.mxu0 0.0
    %3990 = vmatpush1.msra.mxu0 0.0
    %3991 = vmatprep.subr.mxu0 0.0
    %3992 = vmatpush1.msra.mxu0 0.0
    %3993 = vmatprep.subr.mxu0 0.0
    %3994 = vmatpush1.msra.mxu0 0.0
    %3995 = vmatprep.subr.mxu0 0.0
    %3996 = vmatpush1.msra.mxu0 0.0
    %3997 = vmatprep.subr.mxu0 0.0
    %3998 = vmatpush1.msra.mxu0 0.0
    %3999 = vmatprep.mubr.f32.mxu0 0.0
    %4000 = vmatmul.mubr.f32.gmra.mrb[0].mxu0 %v3933
    %v4001 = vpop.f32.mrb[0].mxu0
    %v4002 = vadd.f32 0.0, %v4001
    %v4003 = vpop.f32.mrb[0].mxu0
    %4004 = vdwg.mxu0
    %4005 = vrot.lane.b32.xlu0 %v3673, 120
    %v4006 = vpop.permute.xlu0 %4005
    %4007 = vrot.lane.b32.xlu0 %v3665, 88
    %v4008 = vpop.permute.xlu0 %4007
    %v4009 = vsel %vm239, %v4006, 0
    %v4011 = vsel %vm239, %v4008, 0
    %4013 = vmatprep.subr.mxu0 0.0
    %4014 = vmatpush1.xpose.msra.mxu0 %v4011
    %4015 = vmatprep.subr.mxu0 0.0
    %4016 = vmatpush1.xpose.msra.mxu0 0.0
    %4017 = vmatprep.subr.mxu0 0.0
    %4018 = vmatpush1.xpose.msra.mxu0 0.0
    %4019 = vmatprep.subr.mxu0 0.0
    %4020 = vmatpush1.xpose.msra.mxu0 0.0
    %4021 = vmatprep.subr.mxu0 0.0
    %4022 = vmatpush1.xpose.msra.mxu0 0.0
    %4023 = vmatprep.subr.mxu0 0.0
    %4024 = vmatpush1.xpose.msra.mxu0 0.0
    %4025 = vmatprep.subr.mxu0 0.0
    %4026 = vmatpush1.xpose.msra.mxu0 0.0
    %4027 = vmatprep.subr.mxu0 0.0
    %4028 = vmatpush1.xpose.msra.mxu0 0.0
    %4029 = vmatprep.subr.mxu0 0.0
    %4030 = vmatpush1.xpose.msra.mxu0 0.0
    %4031 = vmatprep.subr.mxu0 0.0
    %4032 = vmatpush1.xpose.msra.mxu0 0.0
    %4033 = vmatprep.subr.mxu0 0.0
    %4034 = vmatpush1.xpose.msra.mxu0 0.0
    %4035 = vmatprep.subr.mxu0 0.0
    %4036 = vmatpush1.xpose.msra.mxu0 0.0
    %4037 = vmatprep.subr.mxu0 0.0
    %4038 = vmatpush1.xpose.msra.mxu0 0.0
    %4039 = vmatprep.subr.mxu0 0.0
    %4040 = vmatpush1.xpose.msra.mxu0 0.0
    %4041 = vmatprep.subr.mxu0 0.0
    %4042 = vmatpush1.xpose.msra.mxu0 0.0
    %4043 = vmatprep.subr.mxu0 0.0
    %4044 = vmatpush1.xpose.msra.mxu0 0.0
    %4045 = vmatprep.subr.mxu0 0.0
    %4046 = vmatpush1.xpose.msra.mxu0 0.0
    %4047 = vmatprep.subr.mxu0 0.0
    %4048 = vmatpush1.xpose.msra.mxu0 0.0
    %4049 = vmatprep.subr.mxu0 0.0
    %4050 = vmatpush1.xpose.msra.mxu0 0.0
    %4051 = vmatprep.subr.mxu0 0.0
    %4052 = vmatpush1.xpose.msra.mxu0 0.0
    %4053 = vmatprep.subr.mxu0 0.0
    %4054 = vmatpush1.xpose.msra.mxu0 0.0
    %4055 = vmatprep.subr.mxu0 0.0
    %4056 = vmatpush1.xpose.msra.mxu0 0.0
    %4057 = vmatprep.subr.mxu0 0.0
    %4058 = vmatpush1.xpose.msra.mxu0 0.0
    %4059 = vmatprep.subr.mxu0 0.0
    %4060 = vmatpush1.xpose.msra.mxu0 0.0
    %4061 = vmatprep.subr.mxu0 0.0
    %4062 = vmatpush1.xpose.msra.mxu0 0.0
    %4063 = vmatprep.subr.mxu0 0.0
    %4064 = vmatpush1.xpose.msra.mxu0 0.0
    %4065 = vmatprep.subr.mxu0 0.0
    %4066 = vmatpush1.xpose.msra.mxu0 0.0
    %4067 = vmatprep.subr.mxu0 0.0
    %4068 = vmatpush1.xpose.msra.mxu0 0.0
    %4069 = vmatprep.subr.mxu0 0.0
    %4070 = vmatpush1.xpose.msra.mxu0 0.0
    %4071 = vmatprep.subr.mxu0 0.0
    %4072 = vmatpush1.xpose.msra.mxu0 0.0
    %4073 = vmatprep.subr.mxu0 0.0
    %4074 = vmatpush1.xpose.msra.mxu0 0.0
    %4075 = vmatprep.subr.mxu0 0.0
    %4076 = vmatpush1.xpose.msra.mxu0 0.0
    %4077 = vmatprep.mubr.f32.mxu0 0.0
    %4078 = vmatmul.mubr.f32.gmra.mrb[0].mxu0 %v4009
    %v4079 = vpop.f32.mrb[0].mxu0
    %v4080 = vadd.f32 %v35, %v4079
    %v4081 = vpop.f32.mrb[0].mxu0
    %4082 = vdwg.mxu0
    %4083 = vrot.lane.b32.xlu0 %v3674, 120
    %v4084 = vpop.permute.xlu0 %4083
    %4085 = vrot.lane.b32.xlu0 %v3670, 88
    %v4086 = vpop.permute.xlu0 %4085
    %v4087 = vsel %vm239, %v4084, 0
    %v4089 = vsel %vm239, %v4086, 0
    %4091 = vmatprep.subr.mxu0 0.0
    %4092 = vmatpush1.xpose.msra.mxu0 %v4089
    %4093 = vmatprep.subr.mxu0 0.0
    %4094 = vmatpush1.xpose.msra.mxu0 0.0
    %4095 = vmatprep.subr.mxu0 0.0
    %4096 = vmatpush1.xpose.msra.mxu0 0.0
    %4097 = vmatprep.subr.mxu0 0.0
    %4098 = vmatpush1.xpose.msra.mxu0 0.0
    %4099 = vmatprep.subr.mxu0 0.0
    %4100 = vmatpush1.xpose.msra.mxu0 0.0
    %4101 = vmatprep.subr.mxu0 0.0
    %4102 = vmatpush1.xpose.msra.mxu0 0.0
    %4103 = vmatprep.subr.mxu0 0.0
    %4104 = vmatpush1.xpose.msra.mxu0 0.0
    %4105 = vmatprep.subr.mxu0 0.0
    %4106 = vmatpush1.xpose.msra.mxu0 0.0
    %4107 = vmatprep.subr.mxu0 0.0
    %4108 = vmatpush1.xpose.msra.mxu0 0.0
    %4109 = vmatprep.subr.mxu0 0.0
    %4110 = vmatpush1.xpose.msra.mxu0 0.0
    %4111 = vmatprep.subr.mxu0 0.0
    %4112 = vmatpush1.xpose.msra.mxu0 0.0
    %4113 = vmatprep.subr.mxu0 0.0
    %4114 = vmatpush1.xpose.msra.mxu0 0.0
    %4115 = vmatprep.subr.mxu0 0.0
    %4116 = vmatpush1.xpose.msra.mxu0 0.0
    %4117 = vmatprep.subr.mxu0 0.0
    %4118 = vmatpush1.xpose.msra.mxu0 0.0
    %4119 = vmatprep.subr.mxu0 0.0
    %4120 = vmatpush1.xpose.msra.mxu0 0.0
    %4121 = vmatprep.subr.mxu0 0.0
    %4122 = vmatpush1.xpose.msra.mxu0 0.0
    %4123 = vmatprep.subr.mxu0 0.0
    %4124 = vmatpush1.xpose.msra.mxu0 0.0
    %4125 = vmatprep.subr.mxu0 0.0
    %4126 = vmatpush1.xpose.msra.mxu0 0.0
    %4127 = vmatprep.subr.mxu0 0.0
    %4128 = vmatpush1.xpose.msra.mxu0 0.0
    %4129 = vmatprep.subr.mxu0 0.0
    %4130 = vmatpush1.xpose.msra.mxu0 0.0
    %4131 = vmatprep.subr.mxu0 0.0
    %4132 = vmatpush1.xpose.msra.mxu0 0.0
    %4133 = vmatprep.subr.mxu0 0.0
    %4134 = vmatpush1.xpose.msra.mxu0 0.0
    %4135 = vmatprep.subr.mxu0 0.0
    %4136 = vmatpush1.xpose.msra.mxu0 0.0
    %4137 = vmatprep.subr.mxu0 0.0
    %4138 = vmatpush1.xpose.msra.mxu0 0.0
    %4139 = vmatprep.subr.mxu0 0.0
    %4140 = vmatpush1.xpose.msra.mxu0 0.0
    %4141 = vmatprep.subr.mxu0 0.0
    %4142 = vmatpush1.xpose.msra.mxu0 0.0
    %4143 = vmatprep.subr.mxu0 0.0
    %4144 = vmatpush1.xpose.msra.mxu0 0.0
    %4145 = vmatprep.subr.mxu0 0.0
    %4146 = vmatpush1.xpose.msra.mxu0 0.0
    %4147 = vmatprep.subr.mxu0 0.0
    %4148 = vmatpush1.xpose.msra.mxu0 0.0
    %4149 = vmatprep.subr.mxu0 0.0
    %4150 = vmatpush1.xpose.msra.mxu0 0.0
    %4151 = vmatprep.subr.mxu0 0.0
    %4152 = vmatpush1.xpose.msra.mxu0 0.0
    %4153 = vmatprep.subr.mxu0 0.0
    %4154 = vmatpush1.xpose.msra.mxu0 0.0
    %4155 = vmatprep.mubr.f32.mxu0 0.0
    %4156 = vmatmul.mubr.f32.gmra.mrb[0].mxu0 %v4087
    %v4157 = vpop.f32.mrb[0].mxu0
    %v4158 = vadd.f32 %v36, %v4157
    %v4159 = vpop.f32.mrb[0].mxu0
    %4160 = vdwg.mxu0
    %v4161 = vsel %vm239, %v4080, -inf
    %4162 = vmax.xlane.f32.xlu0 %v4161
    %v4163 = vpop.xlane.xlu0 %4162
    %v4164 = vsel %vm239, %v4158, -inf
    %4165 = vmax.xlane.f32.xlu0 %v4164
    %v4166 = vpop.xlane.xlu0 %4165
    %v4167 = vsub.f32 %v4080, %v4163
    %v4168 = vsub.f32 %v4158, %v4166
    %v4169 = vmul.f32 %v4167, 1.442695
    %v4170 = vpow.pop %v4169
    %v4171 = vmul.f32 %v4168, 1.442695
    %v4172 = vpow.pop %v4171
    %v4173 = vsel %vm239, %v4170, 0.0
    %4174 = vadd.xlane.f32.xlu0 %v4173
    %v4175 = vpop.xlane.xlu0 %4174
    %v4176 = vsel %vm239, %v4172, 0.0
    %4177 = vadd.xlane.f32.xlu0 %v4176
    %v4178 = vpop.xlane.xlu0 %4177
    %v4179 = vrcp.pop %v4175
    %v4180 = vrcp.pop %v4178
    %v4181 = vmul.f32 %v4170, %v4179
    %v4182 = vmul.f32 %v4172, %v4180
    %4183 = vrot.lane.b32.xlu0 %v3665, 56
    %v4184 = vpop.permute.xlu0 %4183
    %v4187 = vsel %vm239, %v4181, 0
    %4189 = vmatprep.subr.mxu0 0.0
    %4190 = vmatpush1.msra.mxu0 %v4184
    %4191 = vmatprep.subr.mxu0 0.0
    %4192 = vmatpush1.msra.mxu0 0.0
    %4193 = vmatprep.subr.mxu0 0.0
    %4194 = vmatpush1.msra.mxu0 0.0
    %4195 = vmatprep.subr.mxu0 0.0
    %4196 = vmatpush1.msra.mxu0 0.0
    %4197 = vmatprep.subr.mxu0 0.0
    %4198 = vmatpush1.msra.mxu0 0.0
    %4199 = vmatprep.subr.mxu0 0.0
    %4200 = vmatpush1.msra.mxu0 0.0
    %4201 = vmatprep.subr.mxu0 0.0
    %4202 = vmatpush1.msra.mxu0 0.0
    %4203 = vmatprep.subr.mxu0 0.0
    %4204 = vmatpush1.msra.mxu0 0.0
    %4205 = vmatprep.subr.mxu0 0.0
    %4206 = vmatpush1.msra.mxu0 0.0
    %4207 = vmatprep.subr.mxu0 0.0
    %4208 = vmatpush1.msra.mxu0 0.0
    %4209 = vmatprep.subr.mxu0 0.0
    %4210 = vmatpush1.msra.mxu0 0.0
    %4211 = vmatprep.subr.mxu0 0.0
    %4212 = vmatpush1.msra.mxu0 0.0
    %4213 = vmatprep.subr.mxu0 0.0
    %4214 = vmatpush1.msra.mxu0 0.0
    %4215 = vmatprep.subr.mxu0 0.0
    %4216 = vmatpush1.msra.mxu0 0.0
    %4217 = vmatprep.subr.mxu0 0.0
    %4218 = vmatpush1.msra.mxu0 0.0
    %4219 = vmatprep.subr.mxu0 0.0
    %4220 = vmatpush1.msra.mxu0 0.0
    %4221 = vmatprep.subr.mxu0 0.0
    %4222 = vmatpush1.msra.mxu0 0.0
    %4223 = vmatprep.subr.mxu0 0.0
    %4224 = vmatpush1.msra.mxu0 0.0
    %4225 = vmatprep.subr.mxu0 0.0
    %4226 = vmatpush1.msra.mxu0 0.0
    %4227 = vmatprep.subr.mxu0 0.0
    %4228 = vmatpush1.msra.mxu0 0.0
    %4229 = vmatprep.subr.mxu0 0.0
    %4230 = vmatpush1.msra.mxu0 0.0
    %4231 = vmatprep.subr.mxu0 0.0
    %4232 = vmatpush1.msra.mxu0 0.0
    %4233 = vmatprep.subr.mxu0 0.0
    %4234 = vmatpush1.msra.mxu0 0.0
    %4235 = vmatprep.subr.mxu0 0.0
    %4236 = vmatpush1.msra.mxu0 0.0
    %4237 = vmatprep.subr.mxu0 0.0
    %4238 = vmatpush1.msra.mxu0 0.0
    %4239 = vmatprep.subr.mxu0 0.0
    %4240 = vmatpush1.msra.mxu0 0.0
    %4241 = vmatprep.subr.mxu0 0.0
    %4242 = vmatpush1.msra.mxu0 0.0
    %4243 = vmatprep.subr.mxu0 0.0
    %4244 = vmatpush1.msra.mxu0 0.0
    %4245 = vmatprep.subr.mxu0 0.0
    %4246 = vmatpush1.msra.mxu0 0.0
    %4247 = vmatprep.subr.mxu0 0.0
    %4248 = vmatpush1.msra.mxu0 0.0
    %4249 = vmatprep.subr.mxu0 0.0
    %4250 = vmatpush1.msra.mxu0 0.0
    %4251 = vmatprep.subr.mxu0 0.0
    %4252 = vmatpush1.msra.mxu0 0.0
    %4253 = vmatprep.mubr.f32.mxu0 0.0
    %4254 = vmatmul.mubr.f32.gmra.mrb[0].mxu0 %v4187
    %v4255 = vpop.f32.mrb[0].mxu0
    %v4256 = vadd.f32 0.0, %v4255
    %v4257 = vpop.f32.mrb[0].mxu0
    %4258 = vdwg.mxu0
    %4259 = vrot.lane.b32.xlu0 %v3670, 56
    %v4260 = vpop.permute.xlu0 %4259
    %v4263 = vsel %vm239, %v4182, 0
    %4265 = vmatprep.subr.mxu0 0.0
    %4266 = vmatpush1.msra.mxu0 %v4260
    %4267 = vmatprep.subr.mxu0 0.0
    %4268 = vmatpush1.msra.mxu0 0.0
    %4269 = vmatprep.subr.mxu0 0.0
    %4270 = vmatpush1.msra.mxu0 0.0
    %4271 = vmatprep.subr.mxu0 0.0
    %4272 = vmatpush1.msra.mxu0 0.0
    %4273 = vmatprep.subr.mxu0 0.0
    %4274 = vmatpush1.msra.mxu0 0.0
    %4275 = vmatprep.subr.mxu0 0.0
    %4276 = vmatpush1.msra.mxu0 0.0
    %4277 = vmatprep.subr.mxu0 0.0
    %4278 = vmatpush1.msra.mxu0 0.0
    %4279 = vmatprep.subr.mxu0 0.0
    %4280 = vmatpush1.msra.mxu0 0.0
    %4281 = vmatprep.subr.mxu0 0.0
    %4282 = vmatpush1.msra.mxu0 0.0
    %4283 = vmatprep.subr.mxu0 0.0
    %4284 = vmatpush1.msra.mxu0 0.0
    %4285 = vmatprep.subr.mxu0 0.0
    %4286 = vmatpush1.msra.mxu0 0.0
    %4287 = vmatprep.subr.mxu0 0.0
    %4288 = vmatpush1.msra.mxu0 0.0
    %4289 = vmatprep.subr.mxu0 0.0
    %4290 = vmatpush1.msra.mxu0 0.0
    %4291 = vmatprep.subr.mxu0 0.0
    %4292 = vmatpush1.msra.mxu0 0.0
    %4293 = vmatprep.subr.mxu0 0.0
    %4294 = vmatpush1.msra.mxu0 0.0
    %4295 = vmatprep.subr.mxu0 0.0
    %4296 = vmatpush1.msra.mxu0 0.0
    %4297 = vmatprep.subr.mxu0 0.0
    %4298 = vmatpush1.msra.mxu0 0.0
    %4299 = vmatprep.subr.mxu0 0.0
    %4300 = vmatpush1.msra.mxu0 0.0
    %4301 = vmatprep.subr.mxu0 0.0
    %4302 = vmatpush1.msra.mxu0 0.0
    %4303 = vmatprep.subr.mxu0 0.0
    %4304 = vmatpush1.msra.mxu0 0.0
    %4305 = vmatprep.subr.mxu0 0.0
    %4306 = vmatpush1.msra.mxu0 0.0
    %4307 = vmatprep.subr.mxu0 0.0
    %4308 = vmatpush1.msra.mxu0 0.0
    %4309 = vmatprep.subr.mxu0 0.0
    %4310 = vmatpush1.msra.mxu0 0.0
    %4311 = vmatprep.subr.mxu0 0.0
    %4312 = vmatpush1.msra.mxu0 0.0
    %4313 = vmatprep.subr.mxu0 0.0
    %4314 = vmatpush1.msra.mxu0 0.0
    %4315 = vmatprep.subr.mxu0 0.0
    %4316 = vmatpush1.msra.mxu0 0.0
    %4317 = vmatprep.subr.mxu0 0.0
    %4318 = vmatpush1.msra.mxu0 0.0
    %4319 = vmatprep.subr.mxu0 0.0
    %4320 = vmatpush1.msra.mxu0 0.0
    %4321 = vmatprep.subr.mxu0 0.0
    %4322 = vmatpush1.msra.mxu0 0.0
    %4323 = vmatprep.subr.mxu0 0.0
    %4324 = vmatpush1.msra.mxu0 0.0
    %4325 = vmatprep.subr.mxu0 0.0
    %4326 = vmatpush1.msra.mxu0 0.0
    %4327 = vmatprep.subr.mxu0 0.0
    %4328 = vmatpush1.msra.mxu0 0.0
    %4329 = vmatprep.mubr.f32.mxu0 0.0
    %4330 = vmatmul.mubr.f32.gmra.mrb[0].mxu0 %v4263
    %v4331 = vpop.f32.mrb[0].mxu0
    %v4332 = vadd.f32 0.0, %v4331
    %v4333 = vpop.f32.mrb[0].mxu0
    %4334 = vdwg.mxu0
    %4335 = vrot.lane.b32.xlu0 %v3673, 112
    %v4336 = vpop.permute.xlu0 %4335
    %4337 = vrot.lane.b32.xlu0 %v3665, 80
    %v4338 = vpop.permute.xlu0 %4337
    %v4339 = vsel %vm239, %v4336, 0
    %v4341 = vsel %vm239, %v4338, 0
    %4343 = vmatprep.subr.mxu0 0.0
    %4344 = vmatpush1.xpose.msra.mxu0 %v4341
    %4345 = vmatprep.subr.mxu0 0.0
    %4346 = vmatpush1.xpose.msra.mxu0 0.0
    %4347 = vmatprep.subr.mxu0 0.0
    %4348 = vmatpush1.xpose.msra.mxu0 0.0
    %4349 = vmatprep.subr.mxu0 0.0
    %4350 = vmatpush1.xpose.msra.mxu0 0.0
    %4351 = vmatprep.subr.mxu0 0.0
    %4352 = vmatpush1.xpose.msra.mxu0 0.0
    %4353 = vmatprep.subr.mxu0 0.0
    %4354 = vmatpush1.xpose.msra.mxu0 0.0
    %4355 = vmatprep.subr.mxu0 0.0
    %4356 = vmatpush1.xpose.msra.mxu0 0.0
    %4357 = vmatprep.subr.mxu0 0.0
    %4358 = vmatpush1.xpose.msra.mxu0 0.0
    %4359 = vmatprep.subr.mxu0 0.0
    %4360 = vmatpush1.xpose.msra.mxu0 0.0
    %4361 = vmatprep.subr.mxu0 0.0
    %4362 = vmatpush1.xpose.msra.mxu0 0.0
    %4363 = vmatprep.subr.mxu0 0.0
    %4364 = vmatpush1.xpose.msra.mxu0 0.0
    %4365 = vmatprep.subr.mxu0 0.0
    %4366 = vmatpush1.xpose.msra.mxu0 0.0
    %4367 = vmatprep.subr.mxu0 0.0
    %4368 = vmatpush1.xpose.msra.mxu0 0.0
    %4369 = vmatprep.subr.mxu0 0.0
    %4370 = vmatpush1.xpose.msra.mxu0 0.0
    %4371 = vmatprep.subr.mxu0 0.0
    %4372 = vmatpush1.xpose.msra.mxu0 0.0
    %4373 = vmatprep.subr.mxu0 0.0
    %4374 = vmatpush1.xpose.msra.mxu0 0.0
    %4375 = vmatprep.subr.mxu0 0.0
    %4376 = vmatpush1.xpose.msra.mxu0 0.0
    %4377 = vmatprep.subr.mxu0 0.0
    %4378 = vmatpush1.xpose.msra.mxu0 0.0
    %4379 = vmatprep.subr.mxu0 0.0
    %4380 = vmatpush1.xpose.msra.mxu0 0.0
    %4381 = vmatprep.subr.mxu0 0.0
    %4382 = vmatpush1.xpose.msra.mxu0 0.0
    %4383 = vmatprep.subr.mxu0 0.0
    %4384 = vmatpush1.xpose.msra.mxu0 0.0
    %4385 = vmatprep.subr.mxu0 0.0
    %4386 = vmatpush1.xpose.msra.mxu0 0.0
    %4387 = vmatprep.subr.mxu0 0.0
    %4388 = vmatpush1.xpose.msra.mxu0 0.0
    %4389 = vmatprep.subr.mxu0 0.0
    %4390 = vmatpush1.xpose.msra.mxu0 0.0
    %4391 = vmatprep.subr.mxu0 0.0
    %4392 = vmatpush1.xpose.msra.mxu0 0.0
    %4393 = vmatprep.subr.mxu0 0.0
    %4394 = vmatpush1.xpose.msra.mxu0 0.0
    %4395 = vmatprep.subr.mxu0 0.0
    %4396 = vmatpush1.xpose.msra.mxu0 0.0
    %4397 = vmatprep.subr.mxu0 0.0
    %4398 = vmatpush1.xpose.msra.mxu0 0.0
    %4399 = vmatprep.subr.mxu0 0.0
    %4400 = vmatpush1.xpose.msra.mxu0 0.0
    %4401 = vmatprep.subr.mxu0 0.0
    %4402 = vmatpush1.xpose.msra.mxu0 0.0
    %4403 = vmatprep.subr.mxu0 0.0
    %4404 = vmatpush1.xpose.msra.mxu0 0.0
    %4405 = vmatprep.subr.mxu0 0.0
    %4406 = vmatpush1.xpose.msra.mxu0 0.0
    %4407 = vmatprep.mubr.f32.mxu0 0.0
    %4408 = vmatmul.mubr.f32.gmra.mrb[0].mxu0 %v4339
    %v4409 = vpop.f32.mrb[0].mxu0
    %v4410 = vadd.f32 %v35, %v4409
    %v4411 = vpop.f32.mrb[0].mxu0
    %4412 = vdwg.mxu0
    %4413 = vrot.lane.b32.xlu0 %v3674, 112
    %v4414 = vpop.permute.xlu0 %4413
    %4415 = vrot.lane.b32.xlu0 %v3670, 80
    %v4416 = vpop.permute.xlu0 %4415
    %v4417 = vsel %vm239, %v4414, 0
    %v4419 = vsel %vm239, %v4416, 0
    %4421 = vmatprep.subr.mxu0 0.0
    %4422 = vmatpush1.xpose.msra.mxu0 %v4419
    %4423 = vmatprep.subr.mxu0 0.0
    %4424 = vmatpush1.xpose.msra.mxu0 0.0
    %4425 = vmatprep.subr.mxu0 0.0
    %4426 = vmatpush1.xpose.msra.mxu0 0.0
    %4427 = vmatprep.subr.mxu0 0.0
    %4428 = vmatpush1.xpose.msra.mxu0 0.0
    %4429 = vmatprep.subr.mxu0 0.0
    %4430 = vmatpush1.xpose.msra.mxu0 0.0
    %4431 = vmatprep.subr.mxu0 0.0
    %4432 = vmatpush1.xpose.msra.mxu0 0.0
    %4433 = vmatprep.subr.mxu0 0.0
    %4434 = vmatpush1.xpose.msra.mxu0 0.0
    %4435 = vmatprep.subr.mxu0 0.0
    %4436 = vmatpush1.xpose.msra.mxu0 0.0
    %4437 = vmatprep.subr.mxu0 0.0
    %4438 = vmatpush1.xpose.msra.mxu0 0.0
    %4439 = vmatprep.subr.mxu0 0.0
    %4440 = vmatpush1.xpose.msra.mxu0 0.0
    %4441 = vmatprep.subr.mxu0 0.0
    %4442 = vmatpush1.xpose.msra.mxu0 0.0
    %4443 = vmatprep.subr.mxu0 0.0
    %4444 = vmatpush1.xpose.msra.mxu0 0.0
    %4445 = vmatprep.subr.mxu0 0.0
    %4446 = vmatpush1.xpose.msra.mxu0 0.0
    %4447 = vmatprep.subr.mxu0 0.0
    %4448 = vmatpush1.xpose.msra.mxu0 0.0
    %4449 = vmatprep.subr.mxu0 0.0
    %4450 = vmatpush1.xpose.msra.mxu0 0.0
    %4451 = vmatprep.subr.mxu0 0.0
    %4452 = vmatpush1.xpose.msra.mxu0 0.0
    %4453 = vmatprep.subr.mxu0 0.0
    %4454 = vmatpush1.xpose.msra.mxu0 0.0
    %4455 = vmatprep.subr.mxu0 0.0
    %4456 = vmatpush1.xpose.msra.mxu0 0.0
    %4457 = vmatprep.subr.mxu0 0.0
    %4458 = vmatpush1.xpose.msra.mxu0 0.0
    %4459 = vmatprep.subr.mxu0 0.0
    %4460 = vmatpush1.xpose.msra.mxu0 0.0
    %4461 = vmatprep.subr.mxu0 0.0
    %4462 = vmatpush1.xpose.msra.mxu0 0.0
    %4463 = vmatprep.subr.mxu0 0.0
    %4464 = vmatpush1.xpose.msra.mxu0 0.0
    %4465 = vmatprep.subr.mxu0 0.0
    %4466 = vmatpush1.xpose.msra.mxu0 0.0
    %4467 = vmatprep.subr.mxu0 0.0
    %4468 = vmatpush1.xpose.msra.mxu0 0.0
    %4469 = vmatprep.subr.mxu0 0.0
    %4470 = vmatpush1.xpose.msra.mxu0 0.0
    %4471 = vmatprep.subr.mxu0 0.0
    %4472 = vmatpush1.xpose.msra.mxu0 0.0
    %4473 = vmatprep.subr.mxu0 0.0
    %4474 = vmatpush1.xpose.msra.mxu0 0.0
    %4475 = vmatprep.subr.mxu0 0.0
    %4476 = vmatpush1.xpose.msra.mxu0 0.0
    %4477 = vmatprep.subr.mxu0 0.0
    %4478 = vmatpush1.xpose.msra.mxu0 0.0
    %4479 = vmatprep.subr.mxu0 0.0
    %4480 = vmatpush1.xpose.msra.mxu0 0.0
    %4481 = vmatprep.subr.mxu0 0.0
    %4482 = vmatpush1.xpose.msra.mxu0 0.0
    %4483 = vmatprep.subr.mxu0 0.0
    %4484 = vmatpush1.xpose.msra.mxu0 0.0
    %4485 = vmatprep.mubr.f32.mxu0 0.0
    %4486 = vmatmul.mubr.f32.gmra.mrb[0].mxu0 %v4417
    %v4487 = vpop.f32.mrb[0].mxu0
    %v4488 = vadd.f32 %v36, %v4487
    %v4489 = vpop.f32.mrb[0].mxu0
    %4490 = vdwg.mxu0
    %v4491 = vsel %vm239, %v4410, -inf
    %4492 = vmax.xlane.f32.xlu0 %v4491
    %v4493 = vpop.xlane.xlu0 %4492
    %v4494 = vsel %vm239, %v4488, -inf
    %4495 = vmax.xlane.f32.xlu0 %v4494
    %v4496 = vpop.xlane.xlu0 %4495
    %v4497 = vsub.f32 %v4410, %v4493
    %v4498 = vsub.f32 %v4488, %v4496
    %v4499 = vmul.f32 %v4497, 1.442695
    %v4500 = vpow.pop %v4499
    %v4501 = vmul.f32 %v4498, 1.442695
    %v4502 = vpow.pop %v4501
    %v4503 = vsel %vm239, %v4500, 0.0
    %4504 = vadd.xlane.f32.xlu0 %v4503
    %v4505 = vpop.xlane.xlu0 %4504
    %v4506 = vsel %vm239, %v4502, 0.0
    %4507 = vadd.xlane.f32.xlu0 %v4506
    %v4508 = vpop.xlane.xlu0 %4507
    %v4509 = vrcp.pop %v4505
    %v4510 = vrcp.pop %v4508
    %v4511 = vmul.f32 %v4500, %v4509
    %v4512 = vmul.f32 %v4502, %v4510
    %4513 = vrot.lane.b32.xlu0 %v3665, 48
    %v4514 = vpop.permute.xlu0 %4513
    %v4517 = vsel %vm239, %v4511, 0
    %4519 = vmatprep.subr.mxu0 0.0
    %4520 = vmatpush1.msra.mxu0 %v4514
    %4521 = vmatprep.subr.mxu0 0.0
    %4522 = vmatpush1.msra.mxu0 0.0
    %4523 = vmatprep.subr.mxu0 0.0
    %4524 = vmatpush1.msra.mxu0 0.0
    %4525 = vmatprep.subr.mxu0 0.0
    %4526 = vmatpush1.msra.mxu0 0.0
    %4527 = vmatprep.subr.mxu0 0.0
    %4528 = vmatpush1.msra.mxu0 0.0
    %4529 = vmatprep.subr.mxu0 0.0
    %4530 = vmatpush1.msra.mxu0 0.0
    %4531 = vmatprep.subr.mxu0 0.0
    %4532 = vmatpush1.msra.mxu0 0.0
    %4533 = vmatprep.subr.mxu0 0.0
    %4534 = vmatpush1.msra.mxu0 0.0
    %4535 = vmatprep.subr.mxu0 0.0
    %4536 = vmatpush1.msra.mxu0 0.0
    %4537 = vmatprep.subr.mxu0 0.0
    %4538 = vmatpush1.msra.mxu0 0.0
    %4539 = vmatprep.subr.mxu0 0.0
    %4540 = vmatpush1.msra.mxu0 0.0
    %4541 = vmatprep.subr.mxu0 0.0
    %4542 = vmatpush1.msra.mxu0 0.0
    %4543 = vmatprep.subr.mxu0 0.0
    %4544 = vmatpush1.msra.mxu0 0.0
    %4545 = vmatprep.subr.mxu0 0.0
    %4546 = vmatpush1.msra.mxu0 0.0
    %4547 = vmatprep.subr.mxu0 0.0
    %4548 = vmatpush1.msra.mxu0 0.0
    %4549 = vmatprep.subr.mxu0 0.0
    %4550 = vmatpush1.msra.mxu0 0.0
    %4551 = vmatprep.subr.mxu0 0.0
    %4552 = vmatpush1.msra.mxu0 0.0
    %4553 = vmatprep.subr.mxu0 0.0
    %4554 = vmatpush1.msra.mxu0 0.0
    %4555 = vmatprep.subr.mxu0 0.0
    %4556 = vmatpush1.msra.mxu0 0.0
    %4557 = vmatprep.subr.mxu0 0.0
    %4558 = vmatpush1.msra.mxu0 0.0
    %4559 = vmatprep.subr.mxu0 0.0
    %4560 = vmatpush1.msra.mxu0 0.0
    %4561 = vmatprep.subr.mxu0 0.0
    %4562 = vmatpush1.msra.mxu0 0.0
    %4563 = vmatprep.subr.mxu0 0.0
    %4564 = vmatpush1.msra.mxu0 0.0
    %4565 = vmatprep.subr.mxu0 0.0
    %4566 = vmatpush1.msra.mxu0 0.0
    %4567 = vmatprep.subr.mxu0 0.0
    %4568 = vmatpush1.msra.mxu0 0.0
    %4569 = vmatprep.subr.mxu0 0.0
    %4570 = vmatpush1.msra.mxu0 0.0
    %4571 = vmatprep.subr.mxu0 0.0
    %4572 = vmatpush1.msra.mxu0 0.0
    %4573 = vmatprep.subr.mxu0 0.0
    %4574 = vmatpush1.msra.mxu0 0.0
    %4575 = vmatprep.subr.mxu0 0.0
    %4576 = vmatpush1.msra.mxu0 0.0
    %4577 = vmatprep.subr.mxu0 0.0
    %4578 = vmatpush1.msra.mxu0 0.0
    %4579 = vmatprep.subr.mxu0 0.0
    %4580 = vmatpush1.msra.mxu0 0.0
    %4581 = vmatprep.subr.mxu0 0.0
    %4582 = vmatpush1.msra.mxu0 0.0
    %4583 = vmatprep.mubr.f32.mxu0 0.0
    %4584 = vmatmul.mubr.f32.gmra.mrb[0].mxu0 %v4517
    %v4585 = vpop.f32.mrb[0].mxu0
    %v4586 = vadd.f32 0.0, %v4585
    %v4587 = vpop.f32.mrb[0].mxu0
    %4588 = vdwg.mxu0
    %4589 = vrot.lane.b32.xlu0 %v3670, 48
    %v4590 = vpop.permute.xlu0 %4589
    %v4593 = vsel %vm239, %v4512, 0
    %4595 = vmatprep.subr.mxu0 0.0
    %4596 = vmatpush1.msra.mxu0 %v4590
    %4597 = vmatprep.subr.mxu0 0.0
    %4598 = vmatpush1.msra.mxu0 0.0
    %4599 = vmatprep.subr.mxu0 0.0
    %4600 = vmatpush1.msra.mxu0 0.0
    %4601 = vmatprep.subr.mxu0 0.0
    %4602 = vmatpush1.msra.mxu0 0.0
    %4603 = vmatprep.subr.mxu0 0.0
    %4604 = vmatpush1.msra.mxu0 0.0
    %4605 = vmatprep.subr.mxu0 0.0
    %4606 = vmatpush1.msra.mxu0 0.0
    %4607 = vmatprep.subr.mxu0 0.0
    %4608 = vmatpush1.msra.mxu0 0.0
    %4609 = vmatprep.subr.mxu0 0.0
    %4610 = vmatpush1.msra.mxu0 0.0
    %4611 = vmatprep.subr.mxu0 0.0
    %4612 = vmatpush1.msra.mxu0 0.0
    %4613 = vmatprep.subr.mxu0 0.0
    %4614 = vmatpush1.msra.mxu0 0.0
    %4615 = vmatprep.subr.mxu0 0.0
    %4616 = vmatpush1.msra.mxu0 0.0
    %4617 = vmatprep.subr.mxu0 0.0
    %4618 = vmatpush1.msra.mxu0 0.0
    %4619 = vmatprep.subr.mxu0 0.0
    %4620 = vmatpush1.msra.mxu0 0.0
    %4621 = vmatprep.subr.mxu0 0.0
    %4622 = vmatpush1.msra.mxu0 0.0
    %4623 = vmatprep.subr.mxu0 0.0
    %4624 = vmatpush1.msra.mxu0 0.0
    %4625 = vmatprep.subr.mxu0 0.0
    %4626 = vmatpush1.msra.mxu0 0.0
    %4627 = vmatprep.subr.mxu0 0.0
    %4628 = vmatpush1.msra.mxu0 0.0
    %4629 = vmatprep.subr.mxu0 0.0
    %4630 = vmatpush1.msra.mxu0 0.0
    %4631 = vmatprep.subr.mxu0 0.0
    %4632 = vmatpush1.msra.mxu0 0.0
    %4633 = vmatprep.subr.mxu0 0.0
    %4634 = vmatpush1.msra.mxu0 0.0
    %4635 = vmatprep.subr.mxu0 0.0
    %4636 = vmatpush1.msra.mxu0 0.0
    %4637 = vmatprep.subr.mxu0 0.0
    %4638 = vmatpush1.msra.mxu0 0.0
    %4639 = vmatprep.subr.mxu0 0.0
    %4640 = vmatpush1.msra.mxu0 0.0
    %4641 = vmatprep.subr.mxu0 0.0
    %4642 = vmatpush1.msra.mxu0 0.0
    %4643 = vmatprep.subr.mxu0 0.0
    %4644 = vmatpush1.msra.mxu0 0.0
    %4645 = vmatprep.subr.mxu0 0.0
    %4646 = vmatpush1.msra.mxu0 0.0
    %4647 = vmatprep.subr.mxu0 0.0
    %4648 = vmatpush1.msra.mxu0 0.0
    %4649 = vmatprep.subr.mxu0 0.0
    %4650 = vmatpush1.msra.mxu0 0.0
    %4651 = vmatprep.subr.mxu0 0.0
    %4652 = vmatpush1.msra.mxu0 0.0
    %4653 = vmatprep.subr.mxu0 0.0
    %4654 = vmatpush1.msra.mxu0 0.0
    %4655 = vmatprep.subr.mxu0 0.0
    %4656 = vmatpush1.msra.mxu0 0.0
    %4657 = vmatprep.subr.mxu0 0.0
    %4658 = vmatpush1.msra.mxu0 0.0
    %4659 = vmatprep.mubr.f32.mxu0 0.0
    %4660 = vmatmul.mubr.f32.gmra.mrb[0].mxu0 %v4593
    %v4661 = vpop.f32.mrb[0].mxu0
    %v4662 = vadd.f32 0.0, %v4661
    %v4663 = vpop.f32.mrb[0].mxu0
    %4664 = vdwg.mxu0
    %4665 = vrot.lane.b32.xlu0 %v3673, 104
    %v4666 = vpop.permute.xlu0 %4665
    %4667 = vrot.lane.b32.xlu0 %v3665, 72
    %v4668 = vpop.permute.xlu0 %4667
    %v4669 = vsel %vm239, %v4666, 0
    %v4671 = vsel %vm239, %v4668, 0
    %4673 = vmatprep.subr.mxu0 0.0
    %4674 = vmatpush1.xpose.msra.mxu0 %v4671
    %4675 = vmatprep.subr.mxu0 0.0
    %4676 = vmatpush1.xpose.msra.mxu0 0.0
    %4677 = vmatprep.subr.mxu0 0.0
    %4678 = vmatpush1.xpose.msra.mxu0 0.0
    %4679 = vmatprep.subr.mxu0 0.0
    %4680 = vmatpush1.xpose.msra.mxu0 0.0
    %4681 = vmatprep.subr.mxu0 0.0
    %4682 = vmatpush1.xpose.msra.mxu0 0.0
    %4683 = vmatprep.subr.mxu0 0.0
    %4684 = vmatpush1.xpose.msra.mxu0 0.0
    %4685 = vmatprep.subr.mxu0 0.0
    %4686 = vmatpush1.xpose.msra.mxu0 0.0
    %4687 = vmatprep.subr.mxu0 0.0
    %4688 = vmatpush1.xpose.msra.mxu0 0.0
    %4689 = vmatprep.subr.mxu0 0.0
    %4690 = vmatpush1.xpose.msra.mxu0 0.0
    %4691 = vmatprep.subr.mxu0 0.0
    %4692 = vmatpush1.xpose.msra.mxu0 0.0
    %4693 = vmatprep.subr.mxu0 0.0
    %4694 = vmatpush1.xpose.msra.mxu0 0.0
    %4695 = vmatprep.subr.mxu0 0.0
    %4696 = vmatpush1.xpose.msra.mxu0 0.0
    %4697 = vmatprep.subr.mxu0 0.0
    %4698 = vmatpush1.xpose.msra.mxu0 0.0
    %4699 = vmatprep.subr.mxu0 0.0
    %4700 = vmatpush1.xpose.msra.mxu0 0.0
    %4701 = vmatprep.subr.mxu0 0.0
    %4702 = vmatpush1.xpose.msra.mxu0 0.0
    %4703 = vmatprep.subr.mxu0 0.0
    %4704 = vmatpush1.xpose.msra.mxu0 0.0
    %4705 = vmatprep.subr.mxu0 0.0
    %4706 = vmatpush1.xpose.msra.mxu0 0.0
    %4707 = vmatprep.subr.mxu0 0.0
    %4708 = vmatpush1.xpose.msra.mxu0 0.0
    %4709 = vmatprep.subr.mxu0 0.0
    %4710 = vmatpush1.xpose.msra.mxu0 0.0
    %4711 = vmatprep.subr.mxu0 0.0
    %4712 = vmatpush1.xpose.msra.mxu0 0.0
    %4713 = vmatprep.subr.mxu0 0.0
    %4714 = vmatpush1.xpose.msra.mxu0 0.0
    %4715 = vmatprep.subr.mxu0 0.0
    %4716 = vmatpush1.xpose.msra.mxu0 0.0
    %4717 = vmatprep.subr.mxu0 0.0
    %4718 = vmatpush1.xpose.msra.mxu0 0.0
    %4719 = vmatprep.subr.mxu0 0.0
    %4720 = vmatpush1.xpose.msra.mxu0 0.0
    %4721 = vmatprep.subr.mxu0 0.0
    %4722 = vmatpush1.xpose.msra.mxu0 0.0
    %4723 = vmatprep.subr.mxu0 0.0
    %4724 = vmatpush1.xpose.msra.mxu0 0.0
    %4725 = vmatprep.subr.mxu0 0.0
    %4726 = vmatpush1.xpose.msra.mxu0 0.0
    %4727 = vmatprep.subr.mxu0 0.0
    %4728 = vmatpush1.xpose.msra.mxu0 0.0
    %4729 = vmatprep.subr.mxu0 0.0
    %4730 = vmatpush1.xpose.msra.mxu0 0.0
    %4731 = vmatprep.subr.mxu0 0.0
    %4732 = vmatpush1.xpose.msra.mxu0 0.0
    %4733 = vmatprep.subr.mxu0 0.0
    %4734 = vmatpush1.xpose.msra.mxu0 0.0
    %4735 = vmatprep.subr.mxu0 0.0
    %4736 = vmatpush1.xpose.msra.mxu0 0.0
    %4737 = vmatprep.mubr.f32.mxu0 0.0
    %4738 = vmatmul.mubr.f32.gmra.mrb[0].mxu0 %v4669
    %v4739 = vpop.f32.mrb[0].mxu0
    %v4740 = vadd.f32 %v35, %v4739
    %v4741 = vpop.f32.mrb[0].mxu0
    %4742 = vdwg.mxu0
    %4743 = vrot.lane.b32.xlu0 %v3674, 104
    %v4744 = vpop.permute.xlu0 %4743
    %4745 = vrot.lane.b32.xlu0 %v3670, 72
    %v4746 = vpop.permute.xlu0 %4745
    %v4747 = vsel %vm239, %v4744, 0
    %v4749 = vsel %vm239, %v4746, 0
    %4751 = vmatprep.subr.mxu0 0.0
    %4752 = vmatpush1.xpose.msra.mxu0 %v4749
    %4753 = vmatprep.subr.mxu0 0.0
    %4754 = vmatpush1.xpose.msra.mxu0 0.0
    %4755 = vmatprep.subr.mxu0 0.0
    %4756 = vmatpush1.xpose.msra.mxu0 0.0
    %4757 = vmatprep.subr.mxu0 0.0
    %4758 = vmatpush1.xpose.msra.mxu0 0.0
    %4759 = vmatprep.subr.mxu0 0.0
    %4760 = vmatpush1.xpose.msra.mxu0 0.0
    %4761 = vmatprep.subr.mxu0 0.0
    %4762 = vmatpush1.xpose.msra.mxu0 0.0
    %4763 = vmatprep.subr.mxu0 0.0
    %4764 = vmatpush1.xpose.msra.mxu0 0.0
    %4765 = vmatprep.subr.mxu0 0.0
    %4766 = vmatpush1.xpose.msra.mxu0 0.0
    %4767 = vmatprep.subr.mxu0 0.0
    %4768 = vmatpush1.xpose.msra.mxu0 0.0
    %4769 = vmatprep.subr.mxu0 0.0
    %4770 = vmatpush1.xpose.msra.mxu0 0.0
    %4771 = vmatprep.subr.mxu0 0.0
    %4772 = vmatpush1.xpose.msra.mxu0 0.0
    %4773 = vmatprep.subr.mxu0 0.0
    %4774 = vmatpush1.xpose.msra.mxu0 0.0
    %4775 = vmatprep.subr.mxu0 0.0
    %4776 = vmatpush1.xpose.msra.mxu0 0.0
    %4777 = vmatprep.subr.mxu0 0.0
    %4778 = vmatpush1.xpose.msra.mxu0 0.0
    %4779 = vmatprep.subr.mxu0 0.0
    %4780 = vmatpush1.xpose.msra.mxu0 0.0
    %4781 = vmatprep.subr.mxu0 0.0
    %4782 = vmatpush1.xpose.msra.mxu0 0.0
    %4783 = vmatprep.subr.mxu0 0.0
    %4784 = vmatpush1.xpose.msra.mxu0 0.0
    %4785 = vmatprep.subr.mxu0 0.0
    %4786 = vmatpush1.xpose.msra.mxu0 0.0
    %4787 = vmatprep.subr.mxu0 0.0
    %4788 = vmatpush1.xpose.msra.mxu0 0.0
    %4789 = vmatprep.subr.mxu0 0.0
    %4790 = vmatpush1.xpose.msra.mxu0 0.0
    %4791 = vmatprep.subr.mxu0 0.0
    %4792 = vmatpush1.xpose.msra.mxu0 0.0
    %4793 = vmatprep.subr.mxu0 0.0
    %4794 = vmatpush1.xpose.msra.mxu0 0.0
    %4795 = vmatprep.subr.mxu0 0.0
    %4796 = vmatpush1.xpose.msra.mxu0 0.0
    %4797 = vmatprep.subr.mxu0 0.0
    %4798 = vmatpush1.xpose.msra.mxu0 0.0
    %4799 = vmatprep.subr.mxu0 0.0
    %4800 = vmatpush1.xpose.msra.mxu0 0.0
    %4801 = vmatprep.subr.mxu0 0.0
    %4802 = vmatpush1.xpose.msra.mxu0 0.0
    %4803 = vmatprep.subr.mxu0 0.0
    %4804 = vmatpush1.xpose.msra.mxu0 0.0
    %4805 = vmatprep.subr.mxu0 0.0
    %4806 = vmatpush1.xpose.msra.mxu0 0.0
    %4807 = vmatprep.subr.mxu0 0.0
    %4808 = vmatpush1.xpose.msra.mxu0 0.0
    %4809 = vmatprep.subr.mxu0 0.0
    %4810 = vmatpush1.xpose.msra.mxu0 0.0
    %4811 = vmatprep.subr.mxu0 0.0
    %4812 = vmatpush1.xpose.msra.mxu0 0.0
    %4813 = vmatprep.subr.mxu0 0.0
    %4814 = vmatpush1.xpose.msra.mxu0 0.0
    %4815 = vmatprep.mubr.f32.mxu0 0.0
    %4816 = vmatmul.mubr.f32.gmra.mrb[0].mxu0 %v4747
    %v4817 = vpop.f32.mrb[0].mxu0
    %v4818 = vadd.f32 %v36, %v4817
    %v4819 = vpop.f32.mrb[0].mxu0
    %4820 = vdwg.mxu0
    %v4821 = vsel %vm239, %v4740, -inf
    %4822 = vmax.xlane.f32.xlu0 %v4821
    %v4823 = vpop.xlane.xlu0 %4822
    %v4824 = vsel %vm239, %v4818, -inf
    %4825 = vmax.xlane.f32.xlu0 %v4824
    %v4826 = vpop.xlane.xlu0 %4825
    %v4827 = vsub.f32 %v4740, %v4823
    %v4828 = vsub.f32 %v4818, %v4826
    %v4829 = vmul.f32 %v4827, 1.442695
    %v4830 = vpow.pop %v4829
    %v4831 = vmul.f32 %v4828, 1.442695
    %v4832 = vpow.pop %v4831
    %v4833 = vsel %vm239, %v4830, 0.0
    %4834 = vadd.xlane.f32.xlu0 %v4833
    %v4835 = vpop.xlane.xlu0 %4834
    %v4836 = vsel %vm239, %v4832, 0.0
    %4837 = vadd.xlane.f32.xlu0 %v4836
    %v4838 = vpop.xlane.xlu0 %4837
    %v4839 = vrcp.pop %v4835
    %v4840 = vrcp.pop %v4838
    %v4841 = vmul.f32 %v4830, %v4839
    %v4842 = vmul.f32 %v4832, %v4840
    %4843 = vrot.lane.b32.xlu0 %v3665, 40
    %v4844 = vpop.permute.xlu0 %4843
    %v4847 = vsel %vm239, %v4841, 0
    %4849 = vmatprep.subr.mxu0 0.0
    %4850 = vmatpush1.msra.mxu0 %v4844
    %4851 = vmatprep.subr.mxu0 0.0
    %4852 = vmatpush1.msra.mxu0 0.0
    %4853 = vmatprep.subr.mxu0 0.0
    %4854 = vmatpush1.msra.mxu0 0.0
    %4855 = vmatprep.subr.mxu0 0.0
    %4856 = vmatpush1.msra.mxu0 0.0
    %4857 = vmatprep.subr.mxu0 0.0
    %4858 = vmatpush1.msra.mxu0 0.0
    %4859 = vmatprep.subr.mxu0 0.0
    %4860 = vmatpush1.msra.mxu0 0.0
    %4861 = vmatprep.subr.mxu0 0.0
    %4862 = vmatpush1.msra.mxu0 0.0
    %4863 = vmatprep.subr.mxu0 0.0
    %4864 = vmatpush1.msra.mxu0 0.0
    %4865 = vmatprep.subr.mxu0 0.0
    %4866 = vmatpush1.msra.mxu0 0.0
    %4867 = vmatprep.subr.mxu0 0.0
    %4868 = vmatpush1.msra.mxu0 0.0
    %4869 = vmatprep.subr.mxu0 0.0
    %4870 = vmatpush1.msra.mxu0 0.0
    %4871 = vmatprep.subr.mxu0 0.0
    %4872 = vmatpush1.msra.mxu0 0.0
    %4873 = vmatprep.subr.mxu0 0.0
    %4874 = vmatpush1.msra.mxu0 0.0
    %4875 = vmatprep.subr.mxu0 0.0
    %4876 = vmatpush1.msra.mxu0 0.0
    %4877 = vmatprep.subr.mxu0 0.0
    %4878 = vmatpush1.msra.mxu0 0.0
    %4879 = vmatprep.subr.mxu0 0.0
    %4880 = vmatpush1.msra.mxu0 0.0
    %4881 = vmatprep.subr.mxu0 0.0
    %4882 = vmatpush1.msra.mxu0 0.0
    %4883 = vmatprep.subr.mxu0 0.0
    %4884 = vmatpush1.msra.mxu0 0.0
    %4885 = vmatprep.subr.mxu0 0.0
    %4886 = vmatpush1.msra.mxu0 0.0
    %4887 = vmatprep.subr.mxu0 0.0
    %4888 = vmatpush1.msra.mxu0 0.0
    %4889 = vmatprep.subr.mxu0 0.0
    %4890 = vmatpush1.msra.mxu0 0.0
    %4891 = vmatprep.subr.mxu0 0.0
    %4892 = vmatpush1.msra.mxu0 0.0
    %4893 = vmatprep.subr.mxu0 0.0
    %4894 = vmatpush1.msra.mxu0 0.0
    %4895 = vmatprep.subr.mxu0 0.0
    %4896 = vmatpush1.msra.mxu0 0.0
    %4897 = vmatprep.subr.mxu0 0.0
    %4898 = vmatpush1.msra.mxu0 0.0
    %4899 = vmatprep.subr.mxu0 0.0
    %4900 = vmatpush1.msra.mxu0 0.0
    %4901 = vmatprep.subr.mxu0 0.0
    %4902 = vmatpush1.msra.mxu0 0.0
    %4903 = vmatprep.subr.mxu0 0.0
    %4904 = vmatpush1.msra.mxu0 0.0
    %4905 = vmatprep.subr.mxu0 0.0
    %4906 = vmatpush1.msra.mxu0 0.0
    %4907 = vmatprep.subr.mxu0 0.0
    %4908 = vmatpush1.msra.mxu0 0.0
    %4909 = vmatprep.subr.mxu0 0.0
    %4910 = vmatpush1.msra.mxu0 0.0
    %4911 = vmatprep.subr.mxu0 0.0
    %4912 = vmatpush1.msra.mxu0 0.0
    %4913 = vmatprep.mubr.f32.mxu0 0.0
    %4914 = vmatmul.mubr.f32.gmra.mrb[0].mxu0 %v4847
    %v4915 = vpop.f32.mrb[0].mxu0
    %v4916 = vadd.f32 0.0, %v4915
    %v4917 = vpop.f32.mrb[0].mxu0
    %4918 = vdwg.mxu0
    %4919 = vrot.lane.b32.xlu0 %v3670, 40
    %v4920 = vpop.permute.xlu0 %4919
    %v4923 = vsel %vm239, %v4842, 0
    %4925 = vmatprep.subr.mxu0 0.0
    %4926 = vmatpush1.msra.mxu0 %v4920
    %4927 = vmatprep.subr.mxu0 0.0
    %4928 = vmatpush1.msra.mxu0 0.0
    %4929 = vmatprep.subr.mxu0 0.0
    %4930 = vmatpush1.msra.mxu0 0.0
    %4931 = vmatprep.subr.mxu0 0.0
    %4932 = vmatpush1.msra.mxu0 0.0
    %4933 = vmatprep.subr.mxu0 0.0
    %4934 = vmatpush1.msra.mxu0 0.0
    %4935 = vmatprep.subr.mxu0 0.0
    %4936 = vmatpush1.msra.mxu0 0.0
    %4937 = vmatprep.subr.mxu0 0.0
    %4938 = vmatpush1.msra.mxu0 0.0
    %4939 = vmatprep.subr.mxu0 0.0
    %4940 = vmatpush1.msra.mxu0 0.0
    %4941 = vmatprep.subr.mxu0 0.0
    %4942 = vmatpush1.msra.mxu0 0.0
    %4943 = vmatprep.subr.mxu0 0.0
    %4944 = vmatpush1.msra.mxu0 0.0
    %4945 = vmatprep.subr.mxu0 0.0
    %4946 = vmatpush1.msra.mxu0 0.0
    %4947 = vmatprep.subr.mxu0 0.0
    %4948 = vmatpush1.msra.mxu0 0.0
    %4949 = vmatprep.subr.mxu0 0.0
    %4950 = vmatpush1.msra.mxu0 0.0
    %4951 = vmatprep.subr.mxu0 0.0
    %4952 = vmatpush1.msra.mxu0 0.0
    %4953 = vmatprep.subr.mxu0 0.0
    %4954 = vmatpush1.msra.mxu0 0.0
    %4955 = vmatprep.subr.mxu0 0.0
    %4956 = vmatpush1.msra.mxu0 0.0
    %4957 = vmatprep.subr.mxu0 0.0
    %4958 = vmatpush1.msra.mxu0 0.0
    %4959 = vmatprep.subr.mxu0 0.0
    %4960 = vmatpush1.msra.mxu0 0.0
    %4961 = vmatprep.subr.mxu0 0.0
    %4962 = vmatpush1.msra.mxu0 0.0
    %4963 = vmatprep.subr.mxu0 0.0
    %4964 = vmatpush1.msra.mxu0 0.0
    %4965 = vmatprep.subr.mxu0 0.0
    %4966 = vmatpush1.msra.mxu0 0.0
    %4967 = vmatprep.subr.mxu0 0.0
    %4968 = vmatpush1.msra.mxu0 0.0
    %4969 = vmatprep.subr.mxu0 0.0
    %4970 = vmatpush1.msra.mxu0 0.0
    %4971 = vmatprep.subr.mxu0 0.0
    %4972 = vmatpush1.msra.mxu0 0.0
    %4973 = vmatprep.subr.mxu0 0.0
    %4974 = vmatpush1.msra.mxu0 0.0
    %4975 = vmatprep.subr.mxu0 0.0
    %4976 = vmatpush1.msra.mxu0 0.0
    %4977 = vmatprep.subr.mxu0 0.0
    %4978 = vmatpush1.msra.mxu0 0.0
    %4979 = vmatprep.subr.mxu0 0.0
    %4980 = vmatpush1.msra.mxu0 0.0
    %4981 = vmatprep.subr.mxu0 0.0
    %4982 = vmatpush1.msra.mxu0 0.0
    %4983 = vmatprep.subr.mxu0 0.0
    %4984 = vmatpush1.msra.mxu0 0.0
    %4985 = vmatprep.subr.mxu0 0.0
    %4986 = vmatpush1.msra.mxu0 0.0
    %4987 = vmatprep.subr.mxu0 0.0
    %4988 = vmatpush1.msra.mxu0 0.0
    %4989 = vmatprep.mubr.f32.mxu0 0.0
    %4990 = vmatmul.mubr.f32.gmra.mrb[0].mxu0 %v4923
    %v4991 = vpop.f32.mrb[0].mxu0
    %v4992 = vadd.f32 0.0, %v4991
    %v4993 = vpop.f32.mrb[0].mxu0
    %4994 = vdwg.mxu0
    %4997 = vrot.lane.b32.xlu0 %v4256, 8
    %v4998 = vpop.permute.xlu0 %4997
    %4999 = vrot.lane.b32.xlu0 %v4332, 8
    %v5000 = vpop.permute.xlu0 %4999
    %5005 = vrot.lane.b32.xlu0 %v4586, 16
    %v5006 = vpop.permute.xlu0 %5005
    %5007 = vrot.lane.b32.xlu0 %v4662, 16
    %v5008 = vpop.permute.xlu0 %5007
    %5013 = vrot.lane.b32.xlu0 %v4916, 24
    %v5014 = vpop.permute.xlu0 %5013
    %5015 = vrot.lane.b32.xlu0 %v4992, 24
    %v5016 = vpop.permute.xlu0 %5015
    %v5019 = vsel %vm239, %v3926, %v4998
    %v5020 = vsel %vm239, %v4002, %v5000
    %v5021 = vsel %vm1583, %v5019, %v5006
    %v5022 = vsel %vm1583, %v5020, %v5008
    %v5023 = vsel %vm1586, %v5021, %v5014
    %v5024 = vsel %vm1586, %v5022, %v5016
    %v5025 = vld [vmem:[#allocation2 + $0x100] sm:$0xff]
    %v5026 = vld [vmem:[#allocation2 + $0x108] sm:$0xff]
    %v5027 = vld [vmem:[#allocation2 + $0x110] sm:$0xff]
    %v5028 = vld [vmem:[#allocation2 + $0x118] sm:$0xff]
    %v5029 = vld [vmem:[#allocation2 + $0x1ed] sm:$0x1]
    %v5030 = vlaneseq
    %v5031 = vshrl.u32 %v5030, 7
    %v5032 = vsub.s32 0, %v5031
    %v5033 = vrot.slane %v5029, %v5032
    %v5035 = vsel %vm46, %v5023, 0
    %v5038 = vsel %vm46, %v5024, 0
    %5040 = vmatprep.subr.mxu0 0.0
    %5041 = vmatpush1.msra.mxu0 %v5025
    %5042 = vmatprep.subr.mxu0 0.0
    %5043 = vmatpush1.msra.mxu0 %v5026
    %5044 = vmatprep.subr.mxu0 0.0
    %5045 = vmatpush1.msra.mxu0 %v5027
    %5046 = vmatprep.subr.mxu0 0.0
    %5047 = vmatpush1.msra.mxu0 %v5028
    %5048 = vmatprep.subr.mxu0 0.0
    %5049 = vmatpush1.msra.mxu0 0.0
    %5050 = vmatprep.subr.mxu0 0.0
    %5051 = vmatpush1.msra.mxu0 0.0
    %5052 = vmatprep.subr.mxu0 0.0
    %5053 = vmatpush1.msra.mxu0 0.0
    %5054 = vmatprep.subr.mxu0 0.0
    %5055 = vmatpush1.msra.mxu0 0.0
    %5056 = vmatprep.subr.mxu0 0.0
    %5057 = vmatpush1.msra.mxu0 0.0
    %5058 = vmatprep.subr.mxu0 0.0
    %5059 = vmatpush1.msra.mxu0 0.0
    %5060 = vmatprep.subr.mxu0 0.0
    %5061 = vmatpush1.msra.mxu0 0.0
    %5062 = vmatprep.subr.mxu0 0.0
    %5063 = vmatpush1.msra.mxu0 0.0
    %5064 = vmatprep.subr.mxu0 0.0
    %5065 = vmatpush1.msra.mxu0 0.0
    %5066 = vmatprep.subr.mxu0 0.0
    %5067 = vmatpush1.msra.mxu0 0.0
    %5068 = vmatprep.subr.mxu0 0.0
    %5069 = vmatpush1.msra.mxu0 0.0
    %5070 = vmatprep.subr.mxu0 0.0
    %5071 = vmatpush1.msra.mxu0 0.0
    %5072 = vmatprep.subr.mxu0 0.0
    %5073 = vmatpush1.msra.mxu0 0.0
    %5074 = vmatprep.subr.mxu0 0.0
    %5075 = vmatpush1.msra.mxu0 0.0
    %5076 = vmatprep.subr.mxu0 0.0
    %5077 = vmatpush1.msra.mxu0 0.0
    %5078 = vmatprep.subr.mxu0 0.0
    %5079 = vmatpush1.msra.mxu0 0.0
    %5080 = vmatprep.subr.mxu0 0.0
    %5081 = vmatpush1.msra.mxu0 0.0
    %5082 = vmatprep.subr.mxu0 0.0
    %5083 = vmatpush1.msra.mxu0 0.0
    %5084 = vmatprep.subr.mxu0 0.0
    %5085 = vmatpush1.msra.mxu0 0.0
    %5086 = vmatprep.subr.mxu0 0.0
    %5087 = vmatpush1.msra.mxu0 0.0
    %5088 = vmatprep.subr.mxu0 0.0
    %5089 = vmatpush1.msra.mxu0 0.0
    %5090 = vmatprep.subr.mxu0 0.0
    %5091 = vmatpush1.msra.mxu0 0.0
    %5092 = vmatprep.subr.mxu0 0.0
    %5093 = vmatpush1.msra.mxu0 0.0
    %5094 = vmatprep.subr.mxu0 0.0
    %5095 = vmatpush1.msra.mxu0 0.0
    %5096 = vmatprep.subr.mxu0 0.0
    %5097 = vmatpush1.msra.mxu0 0.0
    %5098 = vmatprep.subr.mxu0 0.0
    %5099 = vmatpush1.msra.mxu0 0.0
    %5100 = vmatprep.subr.mxu0 0.0
    %5101 = vmatpush1.msra.mxu0 0.0
    %5102 = vmatprep.subr.mxu0 0.0
    %5103 = vmatpush1.msra.mxu0 0.0
    %5104 = vmatprep.mubr.f32.mxu0 0.0
    %5105 = vmatmul.mubr.f32.gmra.mrb[0].mxu0 %v5035
    %v5106 = vpop.f32.mrb[0].mxu0
    %v5107 = vadd.f32 %v5033, %v5106
    %v5108 = vpop.f32.mrb[0].mxu0
    %5109 = vmatprep.mubr.f32.mxu0 0.0
    %5110 = vmatmul.mubr.f32.gmra.mrb[0].mxu0 %v5038
    %v5111 = vpop.f32.mrb[0].mxu0
    %v5112 = vadd.f32 %v5033, %v5111
    %v5113 = vpop.f32.mrb[0].mxu0
    %5114 = vdwg.mxu0
    %v5115 = vadd.f32 %v5107, %v3581
    %v5116 = vadd.f32 %v5112, %v3582
    %v5117 = vld [vmem:[#allocation2 + $0x1ee] sm:$0x1]
    %v5118 = vld [vmem:[#allocation2 + $0x1ef] sm:$0x1]
    %v5119 = vsel %vm46, %v5115, 0.0
    %5120 = vadd.xlane.f32.xlu0 %v5119
    %v5121 = vpop.xlane.xlu0 %5120
    %v5122 = vsel %vm46, %v5116, 0.0
    %5123 = vadd.xlane.f32.xlu0 %v5122
    %v5124 = vpop.xlane.xlu0 %5123
    %v5125 = vmul.f32 %v5121, %v1689
    %v5126 = vmul.f32 %v5124, %v1689
    %v5127 = vsub.f32 %v5115, %v5125
    %v5128 = vsub.f32 %v5116, %v5126
    %v5129 = vmul.f32 %v5127, %v5127
    %v5130 = vmul.f32 %v5128, %v5128
    %v5131 = vsel %vm46, %v5129, 0.0
    %5132 = vadd.xlane.f32.xlu0 %v5131
    %v5133 = vpop.xlane.xlu0 %5132
    %v5134 = vsel %vm46, %v5130, 0.0
    %5135 = vadd.xlane.f32.xlu0 %v5134
    %v5136 = vpop.xlane.xlu0 %5135
    %v5137 = vmul.f32 %v5133, %v1689
    %v5138 = vmul.f32 %v5136, %v1689
    %v5139 = vadd.f32 %v5137, 1e-05
    %v5140 = vadd.f32 %v5138, 1e-05
    %v5141 = vrsqrt.pop %v5139
    %v5142 = vrsqrt.pop %v5140
    %v5143 = vmul.f32 %v5127, %v5141
    %v5144 = vmul.f32 %v5128, %v5142
    %v5145 = vlaneseq
    %v5146 = vshrl.u32 %v5145, 7
    %v5147 = vsub.s32 0, %v5146
    %v5148 = vrot.slane %v5117, %v5147
    %v5149 = vmul.f32 %v5143, %v5148
    %v5150 = vmul.f32 %v5144, %v5148
    %v5151 = vlaneseq
    %v5152 = vshrl.u32 %v5151, 7
    %v5153 = vsub.s32 0, %v5152
    %v5154 = vrot.slane %v5118, %v5153
    %v5155 = vadd.f32 %v5149, %v5154
    %v5156 = vadd.f32 %v5150, %v5154
    %v5157 = vld [vmem:[#allocation2 + $0x120] sm:$0xff]
    %v5158 = vld [vmem:[#allocation2 + $0x128] sm:$0xff]
    %v5159 = vld [vmem:[#allocation2 + $0x130] sm:$0xff]
    %v5160 = vld [vmem:[#allocation2 + $0x138] sm:$0xff]
    %v5161 = vld [vmem:[#allocation2 + $0x1f0] sm:$0x1]
    %v5162 = vlaneseq
    %v5163 = vshrl.u32 %v5162, 7
    %v5164 = vsub.s32 0, %v5163
    %v5165 = vrot.slane %v5161, %v5164
    %v5167 = vsel %vm46, %v5155, 0
    %v5170 = vsel %vm46, %v5156, 0
    %5172 = vmatprep.subr.mxu0 0.0
    %5173 = vmatpush1.msra.mxu0 %v5157
    %5174 = vmatprep.subr.mxu0 0.0
    %5175 = vmatpush1.msra.mxu0 %v5158
    %5176 = vmatprep.subr.mxu0 0.0
    %5177 = vmatpush1.msra.mxu0 %v5159
    %5178 = vmatprep.subr.mxu0 0.0
    %5179 = vmatpush1.msra.mxu0 %v5160
    %5180 = vmatprep.subr.mxu0 0.0
    %5181 = vmatpush1.msra.mxu0 0.0
    %5182 = vmatprep.subr.mxu0 0.0
    %5183 = vmatpush1.msra.mxu0 0.0
    %5184 = vmatprep.subr.mxu0 0.0
    %5185 = vmatpush1.msra.mxu0 0.0
    %5186 = vmatprep.subr.mxu0 0.0
    %5187 = vmatpush1.msra.mxu0 0.0
    %5188 = vmatprep.subr.mxu0 0.0
    %5189 = vmatpush1.msra.mxu0 0.0
    %5190 = vmatprep.subr.mxu0 0.0
    %5191 = vmatpush1.msra.mxu0 0.0
    %5192 = vmatprep.subr.mxu0 0.0
    %5193 = vmatpush1.msra.mxu0 0.0
    %5194 = vmatprep.subr.mxu0 0.0
    %5195 = vmatpush1.msra.mxu0 0.0
    %5196 = vmatprep.subr.mxu0 0.0
    %5197 = vmatpush1.msra.mxu0 0.0
    %5198 = vmatprep.subr.mxu0 0.0
    %5199 = vmatpush1.msra.mxu0 0.0
    %5200 = vmatprep.subr.mxu0 0.0
    %5201 = vmatpush1.msra.mxu0 0.0
    %5202 = vmatprep.subr.mxu0 0.0
    %5203 = vmatpush1.msra.mxu0 0.0
    %5204 = vmatprep.subr.mxu0 0.0
    %5205 = vmatpush1.msra.mxu0 0.0
    %5206 = vmatprep.subr.mxu0 0.0
    %5207 = vmatpush1.msra.mxu0 0.0
    %5208 = vmatprep.subr.mxu0 0.0
    %5209 = vmatpush1.msra.mxu0 0.0
    %5210 = vmatprep.subr.mxu0 0.0
    %5211 = vmatpush1.msra.mxu0 0.0
    %5212 = vmatprep.subr.mxu0 0.0
    %5213 = vmatpush1.msra.mxu0 0.0
    %5214 = vmatprep.subr.mxu0 0.0
    %5215 = vmatpush1.msra.mxu0 0.0
    %5216 = vmatprep.subr.mxu0 0.0
    %5217 = vmatpush1.msra.mxu0 0.0
    %5218 = vmatprep.subr.mxu0 0.0
    %5219 = vmatpush1.msra.mxu0 0.0
    %5220 = vmatprep.subr.mxu0 0.0
    %5221 = vmatpush1.msra.mxu0 0.0
    %5222 = vmatprep.subr.mxu0 0.0
    %5223 = vmatpush1.msra.mxu0 0.0
    %5224 = vmatprep.subr.mxu0 0.0
    %5225 = vmatpush1.msra.mxu0 0.0
    %5226 = vmatprep.subr.mxu0 0.0
    %5227 = vmatpush1.msra.mxu0 0.0
    %5228 = vmatprep.subr.mxu0 0.0
    %5229 = vmatpush1.msra.mxu0 0.0
    %5230 = vmatprep.subr.mxu0 0.0
    %5231 = vmatpush1.msra.mxu0 0.0
    %5232 = vmatprep.subr.mxu0 0.0
    %5233 = vmatpush1.msra.mxu0 0.0
    %5234 = vmatprep.subr.mxu0 0.0
    %5235 = vmatpush1.msra.mxu0 0.0
    %5236 = vmatprep.mubr.f32.mxu0 0.0
    %5237 = vmatmul.mubr.f32.gmra.mrb[0].mxu0 %v5167
    %v5238 = vpop.f32.mrb[0].mxu0
    %v5239 = vadd.f32 %v5165, %v5238
    %v5240 = vpop.f32.mrb[0].mxu0
    %5241 = vmatprep.mubr.f32.mxu0 0.0
    %5242 = vmatmul.mubr.f32.gmra.mrb[0].mxu0 %v5170
    %v5243 = vpop.f32.mrb[0].mxu0
    %v5244 = vadd.f32 %v5165, %v5243
    %v5245 = vpop.f32.mrb[0].mxu0
    %5246 = vdwg.mxu0
    %v5247 = vmul.f32 %v5239, 0.35355338
    %v5248 = vmul.f32 %v5244, 0.35355338
    %5249 = vrot.lane.b32.xlu0 %v126, 64
    %v5250 = vpop.permute.xlu0 %5249
    %5251 = vrot.lane.b32.xlu0 %v131, 64
    %v5252 = vpop.permute.xlu0 %5251
    %v5254 = vsel %vm239, %v5247, 0
    %v5256 = vsel %vm239, %v5250, 0
    %v5258 = vsel %vm239, %v5252, 0
    %5260 = vmatprep.subr.mxu0 0.0
    %5261 = vmatpush1.xpose.msra.mxu0 %v5256
    %5262 = vmatprep.subr.mxu0 0.0
    %5263 = vmatpush1.xpose.msra.mxu0 %v5258
    %5264 = vmatprep.subr.mxu0 0.0
    %5265 = vmatpush1.xpose.msra.mxu0 0.0
    %5266 = vmatprep.subr.mxu0 0.0
    %5267 = vmatpush1.xpose.msra.mxu0 0.0
    %5268 = vmatprep.subr.mxu0 0.0
    %5269 = vmatpush1.xpose.msra.mxu0 0.0
    %5270 = vmatprep.subr.mxu0 0.0
    %5271 = vmatpush1.xpose.msra.mxu0 0.0
    %5272 = vmatprep.subr.mxu0 0.0
    %5273 = vmatpush1.xpose.msra.mxu0 0.0
    %5274 = vmatprep.subr.mxu0 0.0
    %5275 = vmatpush1.xpose.msra.mxu0 0.0
    %5276 = vmatprep.subr.mxu0 0.0
    %5277 = vmatpush1.xpose.msra.mxu0 0.0
    %5278 = vmatprep.subr.mxu0 0.0
    %5279 = vmatpush1.xpose.msra.mxu0 0.0
    %5280 = vmatprep.subr.mxu0 0.0
    %5281 = vmatpush1.xpose.msra.mxu0 0.0
    %5282 = vmatprep.subr.mxu0 0.0
    %5283 = vmatpush1.xpose.msra.mxu0 0.0
    %5284 = vmatprep.subr.mxu0 0.0
    %5285 = vmatpush1.xpose.msra.mxu0 0.0
    %5286 = vmatprep.subr.mxu0 0.0
    %5287 = vmatpush1.xpose.msra.mxu0 0.0
    %5288 = vmatprep.subr.mxu0 0.0
    %5289 = vmatpush1.xpose.msra.mxu0 0.0
    %5290 = vmatprep.subr.mxu0 0.0
    %5291 = vmatpush1.xpose.msra.mxu0 0.0
    %5292 = vmatprep.subr.mxu0 0.0
    %5293 = vmatpush1.xpose.msra.mxu0 0.0
    %5294 = vmatprep.subr.mxu0 0.0
    %5295 = vmatpush1.xpose.msra.mxu0 0.0
    %5296 = vmatprep.subr.mxu0 0.0
    %5297 = vmatpush1.xpose.msra.mxu0 0.0
    %5298 = vmatprep.subr.mxu0 0.0
    %5299 = vmatpush1.xpose.msra.mxu0 0.0
    %5300 = vmatprep.subr.mxu0 0.0
    %5301 = vmatpush1.xpose.msra.mxu0 0.0
    %5302 = vmatprep.subr.mxu0 0.0
    %5303 = vmatpush1.xpose.msra.mxu0 0.0
    %5304 = vmatprep.subr.mxu0 0.0
    %5305 = vmatpush1.xpose.msra.mxu0 0.0
    %5306 = vmatprep.subr.mxu0 0.0
    %5307 = vmatpush1.xpose.msra.mxu0 0.0
    %5308 = vmatprep.subr.mxu0 0.0
    %5309 = vmatpush1.xpose.msra.mxu0 0.0
    %5310 = vmatprep.subr.mxu0 0.0
    %5311 = vmatpush1.xpose.msra.mxu0 0.0
    %5312 = vmatprep.subr.mxu0 0.0
    %5313 = vmatpush1.xpose.msra.mxu0 0.0
    %5314 = vmatprep.subr.mxu0 0.0
    %5315 = vmatpush1.xpose.msra.mxu0 0.0
    %5316 = vmatprep.subr.mxu0 0.0
    %5317 = vmatpush1.xpose.msra.mxu0 0.0
    %5318 = vmatprep.subr.mxu0 0.0
    %5319 = vmatpush1.xpose.msra.mxu0 0.0
    %5320 = vmatprep.subr.mxu0 0.0
    %5321 = vmatpush1.xpose.msra.mxu0 0.0
    %5322 = vmatprep.subr.mxu0 0.0
    %5323 = vmatpush1.xpose.msra.mxu0 0.0
    %5324 = vmatprep.mubr.f32.mxu0 0.0
    %5325 = vmatmul.mubr.f32.gmra.mrb[0].mxu0 %v5254
    %v5326 = vpop.f32.mrb[0].mxu0
    %v5327 = vadd.f32 %v1816, %v5326
    %v5328 = vpop.f32.mrb[0].mxu0
    %5329 = vdwg.mxu0
    %5330 = vrot.lane.b32.xlu0 %v136, 64
    %v5331 = vpop.permute.xlu0 %5330
    %5332 = vrot.lane.b32.xlu0 %v141, 64
    %v5333 = vpop.permute.xlu0 %5332
    %v5335 = vsel %vm239, %v5248, 0
    %v5337 = vsel %vm239, %v5331, 0
    %v5339 = vsel %vm239, %v5333, 0
    %5341 = vmatprep.subr.mxu0 0.0
    %5342 = vmatpush1.xpose.msra.mxu0 %v5337
    %5343 = vmatprep.subr.mxu0 0.0
    %5344 = vmatpush1.xpose.msra.mxu0 %v5339
    %5345 = vmatprep.subr.mxu0 0.0
    %5346 = vmatpush1.xpose.msra.mxu0 0.0
    %5347 = vmatprep.subr.mxu0 0.0
    %5348 = vmatpush1.xpose.msra.mxu0 0.0
    %5349 = vmatprep.subr.mxu0 0.0
    %5350 = vmatpush1.xpose.msra.mxu0 0.0
    %5351 = vmatprep.subr.mxu0 0.0
    %5352 = vmatpush1.xpose.msra.mxu0 0.0
    %5353 = vmatprep.subr.mxu0 0.0
    %5354 = vmatpush1.xpose.msra.mxu0 0.0
    %5355 = vmatprep.subr.mxu0 0.0
    %5356 = vmatpush1.xpose.msra.mxu0 0.0
    %5357 = vmatprep.subr.mxu0 0.0
    %5358 = vmatpush1.xpose.msra.mxu0 0.0
    %5359 = vmatprep.subr.mxu0 0.0
    %5360 = vmatpush1.xpose.msra.mxu0 0.0
    %5361 = vmatprep.subr.mxu0 0.0
    %5362 = vmatpush1.xpose.msra.mxu0 0.0
    %5363 = vmatprep.subr.mxu0 0.0
    %5364 = vmatpush1.xpose.msra.mxu0 0.0
    %5365 = vmatprep.subr.mxu0 0.0
    %5366 = vmatpush1.xpose.msra.mxu0 0.0
    %5367 = vmatprep.subr.mxu0 0.0
    %5368 = vmatpush1.xpose.msra.mxu0 0.0
    %5369 = vmatprep.subr.mxu0 0.0
    %5370 = vmatpush1.xpose.msra.mxu0 0.0
    %5371 = vmatprep.subr.mxu0 0.0
    %5372 = vmatpush1.xpose.msra.mxu0 0.0
    %5373 = vmatprep.subr.mxu0 0.0
    %5374 = vmatpush1.xpose.msra.mxu0 0.0
    %5375 = vmatprep.subr.mxu0 0.0
    %5376 = vmatpush1.xpose.msra.mxu0 0.0
    %5377 = vmatprep.subr.mxu0 0.0
    %5378 = vmatpush1.xpose.msra.mxu0 0.0
    %5379 = vmatprep.subr.mxu0 0.0
    %5380 = vmatpush1.xpose.msra.mxu0 0.0
    %5381 = vmatprep.subr.mxu0 0.0
    %5382 = vmatpush1.xpose.msra.mxu0 0.0
    %5383 = vmatprep.subr.mxu0 0.0
    %5384 = vmatpush1.xpose.msra.mxu0 0.0
    %5385 = vmatprep.subr.mxu0 0.0
    %5386 = vmatpush1.xpose.msra.mxu0 0.0
    %5387 = vmatprep.subr.mxu0 0.0
    %5388 = vmatpush1.xpose.msra.mxu0 0.0
    %5389 = vmatprep.subr.mxu0 0.0
    %5390 = vmatpush1.xpose.msra.mxu0 0.0
    %5391 = vmatprep.subr.mxu0 0.0
    %5392 = vmatpush1.xpose.msra.mxu0 0.0
    %5393 = vmatprep.subr.mxu0 0.0
    %5394 = vmatpush1.xpose.msra.mxu0 0.0
    %5395 = vmatprep.subr.mxu0 0.0
    %5396 = vmatpush1.xpose.msra.mxu0 0.0
    %5397 = vmatprep.subr.mxu0 0.0
    %5398 = vmatpush1.xpose.msra.mxu0 0.0
    %5399 = vmatprep.subr.mxu0 0.0
    %5400 = vmatpush1.xpose.msra.mxu0 0.0
    %5401 = vmatprep.subr.mxu0 0.0
    %5402 = vmatpush1.xpose.msra.mxu0 0.0
    %5403 = vmatprep.subr.mxu0 0.0
    %5404 = vmatpush1.xpose.msra.mxu0 0.0
    %5405 = vmatprep.mubr.f32.mxu0 0.0
    %5406 = vmatmul.mubr.f32.gmra.mrb[0].mxu0 %v5335
    %v5407 = vpop.f32.mrb[0].mxu0
    %v5408 = vadd.f32 %v1899, %v5407
    %v5409 = vpop.f32.mrb[0].mxu0
    %5410 = vdwg.mxu0
    %v5411 = vsel %vm1583, %v5327, -inf
    %5412 = vmax.xlane.f32.xlu0 %v5411
    %v5413 = vpop.xlane.xlu0 %5412
    %v5414 = vsel %vm1583, %v5408, -inf
    %5415 = vmax.xlane.f32.xlu0 %v5414
    %v5416 = vpop.xlane.xlu0 %5415
    %v5417 = vsub.f32 %v5327, %v5413
    %v5418 = vsub.f32 %v5408, %v5416
    %v5419 = vmul.f32 %v5417, 1.442695
    %v5420 = vpow.pop %v5419
    %v5421 = vmul.f32 %v5418, 1.442695
    %v5422 = vpow.pop %v5421
    %v5423 = vsel %vm1583, %v5420, 0.0
    %5424 = vadd.xlane.f32.xlu0 %v5423
    %v5425 = vpop.xlane.xlu0 %5424
    %v5426 = vsel %vm1583, %v5422, 0.0
    %5427 = vadd.xlane.f32.xlu0 %v5426
    %v5428 = vpop.xlane.xlu0 %5427
    %v5429 = vrcp.pop %v5425
    %v5430 = vrcp.pop %v5428
    %v5431 = vmul.f32 %v5420, %v5429
    %v5432 = vmul.f32 %v5422, %v5430
    %5433 = vrot.lane.b32.xlu0 %v126, 32
    %v5434 = vpop.permute.xlu0 %5433
    %5435 = vrot.lane.b32.xlu0 %v131, 32
    %v5436 = vpop.permute.xlu0 %5435
    %v5440 = vsel %vm1583, %v5431, 0
    %5442 = vmatprep.subr.mxu0 0.0
    %5443 = vmatpush1.msra.mxu0 %v5434
    %5444 = vmatprep.subr.mxu0 0.0
    %5445 = vmatpush1.msra.mxu0 %v5436
    %5446 = vmatprep.subr.mxu0 0.0
    %5447 = vmatpush1.msra.mxu0 0.0
    %5448 = vmatprep.subr.mxu0 0.0
    %5449 = vmatpush1.msra.mxu0 0.0
    %5450 = vmatprep.subr.mxu0 0.0
    %5451 = vmatpush1.msra.mxu0 0.0
    %5452 = vmatprep.subr.mxu0 0.0
    %5453 = vmatpush1.msra.mxu0 0.0
    %5454 = vmatprep.subr.mxu0 0.0
    %5455 = vmatpush1.msra.mxu0 0.0
    %5456 = vmatprep.subr.mxu0 0.0
    %5457 = vmatpush1.msra.mxu0 0.0
    %5458 = vmatprep.subr.mxu0 0.0
    %5459 = vmatpush1.msra.mxu0 0.0
    %5460 = vmatprep.subr.mxu0 0.0
    %5461 = vmatpush1.msra.mxu0 0.0
    %5462 = vmatprep.subr.mxu0 0.0
    %5463 = vmatpush1.msra.mxu0 0.0
    %5464 = vmatprep.subr.mxu0 0.0
    %5465 = vmatpush1.msra.mxu0 0.0
    %5466 = vmatprep.subr.mxu0 0.0
    %5467 = vmatpush1.msra.mxu0 0.0
    %5468 = vmatprep.subr.mxu0 0.0
    %5469 = vmatpush1.msra.mxu0 0.0
    %5470 = vmatprep.subr.mxu0 0.0
    %5471 = vmatpush1.msra.mxu0 0.0
    %5472 = vmatprep.subr.mxu0 0.0
    %5473 = vmatpush1.msra.mxu0 0.0
    %5474 = vmatprep.subr.mxu0 0.0
    %5475 = vmatpush1.msra.mxu0 0.0
    %5476 = vmatprep.subr.mxu0 0.0
    %5477 = vmatpush1.msra.mxu0 0.0
    %5478 = vmatprep.subr.mxu0 0.0
    %5479 = vmatpush1.msra.mxu0 0.0
    %5480 = vmatprep.subr.mxu0 0.0
    %5481 = vmatpush1.msra.mxu0 0.0
    %5482 = vmatprep.subr.mxu0 0.0
    %5483 = vmatpush1.msra.mxu0 0.0
    %5484 = vmatprep.subr.mxu0 0.0
    %5485 = vmatpush1.msra.mxu0 0.0
    %5486 = vmatprep.subr.mxu0 0.0
    %5487 = vmatpush1.msra.mxu0 0.0
    %5488 = vmatprep.subr.mxu0 0.0
    %5489 = vmatpush1.msra.mxu0 0.0
    %5490 = vmatprep.subr.mxu0 0.0
    %5491 = vmatpush1.msra.mxu0 0.0
    %5492 = vmatprep.subr.mxu0 0.0
    %5493 = vmatpush1.msra.mxu0 0.0
    %5494 = vmatprep.subr.mxu0 0.0
    %5495 = vmatpush1.msra.mxu0 0.0
    %5496 = vmatprep.subr.mxu0 0.0
    %5497 = vmatpush1.msra.mxu0 0.0
    %5498 = vmatprep.subr.mxu0 0.0
    %5499 = vmatpush1.msra.mxu0 0.0
    %5500 = vmatprep.subr.mxu0 0.0
    %5501 = vmatpush1.msra.mxu0 0.0
    %5502 = vmatprep.subr.mxu0 0.0
    %5503 = vmatpush1.msra.mxu0 0.0
    %5504 = vmatprep.subr.mxu0 0.0
    %5505 = vmatpush1.msra.mxu0 0.0
    %5506 = vmatprep.mubr.f32.mxu0 0.0
    %5507 = vmatmul.mubr.f32.gmra.mrb[0].mxu0 %v5440
    %v5508 = vpop.f32.mrb[0].mxu0
    %v5509 = vadd.f32 0.0, %v5508
    %v5510 = vpop.f32.mrb[0].mxu0
    %5511 = vdwg.mxu0
    %5512 = vrot.lane.b32.xlu0 %v136, 32
    %v5513 = vpop.permute.xlu0 %5512
    %5514 = vrot.lane.b32.xlu0 %v141, 32
    %v5515 = vpop.permute.xlu0 %5514
    %v5519 = vsel %vm1583, %v5432, 0
    %5521 = vmatprep.subr.mxu0 0.0
    %5522 = vmatpush1.msra.mxu0 %v5513
    %5523 = vmatprep.subr.mxu0 0.0
    %5524 = vmatpush1.msra.mxu0 %v5515
    %5525 = vmatprep.subr.mxu0 0.0
    %5526 = vmatpush1.msra.mxu0 0.0
    %5527 = vmatprep.subr.mxu0 0.0
    %5528 = vmatpush1.msra.mxu0 0.0
    %5529 = vmatprep.subr.mxu0 0.0
    %5530 = vmatpush1.msra.mxu0 0.0
    %5531 = vmatprep.subr.mxu0 0.0
    %5532 = vmatpush1.msra.mxu0 0.0
    %5533 = vmatprep.subr.mxu0 0.0
    %5534 = vmatpush1.msra.mxu0 0.0
    %5535 = vmatprep.subr.mxu0 0.0
    %5536 = vmatpush1.msra.mxu0 0.0
    %5537 = vmatprep.subr.mxu0 0.0
    %5538 = vmatpush1.msra.mxu0 0.0
    %5539 = vmatprep.subr.mxu0 0.0
    %5540 = vmatpush1.msra.mxu0 0.0
    %5541 = vmatprep.subr.mxu0 0.0
    %5542 = vmatpush1.msra.mxu0 0.0
    %5543 = vmatprep.subr.mxu0 0.0
    %5544 = vmatpush1.msra.mxu0 0.0
    %5545 = vmatprep.subr.mxu0 0.0
    %5546 = vmatpush1.msra.mxu0 0.0
    %5547 = vmatprep.subr.mxu0 0.0
    %5548 = vmatpush1.msra.mxu0 0.0
    %5549 = vmatprep.subr.mxu0 0.0
    %5550 = vmatpush1.msra.mxu0 0.0
    %5551 = vmatprep.subr.mxu0 0.0
    %5552 = vmatpush1.msra.mxu0 0.0
    %5553 = vmatprep.subr.mxu0 0.0
    %5554 = vmatpush1.msra.mxu0 0.0
    %5555 = vmatprep.subr.mxu0 0.0
    %5556 = vmatpush1.msra.mxu0 0.0
    %5557 = vmatprep.subr.mxu0 0.0
    %5558 = vmatpush1.msra.mxu0 0.0
    %5559 = vmatprep.subr.mxu0 0.0
    %5560 = vmatpush1.msra.mxu0 0.0
    %5561 = vmatprep.subr.mxu0 0.0
    %5562 = vmatpush1.msra.mxu0 0.0
    %5563 = vmatprep.subr.mxu0 0.0
    %5564 = vmatpush1.msra.mxu0 0.0
    %5565 = vmatprep.subr.mxu0 0.0
    %5566 = vmatpush1.msra.mxu0 0.0
    %5567 = vmatprep.subr.mxu0 0.0
    %5568 = vmatpush1.msra.mxu0 0.0
    %5569 = vmatprep.subr.mxu0 0.0
    %5570 = vmatpush1.msra.mxu0 0.0
    %5571 = vmatprep.subr.mxu0 0.0
    %5572 = vmatpush1.msra.mxu0 0.0
    %5573 = vmatprep.subr.mxu0 0.0
    %5574 = vmatpush1.msra.mxu0 0.0
    %5575 = vmatprep.subr.mxu0 0.0
    %5576 = vmatpush1.msra.mxu0 0.0
    %5577 = vmatprep.subr.mxu0 0.0
    %5578 = vmatpush1.msra.mxu0 0.0
    %5579 = vmatprep.subr.mxu0 0.0
    %5580 = vmatpush1.msra.mxu0 0.0
    %5581 = vmatprep.subr.mxu0 0.0
    %5582 = vmatpush1.msra.mxu0 0.0
    %5583 = vmatprep.subr.mxu0 0.0
    %5584 = vmatpush1.msra.mxu0 0.0
    %5585 = vmatprep.mubr.f32.mxu0 0.0
    %5586 = vmatmul.mubr.f32.gmra.mrb[0].mxu0 %v5519
    %v5587 = vpop.f32.mrb[0].mxu0
    %v5588 = vadd.f32 0.0, %v5587
    %v5589 = vpop.f32.mrb[0].mxu0
    %5590 = vdwg.mxu0
    %5591 = vrot.lane.b32.xlu0 %v5247, 120
    %v5592 = vpop.permute.xlu0 %5591
    %5593 = vrot.lane.b32.xlu0 %v126, 56
    %v5594 = vpop.permute.xlu0 %5593
    %5595 = vrot.lane.b32.xlu0 %v131, 56
    %v5596 = vpop.permute.xlu0 %5595
    %v5597 = vsel %vm239, %v5592, 0
    %v5599 = vsel %vm239, %v5594, 0
    %v5601 = vsel %vm239, %v5596, 0
    %5603 = vmatprep.subr.mxu0 0.0
    %5604 = vmatpush1.xpose.msra.mxu0 %v5599
    %5605 = vmatprep.subr.mxu0 0.0
    %5606 = vmatpush1.xpose.msra.mxu0 %v5601
    %5607 = vmatprep.subr.mxu0 0.0
    %5608 = vmatpush1.xpose.msra.mxu0 0.0
    %5609 = vmatprep.subr.mxu0 0.0
    %5610 = vmatpush1.xpose.msra.mxu0 0.0
    %5611 = vmatprep.subr.mxu0 0.0
    %5612 = vmatpush1.xpose.msra.mxu0 0.0
    %5613 = vmatprep.subr.mxu0 0.0
    %5614 = vmatpush1.xpose.msra.mxu0 0.0
    %5615 = vmatprep.subr.mxu0 0.0
    %5616 = vmatpush1.xpose.msra.mxu0 0.0
    %5617 = vmatprep.subr.mxu0 0.0
    %5618 = vmatpush1.xpose.msra.mxu0 0.0
    %5619 = vmatprep.subr.mxu0 0.0
    %5620 = vmatpush1.xpose.msra.mxu0 0.0
    %5621 = vmatprep.subr.mxu0 0.0
    %5622 = vmatpush1.xpose.msra.mxu0 0.0
    %5623 = vmatprep.subr.mxu0 0.0
    %5624 = vmatpush1.xpose.msra.mxu0 0.0
    %5625 = vmatprep.subr.mxu0 0.0
    %5626 = vmatpush1.xpose.msra.mxu0 0.0
    %5627 = vmatprep.subr.mxu0 0.0
    %5628 = vmatpush1.xpose.msra.mxu0 0.0
    %5629 = vmatprep.subr.mxu0 0.0
    %5630 = vmatpush1.xpose.msra.mxu0 0.0
    %5631 = vmatprep.subr.mxu0 0.0
    %5632 = vmatpush1.xpose.msra.mxu0 0.0
    %5633 = vmatprep.subr.mxu0 0.0
    %5634 = vmatpush1.xpose.msra.mxu0 0.0
    %5635 = vmatprep.subr.mxu0 0.0
    %5636 = vmatpush1.xpose.msra.mxu0 0.0
    %5637 = vmatprep.subr.mxu0 0.0
    %5638 = vmatpush1.xpose.msra.mxu0 0.0
    %5639 = vmatprep.subr.mxu0 0.0
    %5640 = vmatpush1.xpose.msra.mxu0 0.0
    %5641 = vmatprep.subr.mxu0 0.0
    %5642 = vmatpush1.xpose.msra.mxu0 0.0
    %5643 = vmatprep.subr.mxu0 0.0
    %5644 = vmatpush1.xpose.msra.mxu0 0.0
    %5645 = vmatprep.subr.mxu0 0.0
    %5646 = vmatpush1.xpose.msra.mxu0 0.0
    %5647 = vmatprep.subr.mxu0 0.0
    %5648 = vmatpush1.xpose.msra.mxu0 0.0
    %5649 = vmatprep.subr.mxu0 0.0
    %5650 = vmatpush1.xpose.msra.mxu0 0.0
    %5651 = vmatprep.subr.mxu0 0.0
    %5652 = vmatpush1.xpose.msra.mxu0 0.0
    %5653 = vmatprep.subr.mxu0 0.0
    %5654 = vmatpush1.xpose.msra.mxu0 0.0
    %5655 = vmatprep.subr.mxu0 0.0
    %5656 = vmatpush1.xpose.msra.mxu0 0.0
    %5657 = vmatprep.subr.mxu0 0.0
    %5658 = vmatpush1.xpose.msra.mxu0 0.0
    %5659 = vmatprep.subr.mxu0 0.0
    %5660 = vmatpush1.xpose.msra.mxu0 0.0
    %5661 = vmatprep.subr.mxu0 0.0
    %5662 = vmatpush1.xpose.msra.mxu0 0.0
    %5663 = vmatprep.subr.mxu0 0.0
    %5664 = vmatpush1.xpose.msra.mxu0 0.0
    %5665 = vmatprep.subr.mxu0 0.0
    %5666 = vmatpush1.xpose.msra.mxu0 0.0
    %5667 = vmatprep.mubr.f32.mxu0 0.0
    %5668 = vmatmul.mubr.f32.gmra.mrb[0].mxu0 %v5597
    %v5669 = vpop.f32.mrb[0].mxu0
    %v5670 = vadd.f32 %v1816, %v5669
    %v5671 = vpop.f32.mrb[0].mxu0
    %5672 = vdwg.mxu0
    %5673 = vrot.lane.b32.xlu0 %v5248, 120
    %v5674 = vpop.permute.xlu0 %5673
    %5675 = vrot.lane.b32.xlu0 %v136, 56
    %v5676 = vpop.permute.xlu0 %5675
    %5677 = vrot.lane.b32.xlu0 %v141, 56
    %v5678 = vpop.permute.xlu0 %5677
    %v5679 = vsel %vm239, %v5674, 0
    %v5681 = vsel %vm239, %v5676, 0
    %v5683 = vsel %vm239, %v5678, 0
    %5685 = vmatprep.subr.mxu0 0.0
    %5686 = vmatpush1.xpose.msra.mxu0 %v5681
    %5687 = vmatprep.subr.mxu0 0.0
    %5688 = vmatpush1.xpose.msra.mxu0 %v5683
    %5689 = vmatprep.subr.mxu0 0.0
    %5690 = vmatpush1.xpose.msra.mxu0 0.0
    %5691 = vmatprep.subr.mxu0 0.0
    %5692 = vmatpush1.xpose.msra.mxu0 0.0
    %5693 = vmatprep.subr.mxu0 0.0
    %5694 = vmatpush1.xpose.msra.mxu0 0.0
    %5695 = vmatprep.subr.mxu0 0.0
    %5696 = vmatpush1.xpose.msra.mxu0 0.0
    %5697 = vmatprep.subr.mxu0 0.0
    %5698 = vmatpush1.xpose.msra.mxu0 0.0
    %5699 = vmatprep.subr.mxu0 0.0
    %5700 = vmatpush1.xpose.msra.mxu0 0.0
    %5701 = vmatprep.subr.mxu0 0.0
    %5702 = vmatpush1.xpose.msra.mxu0 0.0
    %5703 = vmatprep.subr.mxu0 0.0
    %5704 = vmatpush1.xpose.msra.mxu0 0.0
    %5705 = vmatprep.subr.mxu0 0.0
    %5706 = vmatpush1.xpose.msra.mxu0 0.0
    %5707 = vmatprep.subr.mxu0 0.0
    %5708 = vmatpush1.xpose.msra.mxu0 0.0
    %5709 = vmatprep.subr.mxu0 0.0
    %5710 = vmatpush1.xpose.msra.mxu0 0.0
    %5711 = vmatprep.subr.mxu0 0.0
    %5712 = vmatpush1.xpose.msra.mxu0 0.0
    %5713 = vmatprep.subr.mxu0 0.0
    %5714 = vmatpush1.xpose.msra.mxu0 0.0
    %5715 = vmatprep.subr.mxu0 0.0
    %5716 = vmatpush1.xpose.msra.mxu0 0.0
    %5717 = vmatprep.subr.mxu0 0.0
    %5718 = vmatpush1.xpose.msra.mxu0 0.0
    %5719 = vmatprep.subr.mxu0 0.0
    %5720 = vmatpush1.xpose.msra.mxu0 0.0
    %5721 = vmatprep.subr.mxu0 0.0
    %5722 = vmatpush1.xpose.msra.mxu0 0.0
    %5723 = vmatprep.subr.mxu0 0.0
    %5724 = vmatpush1.xpose.msra.mxu0 0.0
    %5725 = vmatprep.subr.mxu0 0.0
    %5726 = vmatpush1.xpose.msra.mxu0 0.0
    %5727 = vmatprep.subr.mxu0 0.0
    %5728 = vmatpush1.xpose.msra.mxu0 0.0
    %5729 = vmatprep.subr.mxu0 0.0
    %5730 = vmatpush1.xpose.msra.mxu0 0.0
    %5731 = vmatprep.subr.mxu0 0.0
    %5732 = vmatpush1.xpose.msra.mxu0 0.0
    %5733 = vmatprep.subr.mxu0 0.0
    %5734 = vmatpush1.xpose.msra.mxu0 0.0
    %5735 = vmatprep.subr.mxu0 0.0
    %5736 = vmatpush1.xpose.msra.mxu0 0.0
    %5737 = vmatprep.subr.mxu0 0.0
    %5738 = vmatpush1.xpose.msra.mxu0 0.0
    %5739 = vmatprep.subr.mxu0 0.0
    %5740 = vmatpush1.xpose.msra.mxu0 0.0
    %5741 = vmatprep.subr.mxu0 0.0
    %5742 = vmatpush1.xpose.msra.mxu0 0.0
    %5743 = vmatprep.subr.mxu0 0.0
    %5744 = vmatpush1.xpose.msra.mxu0 0.0
    %5745 = vmatprep.subr.mxu0 0.0
    %5746 = vmatpush1.xpose.msra.mxu0 0.0
    %5747 = vmatprep.subr.mxu0 0.0
    %5748 = vmatpush1.xpose.msra.mxu0 0.0
    %5749 = vmatprep.mubr.f32.mxu0 0.0
    %5750 = vmatmul.mubr.f32.gmra.mrb[0].mxu0 %v5679
    %v5751 = vpop.f32.mrb[0].mxu0
    %v5752 = vadd.f32 %v1899, %v5751
    %v5753 = vpop.f32.mrb[0].mxu0
    %5754 = vdwg.mxu0
    %v5755 = vsel %vm1583, %v5670, -inf
    %5756 = vmax.xlane.f32.xlu0 %v5755
    %v5757 = vpop.xlane.xlu0 %5756
    %v5758 = vsel %vm1583, %v5752, -inf
    %5759 = vmax.xlane.f32.xlu0 %v5758
    %v5760 = vpop.xlane.xlu0 %5759
    %v5761 = vsub.f32 %v5670, %v5757
    %v5762 = vsub.f32 %v5752, %v5760
    %v5763 = vmul.f32 %v5761, 1.442695
    %v5764 = vpow.pop %v5763
    %v5765 = vmul.f32 %v5762, 1.442695
    %v5766 = vpow.pop %v5765
    %v5767 = vsel %vm1583, %v5764, 0.0
    %5768 = vadd.xlane.f32.xlu0 %v5767
    %v5769 = vpop.xlane.xlu0 %5768
    %v5770 = vsel %vm1583, %v5766, 0.0
    %5771 = vadd.xlane.f32.xlu0 %v5770
    %v5772 = vpop.xlane.xlu0 %5771
    %v5773 = vrcp.pop %v5769
    %v5774 = vrcp.pop %v5772
    %v5775 = vmul.f32 %v5764, %v5773
    %v5776 = vmul.f32 %v5766, %v5774
    %5777 = vrot.lane.b32.xlu0 %v126, 24
    %v5778 = vpop.permute.xlu0 %5777
    %5779 = vrot.lane.b32.xlu0 %v131, 24
    %v5780 = vpop.permute.xlu0 %5779
    %v5784 = vsel %vm1583, %v5775, 0
    %5786 = vmatprep.subr.mxu0 0.0
    %5787 = vmatpush1.msra.mxu0 %v5778
    %5788 = vmatprep.subr.mxu0 0.0
    %5789 = vmatpush1.msra.mxu0 %v5780
    %5790 = vmatprep.subr.mxu0 0.0
    %5791 = vmatpush1.msra.mxu0 0.0
    %5792 = vmatprep.subr.mxu0 0.0
    %5793 = vmatpush1.msra.mxu0 0.0
    %5794 = vmatprep.subr.mxu0 0.0
    %5795 = vmatpush1.msra.mxu0 0.0
    %5796 = vmatprep.subr.mxu0 0.0
    %5797 = vmatpush1.msra.mxu0 0.0
    %5798 = vmatprep.subr.mxu0 0.0
    %5799 = vmatpush1.msra.mxu0 0.0
    %5800 = vmatprep.subr.mxu0 0.0
    %5801 = vmatpush1.msra.mxu0 0.0
    %5802 = vmatprep.subr.mxu0 0.0
    %5803 = vmatpush1.msra.mxu0 0.0
    %5804 = vmatprep.subr.mxu0 0.0
    %5805 = vmatpush1.msra.mxu0 0.0
    %5806 = vmatprep.subr.mxu0 0.0
    %5807 = vmatpush1.msra.mxu0 0.0
    %5808 = vmatprep.subr.mxu0 0.0
    %5809 = vmatpush1.msra.mxu0 0.0
    %5810 = vmatprep.subr.mxu0 0.0
    %5811 = vmatpush1.msra.mxu0 0.0
    %5812 = vmatprep.subr.mxu0 0.0
    %5813 = vmatpush1.msra.mxu0 0.0
    %5814 = vmatprep.subr.mxu0 0.0
    %5815 = vmatpush1.msra.mxu0 0.0
    %5816 = vmatprep.subr.mxu0 0.0
    %5817 = vmatpush1.msra.mxu0 0.0
    %5818 = vmatprep.subr.mxu0 0.0
    %5819 = vmatpush1.msra.mxu0 0.0
    %5820 = vmatprep.subr.mxu0 0.0
    %5821 = vmatpush1.msra.mxu0 0.0
    %5822 = vmatprep.subr.mxu0 0.0
    %5823 = vmatpush1.msra.mxu0 0.0
    %5824 = vmatprep.subr.mxu0 0.0
    %5825 = vmatpush1.msra.mxu0 0.0
    %5826 = vmatprep.subr.mxu0 0.0
    %5827 = vmatpush1.msra.mxu0 0.0
    %5828 = vmatprep.subr.mxu0 0.0
    %5829 = vmatpush1.msra.mxu0 0.0
    %5830 = vmatprep.subr.mxu0 0.0
    %5831 = vmatpush1.msra.mxu0 0.0
    %5832 = vmatprep.subr.mxu0 0.0
    %5833 = vmatpush1.msra.mxu0 0.0
    %5834 = vmatprep.subr.mxu0 0.0
    %5835 = vmatpush1.msra.mxu0 0.0
    %5836 = vmatprep.subr.mxu0 0.0
    %5837 = vmatpush1.msra.mxu0 0.0
    %5838 = vmatprep.subr.mxu0 0.0
    %5839 = vmatpush1.msra.mxu0 0.0
    %5840 = vmatprep.subr.mxu0 0.0
    %5841 = vmatpush1.msra.mxu0 0.0
    %5842 = vmatprep.subr.mxu0 0.0
    %5843 = vmatpush1.msra.mxu0 0.0
    %5844 = vmatprep.subr.mxu0 0.0
    %5845 = vmatpush1.msra.mxu0 0.0
    %5846 = vmatprep.subr.mxu0 0.0
    %5847 = vmatpush1.msra.mxu0 0.0
    %5848 = vmatprep.subr.mxu0 0.0
    %5849 = vmatpush1.msra.mxu0 0.0
    %5850 = vmatprep.mubr.f32.mxu0 0.0
    %5851 = vmatmul.mubr.f32.gmra.mrb[0].mxu0 %v5784
    %v5852 = vpop.f32.mrb[0].mxu0
    %v5853 = vadd.f32 0.0, %v5852
    %v5854 = vpop.f32.mrb[0].mxu0
    %5855 = vdwg.mxu0
    %5856 = vrot.lane.b32.xlu0 %v136, 24
    %v5857 = vpop.permute.xlu0 %5856
    %5858 = vrot.lane.b32.xlu0 %v141, 24
    %v5859 = vpop.permute.xlu0 %5858
    %v5863 = vsel %vm1583, %v5776, 0
    %5865 = vmatprep.subr.mxu0 0.0
    %5866 = vmatpush1.msra.mxu0 %v5857
    %5867 = vmatprep.subr.mxu0 0.0
    %5868 = vmatpush1.msra.mxu0 %v5859
    %5869 = vmatprep.subr.mxu0 0.0
    %5870 = vmatpush1.msra.mxu0 0.0
    %5871 = vmatprep.subr.mxu0 0.0
    %5872 = vmatpush1.msra.mxu0 0.0
    %5873 = vmatprep.subr.mxu0 0.0
    %5874 = vmatpush1.msra.mxu0 0.0
    %5875 = vmatprep.subr.mxu0 0.0
    %5876 = vmatpush1.msra.mxu0 0.0
    %5877 = vmatprep.subr.mxu0 0.0
    %5878 = vmatpush1.msra.mxu0 0.0
    %5879 = vmatprep.subr.mxu0 0.0
    %5880 = vmatpush1.msra.mxu0 0.0
    %5881 = vmatprep.subr.mxu0 0.0
    %5882 = vmatpush1.msra.mxu0 0.0
    %5883 = vmatprep.subr.mxu0 0.0
    %5884 = vmatpush1.msra.mxu0 0.0
    %5885 = vmatprep.subr.mxu0 0.0
    %5886 = vmatpush1.msra.mxu0 0.0
    %5887 = vmatprep.subr.mxu0 0.0
    %5888 = vmatpush1.msra.mxu0 0.0
    %5889 = vmatprep.subr.mxu0 0.0
    %5890 = vmatpush1.msra.mxu0 0.0
    %5891 = vmatprep.subr.mxu0 0.0
    %5892 = vmatpush1.msra.mxu0 0.0
    %5893 = vmatprep.subr.mxu0 0.0
    %5894 = vmatpush1.msra.mxu0 0.0
    %5895 = vmatprep.subr.mxu0 0.0
    %5896 = vmatpush1.msra.mxu0 0.0
    %5897 = vmatprep.subr.mxu0 0.0
    %5898 = vmatpush1.msra.mxu0 0.0
    %5899 = vmatprep.subr.mxu0 0.0
    %5900 = vmatpush1.msra.mxu0 0.0
    %5901 = vmatprep.subr.mxu0 0.0
    %5902 = vmatpush1.msra.mxu0 0.0
    %5903 = vmatprep.subr.mxu0 0.0
    %5904 = vmatpush1.msra.mxu0 0.0
    %5905 = vmatprep.subr.mxu0 0.0
    %5906 = vmatpush1.msra.mxu0 0.0
    %5907 = vmatprep.subr.mxu0 0.0
    %5908 = vmatpush1.msra.mxu0 0.0
    %5909 = vmatprep.subr.mxu0 0.0
    %5910 = vmatpush1.msra.mxu0 0.0
    %5911 = vmatprep.subr.mxu0 0.0
    %5912 = vmatpush1.msra.mxu0 0.0
    %5913 = vmatprep.subr.mxu0 0.0
    %5914 = vmatpush1.msra.mxu0 0.0
    %5915 = vmatprep.subr.mxu0 0.0
    %5916 = vmatpush1.msra.mxu0 0.0
    %5917 = vmatprep.subr.mxu0 0.0
    %5918 = vmatpush1.msra.mxu0 0.0
    %5919 = vmatprep.subr.mxu0 0.0
    %5920 = vmatpush1.msra.mxu0 0.0
    %5921 = vmatprep.subr.mxu0 0.0
    %5922 = vmatpush1.msra.mxu0 0.0
    %5923 = vmatprep.subr.mxu0 0.0
    %5924 = vmatpush1.msra.mxu0 0.0
    %5925 = vmatprep.subr.mxu0 0.0
    %5926 = vmatpush1.msra.mxu0 0.0
    %5927 = vmatprep.subr.mxu0 0.0
    %5928 = vmatpush1.msra.mxu0 0.0
    %5929 = vmatprep.mubr.f32.mxu0 0.0
    %5930 = vmatmul.mubr.f32.gmra.mrb[0].mxu0 %v5863
    %v5931 = vpop.f32.mrb[0].mxu0
    %v5932 = vadd.f32 0.0, %v5931
    %v5933 = vpop.f32.mrb[0].mxu0
    %5934 = vdwg.mxu0
    %5935 = vrot.lane.b32.xlu0 %v5247, 112
    %v5936 = vpop.permute.xlu0 %5935
    %5937 = vrot.lane.b32.xlu0 %v126, 48
    %v5938 = vpop.permute.xlu0 %5937
    %5939 = vrot.lane.b32.xlu0 %v131, 48
    %v5940 = vpop.permute.xlu0 %5939
    %v5941 = vsel %vm239, %v5936, 0
    %v5943 = vsel %vm239, %v5938, 0
    %v5945 = vsel %vm239, %v5940, 0
    %5947 = vmatprep.subr.mxu0 0.0
    %5948 = vmatpush1.xpose.msra.mxu0 %v5943
    %5949 = vmatprep.subr.mxu0 0.0
    %5950 = vmatpush1.xpose.msra.mxu0 %v5945
    %5951 = vmatprep.subr.mxu0 0.0
    %5952 = vmatpush1.xpose.msra.mxu0 0.0
    %5953 = vmatprep.subr.mxu0 0.0
    %5954 = vmatpush1.xpose.msra.mxu0 0.0
    %5955 = vmatprep.subr.mxu0 0.0
    %5956 = vmatpush1.xpose.msra.mxu0 0.0
    %5957 = vmatprep.subr.mxu0 0.0
    %5958 = vmatpush1.xpose.msra.mxu0 0.0
    %5959 = vmatprep.subr.mxu0 0.0
    %5960 = vmatpush1.xpose.msra.mxu0 0.0
    %5961 = vmatprep.subr.mxu0 0.0
    %5962 = vmatpush1.xpose.msra.mxu0 0.0
    %5963 = vmatprep.subr.mxu0 0.0
    %5964 = vmatpush1.xpose.msra.mxu0 0.0
    %5965 = vmatprep.subr.mxu0 0.0
    %5966 = vmatpush1.xpose.msra.mxu0 0.0
    %5967 = vmatprep.subr.mxu0 0.0
    %5968 = vmatpush1.xpose.msra.mxu0 0.0
    %5969 = vmatprep.subr.mxu0 0.0
    %5970 = vmatpush1.xpose.msra.mxu0 0.0
    %5971 = vmatprep.subr.mxu0 0.0
    %5972 = vmatpush1.xpose.msra.mxu0 0.0
    %5973 = vmatprep.subr.mxu0 0.0
    %5974 = vmatpush1.xpose.msra.mxu0 0.0
    %5975 = vmatprep.subr.mxu0 0.0
    %5976 = vmatpush1.xpose.msra.mxu0 0.0
    %5977 = vmatprep.subr.mxu0 0.0
    %5978 = vmatpush1.xpose.msra.mxu0 0.0
    %5979 = vmatprep.subr.mxu0 0.0
    %5980 = vmatpush1.xpose.msra.mxu0 0.0
    %5981 = vmatprep.subr.mxu0 0.0
    %5982 = vmatpush1.xpose.msra.mxu0 0.0
    %5983 = vmatprep.subr.mxu0 0.0
    %5984 = vmatpush1.xpose.msra.mxu0 0.0
    %5985 = vmatprep.subr.mxu0 0.0
    %5986 = vmatpush1.xpose.msra.mxu0 0.0
    %5987 = vmatprep.subr.mxu0 0.0
    %5988 = vmatpush1.xpose.msra.mxu0 0.0
    %5989 = vmatprep.subr.mxu0 0.0
    %5990 = vmatpush1.xpose.msra.mxu0 0.0
    %5991 = vmatprep.subr.mxu0 0.0
    %5992 = vmatpush1.xpose.msra.mxu0 0.0
    %5993 = vmatprep.subr.mxu0 0.0
    %5994 = vmatpush1.xpose.msra.mxu0 0.0
    %5995 = vmatprep.subr.mxu0 0.0
    %5996 = vmatpush1.xpose.msra.mxu0 0.0
    %5997 = vmatprep.subr.mxu0 0.0
    %5998 = vmatpush1.xpose.msra.mxu0 0.0
    %5999 = vmatprep.subr.mxu0 0.0
    %6000 = vmatpush1.xpose.msra.mxu0 0.0
    %6001 = vmatprep.subr.mxu0 0.0
    %6002 = vmatpush1.xpose.msra.mxu0 0.0
    %6003 = vmatprep.subr.mxu0 0.0
    %6004 = vmatpush1.xpose.msra.mxu0 0.0
    %6005 = vmatprep.subr.mxu0 0.0
    %6006 = vmatpush1.xpose.msra.mxu0 0.0
    %6007 = vmatprep.subr.mxu0 0.0
    %6008 = vmatpush1.xpose.msra.mxu0 0.0
    %6009 = vmatprep.subr.mxu0 0.0
    %6010 = vmatpush1.xpose.msra.mxu0 0.0
    %6011 = vmatprep.mubr.f32.mxu0 0.0
    %6012 = vmatmul.mubr.f32.gmra.mrb[0].mxu0 %v5941
    %v6013 = vpop.f32.mrb[0].mxu0
    %v6014 = vadd.f32 %v1816, %v6013
    %v6015 = vpop.f32.mrb[0].mxu0
    %6016 = vdwg.mxu0
    %6017 = vrot.lane.b32.xlu0 %v5248, 112
    %v6018 = vpop.permute.xlu0 %6017
    %6019 = vrot.lane.b32.xlu0 %v136, 48
    %v6020 = vpop.permute.xlu0 %6019
    %6021 = vrot.lane.b32.xlu0 %v141, 48
    %v6022 = vpop.permute.xlu0 %6021
    %v6023 = vsel %vm239, %v6018, 0
    %v6025 = vsel %vm239, %v6020, 0
    %v6027 = vsel %vm239, %v6022, 0
    %6029 = vmatprep.subr.mxu0 0.0
    %6030 = vmatpush1.xpose.msra.mxu0 %v6025
    %6031 = vmatprep.subr.mxu0 0.0
    %6032 = vmatpush1.xpose.msra.mxu0 %v6027
    %6033 = vmatprep.subr.mxu0 0.0
    %6034 = vmatpush1.xpose.msra.mxu0 0.0
    %6035 = vmatprep.subr.mxu0 0.0
    %6036 = vmatpush1.xpose.msra.mxu0 0.0
    %6037 = vmatprep.subr.mxu0 0.0
    %6038 = vmatpush1.xpose.msra.mxu0 0.0
    %6039 = vmatprep.subr.mxu0 0.0
    %6040 = vmatpush1.xpose.msra.mxu0 0.0
    %6041 = vmatprep.subr.mxu0 0.0
    %6042 = vmatpush1.xpose.msra.mxu0 0.0
    %6043 = vmatprep.subr.mxu0 0.0
    %6044 = vmatpush1.xpose.msra.mxu0 0.0
    %6045 = vmatprep.subr.mxu0 0.0
    %6046 = vmatpush1.xpose.msra.mxu0 0.0
    %6047 = vmatprep.subr.mxu0 0.0
    %6048 = vmatpush1.xpose.msra.mxu0 0.0
    %6049 = vmatprep.subr.mxu0 0.0
    %6050 = vmatpush1.xpose.msra.mxu0 0.0
    %6051 = vmatprep.subr.mxu0 0.0
    %6052 = vmatpush1.xpose.msra.mxu0 0.0
    %6053 = vmatprep.subr.mxu0 0.0
    %6054 = vmatpush1.xpose.msra.mxu0 0.0
    %6055 = vmatprep.subr.mxu0 0.0
    %6056 = vmatpush1.xpose.msra.mxu0 0.0
    %6057 = vmatprep.subr.mxu0 0.0
    %6058 = vmatpush1.xpose.msra.mxu0 0.0
    %6059 = vmatprep.subr.mxu0 0.0
    %6060 = vmatpush1.xpose.msra.mxu0 0.0
    %6061 = vmatprep.subr.mxu0 0.0
    %6062 = vmatpush1.xpose.msra.mxu0 0.0
    %6063 = vmatprep.subr.mxu0 0.0
    %6064 = vmatpush1.xpose.msra.mxu0 0.0
    %6065 = vmatprep.subr.mxu0 0.0
    %6066 = vmatpush1.xpose.msra.mxu0 0.0
    %6067 = vmatprep.subr.mxu0 0.0
    %6068 = vmatpush1.xpose.msra.mxu0 0.0
    %6069 = vmatprep.subr.mxu0 0.0
    %6070 = vmatpush1.xpose.msra.mxu0 0.0
    %6071 = vmatprep.subr.mxu0 0.0
    %6072 = vmatpush1.xpose.msra.mxu0 0.0
    %6073 = vmatprep.subr.mxu0 0.0
    %6074 = vmatpush1.xpose.msra.mxu0 0.0
    %6075 = vmatprep.subr.mxu0 0.0
    %6076 = vmatpush1.xpose.msra.mxu0 0.0
    %6077 = vmatprep.subr.mxu0 0.0
    %6078 = vmatpush1.xpose.msra.mxu0 0.0
    %6079 = vmatprep.subr.mxu0 0.0
    %6080 = vmatpush1.xpose.msra.mxu0 0.0
    %6081 = vmatprep.subr.mxu0 0.0
    %6082 = vmatpush1.xpose.msra.mxu0 0.0
    %6083 = vmatprep.subr.mxu0 0.0
    %6084 = vmatpush1.xpose.msra.mxu0 0.0
    %6085 = vmatprep.subr.mxu0 0.0
    %6086 = vmatpush1.xpose.msra.mxu0 0.0
    %6087 = vmatprep.subr.mxu0 0.0
    %6088 = vmatpush1.xpose.msra.mxu0 0.0
    %6089 = vmatprep.subr.mxu0 0.0
    %6090 = vmatpush1.xpose.msra.mxu0 0.0
    %6091 = vmatprep.subr.mxu0 0.0
    %6092 = vmatpush1.xpose.msra.mxu0 0.0
    %6093 = vmatprep.mubr.f32.mxu0 0.0
    %6094 = vmatmul.mubr.f32.gmra.mrb[0].mxu0 %v6023
    %v6095 = vpop.f32.mrb[0].mxu0
    %v6096 = vadd.f32 %v1899, %v6095
    %v6097 = vpop.f32.mrb[0].mxu0
    %6098 = vdwg.mxu0
    %v6099 = vsel %vm1583, %v6014, -inf
    %6100 = vmax.xlane.f32.xlu0 %v6099
    %v6101 = vpop.xlane.xlu0 %6100
    %v6102 = vsel %vm1583, %v6096, -inf
    %6103 = vmax.xlane.f32.xlu0 %v6102
    %v6104 = vpop.xlane.xlu0 %6103
    %v6105 = vsub.f32 %v6014, %v6101
    %v6106 = vsub.f32 %v6096, %v6104
    %v6107 = vmul.f32 %v6105, 1.442695
    %v6108 = vpow.pop %v6107
    %v6109 = vmul.f32 %v6106, 1.442695
    %v6110 = vpow.pop %v6109
    %v6111 = vsel %vm1583, %v6108, 0.0
    %6112 = vadd.xlane.f32.xlu0 %v6111
    %v6113 = vpop.xlane.xlu0 %6112
    %v6114 = vsel %vm1583, %v6110, 0.0
    %6115 = vadd.xlane.f32.xlu0 %v6114
    %v6116 = vpop.xlane.xlu0 %6115
    %v6117 = vrcp.pop %v6113
    %v6118 = vrcp.pop %v6116
    %v6119 = vmul.f32 %v6108, %v6117
    %v6120 = vmul.f32 %v6110, %v6118
    %6121 = vrot.lane.b32.xlu0 %v126, 16
    %v6122 = vpop.permute.xlu0 %6121
    %6123 = vrot.lane.b32.xlu0 %v131, 16
    %v6124 = vpop.permute.xlu0 %6123
    %v6128 = vsel %vm1583, %v6119, 0
    %6130 = vmatprep.subr.mxu0 0.0
    %6131 = vmatpush1.msra.mxu0 %v6122
    %6132 = vmatprep.subr.mxu0 0.0
    %6133 = vmatpush1.msra.mxu0 %v6124
    %6134 = vmatprep.subr.mxu0 0.0
    %6135 = vmatpush1.msra.mxu0 0.0
    %6136 = vmatprep.subr.mxu0 0.0
    %6137 = vmatpush1.msra.mxu0 0.0
    %6138 = vmatprep.subr.mxu0 0.0
    %6139 = vmatpush1.msra.mxu0 0.0
    %6140 = vmatprep.subr.mxu0 0.0
    %6141 = vmatpush1.msra.mxu0 0.0
    %6142 = vmatprep.subr.mxu0 0.0
    %6143 = vmatpush1.msra.mxu0 0.0
    %6144 = vmatprep.subr.mxu0 0.0
    %6145 = vmatpush1.msra.mxu0 0.0
    %6146 = vmatprep.subr.mxu0 0.0
    %6147 = vmatpush1.msra.mxu0 0.0
    %6148 = vmatprep.subr.mxu0 0.0
    %6149 = vmatpush1.msra.mxu0 0.0
    %6150 = vmatprep.subr.mxu0 0.0
    %6151 = vmatpush1.msra.mxu0 0.0
    %6152 = vmatprep.subr.mxu0 0.0
    %6153 = vmatpush1.msra.mxu0 0.0
    %6154 = vmatprep.subr.mxu0 0.0
    %6155 = vmatpush1.msra.mxu0 0.0
    %6156 = vmatprep.subr.mxu0 0.0
    %6157 = vmatpush1.msra.mxu0 0.0
    %6158 = vmatprep.subr.mxu0 0.0
    %6159 = vmatpush1.msra.mxu0 0.0
    %6160 = vmatprep.subr.mxu0 0.0
    %6161 = vmatpush1.msra.mxu0 0.0
    %6162 = vmatprep.subr.mxu0 0.0
    %6163 = vmatpush1.msra.mxu0 0.0
    %6164 = vmatprep.subr.mxu0 0.0
    %6165 = vmatpush1.msra.mxu0 0.0
    %6166 = vmatprep.subr.mxu0 0.0
    %6167 = vmatpush1.msra.mxu0 0.0
    %6168 = vmatprep.subr.mxu0 0.0
    %6169 = vmatpush1.msra.mxu0 0.0
    %6170 = vmatprep.subr.mxu0 0.0
    %6171 = vmatpush1.msra.mxu0 0.0
    %6172 = vmatprep.subr.mxu0 0.0
    %6173 = vmatpush1.msra.mxu0 0.0
    %6174 = vmatprep.subr.mxu0 0.0
    %6175 = vmatpush1.msra.mxu0 0.0
    %6176 = vmatprep.subr.mxu0 0.0
    %6177 = vmatpush1.msra.mxu0 0.0
    %6178 = vmatprep.subr.mxu0 0.0
    %6179 = vmatpush1.msra.mxu0 0.0
    %6180 = vmatprep.subr.mxu0 0.0
    %6181 = vmatpush1.msra.mxu0 0.0
    %6182 = vmatprep.subr.mxu0 0.0
    %6183 = vmatpush1.msra.mxu0 0.0
    %6184 = vmatprep.subr.mxu0 0.0
    %6185 = vmatpush1.msra.mxu0 0.0
    %6186 = vmatprep.subr.mxu0 0.0
    %6187 = vmatpush1.msra.mxu0 0.0
    %6188 = vmatprep.subr.mxu0 0.0
    %6189 = vmatpush1.msra.mxu0 0.0
    %6190 = vmatprep.subr.mxu0 0.0
    %6191 = vmatpush1.msra.mxu0 0.0
    %6192 = vmatprep.subr.mxu0 0.0
    %6193 = vmatpush1.msra.mxu0 0.0
    %6194 = vmatprep.mubr.f32.mxu0 0.0
    %6195 = vmatmul.mubr.f32.gmra.mrb[0].mxu0 %v6128
    %v6196 = vpop.f32.mrb[0].mxu0
    %v6197 = vadd.f32 0.0, %v6196
    %v6198 = vpop.f32.mrb[0].mxu0
    %6199 = vdwg.mxu0
    %6200 = vrot.lane.b32.xlu0 %v136, 16
    %v6201 = vpop.permute.xlu0 %6200
    %6202 = vrot.lane.b32.xlu0 %v141, 16
    %v6203 = vpop.permute.xlu0 %6202
    %v6207 = vsel %vm1583, %v6120, 0
    %6209 = vmatprep.subr.mxu0 0.0
    %6210 = vmatpush1.msra.mxu0 %v6201
    %6211 = vmatprep.subr.mxu0 0.0
    %6212 = vmatpush1.msra.mxu0 %v6203
    %6213 = vmatprep.subr.mxu0 0.0
    %6214 = vmatpush1.msra.mxu0 0.0
    %6215 = vmatprep.subr.mxu0 0.0
    %6216 = vmatpush1.msra.mxu0 0.0
    %6217 = vmatprep.subr.mxu0 0.0
    %6218 = vmatpush1.msra.mxu0 0.0
    %6219 = vmatprep.subr.mxu0 0.0
    %6220 = vmatpush1.msra.mxu0 0.0
    %6221 = vmatprep.subr.mxu0 0.0
    %6222 = vmatpush1.msra.mxu0 0.0
    %6223 = vmatprep.subr.mxu0 0.0
    %6224 = vmatpush1.msra.mxu0 0.0
    %6225 = vmatprep.subr.mxu0 0.0
    %6226 = vmatpush1.msra.mxu0 0.0
    %6227 = vmatprep.subr.mxu0 0.0
    %6228 = vmatpush1.msra.mxu0 0.0
    %6229 = vmatprep.subr.mxu0 0.0
    %6230 = vmatpush1.msra.mxu0 0.0
    %6231 = vmatprep.subr.mxu0 0.0
    %6232 = vmatpush1.msra.mxu0 0.0
    %6233 = vmatprep.subr.mxu0 0.0
    %6234 = vmatpush1.msra.mxu0 0.0
    %6235 = vmatprep.subr.mxu0 0.0
    %6236 = vmatpush1.msra.mxu0 0.0
    %6237 = vmatprep.subr.mxu0 0.0
    %6238 = vmatpush1.msra.mxu0 0.0
    %6239 = vmatprep.subr.mxu0 0.0
    %6240 = vmatpush1.msra.mxu0 0.0
    %6241 = vmatprep.subr.mxu0 0.0
    %6242 = vmatpush1.msra.mxu0 0.0
    %6243 = vmatprep.subr.mxu0 0.0
    %6244 = vmatpush1.msra.mxu0 0.0
    %6245 = vmatprep.subr.mxu0 0.0
    %6246 = vmatpush1.msra.mxu0 0.0
    %6247 = vmatprep.subr.mxu0 0.0
    %6248 = vmatpush1.msra.mxu0 0.0
    %6249 = vmatprep.subr.mxu0 0.0
    %6250 = vmatpush1.msra.mxu0 0.0
    %6251 = vmatprep.subr.mxu0 0.0
    %6252 = vmatpush1.msra.mxu0 0.0
    %6253 = vmatprep.subr.mxu0 0.0
    %6254 = vmatpush1.msra.mxu0 0.0
    %6255 = vmatprep.subr.mxu0 0.0
    %6256 = vmatpush1.msra.mxu0 0.0
    %6257 = vmatprep.subr.mxu0 0.0
    %6258 = vmatpush1.msra.mxu0 0.0
    %6259 = vmatprep.subr.mxu0 0.0
    %6260 = vmatpush1.msra.mxu0 0.0
    %6261 = vmatprep.subr.mxu0 0.0
    %6262 = vmatpush1.msra.mxu0 0.0
    %6263 = vmatprep.subr.mxu0 0.0
    %6264 = vmatpush1.msra.mxu0 0.0
    %6265 = vmatprep.subr.mxu0 0.0
    %6266 = vmatpush1.msra.mxu0 0.0
    %6267 = vmatprep.subr.mxu0 0.0
    %6268 = vmatpush1.msra.mxu0 0.0
    %6269 = vmatprep.subr.mxu0 0.0
    %6270 = vmatpush1.msra.mxu0 0.0
    %6271 = vmatprep.subr.mxu0 0.0
    %6272 = vmatpush1.msra.mxu0 0.0
    %6273 = vmatprep.mubr.f32.mxu0 0.0
    %6274 = vmatmul.mubr.f32.gmra.mrb[0].mxu0 %v6207
    %v6275 = vpop.f32.mrb[0].mxu0
    %v6276 = vadd.f32 0.0, %v6275
    %v6277 = vpop.f32.mrb[0].mxu0
    %6278 = vdwg.mxu0
    %6279 = vrot.lane.b32.xlu0 %v5247, 104
    %v6280 = vpop.permute.xlu0 %6279
    %6281 = vrot.lane.b32.xlu0 %v126, 40
    %v6282 = vpop.permute.xlu0 %6281
    %6283 = vrot.lane.b32.xlu0 %v131, 40
    %v6284 = vpop.permute.xlu0 %6283
    %v6285 = vsel %vm239, %v6280, 0
    %v6287 = vsel %vm239, %v6282, 0
    %v6289 = vsel %vm239, %v6284, 0
    %6291 = vmatprep.subr.mxu0 0.0
    %6292 = vmatpush1.xpose.msra.mxu0 %v6287
    %6293 = vmatprep.subr.mxu0 0.0
    %6294 = vmatpush1.xpose.msra.mxu0 %v6289
    %6295 = vmatprep.subr.mxu0 0.0
    %6296 = vmatpush1.xpose.msra.mxu0 0.0
    %6297 = vmatprep.subr.mxu0 0.0
    %6298 = vmatpush1.xpose.msra.mxu0 0.0
    %6299 = vmatprep.subr.mxu0 0.0
    %6300 = vmatpush1.xpose.msra.mxu0 0.0
    %6301 = vmatprep.subr.mxu0 0.0
    %6302 = vmatpush1.xpose.msra.mxu0 0.0
    %6303 = vmatprep.subr.mxu0 0.0
    %6304 = vmatpush1.xpose.msra.mxu0 0.0
    %6305 = vmatprep.subr.mxu0 0.0
    %6306 = vmatpush1.xpose.msra.mxu0 0.0
    %6307 = vmatprep.subr.mxu0 0.0
    %6308 = vmatpush1.xpose.msra.mxu0 0.0
    %6309 = vmatprep.subr.mxu0 0.0
    %6310 = vmatpush1.xpose.msra.mxu0 0.0
    %6311 = vmatprep.subr.mxu0 0.0
    %6312 = vmatpush1.xpose.msra.mxu0 0.0
    %6313 = vmatprep.subr.mxu0 0.0
    %6314 = vmatpush1.xpose.msra.mxu0 0.0
    %6315 = vmatprep.subr.mxu0 0.0
    %6316 = vmatpush1.xpose.msra.mxu0 0.0
    %6317 = vmatprep.subr.mxu0 0.0
    %6318 = vmatpush1.xpose.msra.mxu0 0.0
    %6319 = vmatprep.subr.mxu0 0.0
    %6320 = vmatpush1.xpose.msra.mxu0 0.0
    %6321 = vmatprep.subr.mxu0 0.0
    %6322 = vmatpush1.xpose.msra.mxu0 0.0
    %6323 = vmatprep.subr.mxu0 0.0
    %6324 = vmatpush1.xpose.msra.mxu0 0.0
    %6325 = vmatprep.subr.mxu0 0.0
    %6326 = vmatpush1.xpose.msra.mxu0 0.0
    %6327 = vmatprep.subr.mxu0 0.0
    %6328 = vmatpush1.xpose.msra.mxu0 0.0
    %6329 = vmatprep.subr.mxu0 0.0
    %6330 = vmatpush1.xpose.msra.mxu0 0.0
    %6331 = vmatprep.subr.mxu0 0.0
    %6332 = vmatpush1.xpose.msra.mxu0 0.0
    %6333 = vmatprep.subr.mxu0 0.0
    %6334 = vmatpush1.xpose.msra.mxu0 0.0
    %6335 = vmatprep.subr.mxu0 0.0
    %6336 = vmatpush1.xpose.msra.mxu0 0.0
    %6337 = vmatprep.subr.mxu0 0.0
    %6338 = vmatpush1.xpose.msra.mxu0 0.0
    %6339 = vmatprep.subr.mxu0 0.0
    %6340 = vmatpush1.xpose.msra.mxu0 0.0
    %6341 = vmatprep.subr.mxu0 0.0
    %6342 = vmatpush1.xpose.msra.mxu0 0.0
    %6343 = vmatprep.subr.mxu0 0.0
    %6344 = vmatpush1.xpose.msra.mxu0 0.0
    %6345 = vmatprep.subr.mxu0 0.0
    %6346 = vmatpush1.xpose.msra.mxu0 0.0
    %6347 = vmatprep.subr.mxu0 0.0
    %6348 = vmatpush1.xpose.msra.mxu0 0.0
    %6349 = vmatprep.subr.mxu0 0.0
    %6350 = vmatpush1.xpose.msra.mxu0 0.0
    %6351 = vmatprep.subr.mxu0 0.0
    %6352 = vmatpush1.xpose.msra.mxu0 0.0
    %6353 = vmatprep.subr.mxu0 0.0
    %6354 = vmatpush1.xpose.msra.mxu0 0.0
    %6355 = vmatprep.mubr.f32.mxu0 0.0
    %6356 = vmatmul.mubr.f32.gmra.mrb[0].mxu0 %v6285
    %v6357 = vpop.f32.mrb[0].mxu0
    %v6358 = vadd.f32 %v1816, %v6357
    %v6359 = vpop.f32.mrb[0].mxu0
    %6360 = vdwg.mxu0
    %6361 = vrot.lane.b32.xlu0 %v5248, 104
    %v6362 = vpop.permute.xlu0 %6361
    %6363 = vrot.lane.b32.xlu0 %v136, 40
    %v6364 = vpop.permute.xlu0 %6363
    %6365 = vrot.lane.b32.xlu0 %v141, 40
    %v6366 = vpop.permute.xlu0 %6365
    %v6367 = vsel %vm239, %v6362, 0
    %v6369 = vsel %vm239, %v6364, 0
    %v6371 = vsel %vm239, %v6366, 0
    %6373 = vmatprep.subr.mxu0 0.0
    %6374 = vmatpush1.xpose.msra.mxu0 %v6369
    %6375 = vmatprep.subr.mxu0 0.0
    %6376 = vmatpush1.xpose.msra.mxu0 %v6371
    %6377 = vmatprep.subr.mxu0 0.0
    %6378 = vmatpush1.xpose.msra.mxu0 0.0
    %6379 = vmatprep.subr.mxu0 0.0
    %6380 = vmatpush1.xpose.msra.mxu0 0.0
    %6381 = vmatprep.subr.mxu0 0.0
    %6382 = vmatpush1.xpose.msra.mxu0 0.0
    %6383 = vmatprep.subr.mxu0 0.0
    %6384 = vmatpush1.xpose.msra.mxu0 0.0
    %6385 = vmatprep.subr.mxu0 0.0
    %6386 = vmatpush1.xpose.msra.mxu0 0.0
    %6387 = vmatprep.subr.mxu0 0.0
    %6388 = vmatpush1.xpose.msra.mxu0 0.0
    %6389 = vmatprep.subr.mxu0 0.0
    %6390 = vmatpush1.xpose.msra.mxu0 0.0
    %6391 = vmatprep.subr.mxu0 0.0
    %6392 = vmatpush1.xpose.msra.mxu0 0.0
    %6393 = vmatprep.subr.mxu0 0.0
    %6394 = vmatpush1.xpose.msra.mxu0 0.0
    %6395 = vmatprep.subr.mxu0 0.0
    %6396 = vmatpush1.xpose.msra.mxu0 0.0
    %6397 = vmatprep.subr.mxu0 0.0
    %6398 = vmatpush1.xpose.msra.mxu0 0.0
    %6399 = vmatprep.subr.mxu0 0.0
    %6400 = vmatpush1.xpose.msra.mxu0 0.0
    %6401 = vmatprep.subr.mxu0 0.0
    %6402 = vmatpush1.xpose.msra.mxu0 0.0
    %6403 = vmatprep.subr.mxu0 0.0
    %6404 = vmatpush1.xpose.msra.mxu0 0.0
    %6405 = vmatprep.subr.mxu0 0.0
    %6406 = vmatpush1.xpose.msra.mxu0 0.0
    %6407 = vmatprep.subr.mxu0 0.0
    %6408 = vmatpush1.xpose.msra.mxu0 0.0
    %6409 = vmatprep.subr.mxu0 0.0
    %6410 = vmatpush1.xpose.msra.mxu0 0.0
    %6411 = vmatprep.subr.mxu0 0.0
    %6412 = vmatpush1.xpose.msra.mxu0 0.0
    %6413 = vmatprep.subr.mxu0 0.0
    %6414 = vmatpush1.xpose.msra.mxu0 0.0
    %6415 = vmatprep.subr.mxu0 0.0
    %6416 = vmatpush1.xpose.msra.mxu0 0.0
    %6417 = vmatprep.subr.mxu0 0.0
    %6418 = vmatpush1.xpose.msra.mxu0 0.0
    %6419 = vmatprep.subr.mxu0 0.0
    %6420 = vmatpush1.xpose.msra.mxu0 0.0
    %6421 = vmatprep.subr.mxu0 0.0
    %6422 = vmatpush1.xpose.msra.mxu0 0.0
    %6423 = vmatprep.subr.mxu0 0.0
    %6424 = vmatpush1.xpose.msra.mxu0 0.0
    %6425 = vmatprep.subr.mxu0 0.0
    %6426 = vmatpush1.xpose.msra.mxu0 0.0
    %6427 = vmatprep.subr.mxu0 0.0
    %6428 = vmatpush1.xpose.msra.mxu0 0.0
    %6429 = vmatprep.subr.mxu0 0.0
    %6430 = vmatpush1.xpose.msra.mxu0 0.0
    %6431 = vmatprep.subr.mxu0 0.0
    %6432 = vmatpush1.xpose.msra.mxu0 0.0
    %6433 = vmatprep.subr.mxu0 0.0
    %6434 = vmatpush1.xpose.msra.mxu0 0.0
    %6435 = vmatprep.subr.mxu0 0.0
    %6436 = vmatpush1.xpose.msra.mxu0 0.0
    %6437 = vmatprep.mubr.f32.mxu0 0.0
    %6438 = vmatmul.mubr.f32.gmra.mrb[0].mxu0 %v6367
    %v6439 = vpop.f32.mrb[0].mxu0
    %v6440 = vadd.f32 %v1899, %v6439
    %v6441 = vpop.f32.mrb[0].mxu0
    %6442 = vdwg.mxu0
    %v6443 = vsel %vm1583, %v6358, -inf
    %6444 = vmax.xlane.f32.xlu0 %v6443
    %v6445 = vpop.xlane.xlu0 %6444
    %v6446 = vsel %vm1583, %v6440, -inf
    %6447 = vmax.xlane.f32.xlu0 %v6446
    %v6448 = vpop.xlane.xlu0 %6447
    %v6449 = vsub.f32 %v6358, %v6445
    %v6450 = vsub.f32 %v6440, %v6448
    %v6451 = vmul.f32 %v6449, 1.442695
    %v6452 = vpow.pop %v6451
    %v6453 = vmul.f32 %v6450, 1.442695
    %v6454 = vpow.pop %v6453
    %v6455 = vsel %vm1583, %v6452, 0.0
    %6456 = vadd.xlane.f32.xlu0 %v6455
    %v6457 = vpop.xlane.xlu0 %6456
    %v6458 = vsel %vm1583, %v6454, 0.0
    %6459 = vadd.xlane.f32.xlu0 %v6458
    %v6460 = vpop.xlane.xlu0 %6459
    %v6461 = vrcp.pop %v6457
    %v6462 = vrcp.pop %v6460
    %v6463 = vmul.f32 %v6452, %v6461
    %v6464 = vmul.f32 %v6454, %v6462
    %6465 = vrot.lane.b32.xlu0 %v126, 8
    %v6466 = vpop.permute.xlu0 %6465
    %6467 = vrot.lane.b32.xlu0 %v131, 8
    %v6468 = vpop.permute.xlu0 %6467
    %v6472 = vsel %vm1583, %v6463, 0
    %6474 = vmatprep.subr.mxu0 0.0
    %6475 = vmatpush1.msra.mxu0 %v6466
    %6476 = vmatprep.subr.mxu0 0.0
    %6477 = vmatpush1.msra.mxu0 %v6468
    %6478 = vmatprep.subr.mxu0 0.0
    %6479 = vmatpush1.msra.mxu0 0.0
    %6480 = vmatprep.subr.mxu0 0.0
    %6481 = vmatpush1.msra.mxu0 0.0
    %6482 = vmatprep.subr.mxu0 0.0
    %6483 = vmatpush1.msra.mxu0 0.0
    %6484 = vmatprep.subr.mxu0 0.0
    %6485 = vmatpush1.msra.mxu0 0.0
    %6486 = vmatprep.subr.mxu0 0.0
    %6487 = vmatpush1.msra.mxu0 0.0
    %6488 = vmatprep.subr.mxu0 0.0
    %6489 = vmatpush1.msra.mxu0 0.0
    %6490 = vmatprep.subr.mxu0 0.0
    %6491 = vmatpush1.msra.mxu0 0.0
    %6492 = vmatprep.subr.mxu0 0.0
    %6493 = vmatpush1.msra.mxu0 0.0
    %6494 = vmatprep.subr.mxu0 0.0
    %6495 = vmatpush1.msra.mxu0 0.0
    %6496 = vmatprep.subr.mxu0 0.0
    %6497 = vmatpush1.msra.mxu0 0.0
    %6498 = vmatprep.subr.mxu0 0.0
    %6499 = vmatpush1.msra.mxu0 0.0
    %6500 = vmatprep.subr.mxu0 0.0
    %6501 = vmatpush1.msra.mxu0 0.0
    %6502 = vmatprep.subr.mxu0 0.0
    %6503 = vmatpush1.msra.mxu0 0.0
    %6504 = vmatprep.subr.mxu0 0.0
    %6505 = vmatpush1.msra.mxu0 0.0
    %6506 = vmatprep.subr.mxu0 0.0
    %6507 = vmatpush1.msra.mxu0 0.0
    %6508 = vmatprep.subr.mxu0 0.0
    %6509 = vmatpush1.msra.mxu0 0.0
    %6510 = vmatprep.subr.mxu0 0.0
    %6511 = vmatpush1.msra.mxu0 0.0
    %6512 = vmatprep.subr.mxu0 0.0
    %6513 = vmatpush1.msra.mxu0 0.0
    %6514 = vmatprep.subr.mxu0 0.0
    %6515 = vmatpush1.msra.mxu0 0.0
    %6516 = vmatprep.subr.mxu0 0.0
    %6517 = vmatpush1.msra.mxu0 0.0
    %6518 = vmatprep.subr.mxu0 0.0
    %6519 = vmatpush1.msra.mxu0 0.0
    %6520 = vmatprep.subr.mxu0 0.0
    %6521 = vmatpush1.msra.mxu0 0.0
    %6522 = vmatprep.subr.mxu0 0.0
    %6523 = vmatpush1.msra.mxu0 0.0
    %6524 = vmatprep.subr.mxu0 0.0
    %6525 = vmatpush1.msra.mxu0 0.0
    %6526 = vmatprep.subr.mxu0 0.0
    %6527 = vmatpush1.msra.mxu0 0.0
    %6528 = vmatprep.subr.mxu0 0.0
    %6529 = vmatpush1.msra.mxu0 0.0
    %6530 = vmatprep.subr.mxu0 0.0
    %6531 = vmatpush1.msra.mxu0 0.0
    %6532 = vmatprep.subr.mxu0 0.0
    %6533 = vmatpush1.msra.mxu0 0.0
    %6534 = vmatprep.subr.mxu0 0.0
    %6535 = vmatpush1.msra.mxu0 0.0
    %6536 = vmatprep.subr.mxu0 0.0
    %6537 = vmatpush1.msra.mxu0 0.0
    %6538 = vmatprep.mubr.f32.mxu0 0.0
    %6539 = vmatmul.mubr.f32.gmra.mrb[0].mxu0 %v6472
    %v6540 = vpop.f32.mrb[0].mxu0
    %v6541 = vadd.f32 0.0, %v6540
    %v6542 = vpop.f32.mrb[0].mxu0
    %6543 = vdwg.mxu0
    %6544 = vrot.lane.b32.xlu0 %v136, 8
    %v6545 = vpop.permute.xlu0 %6544
    %6546 = vrot.lane.b32.xlu0 %v141, 8
    %v6547 = vpop.permute.xlu0 %6546
    %v6551 = vsel %vm1583, %v6464, 0
    %6553 = vmatprep.subr.mxu0 0.0
    %6554 = vmatpush1.msra.mxu0 %v6545
    %6555 = vmatprep.subr.mxu0 0.0
    %6556 = vmatpush1.msra.mxu0 %v6547
    %6557 = vmatprep.subr.mxu0 0.0
    %6558 = vmatpush1.msra.mxu0 0.0
    %6559 = vmatprep.subr.mxu0 0.0
    %6560 = vmatpush1.msra.mxu0 0.0
    %6561 = vmatprep.subr.mxu0 0.0
    %6562 = vmatpush1.msra.mxu0 0.0
    %6563 = vmatprep.subr.mxu0 0.0
    %6564 = vmatpush1.msra.mxu0 0.0
    %6565 = vmatprep.subr.mxu0 0.0
    %6566 = vmatpush1.msra.mxu0 0.0
    %6567 = vmatprep.subr.mxu0 0.0
    %6568 = vmatpush1.msra.mxu0 0.0
    %6569 = vmatprep.subr.mxu0 0.0
    %6570 = vmatpush1.msra.mxu0 0.0
    %6571 = vmatprep.subr.mxu0 0.0
    %6572 = vmatpush1.msra.mxu0 0.0
    %6573 = vmatprep.subr.mxu0 0.0
    %6574 = vmatpush1.msra.mxu0 0.0
    %6575 = vmatprep.subr.mxu0 0.0
    %6576 = vmatpush1.msra.mxu0 0.0
    %6577 = vmatprep.subr.mxu0 0.0
    %6578 = vmatpush1.msra.mxu0 0.0
    %6579 = vmatprep.subr.mxu0 0.0
    %6580 = vmatpush1.msra.mxu0 0.0
    %6581 = vmatprep.subr.mxu0 0.0
    %6582 = vmatpush1.msra.mxu0 0.0
    %6583 = vmatprep.subr.mxu0 0.0
    %6584 = vmatpush1.msra.mxu0 0.0
    %6585 = vmatprep.subr.mxu0 0.0
    %6586 = vmatpush1.msra.mxu0 0.0
    %6587 = vmatprep.subr.mxu0 0.0
    %6588 = vmatpush1.msra.mxu0 0.0
    %6589 = vmatprep.subr.mxu0 0.0
    %6590 = vmatpush1.msra.mxu0 0.0
    %6591 = vmatprep.subr.mxu0 0.0
    %6592 = vmatpush1.msra.mxu0 0.0
    %6593 = vmatprep.subr.mxu0 0.0
    %6594 = vmatpush1.msra.mxu0 0.0
    %6595 = vmatprep.subr.mxu0 0.0
    %6596 = vmatpush1.msra.mxu0 0.0
    %6597 = vmatprep.subr.mxu0 0.0
    %6598 = vmatpush1.msra.mxu0 0.0
    %6599 = vmatprep.subr.mxu0 0.0
    %6600 = vmatpush1.msra.mxu0 0.0
    %6601 = vmatprep.subr.mxu0 0.0
    %6602 = vmatpush1.msra.mxu0 0.0
    %6603 = vmatprep.subr.mxu0 0.0
    %6604 = vmatpush1.msra.mxu0 0.0
    %6605 = vmatprep.subr.mxu0 0.0
    %6606 = vmatpush1.msra.mxu0 0.0
    %6607 = vmatprep.subr.mxu0 0.0
    %6608 = vmatpush1.msra.mxu0 0.0
    %6609 = vmatprep.subr.mxu0 0.0
    %6610 = vmatpush1.msra.mxu0 0.0
    %6611 = vmatprep.subr.mxu0 0.0
    %6612 = vmatpush1.msra.mxu0 0.0
    %6613 = vmatprep.subr.mxu0 0.0
    %6614 = vmatpush1.msra.mxu0 0.0
    %6615 = vmatprep.subr.mxu0 0.0
    %6616 = vmatpush1.msra.mxu0 0.0
    %6617 = vmatprep.mubr.f32.mxu0 0.0
    %6618 = vmatmul.mubr.f32.gmra.mrb[0].mxu0 %v6551
    %v6619 = vpop.f32.mrb[0].mxu0
    %v6620 = vadd.f32 0.0, %v6619
    %v6621 = vpop.f32.mrb[0].mxu0
    %6622 = vdwg.mxu0
    %6625 = vrot.lane.b32.xlu0 %v5853, 8
    %v6626 = vpop.permute.xlu0 %6625
    %6627 = vrot.lane.b32.xlu0 %v5932, 8
    %v6628 = vpop.permute.xlu0 %6627
    %6633 = vrot.lane.b32.xlu0 %v6197, 16
    %v6634 = vpop.permute.xlu0 %6633
    %6635 = vrot.lane.b32.xlu0 %v6276, 16
    %v6636 = vpop.permute.xlu0 %6635
    %6641 = vrot.lane.b32.xlu0 %v6541, 24
    %v6642 = vpop.permute.xlu0 %6641
    %6643 = vrot.lane.b32.xlu0 %v6620, 24
    %v6644 = vpop.permute.xlu0 %6643
    %v6647 = vsel %vm239, %v5509, %v6626
    %v6648 = vsel %vm239, %v5588, %v6628
    %v6649 = vsel %vm1583, %v6647, %v6634
    %v6650 = vsel %vm1583, %v6648, %v6636
    %v6651 = vsel %vm1586, %v6649, %v6642
    %v6652 = vsel %vm1586, %v6650, %v6644
    %v6653 = vld [vmem:[#allocation2 + $0x140] sm:$0xff]
    %v6654 = vld [vmem:[#allocation2 + $0x148] sm:$0xff]
    %v6655 = vld [vmem:[#allocation2 + $0x150] sm:$0xff]
    %v6656 = vld [vmem:[#allocation2 + $0x158] sm:$0xff]
    %v6657 = vld [vmem:[#allocation2 + $0x1f1] sm:$0x1]
    %v6658 = vlaneseq
    %v6659 = vshrl.u32 %v6658, 7
    %v6660 = vsub.s32 0, %v6659
    %v6661 = vrot.slane %v6657, %v6660
    %v6663 = vsel %vm46, %v6651, 0
    %v6666 = vsel %vm46, %v6652, 0
    %6668 = vmatprep.subr.mxu0 0.0
    %6669 = vmatpush1.msra.mxu0 %v6653
    %6670 = vmatprep.subr.mxu0 0.0
    %6671 = vmatpush1.msra.mxu0 %v6654
    %6672 = vmatprep.subr.mxu0 0.0
    %6673 = vmatpush1.msra.mxu0 %v6655
    %6674 = vmatprep.subr.mxu0 0.0
    %6675 = vmatpush1.msra.mxu0 %v6656
    %6676 = vmatprep.subr.mxu0 0.0
    %6677 = vmatpush1.msra.mxu0 0.0
    %6678 = vmatprep.subr.mxu0 0.0
    %6679 = vmatpush1.msra.mxu0 0.0
    %6680 = vmatprep.subr.mxu0 0.0
    %6681 = vmatpush1.msra.mxu0 0.0
    %6682 = vmatprep.subr.mxu0 0.0
    %6683 = vmatpush1.msra.mxu0 0.0
    %6684 = vmatprep.subr.mxu0 0.0
    %6685 = vmatpush1.msra.mxu0 0.0
    %6686 = vmatprep.subr.mxu0 0.0
    %6687 = vmatpush1.msra.mxu0 0.0
    %6688 = vmatprep.subr.mxu0 0.0
    %6689 = vmatpush1.msra.mxu0 0.0
    %6690 = vmatprep.subr.mxu0 0.0
    %6691 = vmatpush1.msra.mxu0 0.0
    %6692 = vmatprep.subr.mxu0 0.0
    %6693 = vmatpush1.msra.mxu0 0.0
    %6694 = vmatprep.subr.mxu0 0.0
    %6695 = vmatpush1.msra.mxu0 0.0
    %6696 = vmatprep.subr.mxu0 0.0
    %6697 = vmatpush1.msra.mxu0 0.0
    %6698 = vmatprep.subr.mxu0 0.0
    %6699 = vmatpush1.msra.mxu0 0.0
    %6700 = vmatprep.subr.mxu0 0.0
    %6701 = vmatpush1.msra.mxu0 0.0
    %6702 = vmatprep.subr.mxu0 0.0
    %6703 = vmatpush1.msra.mxu0 0.0
    %6704 = vmatprep.subr.mxu0 0.0
    %6705 = vmatpush1.msra.mxu0 0.0
    %6706 = vmatprep.subr.mxu0 0.0
    %6707 = vmatpush1.msra.mxu0 0.0
    %6708 = vmatprep.subr.mxu0 0.0
    %6709 = vmatpush1.msra.mxu0 0.0
    %6710 = vmatprep.subr.mxu0 0.0
    %6711 = vmatpush1.msra.mxu0 0.0
    %6712 = vmatprep.subr.mxu0 0.0
    %6713 = vmatpush1.msra.mxu0 0.0
    %6714 = vmatprep.subr.mxu0 0.0
    %6715 = vmatpush1.msra.mxu0 0.0
    %6716 = vmatprep.subr.mxu0 0.0
    %6717 = vmatpush1.msra.mxu0 0.0
    %6718 = vmatprep.subr.mxu0 0.0
    %6719 = vmatpush1.msra.mxu0 0.0
    %6720 = vmatprep.subr.mxu0 0.0
    %6721 = vmatpush1.msra.mxu0 0.0
    %6722 = vmatprep.subr.mxu0 0.0
    %6723 = vmatpush1.msra.mxu0 0.0
    %6724 = vmatprep.subr.mxu0 0.0
    %6725 = vmatpush1.msra.mxu0 0.0
    %6726 = vmatprep.subr.mxu0 0.0
    %6727 = vmatpush1.msra.mxu0 0.0
    %6728 = vmatprep.subr.mxu0 0.0
    %6729 = vmatpush1.msra.mxu0 0.0
    %6730 = vmatprep.subr.mxu0 0.0
    %6731 = vmatpush1.msra.mxu0 0.0
    %6732 = vmatprep.mubr.f32.mxu0 0.0
    %6733 = vmatmul.mubr.f32.gmra.mrb[0].mxu0 %v6663
    %v6734 = vpop.f32.mrb[0].mxu0
    %v6735 = vadd.f32 %v6661, %v6734
    %v6736 = vpop.f32.mrb[0].mxu0
    %6737 = vmatprep.mubr.f32.mxu0 0.0
    %6738 = vmatmul.mubr.f32.gmra.mrb[0].mxu0 %v6666
    %v6739 = vpop.f32.mrb[0].mxu0
    %v6740 = vadd.f32 %v6661, %v6739
    %v6741 = vpop.f32.mrb[0].mxu0
    %6742 = vdwg.mxu0
    %v6743 = vadd.f32 %v6735, %v5155
    %v6744 = vadd.f32 %v6740, %v5156
    %v6745 = vld [vmem:[#allocation2 + $0x1f2] sm:$0x1]
    %v6746 = vld [vmem:[#allocation2 + $0x1f3] sm:$0x1]
    %v6747 = vsel %vm46, %v6743, 0.0
    %6748 = vadd.xlane.f32.xlu0 %v6747
    %v6749 = vpop.xlane.xlu0 %6748
    %v6750 = vsel %vm46, %v6744, 0.0
    %6751 = vadd.xlane.f32.xlu0 %v6750
    %v6752 = vpop.xlane.xlu0 %6751
    %v6753 = vmul.f32 %v6749, %v1689
    %v6754 = vmul.f32 %v6752, %v1689
    %v6755 = vsub.f32 %v6743, %v6753
    %v6756 = vsub.f32 %v6744, %v6754
    %v6757 = vmul.f32 %v6755, %v6755
    %v6758 = vmul.f32 %v6756, %v6756
    %v6759 = vsel %vm46, %v6757, 0.0
    %6760 = vadd.xlane.f32.xlu0 %v6759
    %v6761 = vpop.xlane.xlu0 %6760
    %v6762 = vsel %vm46, %v6758, 0.0
    %6763 = vadd.xlane.f32.xlu0 %v6762
    %v6764 = vpop.xlane.xlu0 %6763
    %v6765 = vmul.f32 %v6761, %v1689
    %v6766 = vmul.f32 %v6764, %v1689
    %v6767 = vadd.f32 %v6765, 1e-05
    %v6768 = vadd.f32 %v6766, 1e-05
    %v6769 = vrsqrt.pop %v6767
    %v6770 = vrsqrt.pop %v6768
    %v6771 = vmul.f32 %v6755, %v6769
    %v6772 = vmul.f32 %v6756, %v6770
    %v6773 = vlaneseq
    %v6774 = vshrl.u32 %v6773, 7
    %v6775 = vsub.s32 0, %v6774
    %v6776 = vrot.slane %v6745, %v6775
    %v6777 = vmul.f32 %v6771, %v6776
    %v6778 = vmul.f32 %v6772, %v6776
    %v6779 = vlaneseq
    %v6780 = vshrl.u32 %v6779, 7
    %v6781 = vsub.s32 0, %v6780
    %v6782 = vrot.slane %v6746, %v6781
    %v6783 = vadd.f32 %v6777, %v6782
    %v6784 = vadd.f32 %v6778, %v6782
    %v6785 = vld [vmem:[#allocation2 + $0x160] sm:$0xff]
    %v6786 = vld [vmem:[#allocation2 + $0x168] sm:$0xff]
    %v6787 = vld [vmem:[#allocation2 + $0x170] sm:$0xff]
    %v6788 = vld [vmem:[#allocation2 + $0x178] sm:$0xff]
    %v6789 = vld [vmem:[#allocation2 + $0x1f4] sm:$0x1]
    %v6790 = vlaneseq
    %v6791 = vshrl.u32 %v6790, 7
    %v6792 = vsub.s32 0, %v6791
    %v6793 = vrot.slane %v6789, %v6792
    %v6795 = vsel %vm46, %v6783, 0
    %v6798 = vsel %vm46, %v6784, 0
    %6800 = vmatprep.subr.mxu0 0.0
    %6801 = vmatpush1.msra.mxu0 %v6785
    %6802 = vmatprep.subr.mxu0 0.0
    %6803 = vmatpush1.msra.mxu0 %v6786
    %6804 = vmatprep.subr.mxu0 0.0
    %6805 = vmatpush1.msra.mxu0 %v6787
    %6806 = vmatprep.subr.mxu0 0.0
    %6807 = vmatpush1.msra.mxu0 %v6788
    %6808 = vmatprep.subr.mxu0 0.0
    %6809 = vmatpush1.msra.mxu0 0.0
    %6810 = vmatprep.subr.mxu0 0.0
    %6811 = vmatpush1.msra.mxu0 0.0
    %6812 = vmatprep.subr.mxu0 0.0
    %6813 = vmatpush1.msra.mxu0 0.0
    %6814 = vmatprep.subr.mxu0 0.0
    %6815 = vmatpush1.msra.mxu0 0.0
    %6816 = vmatprep.subr.mxu0 0.0
    %6817 = vmatpush1.msra.mxu0 0.0
    %6818 = vmatprep.subr.mxu0 0.0
    %6819 = vmatpush1.msra.mxu0 0.0
    %6820 = vmatprep.subr.mxu0 0.0
    %6821 = vmatpush1.msra.mxu0 0.0
    %6822 = vmatprep.subr.mxu0 0.0
    %6823 = vmatpush1.msra.mxu0 0.0
    %6824 = vmatprep.subr.mxu0 0.0
    %6825 = vmatpush1.msra.mxu0 0.0
    %6826 = vmatprep.subr.mxu0 0.0
    %6827 = vmatpush1.msra.mxu0 0.0
    %6828 = vmatprep.subr.mxu0 0.0
    %6829 = vmatpush1.msra.mxu0 0.0
    %6830 = vmatprep.subr.mxu0 0.0
    %6831 = vmatpush1.msra.mxu0 0.0
    %6832 = vmatprep.subr.mxu0 0.0
    %6833 = vmatpush1.msra.mxu0 0.0
    %6834 = vmatprep.subr.mxu0 0.0
    %6835 = vmatpush1.msra.mxu0 0.0
    %6836 = vmatprep.subr.mxu0 0.0
    %6837 = vmatpush1.msra.mxu0 0.0
    %6838 = vmatprep.subr.mxu0 0.0
    %6839 = vmatpush1.msra.mxu0 0.0
    %6840 = vmatprep.subr.mxu0 0.0
    %6841 = vmatpush1.msra.mxu0 0.0
    %6842 = vmatprep.subr.mxu0 0.0
    %6843 = vmatpush1.msra.mxu0 0.0
    %6844 = vmatprep.subr.mxu0 0.0
    %6845 = vmatpush1.msra.mxu0 0.0
    %6846 = vmatprep.subr.mxu0 0.0
    %6847 = vmatpush1.msra.mxu0 0.0
    %6848 = vmatprep.subr.mxu0 0.0
    %6849 = vmatpush1.msra.mxu0 0.0
    %6850 = vmatprep.subr.mxu0 0.0
    %6851 = vmatpush1.msra.mxu0 0.0
    %6852 = vmatprep.subr.mxu0 0.0
    %6853 = vmatpush1.msra.mxu0 0.0
    %6854 = vmatprep.subr.mxu0 0.0
    %6855 = vmatpush1.msra.mxu0 0.0
    %6856 = vmatprep.subr.mxu0 0.0
    %6857 = vmatpush1.msra.mxu0 0.0
    %6858 = vmatprep.subr.mxu0 0.0
    %6859 = vmatpush1.msra.mxu0 0.0
    %6860 = vmatprep.subr.mxu0 0.0
    %6861 = vmatpush1.msra.mxu0 0.0
    %6862 = vmatprep.subr.mxu0 0.0
    %6863 = vmatpush1.msra.mxu0 0.0
    %6864 = vmatprep.mubr.f32.mxu0 0.0
    %6865 = vmatmul.mubr.f32.gmra.mrb[0].mxu0 %v6795
    %v6866 = vpop.f32.mrb[0].mxu0
    %v6867 = vadd.f32 %v6793, %v6866
    %v6868 = vpop.f32.mrb[0].mxu0
    %6869 = vmatprep.mubr.f32.mxu0 0.0
    %6870 = vmatmul.mubr.f32.gmra.mrb[0].mxu0 %v6798
    %v6871 = vpop.f32.mrb[0].mxu0
    %v6872 = vadd.f32 %v6793, %v6871
    %v6873 = vpop.f32.mrb[0].mxu0
    %6874 = vdwg.mxu0
    %v6875 = vmax.f32 %v6867, 0.0
    %v6876 = vmax.f32 %v6872, 0.0
    %v6877 = vld [vmem:[#allocation2 + $0x180] sm:$0xff]
    %v6878 = vld [vmem:[#allocation2 + $0x188] sm:$0xff]
    %v6879 = vld [vmem:[#allocation2 + $0x190] sm:$0xff]
    %v6880 = vld [vmem:[#allocation2 + $0x198] sm:$0xff]
    %v6881 = vld [vmem:[#allocation2 + $0x1a0] sm:$0xff]
    %v6882 = vld [vmem:[#allocation2 + $0x1a8] sm:$0xff]
    %v6883 = vld [vmem:[#allocation2 + $0x1b0] sm:$0xff]
    %v6884 = vld [vmem:[#allocation2 + $0x1b8] sm:$0xff]
    %v6885 = vld [vmem:[#allocation2 + $0x1f5] sm:$0x1]
    %v6886 = vlaneseq
    %v6887 = vshrl.u32 %v6886, 7
    %v6888 = vsub.s32 0, %v6887
    %v6889 = vrot.slane %v6885, %v6888
    %v6891 = vsel %vm3459, %v6875, 0
    %v6894 = vsel %vm3459, %v6876, 0
    %6896 = vmatprep.subr.mxu0 0.0
    %6897 = vmatpush1.msra.mxu0 %v6877
    %6898 = vmatprep.subr.mxu0 0.0
    %6899 = vmatpush1.msra.mxu0 %v6878
    %6900 = vmatprep.subr.mxu0 0.0
    %6901 = vmatpush1.msra.mxu0 %v6879
    %6902 = vmatprep.subr.mxu0 0.0
    %6903 = vmatpush1.msra.mxu0 %v6880
    %6904 = vmatprep.subr.mxu0 0.0
    %6905 = vmatpush1.msra.mxu0 %v6881
    %6906 = vmatprep.subr.mxu0 0.0
    %6907 = vmatpush1.msra.mxu0 %v6882
    %6908 = vmatprep.subr.mxu0 0.0
    %6909 = vmatpush1.msra.mxu0 %v6883
    %6910 = vmatprep.subr.mxu0 0.0
    %6911 = vmatpush1.msra.mxu0 %v6884
    %6912 = vmatprep.subr.mxu0 0.0
    %6913 = vmatpush1.msra.mxu0 0.0
    %6914 = vmatprep.subr.mxu0 0.0
    %6915 = vmatpush1.msra.mxu0 0.0
    %6916 = vmatprep.subr.mxu0 0.0
    %6917 = vmatpush1.msra.mxu0 0.0
    %6918 = vmatprep.subr.mxu0 0.0
    %6919 = vmatpush1.msra.mxu0 0.0
    %6920 = vmatprep.subr.mxu0 0.0
    %6921 = vmatpush1.msra.mxu0 0.0
    %6922 = vmatprep.subr.mxu0 0.0
    %6923 = vmatpush1.msra.mxu0 0.0
    %6924 = vmatprep.subr.mxu0 0.0
    %6925 = vmatpush1.msra.mxu0 0.0
    %6926 = vmatprep.subr.mxu0 0.0
    %6927 = vmatpush1.msra.mxu0 0.0
    %6928 = vmatprep.subr.mxu0 0.0
    %6929 = vmatpush1.msra.mxu0 0.0
    %6930 = vmatprep.subr.mxu0 0.0
    %6931 = vmatpush1.msra.mxu0 0.0
    %6932 = vmatprep.subr.mxu0 0.0
    %6933 = vmatpush1.msra.mxu0 0.0
    %6934 = vmatprep.subr.mxu0 0.0
    %6935 = vmatpush1.msra.mxu0 0.0
    %6936 = vmatprep.subr.mxu0 0.0
    %6937 = vmatpush1.msra.mxu0 0.0
    %6938 = vmatprep.subr.mxu0 0.0
    %6939 = vmatpush1.msra.mxu0 0.0
    %6940 = vmatprep.subr.mxu0 0.0
    %6941 = vmatpush1.msra.mxu0 0.0
    %6942 = vmatprep.subr.mxu0 0.0
    %6943 = vmatpush1.msra.mxu0 0.0
    %6944 = vmatprep.subr.mxu0 0.0
    %6945 = vmatpush1.msra.mxu0 0.0
    %6946 = vmatprep.subr.mxu0 0.0
    %6947 = vmatpush1.msra.mxu0 0.0
    %6948 = vmatprep.subr.mxu0 0.0
    %6949 = vmatpush1.msra.mxu0 0.0
    %6950 = vmatprep.subr.mxu0 0.0
    %6951 = vmatpush1.msra.mxu0 0.0
    %6952 = vmatprep.subr.mxu0 0.0
    %6953 = vmatpush1.msra.mxu0 0.0
    %6954 = vmatprep.subr.mxu0 0.0
    %6955 = vmatpush1.msra.mxu0 0.0
    %6956 = vmatprep.subr.mxu0 0.0
    %6957 = vmatpush1.msra.mxu0 0.0
    %6958 = vmatprep.subr.mxu0 0.0
    %6959 = vmatpush1.msra.mxu0 0.0
    %6960 = vmatprep.mubr.f32.mxu0 0.0
    %6961 = vmatmul.mubr.f32.gmra.mrb[0].mxu0 %v6891
    %v6962 = vpop.f32.mrb[0].mxu0
    %v6963 = vadd.f32 %v6889, %v6962
    %v6964 = vpop.f32.mrb[0].mxu0
    %6965 = vmatprep.mubr.f32.mxu0 0.0
    %6966 = vmatmul.mubr.f32.gmra.mrb[0].mxu0 %v6894
    %v6967 = vpop.f32.mrb[0].mxu0
    %v6968 = vadd.f32 %v6889, %v6967
    %v6969 = vpop.f32.mrb[0].mxu0
    %6970 = vdwg.mxu0
    %v6971 = vadd.f32 %v6963, %v6783
    %v6972 = vadd.f32 %v6968, %v6784
    %v6973 = vld [vmem:[#allocation2 + $0x1f6] sm:$0x1]
    %v6974 = vld [vmem:[#allocation2 + $0x1f7] sm:$0x1]
    %v6975 = vsel %vm46, %v6971, 0.0
    %6976 = vadd.xlane.f32.xlu0 %v6975
    %v6977 = vpop.xlane.xlu0 %6976
    %v6978 = vsel %vm46, %v6972, 0.0
    %6979 = vadd.xlane.f32.xlu0 %v6978
    %v6980 = vpop.xlane.xlu0 %6979
    %v6981 = vmul.f32 %v6977, %v1689
    %v6982 = vmul.f32 %v6980, %v1689
    %v6983 = vsub.f32 %v6971, %v6981
    %v6984 = vsub.f32 %v6972, %v6982
    %v6985 = vmul.f32 %v6983, %v6983
    %v6986 = vmul.f32 %v6984, %v6984
    %v6987 = vsel %vm46, %v6985, 0.0
    %6988 = vadd.xlane.f32.xlu0 %v6987
    %v6989 = vpop.xlane.xlu0 %6988
    %v6990 = vsel %vm46, %v6986, 0.0
    %6991 = vadd.xlane.f32.xlu0 %v6990
    %v6992 = vpop.xlane.xlu0 %6991
    %v6993 = vmul.f32 %v6989, %v1689
    %v6994 = vmul.f32 %v6992, %v1689
    %v6995 = vadd.f32 %v6993, 1e-05
    %v6996 = vadd.f32 %v6994, 1e-05
    %v6997 = vrsqrt.pop %v6995
    %v6998 = vrsqrt.pop %v6996
    %v6999 = vmul.f32 %v6983, %v6997
    %v7000 = vmul.f32 %v6984, %v6998
    %v7001 = vlaneseq
    %v7002 = vshrl.u32 %v7001, 7
    %v7003 = vsub.s32 0, %v7002
    %v7004 = vrot.slane %v6973, %v7003
    %v7005 = vmul.f32 %v6999, %v7004
    %v7006 = vmul.f32 %v7000, %v7004
    %v7007 = vlaneseq
    %v7008 = vshrl.u32 %v7007, 7
    %v7009 = vsub.s32 0, %v7008
    %v7010 = vrot.slane %v6974, %v7009
    %v7011 = vadd.f32 %v7005, %v7010
    %v7012 = vadd.f32 %v7006, %v7010
    %7013 = vst.msk [vmem:[#allocation5] sm:$0xff] %vm46, %v7011
    %7014 = vst.msk [vmem:[#allocation5 + $0x8] sm:$0xff] %vm46, %v7012
    // Predicated region
    $region18: #{_lambda_.1} parent=1 // pred_check
      _
    $region19: #{_lambda_.1} parent=1 // pred_check_branch
      %7016 = sbr.rel (0) target = $region21
    $region20: #{_lambda_.1} parent=1 // pred_region
      %s7018 = ssub.s32 256, 256
      %7019 = vsyncadd [#allocation4], %s7018
      %s7020 = sshll.u32 [#allocation5], 4
      %s7021 = int_to_ptr.vmem [resolvable:$true] %s7020
      %7026 = dma.vmem_to_hbm [thread:$0]  %s7021, 256, %s3, [#allocation4], 128, 128, 8
    $region21: #{_lambda_.1} parent=1 // pred_fallthru
      _
    // Predicated region
    $region22: #{_lambda_.1} parent=1 // pred_check
      _
    $region23: #{_lambda_.1} parent=1 // pred_check_branch
      %7028 = sbr.rel (0) target = $region25
    $region24: #{_lambda_.1} parent=1 // pred_region
      %7029 = dma.done [#allocation4], 256
    $region25: #{_lambda_.1} parent=1 // pred_fallthru
      _
    %7030 = vsyncpa [#allocation3], 1
    %7031 = vsyncpa [#allocation4], 1

</llo_original>
